<compile_context>
chip_gen: v7x
topology: tpu7x:2x2x1
jax: 0.10.0
libtpu: 0.0.40
codegen_flags: <defaults>
</compile_context>

<pallas_src>
import jax
import jax.numpy as jnp
from jax.experimental import pallas as pl
from jax.experimental.pallas import tpu as pltpu

EPS = 1e-5


def rtb_bottleneck_forward(x, ln, w1, g1, b1, w2_hwio, g2, b2, w3, g3, b3,
                           compute_dtype=jnp.float32):
    """NHWC forward of rtbBottleNeck (stride=1, identity shortcut).

    x:       (N, H, W, Cin) with Cin == expansion * planes
    ln:      (N, H, W, 3)   routing maps; channel 1 -> r1, channel 2 -> r2
                            (channel 0 / r0 is unused, as in the module)
    w1:      (Cin, planes)            1x1 conv weight
    w2_hwio: (3, 3, planes, planes)   3x3 conv weight, HWIO
    w3:      (planes, 4*planes)       1x1 conv weight
    g*/b*:   per-channel BN gamma/beta, 1-D
    """
    N, H, W, Cin = x.shape
    P = w1.shape[1]                      # planes
    Cout = w3.shape[1]                   # expansion * planes
    assert Cin == Cout, "identity shortcut requires in_planes == 4*planes"
    M = N * H * W

    # Free wrapper-side reshapes (contiguous regroupings, no transposes).
    x2d = x.reshape(M, Cin)
    r1 = ln[..., 1].reshape(M, 1)
    r2 = ln[..., 2].reshape(M, 1)
    w2 = w2_hwio.reshape(9 * P, P)       # (kh, kw, cin) flattened, cin fastest

    cd = compute_dtype

    def kernel(x_ref, r1_ref, r2_ref,
               w1_ref, g1_ref, b1_ref,
               w2_ref, g2_ref, b2_ref,
               w3_ref, g3_ref, b3_ref,
               out_ref, pad_ref):
        # x_ref:   (M, Cin)            flattened NHWC input
        # r*_ref:  (M, 1)              per-pixel routing gates
        # w1_ref:  (Cin, P)   w2_ref: (9P, P)   w3_ref: (P, 4P)
        # g*/b*:   (1, C)              BN affine params
        # out_ref: (M, 4P)
        # pad_ref: (N, H+2, W+2, P)    zero-padded scratch for the 3x3 conv

        def mm(a, b):
            # MXU matmul; optionally bf16 operands, always f32 accumulation.
            return jnp.dot(a.astype(cd), b.astype(cd),
                           preferred_element_type=jnp.float32)

        def bn_fold(v, g, b):
            # Training-mode BN, single pass: one sweep computes sum and
            # sum-of-squares; gamma/beta folded into a single scale/shift FMA.
            inv_n = 1.0 / v.shape[0]
            mean = jnp.sum(v, axis=0, keepdims=True) * inv_n
            meansq = jnp.sum(v * v, axis=0, keepdims=True) * inv_n
            var = meansq - mean * mean
            scale = g * jax.lax.rsqrt(var + EPS)      # EUP
            shift = b - mean * scale
            return v * scale + shift

        x2 = x_ref[...]                                    # (M, Cin) f32

        # ---- conv1 (1x1) -> bn1 -> relu ------------------------------------
        y1 = mm(x2, w1_ref[...])                           # (M, P)
        y1 = jnp.maximum(bn_fold(y1, g1_ref[...], b1_ref[...]), 0.0)

        # ---- conv2 (3x3, pad=1) -> bn2 -> relu : one im2col matmul ---------
        pad_ref[...] = jnp.zeros_like(pad_ref)             # halo zeroed once
        pad_ref[:, 1:H + 1, 1:W + 1, :] = y1.reshape(N, H, W, P)
        padded = pad_ref[...]
        cols = jnp.concatenate(
            [padded[:, kh:kh + H, kw:kw + W, :]
             for kh in range(3) for kw in range(3)],
            axis=-1).reshape(M, 9 * P)                     # (M, 9P)
        y2 = mm(cols, w2_ref[...])                         # (M, P)
        y2 = jnp.maximum(bn_fold(y2, g2_ref[...], b2_ref[...]), 0.0)

        # ---- conv3 (1x1, shared weight) on both branches; bn3 stats are ----
        # ---- computed separately per call, matching the PyTorch forward ----
        w3v = w3_ref[...]
        c3_1 = bn_fold(mm(y1, w3v), g3_ref[...], b3_ref[...])   # (M, 4P)
        c3_2 = bn_fold(mm(y2, w3v), g3_ref[...], b3_ref[...])   # (M, 4P)

        # ---- routing gates + identity shortcut + relu ----------------------
        out_ref[...] = jnp.maximum(
            x2 + r1_ref[...] * c3_1 + r2_ref[...] * c3_2, 0.0)

    out2d = pl.pallas_call(
        kernel,
        out_shape=jax.ShapeDtypeStruct((M, Cout), jnp.float32),
        in_specs=[pl.BlockSpec(memory_space=pltpu.MemorySpace.VMEM)] * 12,
        out_specs=pl.BlockSpec(memory_space=pltpu.MemorySpace.VMEM),
        scratch_shapes=[pltpu.VMEM((N, H + 2, W + 2, P), jnp.float32)],
    )(x2d, r1, r2,
      w1, g1.reshape(1, -1), b1.reshape(1, -1),
      w2, g2.reshape(1, -1), b2.reshape(1, -1),
      w3, g3.reshape(1, -1), b3.reshape(1, -1))

    return out2d.reshape(N, H, W, Cout)


def reference_forward(x, ln, w1, g1, b1, w2_hwio, g2, b2, w3, g3, b3):
    """Pure-JAX NHWC reference (training-mode BN, two-pass variance)."""

    def bn(v, g, b):
        m = jnp.mean(v, axis=(0, 1, 2), keepdims=True)
        var = jnp.mean((v - m) ** 2, axis=(0, 1, 2), keepdims=True)
        return (v - m) * jax.lax.rsqrt(var + EPS) * g.reshape(1, 1, 1, -1) \
            + b.reshape(1, 1, 1, -1)

    r1 = ln[..., 1:2]
    r2 = ln[..., 2:3]
    c1 = jnp.maximum(bn(jnp.einsum('nhwc,cd->nhwd', x, w1), g1, b1), 0.0)
    c2 = jax.lax.conv_general_dilated(
        c1, w2_hwio, window_strides=(1, 1), padding="SAME",
        dimension_numbers=("NHWC", "HWIO", "NHWC"))
    c2 = jnp.maximum(bn(c2, g2, b2), 0.0)
    c3_1 = bn(jnp.einsum('nhwc,cd->nhwd', c1, w3), g3, b3)
    c3_2 = bn(jnp.einsum('nhwc,cd->nhwd', c2, w3), g3, b3)
    return jnp.maximum(x + r1 * c3_1 + r2 * c3_2, 0.0)


if __name__ == "__main__":
    # Small deterministic config: batch=2, planes=4, in_planes=4*planes=16,
    # spatial 16x16, stride=1 (identity shortcut, no maxpool/downsample).
    N, H, W = 2, 16, 16
    planes = 4
    in_planes = 4 * planes

    key = jax.random.PRNGKey(0)
    ks = jax.random.split(key, 11)
    x = jax.random.normal(ks[0], (N, H, W, in_planes), dtype=jnp.float32)
    ln = jax.random.uniform(ks[1], (N, H, W, 3), dtype=jnp.float32)
    w1 = 0.1 * jax.random.normal(ks[2], (in_planes, planes), dtype=jnp.float32)
    w2 = 0.1 * jax.random.normal(ks[3], (3, 3, planes, planes), dtype=jnp.float32)
    w3 = 0.1 * jax.random.normal(ks[4], (planes, 4 * planes), dtype=jnp.float32)
    g1 = 1.0 + 0.1 * jax.random.normal(ks[5], (planes,), dtype=jnp.float32)
    b1 = 0.1 * jax.random.normal(ks[6], (planes,), dtype=jnp.float32)
    g2 = 1.0 + 0.1 * jax.random.normal(ks[7], (planes,), dtype=jnp.float32)
    b2 = 0.1 * jax.random.normal(ks[8], (planes,), dtype=jnp.float32)
    g3 = 1.0 + 0.1 * jax.random.normal(ks[9], (4 * planes,), dtype=jnp.float32)
    b3 = 0.1 * jax.random.normal(ks[10], (4 * planes,), dtype=jnp.float32)

    out = jax.block_until_ready(
        rtb_bottleneck_forward(x, ln, w1, g1, b1, w2, g2, b2, w3, g3, b3))
    ref = jax.block_until_ready(
        reference_forward(x, ln, w1, g1, b1, w2, g2, b2, w3, g3, b3))

    assert out.shape == (N, H, W, in_planes)
    err = float(jnp.max(jnp.abs(out - ref)))
    assert err < 1e-3, f"mismatch vs reference: max abs err {err}"
    print("KERNEL_OK")
</pallas_src>

<mosaic_0001>
module attributes {stable_mosaic.version = 11 : i64} {
  func.func @kernel(%arg0: memref<512x16xf32, #tpu.memory_space<vmem>>, %arg1: memref<512x1xf32, #tpu.memory_space<vmem>>, %arg2: memref<512x1xf32, #tpu.memory_space<vmem>>, %arg3: memref<16x4xf32, #tpu.memory_space<vmem>>, %arg4: memref<1x4xf32, #tpu.memory_space<vmem>>, %arg5: memref<1x4xf32, #tpu.memory_space<vmem>>, %arg6: memref<36x4xf32, #tpu.memory_space<vmem>>, %arg7: memref<1x4xf32, #tpu.memory_space<vmem>>, %arg8: memref<1x4xf32, #tpu.memory_space<vmem>>, %arg9: memref<4x16xf32, #tpu.memory_space<vmem>>, %arg10: memref<1x16xf32, #tpu.memory_space<vmem>>, %arg11: memref<1x16xf32, #tpu.memory_space<vmem>>, %arg12: memref<512x16xf32, #tpu.memory_space<vmem>>, %arg13: memref<2x18x18x4xf32, #tpu.memory_space<vmem>>) attributes {dimension_semantics = [], scalar_prefetch = 0 : i64, scratch_operands = 1 : i64, tpu.core_type = #tpu.core_type<tc>} {
    %c0 = arith.constant 0 : index
    %c0_0 = arith.constant 0 : index
    %0 = vector.load %arg0[%c0, %c0_0] : memref<512x16xf32, #tpu.memory_space<vmem>>, vector<512x16xf32>
    %c0_1 = arith.constant 0 : index
    %c0_2 = arith.constant 0 : index
    %1 = vector.load %arg3[%c0_1, %c0_2] : memref<16x4xf32, #tpu.memory_space<vmem>>, vector<16x4xf32>
    %cst = arith.constant dense<0.000000e+00> : vector<512x4xf32>
    %2 = tpu.matmul %0, %1, %cst {dimension_numbers = #tpu.dot_dimension_numbers<[1], [0], [0], [1], [0, 0, 1, 1], [], []>} : vector<512x16xf32>, vector<16x4xf32>, vector<512x4xf32> -> vector<512x4xf32>
    %c0_3 = arith.constant 0 : index
    %c0_4 = arith.constant 0 : index
    %3 = vector.load %arg4[%c0_3, %c0_4] : memref<1x4xf32, #tpu.memory_space<vmem>>, vector<1x4xf32>
    %c0_5 = arith.constant 0 : index
    %c0_6 = arith.constant 0 : index
    %4 = vector.load %arg5[%c0_5, %c0_6] : memref<1x4xf32, #tpu.memory_space<vmem>>, vector<1x4xf32>
    %cst_7 = arith.constant dense<0.000000e+00> : vector<4xf32>
    %5 = vector.multi_reduction <add>, %2, %cst_7 [0] : vector<512x4xf32> to vector<4xf32>
    %6 = vector.shape_cast %5 : vector<4xf32> to vector<1x4xf32>
    %cst_8 = arith.constant 0.001953125 : f32
    %7 = vector.broadcast %cst_8 : f32 to vector<1x4xf32>
    %8 = arith.mulf %6, %7 : vector<1x4xf32>
    %9 = arith.mulf %2, %2 : vector<512x4xf32>
    %cst_9 = arith.constant dense<0.000000e+00> : vector<4xf32>
    %10 = vector.multi_reduction <add>, %9, %cst_9 [0] : vector<512x4xf32> to vector<4xf32>
    %11 = vector.shape_cast %10 : vector<4xf32> to vector<1x4xf32>
    %cst_10 = arith.constant 0.001953125 : f32
    %12 = vector.broadcast %cst_10 : f32 to vector<1x4xf32>
    %13 = arith.mulf %11, %12 : vector<1x4xf32>
    %14 = arith.mulf %8, %8 : vector<1x4xf32>
    %15 = arith.subf %13, %14 : vector<1x4xf32>
    %cst_11 = arith.constant 9.99999974E-6 : f32
    %16 = vector.broadcast %cst_11 : f32 to vector<1x4xf32>
    %17 = arith.addf %15, %16 : vector<1x4xf32>
    %18 = math.rsqrt %17 : vector<1x4xf32>
    %19 = arith.mulf %3, %18 : vector<1x4xf32>
    %20 = arith.mulf %8, %19 : vector<1x4xf32>
    %21 = arith.subf %4, %20 : vector<1x4xf32>
    %22 = vector.broadcast %19 : vector<1x4xf32> to vector<512x4xf32>
    %23 = arith.mulf %2, %22 : vector<512x4xf32>
    %24 = vector.broadcast %21 : vector<1x4xf32> to vector<512x4xf32>
    %25 = arith.addf %23, %24 : vector<512x4xf32>
    %cst_12 = arith.constant 0.000000e+00 : f32
    %26 = vector.broadcast %cst_12 : f32 to vector<512x4xf32>
    %27 = arith.maximumf %25, %26 : vector<512x4xf32>
    %cst_13 = arith.constant 0.000000e+00 : f32
    %28 = vector.broadcast %cst_13 : f32 to vector<2x18x18x4xf32>
    %c0_14 = arith.constant 0 : index
    %c0_15 = arith.constant 0 : index
    %c0_16 = arith.constant 0 : index
    %c0_17 = arith.constant 0 : index
    %29 = vector.load %arg13[%c0_14, %c0_15, %c0_16, %c0_17] : memref<2x18x18x4xf32, #tpu.memory_space<vmem>>, vector<2x18x18x4xf32>
    tpu.vector_store %arg13[%c0_14, %c0_15, %c0_16, %c0_17], %28 {strides = array<i32>} : memref<2x18x18x4xf32, #tpu.memory_space<vmem>>, vector<2x18x18x4xf32>,
    %30 = vector.shape_cast %27 : vector<512x4xf32> to vector<2x16x16x4xf32>
    %c0_18 = arith.constant 0 : index
    %c1 = arith.constant 1 : index
    %c1_19 = arith.constant 1 : index
    %c0_20 = arith.constant 0 : index
    %31 = vector.load %arg13[%c0_18, %c1, %c1_19, %c0_20] : memref<2x18x18x4xf32, #tpu.memory_space<vmem>>, vector<2x16x16x4xf32>
    tpu.vector_store %arg13[%c0_18, %c1, %c1_19, %c0_20], %30 {strides = array<i32>} : memref<2x18x18x4xf32, #tpu.memory_space<vmem>>, vector<2x16x16x4xf32>,
    %c0_21 = arith.constant 0 : index
    %c0_22 = arith.constant 0 : index
    %c0_23 = arith.constant 0 : index
    %c0_24 = arith.constant 0 : index
    %32 = vector.load %arg13[%c0_21, %c0_22, %c0_23, %c0_24] : memref<2x18x18x4xf32, #tpu.memory_space<vmem>>, vector<2x18x18x4xf32>
    %33 = vector.extract_strided_slice %32 {offsets = [0, 0, 0, 0], sizes = [2, 16, 16, 4], strides = [1, 1, 1, 1]} : vector<2x18x18x4xf32> to vector<2x16x16x4xf32>
    %34 = vector.extract_strided_slice %32 {offsets = [0, 0, 1, 0], sizes = [2, 16, 16, 4], strides = [1, 1, 1, 1]} : vector<2x18x18x4xf32> to vector<2x16x16x4xf32>
    %35 = vector.extract_strided_slice %32 {offsets = [0, 0, 2, 0], sizes = [2, 16, 16, 4], strides = [1, 1, 1, 1]} : vector<2x18x18x4xf32> to vector<2x16x16x4xf32>
    %36 = vector.extract_strided_slice %32 {offsets = [0, 1, 0, 0], sizes = [2, 16, 16, 4], strides = [1, 1, 1, 1]} : vector<2x18x18x4xf32> to vector<2x16x16x4xf32>
    %37 = vector.extract_strided_slice %32 {offsets = [0, 1, 1, 0], sizes = [2, 16, 16, 4], strides = [1, 1, 1, 1]} : vector<2x18x18x4xf32> to vector<2x16x16x4xf32>
    %38 = vector.extract_strided_slice %32 {offsets = [0, 1, 2, 0], sizes = [2, 16, 16, 4], strides = [1, 1, 1, 1]} : vector<2x18x18x4xf32> to vector<2x16x16x4xf32>
    %39 = vector.extract_strided_slice %32 {offsets = [0, 2, 0, 0], sizes = [2, 16, 16, 4], strides = [1, 1, 1, 1]} : vector<2x18x18x4xf32> to vector<2x16x16x4xf32>
    %40 = vector.extract_strided_slice %32 {offsets = [0, 2, 1, 0], sizes = [2, 16, 16, 4], strides = [1, 1, 1, 1]} : vector<2x18x18x4xf32> to vector<2x16x16x4xf32>
    %41 = vector.extract_strided_slice %32 {offsets = [0, 2, 2, 0], sizes = [2, 16, 16, 4], strides = [1, 1, 1, 1]} : vector<2x18x18x4xf32> to vector<2x16x16x4xf32>
    %42 = tpu.concatenate %33, %34, %35, %36, %37, %38, %39, %40, %41 in 3 : vector<2x16x16x4xf32>, vector<2x16x16x4xf32>, vector<2x16x16x4xf32>, vector<2x16x16x4xf32>, vector<2x16x16x4xf32>, vector<2x16x16x4xf32>, vector<2x16x16x4xf32>, vector<2x16x16x4xf32>, vector<2x16x16x4xf32> -> vector<2x16x16x36xf32>
    %43 = vector.shape_cast %42 : vector<2x16x16x36xf32> to vector<512x36xf32>
    %c0_25 = arith.constant 0 : index
    %c0_26 = arith.constant 0 : index
    %44 = vector.load %arg6[%c0_25, %c0_26] : memref<36x4xf32, #tpu.memory_space<vmem>>, vector<36x4xf32>
    %cst_27 = arith.constant dense<0.000000e+00> : vector<512x4xf32>
    %45 = tpu.matmul %43, %44, %cst_27 {dimension_numbers = #tpu.dot_dimension_numbers<[1], [0], [0], [1], [0, 0, 1, 1], [], []>} : vector<512x36xf32>, vector<36x4xf32>, vector<512x4xf32> -> vector<512x4xf32>
    %c0_28 = arith.constant 0 : index
    %c0_29 = arith.constant 0 : index
    %46 = vector.load %arg7[%c0_28, %c0_29] : memref<1x4xf32, #tpu.memory_space<vmem>>, vector<1x4xf32>
    %c0_30 = arith.constant 0 : index
    %c0_31 = arith.constant 0 : index
    %47 = vector.load %arg8[%c0_30, %c0_31] : memref<1x4xf32, #tpu.memory_space<vmem>>, vector<1x4xf32>
    %cst_32 = arith.constant dense<0.000000e+00> : vector<4xf32>
    %48 = vector.multi_reduction <add>, %45, %cst_32 [0] : vector<512x4xf32> to vector<4xf32>
    %49 = vector.shape_cast %48 : vector<4xf32> to vector<1x4xf32>
    %cst_33 = arith.constant 0.001953125 : f32
    %50 = vector.broadcast %cst_33 : f32 to vector<1x4xf32>
    %51 = arith.mulf %49, %50 : vector<1x4xf32>
    %52 = arith.mulf %45, %45 : vector<512x4xf32>
    %cst_34 = arith.constant dense<0.000000e+00> : vector<4xf32>
    %53 = vector.multi_reduction <add>, %52, %cst_34 [0] : vector<512x4xf32> to vector<4xf32>
    %54 = vector.shape_cast %53 : vector<4xf32> to vector<1x4xf32>
    %cst_35 = arith.constant 0.001953125 : f32
    %55 = vector.broadcast %cst_35 : f32 to vector<1x4xf32>
    %56 = arith.mulf %54, %55 : vector<1x4xf32>
    %57 = arith.mulf %51, %51 : vector<1x4xf32>
    %58 = arith.subf %56, %57 : vector<1x4xf32>
    %cst_36 = arith.constant 9.99999974E-6 : f32
    %59 = vector.broadcast %cst_36 : f32 to vector<1x4xf32>
    %60 = arith.addf %58, %59 : vector<1x4xf32>
    %61 = math.rsqrt %60 : vector<1x4xf32>
    %62 = arith.mulf %46, %61 : vector<1x4xf32>
    %63 = arith.mulf %51, %62 : vector<1x4xf32>
    %64 = arith.subf %47, %63 : vector<1x4xf32>
    %65 = vector.broadcast %62 : vector<1x4xf32> to vector<512x4xf32>
    %66 = arith.mulf %45, %65 : vector<512x4xf32>
    %67 = vector.broadcast %64 : vector<1x4xf32> to vector<512x4xf32>
    %68 = arith.addf %66, %67 : vector<512x4xf32>
    %cst_37 = arith.constant 0.000000e+00 : f32
    %69 = vector.broadcast %cst_37 : f32 to vector<512x4xf32>
    %70 = arith.maximumf %68, %69 : vector<512x4xf32>
    %c0_38 = arith.constant 0 : index
    %c0_39 = arith.constant 0 : index
    %71 = vector.load %arg9[%c0_38, %c0_39] : memref<4x16xf32, #tpu.memory_space<vmem>>, vector<4x16xf32>
    %cst_40 = arith.constant dense<0.000000e+00> : vector<512x16xf32>
    %72 = tpu.matmul %27, %71, %cst_40 {dimension_numbers = #tpu.dot_dimension_numbers<[1], [0], [0], [1], [0, 0, 1, 1], [], []>} : vector<512x4xf32>, vector<4x16xf32>, vector<512x16xf32> -> vector<512x16xf32>
    %c0_41 = arith.constant 0 : index
    %c0_42 = arith.constant 0 : index
    %73 = vector.load %arg10[%c0_41, %c0_42] : memref<1x16xf32, #tpu.memory_space<vmem>>, vector<1x16xf32>
    %c0_43 = arith.constant 0 : index
    %c0_44 = arith.constant 0 : index
    %74 = vector.load %arg11[%c0_43, %c0_44] : memref<1x16xf32, #tpu.memory_space<vmem>>, vector<1x16xf32>
    %cst_45 = arith.constant dense<0.000000e+00> : vector<16xf32>
    %75 = vector.multi_reduction <add>, %72, %cst_45 [0] : vector<512x16xf32> to vector<16xf32>
    %76 = vector.shape_cast %75 : vector<16xf32> to vector<1x16xf32>
    %cst_46 = arith.constant 0.001953125 : f32
    %77 = vector.broadcast %cst_46 : f32 to vector<1x16xf32>
    %78 = arith.mulf %76, %77 : vector<1x16xf32>
    %79 = arith.mulf %72, %72 : vector<512x16xf32>
    %cst_47 = arith.constant dense<0.000000e+00> : vector<16xf32>
    %80 = vector.multi_reduction <add>, %79, %cst_47 [0] : vector<512x16xf32> to vector<16xf32>
    %81 = vector.shape_cast %80 : vector<16xf32> to vector<1x16xf32>
    %cst_48 = arith.constant 0.001953125 : f32
    %82 = vector.broadcast %cst_48 : f32 to vector<1x16xf32>
    %83 = arith.mulf %81, %82 : vector<1x16xf32>
    %84 = arith.mulf %78, %78 : vector<1x16xf32>
    %85 = arith.subf %83, %84 : vector<1x16xf32>
    %cst_49 = arith.constant 9.99999974E-6 : f32
    %86 = vector.broadcast %cst_49 : f32 to vector<1x16xf32>
    %87 = arith.addf %85, %86 : vector<1x16xf32>
    %88 = math.rsqrt %87 : vector<1x16xf32>
    %89 = arith.mulf %73, %88 : vector<1x16xf32>
    %90 = arith.mulf %78, %89 : vector<1x16xf32>
    %91 = arith.subf %74, %90 : vector<1x16xf32>
    %92 = vector.broadcast %89 : vector<1x16xf32> to vector<512x16xf32>
    %93 = arith.mulf %72, %92 : vector<512x16xf32>
    %94 = vector.broadcast %91 : vector<1x16xf32> to vector<512x16xf32>
    %95 = arith.addf %93, %94 : vector<512x16xf32>
    %cst_50 = arith.constant dense<0.000000e+00> : vector<512x16xf32>
    %96 = tpu.matmul %70, %71, %cst_50 {dimension_numbers = #tpu.dot_dimension_numbers<[1], [0], [0], [1], [0, 0, 1, 1], [], []>} : vector<512x4xf32>, vector<4x16xf32>, vector<512x16xf32> -> vector<512x16xf32>
    %c0_51 = arith.constant 0 : index
    %c0_52 = arith.constant 0 : index
    %97 = vector.load %arg10[%c0_51, %c0_52] : memref<1x16xf32, #tpu.memory_space<vmem>>, vector<1x16xf32>
    %c0_53 = arith.constant 0 : index
    %c0_54 = arith.constant 0 : index
    %98 = vector.load %arg11[%c0_53, %c0_54] : memref<1x16xf32, #tpu.memory_space<vmem>>, vector<1x16xf32>
    %cst_55 = arith.constant dense<0.000000e+00> : vector<16xf32>
    %99 = vector.multi_reduction <add>, %96, %cst_55 [0] : vector<512x16xf32> to vector<16xf32>
    %100 = vector.shape_cast %99 : vector<16xf32> to vector<1x16xf32>
    %cst_56 = arith.constant 0.001953125 : f32
    %101 = vector.broadcast %cst_56 : f32 to vector<1x16xf32>
    %102 = arith.mulf %100, %101 : vector<1x16xf32>
    %103 = arith.mulf %96, %96 : vector<512x16xf32>
    %cst_57 = arith.constant dense<0.000000e+00> : vector<16xf32>
    %104 = vector.multi_reduction <add>, %103, %cst_57 [0] : vector<512x16xf32> to vector<16xf32>
    %105 = vector.shape_cast %104 : vector<16xf32> to vector<1x16xf32>
    %cst_58 = arith.constant 0.001953125 : f32
    %106 = vector.broadcast %cst_58 : f32 to vector<1x16xf32>
    %107 = arith.mulf %105, %106 : vector<1x16xf32>
    %108 = arith.mulf %102, %102 : vector<1x16xf32>
    %109 = arith.subf %107, %108 : vector<1x16xf32>
    %cst_59 = arith.constant 9.99999974E-6 : f32
    %110 = vector.broadcast %cst_59 : f32 to vector<1x16xf32>
    %111 = arith.addf %109, %110 : vector<1x16xf32>
    %112 = math.rsqrt %111 : vector<1x16xf32>
    %113 = arith.mulf %97, %112 : vector<1x16xf32>
    %114 = arith.mulf %102, %113 : vector<1x16xf32>
    %115 = arith.subf %98, %114 : vector<1x16xf32>
    %116 = vector.broadcast %113 : vector<1x16xf32> to vector<512x16xf32>
    %117 = arith.mulf %96, %116 : vector<512x16xf32>
    %118 = vector.broadcast %115 : vector<1x16xf32> to vector<512x16xf32>
    %119 = arith.addf %117, %118 : vector<512x16xf32>
    %c0_60 = arith.constant 0 : index
    %c0_61 = arith.constant 0 : index
    %120 = vector.load %arg1[%c0_60, %c0_61] : memref<512x1xf32, #tpu.memory_space<vmem>>, vector<512x1xf32>
    %121 = vector.broadcast %120 : vector<512x1xf32> to vector<512x16xf32>
    %122 = arith.mulf %121, %95 : vector<512x16xf32>
    %123 = arith.addf %0, %122 : vector<512x16xf32>
    %c0_62 = arith.constant 0 : index
    %c0_63 = arith.constant 0 : index
    %124 = vector.load %arg2[%c0_62, %c0_63] : memref<512x1xf32, #tpu.memory_space<vmem>>, vector<512x1xf32>
    %125 = vector.broadcast %124 : vector<512x1xf32> to vector<512x16xf32>
    %126 = arith.mulf %125, %119 : vector<512x16xf32>
    %127 = arith.addf %123, %126 : vector<512x16xf32>
    %cst_64 = arith.constant 0.000000e+00 : f32
    %128 = vector.broadcast %cst_64 : f32 to vector<512x16xf32>
    %129 = arith.maximumf %127, %128 : vector<512x16xf32>
    %c0_65 = arith.constant 0 : index
    %c0_66 = arith.constant 0 : index
    %130 = vector.load %arg12[%c0_65, %c0_66] : memref<512x16xf32, #tpu.memory_space<vmem>>, vector<512x16xf32>
    tpu.vector_store %arg12[%c0_65, %c0_66], %129 {strides = array<i32>} : memref<512x16xf32, #tpu.memory_space<vmem>>, vector<512x16xf32>,
    return
  }
}

</mosaic_0001>

<llo_original>
// kernel: tpu_custom_call.1
$region0: #{tpu_custom_call.1}
  #allocation0 [shape = 'u32[]', space=smem, size = 0x4, offset = 0x4, fixed_abs, tag = 'smem constant byte address 0x4 - core index']
  #allocation1 [shape = 'u32[144,128]{1,0:T(1,128)}', space=vmem, size = 0x12000, scoped, tag = 'internal scratch']
  #allocation2 [shape = 'f32[2,18,18,4]{3,2,1,0:T(8,128)}', space=vmem, size = 0x6c000, scoped, tag = 'scratch operand']
  %s0 = inlined_call_operand.vmem [shape: f32[512,16], index: 0, kind: input, shape index: {}]
  %s1 = inlined_call_operand.vmem [shape: f32[512,1], index: 1, kind: input, shape index: {}]
  %s2 = inlined_call_operand.vmem [shape: f32[512,1], index: 2, kind: input, shape index: {}]
  %s3 = inlined_call_operand.vmem [shape: f32[16,4], index: 3, kind: input, shape index: {}]
  %s4 = inlined_call_operand.vmem [shape: f32[1,4], index: 4, kind: input, shape index: {}]
  %s5 = inlined_call_operand.vmem [shape: f32[1,4], index: 5, kind: input, shape index: {}]
  %s6 = inlined_call_operand.vmem [shape: f32[36,4], index: 6, kind: input, shape index: {}]
  %s7 = inlined_call_operand.vmem [shape: f32[1,4], index: 7, kind: input, shape index: {}]
  %s8 = inlined_call_operand.vmem [shape: f32[1,4], index: 8, kind: input, shape index: {}]
  %s9 = inlined_call_operand.vmem [shape: f32[4,16], index: 9, kind: input, shape index: {}]
  %s10 = inlined_call_operand.vmem [shape: f32[1,16], index: 10, kind: input, shape index: {}]
  %s11 = inlined_call_operand.vmem [shape: f32[1,16], index: 11, kind: input, shape index: {}]
  %s12 = inlined_call_operand.vmem [shape: f32[512,16], index: 12, kind: output, shape index: {}]
  %s13 = sld [smem:[#allocation0]]
  $region58: #{tpu_custom_call.1} parent=0
    _
  %s15 = ssub.s32 1, %s13
  %s16 = scalar_select 0, %s15, %s13
  // Predicated region
  $region2: #{tpu_custom_call.1} parent=0 // pred_check
    _
  $region3: #{tpu_custom_call.1} parent=0 // pred_check_branch
    %18 = sbr.rel (0) target = $region5
  $region4: #{tpu_custom_call.1} parent=0 // pred_region
    _
  $region5: #{tpu_custom_call.1} parent=0 // pred_fallthru
    _
  // Predicated region
  $region6: #{tpu_custom_call.1} parent=0 // pred_check
    _
  $region7: #{tpu_custom_call.1} parent=0 // pred_check_branch
    %20 = sbr.rel (0) target = $region9
  $region8: #{tpu_custom_call.1} parent=0 // pred_region
    _
  $region9: #{tpu_custom_call.1} parent=0 // pred_fallthru
    _
  // Predicated region
  $region10: #{tpu_custom_call.1} parent=0 // pred_check
    _
  $region11: #{tpu_custom_call.1} parent=0 // pred_check_branch
    %22 = sbr.rel (0) target = $region13
  $region12: #{tpu_custom_call.1} parent=0 // pred_region
    _
  $region13: #{tpu_custom_call.1} parent=0 // pred_fallthru
    _
  // Predicated region
  $region14: #{tpu_custom_call.1} parent=0 // pred_check
    _
  $region15: #{tpu_custom_call.1} parent=0 // pred_check_branch
    %24 = sbr.rel (0) target = $region17
  $region16: #{tpu_custom_call.1} parent=0 // pred_region
    _
  $region17: #{tpu_custom_call.1} parent=0 // pred_fallthru
    _
  // Predicated region
  $region18: #{tpu_custom_call.1} parent=0 // pred_check
    _
  $region19: #{tpu_custom_call.1} parent=0 // pred_check_branch
    %26 = sbr.rel (0) target = $region21
  $region20: #{tpu_custom_call.1} parent=0 // pred_region
    _
  $region21: #{tpu_custom_call.1} parent=0 // pred_fallthru
    _
  // Predicated region
  $region22: #{tpu_custom_call.1} parent=0 // pred_check
    _
  $region23: #{tpu_custom_call.1} parent=0 // pred_check_branch
    %28 = sbr.rel (0) target = $region25
  $region24: #{tpu_custom_call.1} parent=0 // pred_region
    _
  $region25: #{tpu_custom_call.1} parent=0 // pred_fallthru
    _
  // Predicated region
  $region26: #{tpu_custom_call.1} parent=0 // pred_check
    _
  $region27: #{tpu_custom_call.1} parent=0 // pred_check_branch
    %30 = sbr.rel (0) target = $region29
  $region28: #{tpu_custom_call.1} parent=0 // pred_region
    _
  $region29: #{tpu_custom_call.1} parent=0 // pred_fallthru
    _
  // Predicated region
  $region30: #{tpu_custom_call.1} parent=0 // pred_check
    _
  $region31: #{tpu_custom_call.1} parent=0 // pred_check_branch
    %32 = sbr.rel (0) target = $region33
  $region32: #{tpu_custom_call.1} parent=0 // pred_region
    _
  $region33: #{tpu_custom_call.1} parent=0 // pred_fallthru
    _
  // Predicated region
  $region34: #{tpu_custom_call.1} parent=0 // pred_check
    _
  $region35: #{tpu_custom_call.1} parent=0 // pred_check_branch
    %34 = sbr.rel (0) target = $region37
  $region36: #{tpu_custom_call.1} parent=0 // pred_region
    _
  $region37: #{tpu_custom_call.1} parent=0 // pred_fallthru
    _
  // Predicated region
  $region38: #{tpu_custom_call.1} parent=0 // pred_check
    _
  $region39: #{tpu_custom_call.1} parent=0 // pred_check_branch
    %36 = sbr.rel (0) target = $region41
  $region40: #{tpu_custom_call.1} parent=0 // pred_region
    _
  $region41: #{tpu_custom_call.1} parent=0 // pred_fallthru
    _
  // Predicated region
  $region42: #{tpu_custom_call.1} parent=0 // pred_check
    _
  $region43: #{tpu_custom_call.1} parent=0 // pred_check_branch
    %38 = sbr.rel (0) target = $region45
  $region44: #{tpu_custom_call.1} parent=0 // pred_region
    _
  $region45: #{tpu_custom_call.1} parent=0 // pred_fallthru
    _
  // Predicated region
  $region46: #{tpu_custom_call.1} parent=0 // pred_check
    _
  $region47: #{tpu_custom_call.1} parent=0 // pred_check_branch
    %40 = sbr.rel (0) target = $region49
  $region48: #{tpu_custom_call.1} parent=0 // pred_region
    _
  $region49: #{tpu_custom_call.1} parent=0 // pred_fallthru
    _
  %v41 = vld [vmem:[%s0] sm:$0xff]
  %v42 = vld [vmem:[%s0 + $0x8] sm:$0xff]
  %v43 = vld [vmem:[%s0 + $0x10] sm:$0xff]
  %v44 = vld [vmem:[%s0 + $0x18] sm:$0xff]
  %v45 = vld [vmem:[%s0 + $0x20] sm:$0xff]
  %v46 = vld [vmem:[%s0 + $0x28] sm:$0xff]
  %v47 = vld [vmem:[%s0 + $0x30] sm:$0xff]
  %v48 = vld [vmem:[%s0 + $0x38] sm:$0xff]
  %v49 = vld [vmem:[%s0 + $0x40] sm:$0xff]
  %v50 = vld [vmem:[%s0 + $0x48] sm:$0xff]
  %v51 = vld [vmem:[%s0 + $0x50] sm:$0xff]
  %v52 = vld [vmem:[%s0 + $0x58] sm:$0xff]
  %v53 = vld [vmem:[%s0 + $0x60] sm:$0xff]
  %v54 = vld [vmem:[%s0 + $0x68] sm:$0xff]
  %v55 = vld [vmem:[%s0 + $0x70] sm:$0xff]
  %v56 = vld [vmem:[%s0 + $0x78] sm:$0xff]
  %v57 = vld [vmem:[%s0 + $0x80] sm:$0xff]
  %v58 = vld [vmem:[%s0 + $0x88] sm:$0xff]
  %v59 = vld [vmem:[%s0 + $0x90] sm:$0xff]
  %v60 = vld [vmem:[%s0 + $0x98] sm:$0xff]
  %v61 = vld [vmem:[%s0 + $0xa0] sm:$0xff]
  %v62 = vld [vmem:[%s0 + $0xa8] sm:$0xff]
  %v63 = vld [vmem:[%s0 + $0xb0] sm:$0xff]
  %v64 = vld [vmem:[%s0 + $0xb8] sm:$0xff]
  %v65 = vld [vmem:[%s0 + $0xc0] sm:$0xff]
  %v66 = vld [vmem:[%s0 + $0xc8] sm:$0xff]
  %v67 = vld [vmem:[%s0 + $0xd0] sm:$0xff]
  %v68 = vld [vmem:[%s0 + $0xd8] sm:$0xff]
  %v69 = vld [vmem:[%s0 + $0xe0] sm:$0xff]
  %v70 = vld [vmem:[%s0 + $0xe8] sm:$0xff]
  %v71 = vld [vmem:[%s0 + $0xf0] sm:$0xff]
  %v72 = vld [vmem:[%s0 + $0xf8] sm:$0xff]
  %v73 = vld [vmem:[%s0 + $0x100] sm:$0xff]
  %v74 = vld [vmem:[%s0 + $0x108] sm:$0xff]
  %v75 = vld [vmem:[%s0 + $0x110] sm:$0xff]
  %v76 = vld [vmem:[%s0 + $0x118] sm:$0xff]
  %v77 = vld [vmem:[%s0 + $0x120] sm:$0xff]
  %v78 = vld [vmem:[%s0 + $0x128] sm:$0xff]
  %v79 = vld [vmem:[%s0 + $0x130] sm:$0xff]
  %v80 = vld [vmem:[%s0 + $0x138] sm:$0xff]
  %v81 = vld [vmem:[%s0 + $0x140] sm:$0xff]
  %v82 = vld [vmem:[%s0 + $0x148] sm:$0xff]
  %v83 = vld [vmem:[%s0 + $0x150] sm:$0xff]
  %v84 = vld [vmem:[%s0 + $0x158] sm:$0xff]
  %v85 = vld [vmem:[%s0 + $0x160] sm:$0xff]
  %v86 = vld [vmem:[%s0 + $0x168] sm:$0xff]
  %v87 = vld [vmem:[%s0 + $0x170] sm:$0xff]
  %v88 = vld [vmem:[%s0 + $0x178] sm:$0xff]
  %v89 = vld [vmem:[%s0 + $0x180] sm:$0xff]
  %v90 = vld [vmem:[%s0 + $0x188] sm:$0xff]
  %v91 = vld [vmem:[%s0 + $0x190] sm:$0xff]
  %v92 = vld [vmem:[%s0 + $0x198] sm:$0xff]
  %v93 = vld [vmem:[%s0 + $0x1a0] sm:$0xff]
  %v94 = vld [vmem:[%s0 + $0x1a8] sm:$0xff]
  %v95 = vld [vmem:[%s0 + $0x1b0] sm:$0xff]
  %v96 = vld [vmem:[%s0 + $0x1b8] sm:$0xff]
  %v97 = vld [vmem:[%s0 + $0x1c0] sm:$0xff]
  %v98 = vld [vmem:[%s0 + $0x1c8] sm:$0xff]
  %v99 = vld [vmem:[%s0 + $0x1d0] sm:$0xff]
  %v100 = vld [vmem:[%s0 + $0x1d8] sm:$0xff]
  %v101 = vld [vmem:[%s0 + $0x1e0] sm:$0xff]
  %v102 = vld [vmem:[%s0 + $0x1e8] sm:$0xff]
  %v103 = vld [vmem:[%s0 + $0x1f0] sm:$0xff]
  %v104 = vld [vmem:[%s0 + $0x1f8] sm:$0xff]
  %v105 = vld [vmem:[%s3] sm:$0xff]
  %v106 = vld [vmem:[%s3 + $0x8] sm:$0xff]
  %vm107 = vcmask 130048
  %v109 = vsel %vm107, %v41, 0
  %v112 = vsel %vm107, %v42, 0
  %v115 = vsel %vm107, %v43, 0
  %v118 = vsel %vm107, %v44, 0
  %v121 = vsel %vm107, %v45, 0
  %v124 = vsel %vm107, %v46, 0
  %v127 = vsel %vm107, %v47, 0
  %v130 = vsel %vm107, %v48, 0
  %v133 = vsel %vm107, %v49, 0
  %v136 = vsel %vm107, %v50, 0
  %v139 = vsel %vm107, %v51, 0
  %v142 = vsel %vm107, %v52, 0
  %v145 = vsel %vm107, %v53, 0
  %v148 = vsel %vm107, %v54, 0
  %v151 = vsel %vm107, %v55, 0
  %v154 = vsel %vm107, %v56, 0
  %v157 = vsel %vm107, %v57, 0
  %v160 = vsel %vm107, %v58, 0
  %v163 = vsel %vm107, %v59, 0
  %v166 = vsel %vm107, %v60, 0
  %v169 = vsel %vm107, %v61, 0
  %v172 = vsel %vm107, %v62, 0
  %v175 = vsel %vm107, %v63, 0
  %v178 = vsel %vm107, %v64, 0
  %v181 = vsel %vm107, %v65, 0
  %v184 = vsel %vm107, %v66, 0
  %v187 = vsel %vm107, %v67, 0
  %v190 = vsel %vm107, %v68, 0
  %v193 = vsel %vm107, %v69, 0
  %v196 = vsel %vm107, %v70, 0
  %v199 = vsel %vm107, %v71, 0
  %v202 = vsel %vm107, %v72, 0
  %v205 = vsel %vm107, %v73, 0
  %v208 = vsel %vm107, %v74, 0
  %v211 = vsel %vm107, %v75, 0
  %v214 = vsel %vm107, %v76, 0
  %v217 = vsel %vm107, %v77, 0
  %v220 = vsel %vm107, %v78, 0
  %v223 = vsel %vm107, %v79, 0
  %v226 = vsel %vm107, %v80, 0
  %v229 = vsel %vm107, %v81, 0
  %v232 = vsel %vm107, %v82, 0
  %v235 = vsel %vm107, %v83, 0
  %v238 = vsel %vm107, %v84, 0
  %v241 = vsel %vm107, %v85, 0
  %v244 = vsel %vm107, %v86, 0
  %v247 = vsel %vm107, %v87, 0
  %v250 = vsel %vm107, %v88, 0
  %v253 = vsel %vm107, %v89, 0
  %v256 = vsel %vm107, %v90, 0
  %v259 = vsel %vm107, %v91, 0
  %v262 = vsel %vm107, %v92, 0
  %v265 = vsel %vm107, %v93, 0
  %v268 = vsel %vm107, %v94, 0
  %v271 = vsel %vm107, %v95, 0
  %v274 = vsel %vm107, %v96, 0
  %v277 = vsel %vm107, %v97, 0
  %v280 = vsel %vm107, %v98, 0
  %v283 = vsel %vm107, %v99, 0
  %v286 = vsel %vm107, %v100, 0
  %v289 = vsel %vm107, %v101, 0
  %v292 = vsel %vm107, %v102, 0
  %v295 = vsel %vm107, %v103, 0
  %v298 = vsel %vm107, %v104, 0
  %300 = vmatprep.subr.mxu0 0.0
  %301 = vmatpush1.msra.mxu0 %v105
  %302 = vmatprep.subr.mxu0 0.0
  %303 = vmatpush1.msra.mxu0 %v106
  %304 = vmatprep.subr.mxu0 0.0
  %305 = vmatpush1.msra.mxu0 0.0
  %306 = vmatprep.subr.mxu0 0.0
  %307 = vmatpush1.msra.mxu0 0.0
  %308 = vmatprep.subr.mxu0 0.0
  %309 = vmatpush1.msra.mxu0 0.0
  %310 = vmatprep.subr.mxu0 0.0
  %311 = vmatpush1.msra.mxu0 0.0
  %312 = vmatprep.subr.mxu0 0.0
  %313 = vmatpush1.msra.mxu0 0.0
  %314 = vmatprep.subr.mxu0 0.0
  %315 = vmatpush1.msra.mxu0 0.0
  %316 = vmatprep.subr.mxu0 0.0
  %317 = vmatpush1.msra.mxu0 0.0
  %318 = vmatprep.subr.mxu0 0.0
  %319 = vmatpush1.msra.mxu0 0.0
  %320 = vmatprep.subr.mxu0 0.0
  %321 = vmatpush1.msra.mxu0 0.0
  %322 = vmatprep.subr.mxu0 0.0
  %323 = vmatpush1.msra.mxu0 0.0
  %324 = vmatprep.subr.mxu0 0.0
  %325 = vmatpush1.msra.mxu0 0.0
  %326 = vmatprep.subr.mxu0 0.0
  %327 = vmatpush1.msra.mxu0 0.0
  %328 = vmatprep.subr.mxu0 0.0
  %329 = vmatpush1.msra.mxu0 0.0
  %330 = vmatprep.subr.mxu0 0.0
  %331 = vmatpush1.msra.mxu0 0.0
  %332 = vmatprep.subr.mxu0 0.0
  %333 = vmatpush1.msra.mxu0 0.0
  %334 = vmatprep.subr.mxu0 0.0
  %335 = vmatpush1.msra.mxu0 0.0
  %336 = vmatprep.subr.mxu0 0.0
  %337 = vmatpush1.msra.mxu0 0.0
  %338 = vmatprep.subr.mxu0 0.0
  %339 = vmatpush1.msra.mxu0 0.0
  %340 = vmatprep.subr.mxu0 0.0
  %341 = vmatpush1.msra.mxu0 0.0
  %342 = vmatprep.subr.mxu0 0.0
  %343 = vmatpush1.msra.mxu0 0.0
  %344 = vmatprep.subr.mxu0 0.0
  %345 = vmatpush1.msra.mxu0 0.0
  %346 = vmatprep.subr.mxu0 0.0
  %347 = vmatpush1.msra.mxu0 0.0
  %348 = vmatprep.subr.mxu0 0.0
  %349 = vmatpush1.msra.mxu0 0.0
  %350 = vmatprep.subr.mxu0 0.0
  %351 = vmatpush1.msra.mxu0 0.0
  %352 = vmatprep.subr.mxu0 0.0
  %353 = vmatpush1.msra.mxu0 0.0
  %354 = vmatprep.subr.mxu0 0.0
  %355 = vmatpush1.msra.mxu0 0.0
  %356 = vmatprep.subr.mxu0 0.0
  %357 = vmatpush1.msra.mxu0 0.0
  %358 = vmatprep.subr.mxu0 0.0
  %359 = vmatpush1.msra.mxu0 0.0
  %360 = vmatprep.subr.mxu0 0.0
  %361 = vmatpush1.msra.mxu0 0.0
  %362 = vmatprep.subr.mxu0 0.0
  %363 = vmatpush1.msra.mxu0 0.0
  %364 = vmatprep.mubr.f32.mxu0 0.0
  %365 = vmatmul.mubr.f32.gmra.mrb[0].mxu0 %v109
  %v366 = vpop.f32.mrb[0].mxu0
  %v367 = vadd.f32 0.0, %v366
  %v368 = vpop.f32.mrb[0].mxu0
  %369 = vmatprep.mubr.f32.mxu0 0.0
  %370 = vmatmul.mubr.f32.gmra.mrb[0].mxu0 %v112
  %v371 = vpop.f32.mrb[0].mxu0
  %v372 = vadd.f32 0.0, %v371
  %v373 = vpop.f32.mrb[0].mxu0
  %374 = vmatprep.mubr.f32.mxu0 0.0
  %375 = vmatmul.mubr.f32.gmra.mrb[0].mxu0 %v115
  %v376 = vpop.f32.mrb[0].mxu0
  %v377 = vadd.f32 0.0, %v376
  %v378 = vpop.f32.mrb[0].mxu0
  %379 = vmatprep.mubr.f32.mxu0 0.0
  %380 = vmatmul.mubr.f32.gmra.mrb[0].mxu0 %v118
  %v381 = vpop.f32.mrb[0].mxu0
  %v382 = vadd.f32 0.0, %v381
  %v383 = vpop.f32.mrb[0].mxu0
  %384 = vmatprep.mubr.f32.mxu0 0.0
  %385 = vmatmul.mubr.f32.gmra.mrb[0].mxu0 %v121
  %v386 = vpop.f32.mrb[0].mxu0
  %v387 = vadd.f32 0.0, %v386
  %v388 = vpop.f32.mrb[0].mxu0
  %389 = vmatprep.mubr.f32.mxu0 0.0
  %390 = vmatmul.mubr.f32.gmra.mrb[0].mxu0 %v124
  %v391 = vpop.f32.mrb[0].mxu0
  %v392 = vadd.f32 0.0, %v391
  %v393 = vpop.f32.mrb[0].mxu0
  %394 = vmatprep.mubr.f32.mxu0 0.0
  %395 = vmatmul.mubr.f32.gmra.mrb[0].mxu0 %v127
  %v396 = vpop.f32.mrb[0].mxu0
  %v397 = vadd.f32 0.0, %v396
  %v398 = vpop.f32.mrb[0].mxu0
  %399 = vmatprep.mubr.f32.mxu0 0.0
  %400 = vmatmul.mubr.f32.gmra.mrb[0].mxu0 %v130
  %v401 = vpop.f32.mrb[0].mxu0
  %v402 = vadd.f32 0.0, %v401
  %v403 = vpop.f32.mrb[0].mxu0
  %404 = vmatprep.mubr.f32.mxu0 0.0
  %405 = vmatmul.mubr.f32.gmra.mrb[0].mxu0 %v133
  %v406 = vpop.f32.mrb[0].mxu0
  %v407 = vadd.f32 0.0, %v406
  %v408 = vpop.f32.mrb[0].mxu0
  %409 = vmatprep.mubr.f32.mxu0 0.0
  %410 = vmatmul.mubr.f32.gmra.mrb[0].mxu0 %v136
  %v411 = vpop.f32.mrb[0].mxu0
  %v412 = vadd.f32 0.0, %v411
  %v413 = vpop.f32.mrb[0].mxu0
  %414 = vmatprep.mubr.f32.mxu0 0.0
  %415 = vmatmul.mubr.f32.gmra.mrb[0].mxu0 %v139
  %v416 = vpop.f32.mrb[0].mxu0
  %v417 = vadd.f32 0.0, %v416
  %v418 = vpop.f32.mrb[0].mxu0
  %419 = vmatprep.mubr.f32.mxu0 0.0
  %420 = vmatmul.mubr.f32.gmra.mrb[0].mxu0 %v142
  %v421 = vpop.f32.mrb[0].mxu0
  %v422 = vadd.f32 0.0, %v421
  %v423 = vpop.f32.mrb[0].mxu0
  %424 = vmatprep.mubr.f32.mxu0 0.0
  %425 = vmatmul.mubr.f32.gmra.mrb[0].mxu0 %v145
  %v426 = vpop.f32.mrb[0].mxu0
  %v427 = vadd.f32 0.0, %v426
  %v428 = vpop.f32.mrb[0].mxu0
  %429 = vmatprep.mubr.f32.mxu0 0.0
  %430 = vmatmul.mubr.f32.gmra.mrb[0].mxu0 %v148
  %v431 = vpop.f32.mrb[0].mxu0
  %v432 = vadd.f32 0.0, %v431
  %v433 = vpop.f32.mrb[0].mxu0
  %434 = vmatprep.mubr.f32.mxu0 0.0
  %435 = vmatmul.mubr.f32.gmra.mrb[0].mxu0 %v151
  %v436 = vpop.f32.mrb[0].mxu0
  %v437 = vadd.f32 0.0, %v436
  %v438 = vpop.f32.mrb[0].mxu0
  %439 = vmatprep.mubr.f32.mxu0 0.0
  %440 = vmatmul.mubr.f32.gmra.mrb[0].mxu0 %v154
  %v441 = vpop.f32.mrb[0].mxu0
  %v442 = vadd.f32 0.0, %v441
  %v443 = vpop.f32.mrb[0].mxu0
  %444 = vmatprep.mubr.f32.mxu0 0.0
  %445 = vmatmul.mubr.f32.gmra.mrb[0].mxu0 %v157
  %v446 = vpop.f32.mrb[0].mxu0
  %v447 = vadd.f32 0.0, %v446
  %v448 = vpop.f32.mrb[0].mxu0
  %449 = vmatprep.mubr.f32.mxu0 0.0
  %450 = vmatmul.mubr.f32.gmra.mrb[0].mxu0 %v160
  %v451 = vpop.f32.mrb[0].mxu0
  %v452 = vadd.f32 0.0, %v451
  %v453 = vpop.f32.mrb[0].mxu0
  %454 = vmatprep.mubr.f32.mxu0 0.0
  %455 = vmatmul.mubr.f32.gmra.mrb[0].mxu0 %v163
  %v456 = vpop.f32.mrb[0].mxu0
  %v457 = vadd.f32 0.0, %v456
  %v458 = vpop.f32.mrb[0].mxu0
  %459 = vmatprep.mubr.f32.mxu0 0.0
  %460 = vmatmul.mubr.f32.gmra.mrb[0].mxu0 %v166
  %v461 = vpop.f32.mrb[0].mxu0
  %v462 = vadd.f32 0.0, %v461
  %v463 = vpop.f32.mrb[0].mxu0
  %464 = vmatprep.mubr.f32.mxu0 0.0
  %465 = vmatmul.mubr.f32.gmra.mrb[0].mxu0 %v169
  %v466 = vpop.f32.mrb[0].mxu0
  %v467 = vadd.f32 0.0, %v466
  %v468 = vpop.f32.mrb[0].mxu0
  %469 = vmatprep.mubr.f32.mxu0 0.0
  %470 = vmatmul.mubr.f32.gmra.mrb[0].mxu0 %v172
  %v471 = vpop.f32.mrb[0].mxu0
  %v472 = vadd.f32 0.0, %v471
  %v473 = vpop.f32.mrb[0].mxu0
  %474 = vmatprep.mubr.f32.mxu0 0.0
  %475 = vmatmul.mubr.f32.gmra.mrb[0].mxu0 %v175
  %v476 = vpop.f32.mrb[0].mxu0
  %v477 = vadd.f32 0.0, %v476
  %v478 = vpop.f32.mrb[0].mxu0
  %479 = vmatprep.mubr.f32.mxu0 0.0
  %480 = vmatmul.mubr.f32.gmra.mrb[0].mxu0 %v178
  %v481 = vpop.f32.mrb[0].mxu0
  %v482 = vadd.f32 0.0, %v481
  %v483 = vpop.f32.mrb[0].mxu0
  %484 = vmatprep.mubr.f32.mxu0 0.0
  %485 = vmatmul.mubr.f32.gmra.mrb[0].mxu0 %v181
  %v486 = vpop.f32.mrb[0].mxu0
  %v487 = vadd.f32 0.0, %v486
  %v488 = vpop.f32.mrb[0].mxu0
  %489 = vmatprep.mubr.f32.mxu0 0.0
  %490 = vmatmul.mubr.f32.gmra.mrb[0].mxu0 %v184
  %v491 = vpop.f32.mrb[0].mxu0
  %v492 = vadd.f32 0.0, %v491
  %v493 = vpop.f32.mrb[0].mxu0
  %494 = vmatprep.mubr.f32.mxu0 0.0
  %495 = vmatmul.mubr.f32.gmra.mrb[0].mxu0 %v187
  %v496 = vpop.f32.mrb[0].mxu0
  %v497 = vadd.f32 0.0, %v496
  %v498 = vpop.f32.mrb[0].mxu0
  %499 = vmatprep.mubr.f32.mxu0 0.0
  %500 = vmatmul.mubr.f32.gmra.mrb[0].mxu0 %v190
  %v501 = vpop.f32.mrb[0].mxu0
  %v502 = vadd.f32 0.0, %v501
  %v503 = vpop.f32.mrb[0].mxu0
  %504 = vmatprep.mubr.f32.mxu0 0.0
  %505 = vmatmul.mubr.f32.gmra.mrb[0].mxu0 %v193
  %v506 = vpop.f32.mrb[0].mxu0
  %v507 = vadd.f32 0.0, %v506
  %v508 = vpop.f32.mrb[0].mxu0
  %509 = vmatprep.mubr.f32.mxu0 0.0
  %510 = vmatmul.mubr.f32.gmra.mrb[0].mxu0 %v196
  %v511 = vpop.f32.mrb[0].mxu0
  %v512 = vadd.f32 0.0, %v511
  %v513 = vpop.f32.mrb[0].mxu0
  %514 = vmatprep.mubr.f32.mxu0 0.0
  %515 = vmatmul.mubr.f32.gmra.mrb[0].mxu0 %v199
  %v516 = vpop.f32.mrb[0].mxu0
  %v517 = vadd.f32 0.0, %v516
  %v518 = vpop.f32.mrb[0].mxu0
  %519 = vmatprep.mubr.f32.mxu0 0.0
  %520 = vmatmul.mubr.f32.gmra.mrb[0].mxu0 %v202
  %v521 = vpop.f32.mrb[0].mxu0
  %v522 = vadd.f32 0.0, %v521
  %v523 = vpop.f32.mrb[0].mxu0
  %524 = vmatprep.mubr.f32.mxu0 0.0
  %525 = vmatmul.mubr.f32.gmra.mrb[0].mxu0 %v205
  %v526 = vpop.f32.mrb[0].mxu0
  %v527 = vadd.f32 0.0, %v526
  %v528 = vpop.f32.mrb[0].mxu0
  %529 = vmatprep.mubr.f32.mxu0 0.0
  %530 = vmatmul.mubr.f32.gmra.mrb[0].mxu0 %v208
  %v531 = vpop.f32.mrb[0].mxu0
  %v532 = vadd.f32 0.0, %v531
  %v533 = vpop.f32.mrb[0].mxu0
  %534 = vmatprep.mubr.f32.mxu0 0.0
  %535 = vmatmul.mubr.f32.gmra.mrb[0].mxu0 %v211
  %v536 = vpop.f32.mrb[0].mxu0
  %v537 = vadd.f32 0.0, %v536
  %v538 = vpop.f32.mrb[0].mxu0
  %539 = vmatprep.mubr.f32.mxu0 0.0
  %540 = vmatmul.mubr.f32.gmra.mrb[0].mxu0 %v214
  %v541 = vpop.f32.mrb[0].mxu0
  %v542 = vadd.f32 0.0, %v541
  %v543 = vpop.f32.mrb[0].mxu0
  %544 = vmatprep.mubr.f32.mxu0 0.0
  %545 = vmatmul.mubr.f32.gmra.mrb[0].mxu0 %v217
  %v546 = vpop.f32.mrb[0].mxu0
  %v547 = vadd.f32 0.0, %v546
  %v548 = vpop.f32.mrb[0].mxu0
  %549 = vmatprep.mubr.f32.mxu0 0.0
  %550 = vmatmul.mubr.f32.gmra.mrb[0].mxu0 %v220
  %v551 = vpop.f32.mrb[0].mxu0
  %v552 = vadd.f32 0.0, %v551
  %v553 = vpop.f32.mrb[0].mxu0
  %554 = vmatprep.mubr.f32.mxu0 0.0
  %555 = vmatmul.mubr.f32.gmra.mrb[0].mxu0 %v223
  %v556 = vpop.f32.mrb[0].mxu0
  %v557 = vadd.f32 0.0, %v556
  %v558 = vpop.f32.mrb[0].mxu0
  %559 = vmatprep.mubr.f32.mxu0 0.0
  %560 = vmatmul.mubr.f32.gmra.mrb[0].mxu0 %v226
  %v561 = vpop.f32.mrb[0].mxu0
  %v562 = vadd.f32 0.0, %v561
  %v563 = vpop.f32.mrb[0].mxu0
  %564 = vmatprep.mubr.f32.mxu0 0.0
  %565 = vmatmul.mubr.f32.gmra.mrb[0].mxu0 %v229
  %v566 = vpop.f32.mrb[0].mxu0
  %v567 = vadd.f32 0.0, %v566
  %v568 = vpop.f32.mrb[0].mxu0
  %569 = vmatprep.mubr.f32.mxu0 0.0
  %570 = vmatmul.mubr.f32.gmra.mrb[0].mxu0 %v232
  %v571 = vpop.f32.mrb[0].mxu0
  %v572 = vadd.f32 0.0, %v571
  %v573 = vpop.f32.mrb[0].mxu0
  %574 = vmatprep.mubr.f32.mxu0 0.0
  %575 = vmatmul.mubr.f32.gmra.mrb[0].mxu0 %v235
  %v576 = vpop.f32.mrb[0].mxu0
  %v577 = vadd.f32 0.0, %v576
  %v578 = vpop.f32.mrb[0].mxu0
  %579 = vmatprep.mubr.f32.mxu0 0.0
  %580 = vmatmul.mubr.f32.gmra.mrb[0].mxu0 %v238
  %v581 = vpop.f32.mrb[0].mxu0
  %v582 = vadd.f32 0.0, %v581
  %v583 = vpop.f32.mrb[0].mxu0
  %584 = vmatprep.mubr.f32.mxu0 0.0
  %585 = vmatmul.mubr.f32.gmra.mrb[0].mxu0 %v241
  %v586 = vpop.f32.mrb[0].mxu0
  %v587 = vadd.f32 0.0, %v586
  %v588 = vpop.f32.mrb[0].mxu0
  %589 = vmatprep.mubr.f32.mxu0 0.0
  %590 = vmatmul.mubr.f32.gmra.mrb[0].mxu0 %v244
  %v591 = vpop.f32.mrb[0].mxu0
  %v592 = vadd.f32 0.0, %v591
  %v593 = vpop.f32.mrb[0].mxu0
  %594 = vmatprep.mubr.f32.mxu0 0.0
  %595 = vmatmul.mubr.f32.gmra.mrb[0].mxu0 %v247
  %v596 = vpop.f32.mrb[0].mxu0
  %v597 = vadd.f32 0.0, %v596
  %v598 = vpop.f32.mrb[0].mxu0
  %599 = vmatprep.mubr.f32.mxu0 0.0
  %600 = vmatmul.mubr.f32.gmra.mrb[0].mxu0 %v250
  %v601 = vpop.f32.mrb[0].mxu0
  %v602 = vadd.f32 0.0, %v601
  %v603 = vpop.f32.mrb[0].mxu0
  %604 = vmatprep.mubr.f32.mxu0 0.0
  %605 = vmatmul.mubr.f32.gmra.mrb[0].mxu0 %v253
  %v606 = vpop.f32.mrb[0].mxu0
  %v607 = vadd.f32 0.0, %v606
  %v608 = vpop.f32.mrb[0].mxu0
  %609 = vmatprep.mubr.f32.mxu0 0.0
  %610 = vmatmul.mubr.f32.gmra.mrb[0].mxu0 %v256
  %v611 = vpop.f32.mrb[0].mxu0
  %v612 = vadd.f32 0.0, %v611
  %v613 = vpop.f32.mrb[0].mxu0
  %614 = vmatprep.mubr.f32.mxu0 0.0
  %615 = vmatmul.mubr.f32.gmra.mrb[0].mxu0 %v259
  %v616 = vpop.f32.mrb[0].mxu0
  %v617 = vadd.f32 0.0, %v616
  %v618 = vpop.f32.mrb[0].mxu0
  %619 = vmatprep.mubr.f32.mxu0 0.0
  %620 = vmatmul.mubr.f32.gmra.mrb[0].mxu0 %v262
  %v621 = vpop.f32.mrb[0].mxu0
  %v622 = vadd.f32 0.0, %v621
  %v623 = vpop.f32.mrb[0].mxu0
  %624 = vmatprep.mubr.f32.mxu0 0.0
  %625 = vmatmul.mubr.f32.gmra.mrb[0].mxu0 %v265
  %v626 = vpop.f32.mrb[0].mxu0
  %v627 = vadd.f32 0.0, %v626
  %v628 = vpop.f32.mrb[0].mxu0
  %629 = vmatprep.mubr.f32.mxu0 0.0
  %630 = vmatmul.mubr.f32.gmra.mrb[0].mxu0 %v268
  %v631 = vpop.f32.mrb[0].mxu0
  %v632 = vadd.f32 0.0, %v631
  %v633 = vpop.f32.mrb[0].mxu0
  %634 = vmatprep.mubr.f32.mxu0 0.0
  %635 = vmatmul.mubr.f32.gmra.mrb[0].mxu0 %v271
  %v636 = vpop.f32.mrb[0].mxu0
  %v637 = vadd.f32 0.0, %v636
  %v638 = vpop.f32.mrb[0].mxu0
  %639 = vmatprep.mubr.f32.mxu0 0.0
  %640 = vmatmul.mubr.f32.gmra.mrb[0].mxu0 %v274
  %v641 = vpop.f32.mrb[0].mxu0
  %v642 = vadd.f32 0.0, %v641
  %v643 = vpop.f32.mrb[0].mxu0
  %644 = vmatprep.mubr.f32.mxu0 0.0
  %645 = vmatmul.mubr.f32.gmra.mrb[0].mxu0 %v277
  %v646 = vpop.f32.mrb[0].mxu0
  %v647 = vadd.f32 0.0, %v646
  %v648 = vpop.f32.mrb[0].mxu0
  %649 = vmatprep.mubr.f32.mxu0 0.0
  %650 = vmatmul.mubr.f32.gmra.mrb[0].mxu0 %v280
  %v651 = vpop.f32.mrb[0].mxu0
  %v652 = vadd.f32 0.0, %v651
  %v653 = vpop.f32.mrb[0].mxu0
  %654 = vmatprep.mubr.f32.mxu0 0.0
  %655 = vmatmul.mubr.f32.gmra.mrb[0].mxu0 %v283
  %v656 = vpop.f32.mrb[0].mxu0
  %v657 = vadd.f32 0.0, %v656
  %v658 = vpop.f32.mrb[0].mxu0
  %659 = vmatprep.mubr.f32.mxu0 0.0
  %660 = vmatmul.mubr.f32.gmra.mrb[0].mxu0 %v286
  %v661 = vpop.f32.mrb[0].mxu0
  %v662 = vadd.f32 0.0, %v661
  %v663 = vpop.f32.mrb[0].mxu0
  %664 = vmatprep.mubr.f32.mxu0 0.0
  %665 = vmatmul.mubr.f32.gmra.mrb[0].mxu0 %v289
  %v666 = vpop.f32.mrb[0].mxu0
  %v667 = vadd.f32 0.0, %v666
  %v668 = vpop.f32.mrb[0].mxu0
  %669 = vmatprep.mubr.f32.mxu0 0.0
  %670 = vmatmul.mubr.f32.gmra.mrb[0].mxu0 %v292
  %v671 = vpop.f32.mrb[0].mxu0
  %v672 = vadd.f32 0.0, %v671
  %v673 = vpop.f32.mrb[0].mxu0
  %674 = vmatprep.mubr.f32.mxu0 0.0
  %675 = vmatmul.mubr.f32.gmra.mrb[0].mxu0 %v295
  %v676 = vpop.f32.mrb[0].mxu0
  %v677 = vadd.f32 0.0, %v676
  %v678 = vpop.f32.mrb[0].mxu0
  %679 = vmatprep.mubr.f32.mxu0 0.0
  %680 = vmatmul.mubr.f32.gmra.mrb[0].mxu0 %v298
  %v681 = vpop.f32.mrb[0].mxu0
  %v682 = vadd.f32 0.0, %v681
  %v683 = vpop.f32.mrb[0].mxu0
  %684 = vdwg.mxu0
  %v685 = vld [vmem:[%s4] sm:$0x1]
  %v686 = vld [vmem:[%s5] sm:$0x1]
  %vm687 = vcmask 31744
  %v688 = vsel %vm687, %v367, 0.0
  %v689 = vsel %vm687, %v372, 0.0
  %v690 = vadd.f32 %v688, %v689
  %v691 = vsel %vm687, %v377, 0.0
  %v692 = vadd.f32 %v690, %v691
  %v693 = vsel %vm687, %v382, 0.0
  %v694 = vadd.f32 %v692, %v693
  %v695 = vsel %vm687, %v387, 0.0
  %v696 = vadd.f32 %v694, %v695
  %v697 = vsel %vm687, %v392, 0.0
  %v698 = vadd.f32 %v696, %v697
  %v699 = vsel %vm687, %v397, 0.0
  %v700 = vadd.f32 %v698, %v699
  %v701 = vsel %vm687, %v402, 0.0
  %v702 = vadd.f32 %v700, %v701
  %v703 = vsel %vm687, %v407, 0.0
  %v704 = vadd.f32 %v702, %v703
  %v705 = vsel %vm687, %v412, 0.0
  %v706 = vadd.f32 %v704, %v705
  %v707 = vsel %vm687, %v417, 0.0
  %v708 = vadd.f32 %v706, %v707
  %v709 = vsel %vm687, %v422, 0.0
  %v710 = vadd.f32 %v708, %v709
  %v711 = vsel %vm687, %v427, 0.0
  %v712 = vadd.f32 %v710, %v711
  %v713 = vsel %vm687, %v432, 0.0
  %v714 = vadd.f32 %v712, %v713
  %v715 = vsel %vm687, %v437, 0.0
  %v716 = vadd.f32 %v714, %v715
  %v717 = vsel %vm687, %v442, 0.0
  %v718 = vadd.f32 %v716, %v717
  %v719 = vsel %vm687, %v447, 0.0
  %v720 = vadd.f32 %v718, %v719
  %v721 = vsel %vm687, %v452, 0.0
  %v722 = vadd.f32 %v720, %v721
  %v723 = vsel %vm687, %v457, 0.0
  %v724 = vadd.f32 %v722, %v723
  %v725 = vsel %vm687, %v462, 0.0
  %v726 = vadd.f32 %v724, %v725
  %v727 = vsel %vm687, %v467, 0.0
  %v728 = vadd.f32 %v726, %v727
  %v729 = vsel %vm687, %v472, 0.0
  %v730 = vadd.f32 %v728, %v729
  %v731 = vsel %vm687, %v477, 0.0
  %v732 = vadd.f32 %v730, %v731
  %v733 = vsel %vm687, %v482, 0.0
  %v734 = vadd.f32 %v732, %v733
  %v735 = vsel %vm687, %v487, 0.0
  %v736 = vadd.f32 %v734, %v735
  %v737 = vsel %vm687, %v492, 0.0
  %v738 = vadd.f32 %v736, %v737
  %v739 = vsel %vm687, %v497, 0.0
  %v740 = vadd.f32 %v738, %v739
  %v741 = vsel %vm687, %v502, 0.0
  %v742 = vadd.f32 %v740, %v741
  %v743 = vsel %vm687, %v507, 0.0
  %v744 = vadd.f32 %v742, %v743
  %v745 = vsel %vm687, %v512, 0.0
  %v746 = vadd.f32 %v744, %v745
  %v747 = vsel %vm687, %v517, 0.0
  %v748 = vadd.f32 %v746, %v747
  %v749 = vsel %vm687, %v522, 0.0
  %v750 = vadd.f32 %v748, %v749
  %v751 = vsel %vm687, %v527, 0.0
  %v752 = vadd.f32 %v750, %v751
  %v753 = vsel %vm687, %v532, 0.0
  %v754 = vadd.f32 %v752, %v753
  %v755 = vsel %vm687, %v537, 0.0
  %v756 = vadd.f32 %v754, %v755
  %v757 = vsel %vm687, %v542, 0.0
  %v758 = vadd.f32 %v756, %v757
  %v759 = vsel %vm687, %v547, 0.0
  %v760 = vadd.f32 %v758, %v759
  %v761 = vsel %vm687, %v552, 0.0
  %v762 = vadd.f32 %v760, %v761
  %v763 = vsel %vm687, %v557, 0.0
  %v764 = vadd.f32 %v762, %v763
  %v765 = vsel %vm687, %v562, 0.0
  %v766 = vadd.f32 %v764, %v765
  %v767 = vsel %vm687, %v567, 0.0
  %v768 = vadd.f32 %v766, %v767
  %v769 = vsel %vm687, %v572, 0.0
  %v770 = vadd.f32 %v768, %v769
  %v771 = vsel %vm687, %v577, 0.0
  %v772 = vadd.f32 %v770, %v771
  %v773 = vsel %vm687, %v582, 0.0
  %v774 = vadd.f32 %v772, %v773
  %v775 = vsel %vm687, %v587, 0.0
  %v776 = vadd.f32 %v774, %v775
  %v777 = vsel %vm687, %v592, 0.0
  %v778 = vadd.f32 %v776, %v777
  %v779 = vsel %vm687, %v597, 0.0
  %v780 = vadd.f32 %v778, %v779
  %v781 = vsel %vm687, %v602, 0.0
  %v782 = vadd.f32 %v780, %v781
  %v783 = vsel %vm687, %v607, 0.0
  %v784 = vadd.f32 %v782, %v783
  %v785 = vsel %vm687, %v612, 0.0
  %v786 = vadd.f32 %v784, %v785
  %v787 = vsel %vm687, %v617, 0.0
  %v788 = vadd.f32 %v786, %v787
  %v789 = vsel %vm687, %v622, 0.0
  %v790 = vadd.f32 %v788, %v789
  %v791 = vsel %vm687, %v627, 0.0
  %v792 = vadd.f32 %v790, %v791
  %v793 = vsel %vm687, %v632, 0.0
  %v794 = vadd.f32 %v792, %v793
  %v795 = vsel %vm687, %v637, 0.0
  %v796 = vadd.f32 %v794, %v795
  %v797 = vsel %vm687, %v642, 0.0
  %v798 = vadd.f32 %v796, %v797
  %v799 = vsel %vm687, %v647, 0.0
  %v800 = vadd.f32 %v798, %v799
  %v801 = vsel %vm687, %v652, 0.0
  %v802 = vadd.f32 %v800, %v801
  %v803 = vsel %vm687, %v657, 0.0
  %v804 = vadd.f32 %v802, %v803
  %v805 = vsel %vm687, %v662, 0.0
  %v806 = vadd.f32 %v804, %v805
  %v807 = vsel %vm687, %v667, 0.0
  %v808 = vadd.f32 %v806, %v807
  %v809 = vsel %vm687, %v672, 0.0
  %v810 = vadd.f32 %v808, %v809
  %v811 = vsel %vm687, %v677, 0.0
  %v812 = vadd.f32 %v810, %v811
  %v813 = vsel %vm687, %v682, 0.0
  %v814 = vadd.f32 %v812, %v813
  %v815 = vrot.slane %v814, 4
  %v816 = vadd.f32 %v814, %v815
  %v817 = vrot.slane %v816, 2
  %v818 = vadd.f32 %v816, %v817
  %v819 = vrot.slane %v818, 1
  %v820 = vadd.f32 %v818, %v819
  %v821 = vmul.f32 %v820, 0.001953125
  %v822 = vmul.f32 %v367, %v367
  %v823 = vmul.f32 %v372, %v372
  %v824 = vmul.f32 %v377, %v377
  %v825 = vmul.f32 %v382, %v382
  %v826 = vmul.f32 %v387, %v387
  %v827 = vmul.f32 %v392, %v392
  %v828 = vmul.f32 %v397, %v397
  %v829 = vmul.f32 %v402, %v402
  %v830 = vmul.f32 %v407, %v407
  %v831 = vmul.f32 %v412, %v412
  %v832 = vmul.f32 %v417, %v417
  %v833 = vmul.f32 %v422, %v422
  %v834 = vmul.f32 %v427, %v427
  %v835 = vmul.f32 %v432, %v432
  %v836 = vmul.f32 %v437, %v437
  %v837 = vmul.f32 %v442, %v442
  %v838 = vmul.f32 %v447, %v447
  %v839 = vmul.f32 %v452, %v452
  %v840 = vmul.f32 %v457, %v457
  %v841 = vmul.f32 %v462, %v462
  %v842 = vmul.f32 %v467, %v467
  %v843 = vmul.f32 %v472, %v472
  %v844 = vmul.f32 %v477, %v477
  %v845 = vmul.f32 %v482, %v482
  %v846 = vmul.f32 %v487, %v487
  %v847 = vmul.f32 %v492, %v492
  %v848 = vmul.f32 %v497, %v497
  %v849 = vmul.f32 %v502, %v502
  %v850 = vmul.f32 %v507, %v507
  %v851 = vmul.f32 %v512, %v512
  %v852 = vmul.f32 %v517, %v517
  %v853 = vmul.f32 %v522, %v522
  %v854 = vmul.f32 %v527, %v527
  %v855 = vmul.f32 %v532, %v532
  %v856 = vmul.f32 %v537, %v537
  %v857 = vmul.f32 %v542, %v542
  %v858 = vmul.f32 %v547, %v547
  %v859 = vmul.f32 %v552, %v552
  %v860 = vmul.f32 %v557, %v557
  %v861 = vmul.f32 %v562, %v562
  %v862 = vmul.f32 %v567, %v567
  %v863 = vmul.f32 %v572, %v572
  %v864 = vmul.f32 %v577, %v577
  %v865 = vmul.f32 %v582, %v582
  %v866 = vmul.f32 %v587, %v587
  %v867 = vmul.f32 %v592, %v592
  %v868 = vmul.f32 %v597, %v597
  %v869 = vmul.f32 %v602, %v602
  %v870 = vmul.f32 %v607, %v607
  %v871 = vmul.f32 %v612, %v612
  %v872 = vmul.f32 %v617, %v617
  %v873 = vmul.f32 %v622, %v622
  %v874 = vmul.f32 %v627, %v627
  %v875 = vmul.f32 %v632, %v632
  %v876 = vmul.f32 %v637, %v637
  %v877 = vmul.f32 %v642, %v642
  %v878 = vmul.f32 %v647, %v647
  %v879 = vmul.f32 %v652, %v652
  %v880 = vmul.f32 %v657, %v657
  %v881 = vmul.f32 %v662, %v662
  %v882 = vmul.f32 %v667, %v667
  %v883 = vmul.f32 %v672, %v672
  %v884 = vmul.f32 %v677, %v677
  %v885 = vmul.f32 %v682, %v682
  %v886 = vsel %vm687, %v822, 0.0
  %v887 = vsel %vm687, %v823, 0.0
  %v888 = vadd.f32 %v886, %v887
  %v889 = vsel %vm687, %v824, 0.0
  %v890 = vadd.f32 %v888, %v889
  %v891 = vsel %vm687, %v825, 0.0
  %v892 = vadd.f32 %v890, %v891
  %v893 = vsel %vm687, %v826, 0.0
  %v894 = vadd.f32 %v892, %v893
  %v895 = vsel %vm687, %v827, 0.0
  %v896 = vadd.f32 %v894, %v895
  %v897 = vsel %vm687, %v828, 0.0
  %v898 = vadd.f32 %v896, %v897
  %v899 = vsel %vm687, %v829, 0.0
  %v900 = vadd.f32 %v898, %v899
  %v901 = vsel %vm687, %v830, 0.0
  %v902 = vadd.f32 %v900, %v901
  %v903 = vsel %vm687, %v831, 0.0
  %v904 = vadd.f32 %v902, %v903
  %v905 = vsel %vm687, %v832, 0.0
  %v906 = vadd.f32 %v904, %v905
  %v907 = vsel %vm687, %v833, 0.0
  %v908 = vadd.f32 %v906, %v907
  %v909 = vsel %vm687, %v834, 0.0
  %v910 = vadd.f32 %v908, %v909
  %v911 = vsel %vm687, %v835, 0.0
  %v912 = vadd.f32 %v910, %v911
  %v913 = vsel %vm687, %v836, 0.0
  %v914 = vadd.f32 %v912, %v913
  %v915 = vsel %vm687, %v837, 0.0
  %v916 = vadd.f32 %v914, %v915
  %v917 = vsel %vm687, %v838, 0.0
  %v918 = vadd.f32 %v916, %v917
  %v919 = vsel %vm687, %v839, 0.0
  %v920 = vadd.f32 %v918, %v919
  %v921 = vsel %vm687, %v840, 0.0
  %v922 = vadd.f32 %v920, %v921
  %v923 = vsel %vm687, %v841, 0.0
  %v924 = vadd.f32 %v922, %v923
  %v925 = vsel %vm687, %v842, 0.0
  %v926 = vadd.f32 %v924, %v925
  %v927 = vsel %vm687, %v843, 0.0
  %v928 = vadd.f32 %v926, %v927
  %v929 = vsel %vm687, %v844, 0.0
  %v930 = vadd.f32 %v928, %v929
  %v931 = vsel %vm687, %v845, 0.0
  %v932 = vadd.f32 %v930, %v931
  %v933 = vsel %vm687, %v846, 0.0
  %v934 = vadd.f32 %v932, %v933
  %v935 = vsel %vm687, %v847, 0.0
  %v936 = vadd.f32 %v934, %v935
  %v937 = vsel %vm687, %v848, 0.0
  %v938 = vadd.f32 %v936, %v937
  %v939 = vsel %vm687, %v849, 0.0
  %v940 = vadd.f32 %v938, %v939
  %v941 = vsel %vm687, %v850, 0.0
  %v942 = vadd.f32 %v940, %v941
  %v943 = vsel %vm687, %v851, 0.0
  %v944 = vadd.f32 %v942, %v943
  %v945 = vsel %vm687, %v852, 0.0
  %v946 = vadd.f32 %v944, %v945
  %v947 = vsel %vm687, %v853, 0.0
  %v948 = vadd.f32 %v946, %v947
  %v949 = vsel %vm687, %v854, 0.0
  %v950 = vadd.f32 %v948, %v949
  %v951 = vsel %vm687, %v855, 0.0
  %v952 = vadd.f32 %v950, %v951
  %v953 = vsel %vm687, %v856, 0.0
  %v954 = vadd.f32 %v952, %v953
  %v955 = vsel %vm687, %v857, 0.0
  %v956 = vadd.f32 %v954, %v955
  %v957 = vsel %vm687, %v858, 0.0
  %v958 = vadd.f32 %v956, %v957
  %v959 = vsel %vm687, %v859, 0.0
  %v960 = vadd.f32 %v958, %v959
  %v961 = vsel %vm687, %v860, 0.0
  %v962 = vadd.f32 %v960, %v961
  %v963 = vsel %vm687, %v861, 0.0
  %v964 = vadd.f32 %v962, %v963
  %v965 = vsel %vm687, %v862, 0.0
  %v966 = vadd.f32 %v964, %v965
  %v967 = vsel %vm687, %v863, 0.0
  %v968 = vadd.f32 %v966, %v967
  %v969 = vsel %vm687, %v864, 0.0
  %v970 = vadd.f32 %v968, %v969
  %v971 = vsel %vm687, %v865, 0.0
  %v972 = vadd.f32 %v970, %v971
  %v973 = vsel %vm687, %v866, 0.0
  %v974 = vadd.f32 %v972, %v973
  %v975 = vsel %vm687, %v867, 0.0
  %v976 = vadd.f32 %v974, %v975
  %v977 = vsel %vm687, %v868, 0.0
  %v978 = vadd.f32 %v976, %v977
  %v979 = vsel %vm687, %v869, 0.0
  %v980 = vadd.f32 %v978, %v979
  %v981 = vsel %vm687, %v870, 0.0
  %v982 = vadd.f32 %v980, %v981
  %v983 = vsel %vm687, %v871, 0.0
  %v984 = vadd.f32 %v982, %v983
  %v985 = vsel %vm687, %v872, 0.0
  %v986 = vadd.f32 %v984, %v985
  %v987 = vsel %vm687, %v873, 0.0
  %v988 = vadd.f32 %v986, %v987
  %v989 = vsel %vm687, %v874, 0.0
  %v990 = vadd.f32 %v988, %v989
  %v991 = vsel %vm687, %v875, 0.0
  %v992 = vadd.f32 %v990, %v991
  %v993 = vsel %vm687, %v876, 0.0
  %v994 = vadd.f32 %v992, %v993
  %v995 = vsel %vm687, %v877, 0.0
  %v996 = vadd.f32 %v994, %v995
  %v997 = vsel %vm687, %v878, 0.0
  %v998 = vadd.f32 %v996, %v997
  %v999 = vsel %vm687, %v879, 0.0
  %v1000 = vadd.f32 %v998, %v999
  %v1001 = vsel %vm687, %v880, 0.0
  %v1002 = vadd.f32 %v1000, %v1001
  %v1003 = vsel %vm687, %v881, 0.0
  %v1004 = vadd.f32 %v1002, %v1003
  %v1005 = vsel %vm687, %v882, 0.0
  %v1006 = vadd.f32 %v1004, %v1005
  %v1007 = vsel %vm687, %v883, 0.0
  %v1008 = vadd.f32 %v1006, %v1007
  %v1009 = vsel %vm687, %v884, 0.0
  %v1010 = vadd.f32 %v1008, %v1009
  %v1011 = vsel %vm687, %v885, 0.0
  %v1012 = vadd.f32 %v1010, %v1011
  %v1013 = vrot.slane %v1012, 4
  %v1014 = vadd.f32 %v1012, %v1013
  %v1015 = vrot.slane %v1014, 2
  %v1016 = vadd.f32 %v1014, %v1015
  %v1017 = vrot.slane %v1016, 1
  %v1018 = vadd.f32 %v1016, %v1017
  %v1019 = vmul.f32 %v1018, 0.001953125
  %v1020 = vmul.f32 %v821, %v821
  %v1021 = vsub.f32 %v1019, %v1020
  %v1022 = vadd.f32 %v1021, 1e-05
  %v1023 = vrsqrt.pop %v1022
  %v1024 = vmul.f32 %v685, %v1023
  %v1025 = vmul.f32 %v821, %v1024
  %v1026 = vsub.f32 %v686, %v1025
  %v1028 = vlaneseq
  %v1029 = vshrl.u32 %v1028, 7
  %v1030 = vsub.s32 0, %v1029
  %v1031 = vrot.slane %v1024, %v1030
  %v1033 = vmul.f32 %v367, %v1031
  %v1034 = vmul.f32 %v372, %v1031
  %v1035 = vmul.f32 %v377, %v1031
  %v1036 = vmul.f32 %v382, %v1031
  %v1037 = vmul.f32 %v387, %v1031
  %v1038 = vmul.f32 %v392, %v1031
  %v1039 = vmul.f32 %v397, %v1031
  %v1040 = vmul.f32 %v402, %v1031
  %v1041 = vmul.f32 %v407, %v1031
  %v1042 = vmul.f32 %v412, %v1031
  %v1043 = vmul.f32 %v417, %v1031
  %v1044 = vmul.f32 %v422, %v1031
  %v1045 = vmul.f32 %v427, %v1031
  %v1046 = vmul.f32 %v432, %v1031
  %v1047 = vmul.f32 %v437, %v1031
  %v1048 = vmul.f32 %v442, %v1031
  %v1049 = vmul.f32 %v447, %v1031
  %v1050 = vmul.f32 %v452, %v1031
  %v1051 = vmul.f32 %v457, %v1031
  %v1052 = vmul.f32 %v462, %v1031
  %v1053 = vmul.f32 %v467, %v1031
  %v1054 = vmul.f32 %v472, %v1031
  %v1055 = vmul.f32 %v477, %v1031
  %v1056 = vmul.f32 %v482, %v1031
  %v1057 = vmul.f32 %v487, %v1031
  %v1058 = vmul.f32 %v492, %v1031
  %v1059 = vmul.f32 %v497, %v1031
  %v1060 = vmul.f32 %v502, %v1031
  %v1061 = vmul.f32 %v507, %v1031
  %v1062 = vmul.f32 %v512, %v1031
  %v1063 = vmul.f32 %v517, %v1031
  %v1064 = vmul.f32 %v522, %v1031
  %v1065 = vmul.f32 %v527, %v1031
  %v1066 = vmul.f32 %v532, %v1031
  %v1067 = vmul.f32 %v537, %v1031
  %v1068 = vmul.f32 %v542, %v1031
  %v1069 = vmul.f32 %v547, %v1031
  %v1070 = vmul.f32 %v552, %v1031
  %v1071 = vmul.f32 %v557, %v1031
  %v1072 = vmul.f32 %v562, %v1031
  %v1073 = vmul.f32 %v567, %v1031
  %v1074 = vmul.f32 %v572, %v1031
  %v1075 = vmul.f32 %v577, %v1031
  %v1076 = vmul.f32 %v582, %v1031
  %v1077 = vmul.f32 %v587, %v1031
  %v1078 = vmul.f32 %v592, %v1031
  %v1079 = vmul.f32 %v597, %v1031
  %v1080 = vmul.f32 %v602, %v1031
  %v1081 = vmul.f32 %v607, %v1031
  %v1082 = vmul.f32 %v612, %v1031
  %v1083 = vmul.f32 %v617, %v1031
  %v1084 = vmul.f32 %v622, %v1031
  %v1085 = vmul.f32 %v627, %v1031
  %v1086 = vmul.f32 %v632, %v1031
  %v1087 = vmul.f32 %v637, %v1031
  %v1088 = vmul.f32 %v642, %v1031
  %v1089 = vmul.f32 %v647, %v1031
  %v1090 = vmul.f32 %v652, %v1031
  %v1091 = vmul.f32 %v657, %v1031
  %v1092 = vmul.f32 %v662, %v1031
  %v1093 = vmul.f32 %v667, %v1031
  %v1094 = vmul.f32 %v672, %v1031
  %v1095 = vmul.f32 %v677, %v1031
  %v1096 = vmul.f32 %v682, %v1031
  %v1098 = vlaneseq
  %v1099 = vshrl.u32 %v1098, 7
  %v1100 = vsub.s32 0, %v1099
  %v1101 = vrot.slane %v1026, %v1100
  %v1103 = vadd.f32 %v1033, %v1101
  %v1104 = vadd.f32 %v1034, %v1101
  %v1105 = vadd.f32 %v1035, %v1101
  %v1106 = vadd.f32 %v1036, %v1101
  %v1107 = vadd.f32 %v1037, %v1101
  %v1108 = vadd.f32 %v1038, %v1101
  %v1109 = vadd.f32 %v1039, %v1101
  %v1110 = vadd.f32 %v1040, %v1101
  %v1111 = vadd.f32 %v1041, %v1101
  %v1112 = vadd.f32 %v1042, %v1101
  %v1113 = vadd.f32 %v1043, %v1101
  %v1114 = vadd.f32 %v1044, %v1101
  %v1115 = vadd.f32 %v1045, %v1101
  %v1116 = vadd.f32 %v1046, %v1101
  %v1117 = vadd.f32 %v1047, %v1101
  %v1118 = vadd.f32 %v1048, %v1101
  %v1119 = vadd.f32 %v1049, %v1101
  %v1120 = vadd.f32 %v1050, %v1101
  %v1121 = vadd.f32 %v1051, %v1101
  %v1122 = vadd.f32 %v1052, %v1101
  %v1123 = vadd.f32 %v1053, %v1101
  %v1124 = vadd.f32 %v1054, %v1101
  %v1125 = vadd.f32 %v1055, %v1101
  %v1126 = vadd.f32 %v1056, %v1101
  %v1127 = vadd.f32 %v1057, %v1101
  %v1128 = vadd.f32 %v1058, %v1101
  %v1129 = vadd.f32 %v1059, %v1101
  %v1130 = vadd.f32 %v1060, %v1101
  %v1131 = vadd.f32 %v1061, %v1101
  %v1132 = vadd.f32 %v1062, %v1101
  %v1133 = vadd.f32 %v1063, %v1101
  %v1134 = vadd.f32 %v1064, %v1101
  %v1135 = vadd.f32 %v1065, %v1101
  %v1136 = vadd.f32 %v1066, %v1101
  %v1137 = vadd.f32 %v1067, %v1101
  %v1138 = vadd.f32 %v1068, %v1101
  %v1139 = vadd.f32 %v1069, %v1101
  %v1140 = vadd.f32 %v1070, %v1101
  %v1141 = vadd.f32 %v1071, %v1101
  %v1142 = vadd.f32 %v1072, %v1101
  %v1143 = vadd.f32 %v1073, %v1101
  %v1144 = vadd.f32 %v1074, %v1101
  %v1145 = vadd.f32 %v1075, %v1101
  %v1146 = vadd.f32 %v1076, %v1101
  %v1147 = vadd.f32 %v1077, %v1101
  %v1148 = vadd.f32 %v1078, %v1101
  %v1149 = vadd.f32 %v1079, %v1101
  %v1150 = vadd.f32 %v1080, %v1101
  %v1151 = vadd.f32 %v1081, %v1101
  %v1152 = vadd.f32 %v1082, %v1101
  %v1153 = vadd.f32 %v1083, %v1101
  %v1154 = vadd.f32 %v1084, %v1101
  %v1155 = vadd.f32 %v1085, %v1101
  %v1156 = vadd.f32 %v1086, %v1101
  %v1157 = vadd.f32 %v1087, %v1101
  %v1158 = vadd.f32 %v1088, %v1101
  %v1159 = vadd.f32 %v1089, %v1101
  %v1160 = vadd.f32 %v1090, %v1101
  %v1161 = vadd.f32 %v1091, %v1101
  %v1162 = vadd.f32 %v1092, %v1101
  %v1163 = vadd.f32 %v1093, %v1101
  %v1164 = vadd.f32 %v1094, %v1101
  %v1165 = vadd.f32 %v1095, %v1101
  %v1166 = vadd.f32 %v1096, %v1101
  %v1167 = vmax.f32 %v1103, 0.0
  %v1168 = vmax.f32 %v1104, 0.0
  %v1169 = vmax.f32 %v1105, 0.0
  %v1170 = vmax.f32 %v1106, 0.0
  %v1171 = vmax.f32 %v1107, 0.0
  %v1172 = vmax.f32 %v1108, 0.0
  %v1173 = vmax.f32 %v1109, 0.0
  %v1174 = vmax.f32 %v1110, 0.0
  %v1175 = vmax.f32 %v1111, 0.0
  %v1176 = vmax.f32 %v1112, 0.0
  %v1177 = vmax.f32 %v1113, 0.0
  %v1178 = vmax.f32 %v1114, 0.0
  %v1179 = vmax.f32 %v1115, 0.0
  %v1180 = vmax.f32 %v1116, 0.0
  %v1181 = vmax.f32 %v1117, 0.0
  %v1182 = vmax.f32 %v1118, 0.0
  %v1183 = vmax.f32 %v1119, 0.0
  %v1184 = vmax.f32 %v1120, 0.0
  %v1185 = vmax.f32 %v1121, 0.0
  %v1186 = vmax.f32 %v1122, 0.0
  %v1187 = vmax.f32 %v1123, 0.0
  %v1188 = vmax.f32 %v1124, 0.0
  %v1189 = vmax.f32 %v1125, 0.0
  %v1190 = vmax.f32 %v1126, 0.0
  %v1191 = vmax.f32 %v1127, 0.0
  %v1192 = vmax.f32 %v1128, 0.0
  %v1193 = vmax.f32 %v1129, 0.0
  %v1194 = vmax.f32 %v1130, 0.0
  %v1195 = vmax.f32 %v1131, 0.0
  %v1196 = vmax.f32 %v1132, 0.0
  %v1197 = vmax.f32 %v1133, 0.0
  %v1198 = vmax.f32 %v1134, 0.0
  %v1199 = vmax.f32 %v1135, 0.0
  %v1200 = vmax.f32 %v1136, 0.0
  %v1201 = vmax.f32 %v1137, 0.0
  %v1202 = vmax.f32 %v1138, 0.0
  %v1203 = vmax.f32 %v1139, 0.0
  %v1204 = vmax.f32 %v1140, 0.0
  %v1205 = vmax.f32 %v1141, 0.0
  %v1206 = vmax.f32 %v1142, 0.0
  %v1207 = vmax.f32 %v1143, 0.0
  %v1208 = vmax.f32 %v1144, 0.0
  %v1209 = vmax.f32 %v1145, 0.0
  %v1210 = vmax.f32 %v1146, 0.0
  %v1211 = vmax.f32 %v1147, 0.0
  %v1212 = vmax.f32 %v1148, 0.0
  %v1213 = vmax.f32 %v1149, 0.0
  %v1214 = vmax.f32 %v1150, 0.0
  %v1215 = vmax.f32 %v1151, 0.0
  %v1216 = vmax.f32 %v1152, 0.0
  %v1217 = vmax.f32 %v1153, 0.0
  %v1218 = vmax.f32 %v1154, 0.0
  %v1219 = vmax.f32 %v1155, 0.0
  %v1220 = vmax.f32 %v1156, 0.0
  %v1221 = vmax.f32 %v1157, 0.0
  %v1222 = vmax.f32 %v1158, 0.0
  %v1223 = vmax.f32 %v1159, 0.0
  %v1224 = vmax.f32 %v1160, 0.0
  %v1225 = vmax.f32 %v1161, 0.0
  %v1226 = vmax.f32 %v1162, 0.0
  %v1227 = vmax.f32 %v1163, 0.0
  %v1228 = vmax.f32 %v1164, 0.0
  %v1229 = vmax.f32 %v1165, 0.0
  %v1230 = vmax.f32 %v1166, 0.0
  %1231 = vst.msk [vmem:[#allocation2] sm:$0xff] %vm687, 0.0
  %1232 = vst.msk [vmem:[#allocation2 + $0x8] sm:$0xff] %vm687, 0.0
  %vm1233 = vcmask 25600
  %1234 = vst.msk [vmem:[#allocation2 + $0x10] sm:$0x3] %vm1233, 0.0
  %1235 = vst.msk [vmem:[#allocation2 + $0x18] sm:$0xff] %vm687, 0.0
  %1236 = vst.msk [vmem:[#allocation2 + $0x20] sm:$0xff] %vm687, 0.0
  %1237 = vst.msk [vmem:[#allocation2 + $0x28] sm:$0x3] %vm1233, 0.0
  %1238 = vst.msk [vmem:[#allocation2 + $0x30] sm:$0xff] %vm687, 0.0
  %1239 = vst.msk [vmem:[#allocation2 + $0x38] sm:$0xff] %vm687, 0.0
  %1240 = vst.msk [vmem:[#allocation2 + $0x40] sm:$0x3] %vm1233, 0.0
  %1241 = vst.msk [vmem:[#allocation2 + $0x48] sm:$0xff] %vm687, 0.0
  %1242 = vst.msk [vmem:[#allocation2 + $0x50] sm:$0xff] %vm687, 0.0
  %1243 = vst.msk [vmem:[#allocation2 + $0x58] sm:$0x3] %vm1233, 0.0
  %1244 = vst.msk [vmem:[#allocation2 + $0x60] sm:$0xff] %vm687, 0.0
  %1245 = vst.msk [vmem:[#allocation2 + $0x68] sm:$0xff] %vm687, 0.0
  %1246 = vst.msk [vmem:[#allocation2 + $0x70] sm:$0x3] %vm1233, 0.0
  %1247 = vst.msk [vmem:[#allocation2 + $0x78] sm:$0xff] %vm687, 0.0
  %1248 = vst.msk [vmem:[#allocation2 + $0x80] sm:$0xff] %vm687, 0.0
  %1249 = vst.msk [vmem:[#allocation2 + $0x88] sm:$0x3] %vm1233, 0.0
  %1250 = vst.msk [vmem:[#allocation2 + $0x90] sm:$0xff] %vm687, 0.0
  %1251 = vst.msk [vmem:[#allocation2 + $0x98] sm:$0xff] %vm687, 0.0
  %1252 = vst.msk [vmem:[#allocation2 + $0xa0] sm:$0x3] %vm1233, 0.0
  %1253 = vst.msk [vmem:[#allocation2 + $0xa8] sm:$0xff] %vm687, 0.0
  %1254 = vst.msk [vmem:[#allocation2 + $0xb0] sm:$0xff] %vm687, 0.0
  %1255 = vst.msk [vmem:[#allocation2 + $0xb8] sm:$0x3] %vm1233, 0.0
  %1256 = vst.msk [vmem:[#allocation2 + $0xc0] sm:$0xff] %vm687, 0.0
  %1257 = vst.msk [vmem:[#allocation2 + $0xc8] sm:$0xff] %vm687, 0.0
  %1258 = vst.msk [vmem:[#allocation2 + $0xd0] sm:$0x3] %vm1233, 0.0
  %1259 = vst.msk [vmem:[#allocation2 + $0xd8] sm:$0xff] %vm687, 0.0
  %1260 = vst.msk [vmem:[#allocation2 + $0xe0] sm:$0xff] %vm687, 0.0
  %1261 = vst.msk [vmem:[#allocation2 + $0xe8] sm:$0x3] %vm1233, 0.0
  %1262 = vst.msk [vmem:[#allocation2 + $0xf0] sm:$0xff] %vm687, 0.0
  %1263 = vst.msk [vmem:[#allocation2 + $0xf8] sm:$0xff] %vm687, 0.0
  %1264 = vst.msk [vmem:[#allocation2 + $0x100] sm:$0x3] %vm1233, 0.0
  %1265 = vst.msk [vmem:[#allocation2 + $0x108] sm:$0xff] %vm687, 0.0
  %1266 = vst.msk [vmem:[#allocation2 + $0x110] sm:$0xff] %vm687, 0.0
  %1267 = vst.msk [vmem:[#allocation2 + $0x118] sm:$0x3] %vm1233, 0.0
  %1268 = vst.msk [vmem:[#allocation2 + $0x120] sm:$0xff] %vm687, 0.0
  %1269 = vst.msk [vmem:[#allocation2 + $0x128] sm:$0xff] %vm687, 0.0
  %1270 = vst.msk [vmem:[#allocation2 + $0x130] sm:$0x3] %vm1233, 0.0
  %1271 = vst.msk [vmem:[#allocation2 + $0x138] sm:$0xff] %vm687, 0.0
  %1272 = vst.msk [vmem:[#allocation2 + $0x140] sm:$0xff] %vm687, 0.0
  %1273 = vst.msk [vmem:[#allocation2 + $0x148] sm:$0x3] %vm1233, 0.0
  %1274 = vst.msk [vmem:[#allocation2 + $0x150] sm:$0xff] %vm687, 0.0
  %1275 = vst.msk [vmem:[#allocation2 + $0x158] sm:$0xff] %vm687, 0.0
  %1276 = vst.msk [vmem:[#allocation2 + $0x160] sm:$0x3] %vm1233, 0.0
  %1277 = vst.msk [vmem:[#allocation2 + $0x168] sm:$0xff] %vm687, 0.0
  %1278 = vst.msk [vmem:[#allocation2 + $0x170] sm:$0xff] %vm687, 0.0
  %1279 = vst.msk [vmem:[#allocation2 + $0x178] sm:$0x3] %vm1233, 0.0
  %1280 = vst.msk [vmem:[#allocation2 + $0x180] sm:$0xff] %vm687, 0.0
  %1281 = vst.msk [vmem:[#allocation2 + $0x188] sm:$0xff] %vm687, 0.0
  %1282 = vst.msk [vmem:[#allocation2 + $0x190] sm:$0x3] %vm1233, 0.0
  %1283 = vst.msk [vmem:[#allocation2 + $0x198] sm:$0xff] %vm687, 0.0
  %1284 = vst.msk [vmem:[#allocation2 + $0x1a0] sm:$0xff] %vm687, 0.0
  %1285 = vst.msk [vmem:[#allocation2 + $0x1a8] sm:$0x3] %vm1233, 0.0
  %1286 = vst.msk [vmem:[#allocation2 + $0x1b0] sm:$0xff] %vm687, 0.0
  %1287 = vst.msk [vmem:[#allocation2 + $0x1b8] sm:$0xff] %vm687, 0.0
  %1288 = vst.msk [vmem:[#allocation2 + $0x1c0] sm:$0x3] %vm1233, 0.0
  %1289 = vst.msk [vmem:[#allocation2 + $0x1c8] sm:$0xff] %vm687, 0.0
  %1290 = vst.msk [vmem:[#allocation2 + $0x1d0] sm:$0xff] %vm687, 0.0
  %1291 = vst.msk [vmem:[#allocation2 + $0x1d8] sm:$0x3] %vm1233, 0.0
  %1292 = vst.msk [vmem:[#allocation2 + $0x1e0] sm:$0xff] %vm687, 0.0
  %1293 = vst.msk [vmem:[#allocation2 + $0x1e8] sm:$0xff] %vm687, 0.0
  %1294 = vst.msk [vmem:[#allocation2 + $0x1f0] sm:$0x3] %vm1233, 0.0
  %1295 = vst.msk [vmem:[#allocation2 + $0x1f8] sm:$0xff] %vm687, 0.0
  %1296 = vst.msk [vmem:[#allocation2 + $0x200] sm:$0xff] %vm687, 0.0
  %1297 = vst.msk [vmem:[#allocation2 + $0x208] sm:$0x3] %vm1233, 0.0
  %1298 = vst.msk [vmem:[#allocation2 + $0x210] sm:$0xff] %vm687, 0.0
  %1299 = vst.msk [vmem:[#allocation2 + $0x218] sm:$0xff] %vm687, 0.0
  %1300 = vst.msk [vmem:[#allocation2 + $0x220] sm:$0x3] %vm1233, 0.0
  %1301 = vst.msk [vmem:[#allocation2 + $0x228] sm:$0xff] %vm687, 0.0
  %1302 = vst.msk [vmem:[#allocation2 + $0x230] sm:$0xff] %vm687, 0.0
  %1303 = vst.msk [vmem:[#allocation2 + $0x238] sm:$0x3] %vm1233, 0.0
  %1304 = vst.msk [vmem:[#allocation2 + $0x240] sm:$0xff] %vm687, 0.0
  %1305 = vst.msk [vmem:[#allocation2 + $0x248] sm:$0xff] %vm687, 0.0
  %1306 = vst.msk [vmem:[#allocation2 + $0x250] sm:$0x3] %vm1233, 0.0
  %1307 = vst.msk [vmem:[#allocation2 + $0x258] sm:$0xff] %vm687, 0.0
  %1308 = vst.msk [vmem:[#allocation2 + $0x260] sm:$0xff] %vm687, 0.0
  %1309 = vst.msk [vmem:[#allocation2 + $0x268] sm:$0x3] %vm1233, 0.0
  %1310 = vst.msk [vmem:[#allocation2 + $0x270] sm:$0xff] %vm687, 0.0
  %1311 = vst.msk [vmem:[#allocation2 + $0x278] sm:$0xff] %vm687, 0.0
  %1312 = vst.msk [vmem:[#allocation2 + $0x280] sm:$0x3] %vm1233, 0.0
  %1313 = vst.msk [vmem:[#allocation2 + $0x288] sm:$0xff] %vm687, 0.0
  %1314 = vst.msk [vmem:[#allocation2 + $0x290] sm:$0xff] %vm687, 0.0
  %1315 = vst.msk [vmem:[#allocation2 + $0x298] sm:$0x3] %vm1233, 0.0
  %1316 = vst.msk [vmem:[#allocation2 + $0x2a0] sm:$0xff] %vm687, 0.0
  %1317 = vst.msk [vmem:[#allocation2 + $0x2a8] sm:$0xff] %vm687, 0.0
  %1318 = vst.msk [vmem:[#allocation2 + $0x2b0] sm:$0x3] %vm1233, 0.0
  %1319 = vst.msk [vmem:[#allocation2 + $0x2b8] sm:$0xff] %vm687, 0.0
  %1320 = vst.msk [vmem:[#allocation2 + $0x2c0] sm:$0xff] %vm687, 0.0
  %1321 = vst.msk [vmem:[#allocation2 + $0x2c8] sm:$0x3] %vm1233, 0.0
  %1322 = vst.msk [vmem:[#allocation2 + $0x2d0] sm:$0xff] %vm687, 0.0
  %1323 = vst.msk [vmem:[#allocation2 + $0x2d8] sm:$0xff] %vm687, 0.0
  %1324 = vst.msk [vmem:[#allocation2 + $0x2e0] sm:$0x3] %vm1233, 0.0
  %1325 = vst.msk [vmem:[#allocation2 + $0x2e8] sm:$0xff] %vm687, 0.0
  %1326 = vst.msk [vmem:[#allocation2 + $0x2f0] sm:$0xff] %vm687, 0.0
  %1327 = vst.msk [vmem:[#allocation2 + $0x2f8] sm:$0x3] %vm1233, 0.0
  %1328 = vst.msk [vmem:[#allocation2 + $0x300] sm:$0xff] %vm687, 0.0
  %1329 = vst.msk [vmem:[#allocation2 + $0x308] sm:$0xff] %vm687, 0.0
  %1330 = vst.msk [vmem:[#allocation2 + $0x310] sm:$0x3] %vm1233, 0.0
  %1331 = vst.msk [vmem:[#allocation2 + $0x318] sm:$0xff] %vm687, 0.0
  %1332 = vst.msk [vmem:[#allocation2 + $0x320] sm:$0xff] %vm687, 0.0
  %1333 = vst.msk [vmem:[#allocation2 + $0x328] sm:$0x3] %vm1233, 0.0
  %1334 = vst.msk [vmem:[#allocation2 + $0x330] sm:$0xff] %vm687, 0.0
  %1335 = vst.msk [vmem:[#allocation2 + $0x338] sm:$0xff] %vm687, 0.0
  %1336 = vst.msk [vmem:[#allocation2 + $0x340] sm:$0x3] %vm1233, 0.0
  %1337 = vst.msk [vmem:[#allocation2 + $0x348] sm:$0xff] %vm687, 0.0
  %1338 = vst.msk [vmem:[#allocation2 + $0x350] sm:$0xff] %vm687, 0.0
  %1339 = vst.msk [vmem:[#allocation2 + $0x358] sm:$0x3] %vm1233, 0.0
  %s1340 = scalar_lea.vmem [#allocation2], 24
  %1341 = vst.msk [vmem:[%s1340 + $0x1] sm:$0xff] %vm687, %v1167
  %1342 = vst.msk [vmem:[%s1340 + $0x9] sm:$0xff] %vm687, %v1168
  %1343 = vst.msk [vmem:[%s1340 + $0x19] sm:$0xff] %vm687, %v1169
  %1344 = vst.msk [vmem:[%s1340 + $0x21] sm:$0xff] %vm687, %v1170
  %1345 = vst.msk [vmem:[%s1340 + $0x31] sm:$0xff] %vm687, %v1171
  %1346 = vst.msk [vmem:[%s1340 + $0x39] sm:$0xff] %vm687, %v1172
  %1347 = vst.msk [vmem:[%s1340 + $0x49] sm:$0xff] %vm687, %v1173
  %1348 = vst.msk [vmem:[%s1340 + $0x51] sm:$0xff] %vm687, %v1174
  %1349 = vst.msk [vmem:[%s1340 + $0x61] sm:$0xff] %vm687, %v1175
  %1350 = vst.msk [vmem:[%s1340 + $0x69] sm:$0xff] %vm687, %v1176
  %1351 = vst.msk [vmem:[%s1340 + $0x79] sm:$0xff] %vm687, %v1177
  %1352 = vst.msk [vmem:[%s1340 + $0x81] sm:$0xff] %vm687, %v1178
  %1353 = vst.msk [vmem:[%s1340 + $0x91] sm:$0xff] %vm687, %v1179
  %1354 = vst.msk [vmem:[%s1340 + $0x99] sm:$0xff] %vm687, %v1180
  %1355 = vst.msk [vmem:[%s1340 + $0xa9] sm:$0xff] %vm687, %v1181
  %1356 = vst.msk [vmem:[%s1340 + $0xb1] sm:$0xff] %vm687, %v1182
  %1357 = vst.msk [vmem:[%s1340 + $0xc1] sm:$0xff] %vm687, %v1183
  %1358 = vst.msk [vmem:[%s1340 + $0xc9] sm:$0xff] %vm687, %v1184
  %1359 = vst.msk [vmem:[%s1340 + $0xd9] sm:$0xff] %vm687, %v1185
  %1360 = vst.msk [vmem:[%s1340 + $0xe1] sm:$0xff] %vm687, %v1186
  %1361 = vst.msk [vmem:[%s1340 + $0xf1] sm:$0xff] %vm687, %v1187
  %1362 = vst.msk [vmem:[%s1340 + $0xf9] sm:$0xff] %vm687, %v1188
  %1363 = vst.msk [vmem:[%s1340 + $0x109] sm:$0xff] %vm687, %v1189
  %1364 = vst.msk [vmem:[%s1340 + $0x111] sm:$0xff] %vm687, %v1190
  %1365 = vst.msk [vmem:[%s1340 + $0x121] sm:$0xff] %vm687, %v1191
  %1366 = vst.msk [vmem:[%s1340 + $0x129] sm:$0xff] %vm687, %v1192
  %1367 = vst.msk [vmem:[%s1340 + $0x139] sm:$0xff] %vm687, %v1193
  %1368 = vst.msk [vmem:[%s1340 + $0x141] sm:$0xff] %vm687, %v1194
  %1369 = vst.msk [vmem:[%s1340 + $0x151] sm:$0xff] %vm687, %v1195
  %1370 = vst.msk [vmem:[%s1340 + $0x159] sm:$0xff] %vm687, %v1196
  %1371 = vst.msk [vmem:[%s1340 + $0x169] sm:$0xff] %vm687, %v1197
  %1372 = vst.msk [vmem:[%s1340 + $0x171] sm:$0xff] %vm687, %v1198
  %1373 = vst.msk [vmem:[%s1340 + $0x1b1] sm:$0xff] %vm687, %v1199
  %1374 = vst.msk [vmem:[%s1340 + $0x1b9] sm:$0xff] %vm687, %v1200
  %1375 = vst.msk [vmem:[%s1340 + $0x1c9] sm:$0xff] %vm687, %v1201
  %1376 = vst.msk [vmem:[%s1340 + $0x1d1] sm:$0xff] %vm687, %v1202
  %1377 = vst.msk [vmem:[%s1340 + $0x1e1] sm:$0xff] %vm687, %v1203
  %1378 = vst.msk [vmem:[%s1340 + $0x1e9] sm:$0xff] %vm687, %v1204
  %1379 = vst.msk [vmem:[%s1340 + $0x1f9] sm:$0xff] %vm687, %v1205
  %1380 = vst.msk [vmem:[%s1340 + $0x201] sm:$0xff] %vm687, %v1206
  %1381 = vst.msk [vmem:[%s1340 + $0x211] sm:$0xff] %vm687, %v1207
  %1382 = vst.msk [vmem:[%s1340 + $0x219] sm:$0xff] %vm687, %v1208
  %1383 = vst.msk [vmem:[%s1340 + $0x229] sm:$0xff] %vm687, %v1209
  %1384 = vst.msk [vmem:[%s1340 + $0x231] sm:$0xff] %vm687, %v1210
  %1385 = vst.msk [vmem:[%s1340 + $0x241] sm:$0xff] %vm687, %v1211
  %1386 = vst.msk [vmem:[%s1340 + $0x249] sm:$0xff] %vm687, %v1212
  %1387 = vst.msk [vmem:[%s1340 + $0x259] sm:$0xff] %vm687, %v1213
  %1388 = vst.msk [vmem:[%s1340 + $0x261] sm:$0xff] %vm687, %v1214
  %1389 = vst.msk [vmem:[%s1340 + $0x271] sm:$0xff] %vm687, %v1215
  %1390 = vst.msk [vmem:[%s1340 + $0x279] sm:$0xff] %vm687, %v1216
  %1391 = vst.msk [vmem:[%s1340 + $0x289] sm:$0xff] %vm687, %v1217
  %1392 = vst.msk [vmem:[%s1340 + $0x291] sm:$0xff] %vm687, %v1218
  %1393 = vst.msk [vmem:[%s1340 + $0x2a1] sm:$0xff] %vm687, %v1219
  %1394 = vst.msk [vmem:[%s1340 + $0x2a9] sm:$0xff] %vm687, %v1220
  %1395 = vst.msk [vmem:[%s1340 + $0x2b9] sm:$0xff] %vm687, %v1221
  %1396 = vst.msk [vmem:[%s1340 + $0x2c1] sm:$0xff] %vm687, %v1222
  %1397 = vst.msk [vmem:[%s1340 + $0x2d1] sm:$0xff] %vm687, %v1223
  %1398 = vst.msk [vmem:[%s1340 + $0x2d9] sm:$0xff] %vm687, %v1224
  %1399 = vst.msk [vmem:[%s1340 + $0x2e9] sm:$0xff] %vm687, %v1225
  %1400 = vst.msk [vmem:[%s1340 + $0x2f1] sm:$0xff] %vm687, %v1226
  %1401 = vst.msk [vmem:[%s1340 + $0x301] sm:$0xff] %vm687, %v1227
  %1402 = vst.msk [vmem:[%s1340 + $0x309] sm:$0xff] %vm687, %v1228
  %1403 = vst.msk [vmem:[%s1340 + $0x319] sm:$0xff] %vm687, %v1229
  %1404 = vst.msk [vmem:[%s1340 + $0x321] sm:$0xff] %vm687, %v1230
  %v1405 = vld [vmem:[#allocation2] sm:$0xff]
  %v1406 = vld [vmem:[#allocation2 + $0x8] sm:$0xff]
  %v1407 = vld [vmem:[#allocation2 + $0x10] sm:$0x3]
  %v1408 = vld [vmem:[#allocation2 + $0x18] sm:$0xff]
  %v1409 = vld [vmem:[#allocation2 + $0x20] sm:$0xff]
  %v1410 = vld [vmem:[#allocation2 + $0x28] sm:$0x3]
  %v1411 = vld [vmem:[#allocation2 + $0x30] sm:$0xff]
  %v1412 = vld [vmem:[#allocation2 + $0x38] sm:$0xff]
  %v1413 = vld [vmem:[#allocation2 + $0x40] sm:$0x3]
  %v1414 = vld [vmem:[#allocation2 + $0x48] sm:$0xff]
  %v1415 = vld [vmem:[#allocation2 + $0x50] sm:$0xff]
  %v1416 = vld [vmem:[#allocation2 + $0x58] sm:$0x3]
  %v1417 = vld [vmem:[#allocation2 + $0x60] sm:$0xff]
  %v1418 = vld [vmem:[#allocation2 + $0x68] sm:$0xff]
  %v1419 = vld [vmem:[#allocation2 + $0x70] sm:$0x3]
  %v1420 = vld [vmem:[#allocation2 + $0x78] sm:$0xff]
  %v1421 = vld [vmem:[#allocation2 + $0x80] sm:$0xff]
  %v1422 = vld [vmem:[#allocation2 + $0x88] sm:$0x3]
  %v1423 = vld [vmem:[#allocation2 + $0x90] sm:$0xff]
  %v1424 = vld [vmem:[#allocation2 + $0x98] sm:$0xff]
  %v1425 = vld [vmem:[#allocation2 + $0xa0] sm:$0x3]
  %v1426 = vld [vmem:[#allocation2 + $0xa8] sm:$0xff]
  %v1427 = vld [vmem:[#allocation2 + $0xb0] sm:$0xff]
  %v1428 = vld [vmem:[#allocation2 + $0xb8] sm:$0x3]
  %v1429 = vld [vmem:[#allocation2 + $0xc0] sm:$0xff]
  %v1430 = vld [vmem:[#allocation2 + $0xc8] sm:$0xff]
  %v1431 = vld [vmem:[#allocation2 + $0xd0] sm:$0x3]
  %v1432 = vld [vmem:[#allocation2 + $0xd8] sm:$0xff]
  %v1433 = vld [vmem:[#allocation2 + $0xe0] sm:$0xff]
  %v1434 = vld [vmem:[#allocation2 + $0xe8] sm:$0x3]
  %v1435 = vld [vmem:[#allocation2 + $0xf0] sm:$0xff]
  %v1436 = vld [vmem:[#allocation2 + $0xf8] sm:$0xff]
  %v1437 = vld [vmem:[#allocation2 + $0x100] sm:$0x3]
  %v1438 = vld [vmem:[#allocation2 + $0x108] sm:$0xff]
  %v1439 = vld [vmem:[#allocation2 + $0x110] sm:$0xff]
  %v1440 = vld [vmem:[#allocation2 + $0x118] sm:$0x3]
  %v1441 = vld [vmem:[#allocation2 + $0x120] sm:$0xff]
  %v1442 = vld [vmem:[#allocation2 + $0x128] sm:$0xff]
  %v1443 = vld [vmem:[#allocation2 + $0x130] sm:$0x3]
  %v1444 = vld [vmem:[#allocation2 + $0x138] sm:$0xff]
  %v1445 = vld [vmem:[#allocation2 + $0x140] sm:$0xff]
  %v1446 = vld [vmem:[#allocation2 + $0x148] sm:$0x3]
  %v1447 = vld [vmem:[#allocation2 + $0x150] sm:$0xff]
  %v1448 = vld [vmem:[#allocation2 + $0x158] sm:$0xff]
  %v1449 = vld [vmem:[#allocation2 + $0x160] sm:$0x3]
  %v1450 = vld [vmem:[#allocation2 + $0x168] sm:$0xff]
  %v1451 = vld [vmem:[#allocation2 + $0x170] sm:$0xff]
  %v1452 = vld [vmem:[#allocation2 + $0x178] sm:$0x3]
  %v1453 = vld [vmem:[#allocation2 + $0x180] sm:$0xff]
  %v1454 = vld [vmem:[#allocation2 + $0x188] sm:$0xff]
  %v1455 = vld [vmem:[#allocation2 + $0x190] sm:$0x3]
  %v1456 = vld [vmem:[#allocation2 + $0x198] sm:$0xff]
  %v1457 = vld [vmem:[#allocation2 + $0x1a0] sm:$0xff]
  %v1458 = vld [vmem:[#allocation2 + $0x1a8] sm:$0x3]
  %v1459 = vld [vmem:[#allocation2 + $0x1b0] sm:$0xff]
  %v1460 = vld [vmem:[#allocation2 + $0x1b8] sm:$0xff]
  %v1461 = vld [vmem:[#allocation2 + $0x1c0] sm:$0x3]
  %v1462 = vld [vmem:[#allocation2 + $0x1c8] sm:$0xff]
  %v1463 = vld [vmem:[#allocation2 + $0x1d0] sm:$0xff]
  %v1464 = vld [vmem:[#allocation2 + $0x1d8] sm:$0x3]
  %v1465 = vld [vmem:[#allocation2 + $0x1e0] sm:$0xff]
  %v1466 = vld [vmem:[#allocation2 + $0x1e8] sm:$0xff]
  %v1467 = vld [vmem:[#allocation2 + $0x1f0] sm:$0x3]
  %v1468 = vld [vmem:[#allocation2 + $0x1f8] sm:$0xff]
  %v1469 = vld [vmem:[#allocation2 + $0x200] sm:$0xff]
  %v1470 = vld [vmem:[#allocation2 + $0x208] sm:$0x3]
  %v1471 = vld [vmem:[#allocation2 + $0x210] sm:$0xff]
  %v1472 = vld [vmem:[#allocation2 + $0x218] sm:$0xff]
  %v1473 = vld [vmem:[#allocation2 + $0x220] sm:$0x3]
  %v1474 = vld [vmem:[#allocation2 + $0x228] sm:$0xff]
  %v1475 = vld [vmem:[#allocation2 + $0x230] sm:$0xff]
  %v1476 = vld [vmem:[#allocation2 + $0x238] sm:$0x3]
  %v1477 = vld [vmem:[#allocation2 + $0x240] sm:$0xff]
  %v1478 = vld [vmem:[#allocation2 + $0x248] sm:$0xff]
  %v1479 = vld [vmem:[#allocation2 + $0x250] sm:$0x3]
  %v1480 = vld [vmem:[#allocation2 + $0x258] sm:$0xff]
  %v1481 = vld [vmem:[#allocation2 + $0x260] sm:$0xff]
  %v1482 = vld [vmem:[#allocation2 + $0x268] sm:$0x3]
  %v1483 = vld [vmem:[#allocation2 + $0x270] sm:$0xff]
  %v1484 = vld [vmem:[#allocation2 + $0x278] sm:$0xff]
  %v1485 = vld [vmem:[#allocation2 + $0x280] sm:$0x3]
  %v1486 = vld [vmem:[#allocation2 + $0x288] sm:$0xff]
  %v1487 = vld [vmem:[#allocation2 + $0x290] sm:$0xff]
  %v1488 = vld [vmem:[#allocation2 + $0x298] sm:$0x3]
  %v1489 = vld [vmem:[#allocation2 + $0x2a0] sm:$0xff]
  %v1490 = vld [vmem:[#allocation2 + $0x2a8] sm:$0xff]
  %v1491 = vld [vmem:[#allocation2 + $0x2b0] sm:$0x3]
  %v1492 = vld [vmem:[#allocation2 + $0x2b8] sm:$0xff]
  %v1493 = vld [vmem:[#allocation2 + $0x2c0] sm:$0xff]
  %v1494 = vld [vmem:[#allocation2 + $0x2c8] sm:$0x3]
  %v1495 = vld [vmem:[#allocation2 + $0x2d0] sm:$0xff]
  %v1496 = vld [vmem:[#allocation2 + $0x2d8] sm:$0xff]
  %v1497 = vld [vmem:[#allocation2 + $0x2e0] sm:$0x3]
  %v1498 = vld [vmem:[#allocation2 + $0x2e8] sm:$0xff]
  %v1499 = vld [vmem:[#allocation2 + $0x2f0] sm:$0xff]
  %v1500 = vld [vmem:[#allocation2 + $0x2f8] sm:$0x3]
  %v1501 = vld [vmem:[#allocation2 + $0x300] sm:$0xff]
  %v1502 = vld [vmem:[#allocation2 + $0x308] sm:$0xff]
  %v1503 = vld [vmem:[#allocation2 + $0x310] sm:$0x3]
  %v1504 = vld [vmem:[#allocation2 + $0x318] sm:$0xff]
  %v1505 = vld [vmem:[#allocation2 + $0x320] sm:$0xff]
  %v1506 = vld [vmem:[#allocation2 + $0x328] sm:$0x3]
  %v1507 = vld [vmem:[#allocation2 + $0x330] sm:$0xff]
  %v1508 = vld [vmem:[#allocation2 + $0x338] sm:$0xff]
  %v1509 = vld [vmem:[#allocation2 + $0x340] sm:$0x3]
  %v1510 = vld [vmem:[#allocation2 + $0x348] sm:$0xff]
  %v1511 = vld [vmem:[#allocation2 + $0x350] sm:$0xff]
  %v1512 = vld [vmem:[#allocation2 + $0x358] sm:$0x3]
  %vm1609 = vcmask 1046528
  %v1610 = vrot.slane %v1405, 1
  %v1611 = vrot.slane %v1406, 1
  %v1612 = vsel %vm1609, %v1610, %v1611
  %v1613 = vrot.slane %v1407, 1
  %v1614 = vsel %vm1609, %v1611, %v1613
  %v1615 = vrot.slane %v1408, 1
  %v1616 = vrot.slane %v1409, 1
  %v1617 = vsel %vm1609, %v1615, %v1616
  %v1618 = vrot.slane %v1410, 1
  %v1619 = vsel %vm1609, %v1616, %v1618
  %v1620 = vrot.slane %v1411, 1
  %v1621 = vrot.slane %v1412, 1
  %v1622 = vsel %vm1609, %v1620, %v1621
  %v1623 = vrot.slane %v1413, 1
  %v1624 = vsel %vm1609, %v1621, %v1623
  %v1625 = vrot.slane %v1414, 1
  %v1626 = vrot.slane %v1415, 1
  %v1627 = vsel %vm1609, %v1625, %v1626
  %v1628 = vrot.slane %v1416, 1
  %v1629 = vsel %vm1609, %v1626, %v1628
  %v1630 = vrot.slane %v1417, 1
  %v1631 = vrot.slane %v1418, 1
  %v1632 = vsel %vm1609, %v1630, %v1631
  %v1633 = vrot.slane %v1419, 1
  %v1634 = vsel %vm1609, %v1631, %v1633
  %v1635 = vrot.slane %v1420, 1
  %v1636 = vrot.slane %v1421, 1
  %v1637 = vsel %vm1609, %v1635, %v1636
  %v1638 = vrot.slane %v1422, 1
  %v1639 = vsel %vm1609, %v1636, %v1638
  %v1640 = vrot.slane %v1423, 1
  %v1641 = vrot.slane %v1424, 1
  %v1642 = vsel %vm1609, %v1640, %v1641
  %v1643 = vrot.slane %v1425, 1
  %v1644 = vsel %vm1609, %v1641, %v1643
  %v1645 = vrot.slane %v1426, 1
  %v1646 = vrot.slane %v1427, 1
  %v1647 = vsel %vm1609, %v1645, %v1646
  %v1648 = vrot.slane %v1428, 1
  %v1649 = vsel %vm1609, %v1646, %v1648
  %v1650 = vrot.slane %v1429, 1
  %v1651 = vrot.slane %v1430, 1
  %v1652 = vsel %vm1609, %v1650, %v1651
  %v1653 = vrot.slane %v1431, 1
  %v1654 = vsel %vm1609, %v1651, %v1653
  %v1655 = vrot.slane %v1432, 1
  %v1656 = vrot.slane %v1433, 1
  %v1657 = vsel %vm1609, %v1655, %v1656
  %v1658 = vrot.slane %v1434, 1
  %v1659 = vsel %vm1609, %v1656, %v1658
  %v1660 = vrot.slane %v1435, 1
  %v1661 = vrot.slane %v1436, 1
  %v1662 = vsel %vm1609, %v1660, %v1661
  %v1663 = vrot.slane %v1437, 1
  %v1664 = vsel %vm1609, %v1661, %v1663
  %v1665 = vrot.slane %v1438, 1
  %v1666 = vrot.slane %v1439, 1
  %v1667 = vsel %vm1609, %v1665, %v1666
  %v1668 = vrot.slane %v1440, 1
  %v1669 = vsel %vm1609, %v1666, %v1668
  %v1670 = vrot.slane %v1441, 1
  %v1671 = vrot.slane %v1442, 1
  %v1672 = vsel %vm1609, %v1670, %v1671
  %v1673 = vrot.slane %v1443, 1
  %v1674 = vsel %vm1609, %v1671, %v1673
  %v1675 = vrot.slane %v1444, 1
  %v1676 = vrot.slane %v1445, 1
  %v1677 = vsel %vm1609, %v1675, %v1676
  %v1678 = vrot.slane %v1446, 1
  %v1679 = vsel %vm1609, %v1676, %v1678
  %v1680 = vrot.slane %v1447, 1
  %v1681 = vrot.slane %v1448, 1
  %v1682 = vsel %vm1609, %v1680, %v1681
  %v1683 = vrot.slane %v1449, 1
  %v1684 = vsel %vm1609, %v1681, %v1683
  %v1685 = vrot.slane %v1450, 1
  %v1686 = vrot.slane %v1451, 1
  %v1687 = vsel %vm1609, %v1685, %v1686
  %v1688 = vrot.slane %v1452, 1
  %v1689 = vsel %vm1609, %v1686, %v1688
  %v1690 = vrot.slane %v1459, 1
  %v1691 = vrot.slane %v1460, 1
  %v1692 = vsel %vm1609, %v1690, %v1691
  %v1693 = vrot.slane %v1461, 1
  %v1694 = vsel %vm1609, %v1691, %v1693
  %v1695 = vrot.slane %v1462, 1
  %v1696 = vrot.slane %v1463, 1
  %v1697 = vsel %vm1609, %v1695, %v1696
  %v1698 = vrot.slane %v1464, 1
  %v1699 = vsel %vm1609, %v1696, %v1698
  %v1700 = vrot.slane %v1465, 1
  %v1701 = vrot.slane %v1466, 1
  %v1702 = vsel %vm1609, %v1700, %v1701
  %v1703 = vrot.slane %v1467, 1
  %v1704 = vsel %vm1609, %v1701, %v1703
  %v1705 = vrot.slane %v1468, 1
  %v1706 = vrot.slane %v1469, 1
  %v1707 = vsel %vm1609, %v1705, %v1706
  %v1708 = vrot.slane %v1470, 1
  %v1709 = vsel %vm1609, %v1706, %v1708
  %v1710 = vrot.slane %v1471, 1
  %v1711 = vrot.slane %v1472, 1
  %v1712 = vsel %vm1609, %v1710, %v1711
  %v1713 = vrot.slane %v1473, 1
  %v1714 = vsel %vm1609, %v1711, %v1713
  %v1715 = vrot.slane %v1474, 1
  %v1716 = vrot.slane %v1475, 1
  %v1717 = vsel %vm1609, %v1715, %v1716
  %v1718 = vrot.slane %v1476, 1
  %v1719 = vsel %vm1609, %v1716, %v1718
  %v1720 = vrot.slane %v1477, 1
  %v1721 = vrot.slane %v1478, 1
  %v1722 = vsel %vm1609, %v1720, %v1721
  %v1723 = vrot.slane %v1479, 1
  %v1724 = vsel %vm1609, %v1721, %v1723
  %v1725 = vrot.slane %v1480, 1
  %v1726 = vrot.slane %v1481, 1
  %v1727 = vsel %vm1609, %v1725, %v1726
  %v1728 = vrot.slane %v1482, 1
  %v1729 = vsel %vm1609, %v1726, %v1728
  %v1730 = vrot.slane %v1483, 1
  %v1731 = vrot.slane %v1484, 1
  %v1732 = vsel %vm1609, %v1730, %v1731
  %v1733 = vrot.slane %v1485, 1
  %v1734 = vsel %vm1609, %v1731, %v1733
  %v1735 = vrot.slane %v1486, 1
  %v1736 = vrot.slane %v1487, 1
  %v1737 = vsel %vm1609, %v1735, %v1736
  %v1738 = vrot.slane %v1488, 1
  %v1739 = vsel %vm1609, %v1736, %v1738
  %v1740 = vrot.slane %v1489, 1
  %v1741 = vrot.slane %v1490, 1
  %v1742 = vsel %vm1609, %v1740, %v1741
  %v1743 = vrot.slane %v1491, 1
  %v1744 = vsel %vm1609, %v1741, %v1743
  %v1745 = vrot.slane %v1492, 1
  %v1746 = vrot.slane %v1493, 1
  %v1747 = vsel %vm1609, %v1745, %v1746
  %v1748 = vrot.slane %v1494, 1
  %v1749 = vsel %vm1609, %v1746, %v1748
  %v1750 = vrot.slane %v1495, 1
  %v1751 = vrot.slane %v1496, 1
  %v1752 = vsel %vm1609, %v1750, %v1751
  %v1753 = vrot.slane %v1497, 1
  %v1754 = vsel %vm1609, %v1751, %v1753
  %v1755 = vrot.slane %v1498, 1
  %v1756 = vrot.slane %v1499, 1
  %v1757 = vsel %vm1609, %v1755, %v1756
  %v1758 = vrot.slane %v1500, 1
  %v1759 = vsel %vm1609, %v1756, %v1758
  %v1760 = vrot.slane %v1501, 1
  %v1761 = vrot.slane %v1502, 1
  %v1762 = vsel %vm1609, %v1760, %v1761
  %v1763 = vrot.slane %v1503, 1
  %v1764 = vsel %vm1609, %v1761, %v1763
  %v1765 = vrot.slane %v1504, 1
  %v1766 = vrot.slane %v1505, 1
  %v1767 = vsel %vm1609, %v1765, %v1766
  %v1768 = vrot.slane %v1506, 1
  %v1769 = vsel %vm1609, %v1766, %v1768
  %1770 = vrot.lane.b32.xlu0 %v1612, 4
  %v1771 = vpop.permute.xlu0 %1770
  %1772 = vrot.lane.b32.xlu0 %v1614, 4
  %v1773 = vpop.permute.xlu0 %1772
  %1774 = vrot.lane.b32.xlu0 %v1617, 4
  %v1775 = vpop.permute.xlu0 %1774
  %1776 = vrot.lane.b32.xlu0 %v1619, 4
  %v1777 = vpop.permute.xlu0 %1776
  %1778 = vrot.lane.b32.xlu0 %v1622, 4
  %v1779 = vpop.permute.xlu0 %1778
  %1780 = vrot.lane.b32.xlu0 %v1624, 4
  %v1781 = vpop.permute.xlu0 %1780
  %1782 = vrot.lane.b32.xlu0 %v1627, 4
  %v1783 = vpop.permute.xlu0 %1782
  %1784 = vrot.lane.b32.xlu0 %v1629, 4
  %v1785 = vpop.permute.xlu0 %1784
  %1786 = vrot.lane.b32.xlu0 %v1632, 4
  %v1787 = vpop.permute.xlu0 %1786
  %1788 = vrot.lane.b32.xlu0 %v1634, 4
  %v1789 = vpop.permute.xlu0 %1788
  %1790 = vrot.lane.b32.xlu0 %v1637, 4
  %v1791 = vpop.permute.xlu0 %1790
  %1792 = vrot.lane.b32.xlu0 %v1639, 4
  %v1793 = vpop.permute.xlu0 %1792
  %1794 = vrot.lane.b32.xlu0 %v1642, 4
  %v1795 = vpop.permute.xlu0 %1794
  %1796 = vrot.lane.b32.xlu0 %v1644, 4
  %v1797 = vpop.permute.xlu0 %1796
  %1798 = vrot.lane.b32.xlu0 %v1647, 4
  %v1799 = vpop.permute.xlu0 %1798
  %1800 = vrot.lane.b32.xlu0 %v1649, 4
  %v1801 = vpop.permute.xlu0 %1800
  %1802 = vrot.lane.b32.xlu0 %v1652, 4
  %v1803 = vpop.permute.xlu0 %1802
  %1804 = vrot.lane.b32.xlu0 %v1654, 4
  %v1805 = vpop.permute.xlu0 %1804
  %1806 = vrot.lane.b32.xlu0 %v1657, 4
  %v1807 = vpop.permute.xlu0 %1806
  %1808 = vrot.lane.b32.xlu0 %v1659, 4
  %v1809 = vpop.permute.xlu0 %1808
  %1810 = vrot.lane.b32.xlu0 %v1662, 4
  %v1811 = vpop.permute.xlu0 %1810
  %1812 = vrot.lane.b32.xlu0 %v1664, 4
  %v1813 = vpop.permute.xlu0 %1812
  %1814 = vrot.lane.b32.xlu0 %v1667, 4
  %v1815 = vpop.permute.xlu0 %1814
  %1816 = vrot.lane.b32.xlu0 %v1669, 4
  %v1817 = vpop.permute.xlu0 %1816
  %1818 = vrot.lane.b32.xlu0 %v1672, 4
  %v1819 = vpop.permute.xlu0 %1818
  %1820 = vrot.lane.b32.xlu0 %v1674, 4
  %v1821 = vpop.permute.xlu0 %1820
  %1822 = vrot.lane.b32.xlu0 %v1677, 4
  %v1823 = vpop.permute.xlu0 %1822
  %1824 = vrot.lane.b32.xlu0 %v1679, 4
  %v1825 = vpop.permute.xlu0 %1824
  %1826 = vrot.lane.b32.xlu0 %v1682, 4
  %v1827 = vpop.permute.xlu0 %1826
  %1828 = vrot.lane.b32.xlu0 %v1684, 4
  %v1829 = vpop.permute.xlu0 %1828
  %1830 = vrot.lane.b32.xlu0 %v1687, 4
  %v1831 = vpop.permute.xlu0 %1830
  %1832 = vrot.lane.b32.xlu0 %v1689, 4
  %v1833 = vpop.permute.xlu0 %1832
  %1834 = vrot.lane.b32.xlu0 %v1692, 4
  %v1835 = vpop.permute.xlu0 %1834
  %1836 = vrot.lane.b32.xlu0 %v1694, 4
  %v1837 = vpop.permute.xlu0 %1836
  %1838 = vrot.lane.b32.xlu0 %v1697, 4
  %v1839 = vpop.permute.xlu0 %1838
  %1840 = vrot.lane.b32.xlu0 %v1699, 4
  %v1841 = vpop.permute.xlu0 %1840
  %1842 = vrot.lane.b32.xlu0 %v1702, 4
  %v1843 = vpop.permute.xlu0 %1842
  %1844 = vrot.lane.b32.xlu0 %v1704, 4
  %v1845 = vpop.permute.xlu0 %1844
  %1846 = vrot.lane.b32.xlu0 %v1707, 4
  %v1847 = vpop.permute.xlu0 %1846
  %1848 = vrot.lane.b32.xlu0 %v1709, 4
  %v1849 = vpop.permute.xlu0 %1848
  %1850 = vrot.lane.b32.xlu0 %v1712, 4
  %v1851 = vpop.permute.xlu0 %1850
  %1852 = vrot.lane.b32.xlu0 %v1714, 4
  %v1853 = vpop.permute.xlu0 %1852
  %1854 = vrot.lane.b32.xlu0 %v1717, 4
  %v1855 = vpop.permute.xlu0 %1854
  %1856 = vrot.lane.b32.xlu0 %v1719, 4
  %v1857 = vpop.permute.xlu0 %1856
  %1858 = vrot.lane.b32.xlu0 %v1722, 4
  %v1859 = vpop.permute.xlu0 %1858
  %1860 = vrot.lane.b32.xlu0 %v1724, 4
  %v1861 = vpop.permute.xlu0 %1860
  %1862 = vrot.lane.b32.xlu0 %v1727, 4
  %v1863 = vpop.permute.xlu0 %1862
  %1864 = vrot.lane.b32.xlu0 %v1729, 4
  %v1865 = vpop.permute.xlu0 %1864
  %1866 = vrot.lane.b32.xlu0 %v1732, 4
  %v1867 = vpop.permute.xlu0 %1866
  %1868 = vrot.lane.b32.xlu0 %v1734, 4
  %v1869 = vpop.permute.xlu0 %1868
  %1870 = vrot.lane.b32.xlu0 %v1737, 4
  %v1871 = vpop.permute.xlu0 %1870
  %1872 = vrot.lane.b32.xlu0 %v1739, 4
  %v1873 = vpop.permute.xlu0 %1872
  %1874 = vrot.lane.b32.xlu0 %v1742, 4
  %v1875 = vpop.permute.xlu0 %1874
  %1876 = vrot.lane.b32.xlu0 %v1744, 4
  %v1877 = vpop.permute.xlu0 %1876
  %1878 = vrot.lane.b32.xlu0 %v1747, 4
  %v1879 = vpop.permute.xlu0 %1878
  %1880 = vrot.lane.b32.xlu0 %v1749, 4
  %v1881 = vpop.permute.xlu0 %1880
  %1882 = vrot.lane.b32.xlu0 %v1752, 4
  %v1883 = vpop.permute.xlu0 %1882
  %1884 = vrot.lane.b32.xlu0 %v1754, 4
  %v1885 = vpop.permute.xlu0 %1884
  %1886 = vrot.lane.b32.xlu0 %v1757, 4
  %v1887 = vpop.permute.xlu0 %1886
  %1888 = vrot.lane.b32.xlu0 %v1759, 4
  %v1889 = vpop.permute.xlu0 %1888
  %1890 = vrot.lane.b32.xlu0 %v1762, 4
  %v1891 = vpop.permute.xlu0 %1890
  %1892 = vrot.lane.b32.xlu0 %v1764, 4
  %v1893 = vpop.permute.xlu0 %1892
  %1894 = vrot.lane.b32.xlu0 %v1767, 4
  %v1895 = vpop.permute.xlu0 %1894
  %1896 = vrot.lane.b32.xlu0 %v1769, 4
  %v1897 = vpop.permute.xlu0 %1896
  %vm1962 = vcmask 1045504
  %v1963 = vrot.slane %v1405, 2
  %v1964 = vrot.slane %v1406, 2
  %v1965 = vsel %vm1962, %v1963, %v1964
  %v1966 = vrot.slane %v1407, 2
  %v1967 = vsel %vm1962, %v1964, %v1966
  %v1968 = vrot.slane %v1408, 2
  %v1969 = vrot.slane %v1409, 2
  %v1970 = vsel %vm1962, %v1968, %v1969
  %v1971 = vrot.slane %v1410, 2
  %v1972 = vsel %vm1962, %v1969, %v1971
  %v1973 = vrot.slane %v1411, 2
  %v1974 = vrot.slane %v1412, 2
  %v1975 = vsel %vm1962, %v1973, %v1974
  %v1976 = vrot.slane %v1413, 2
  %v1977 = vsel %vm1962, %v1974, %v1976
  %v1978 = vrot.slane %v1414, 2
  %v1979 = vrot.slane %v1415, 2
  %v1980 = vsel %vm1962, %v1978, %v1979
  %v1981 = vrot.slane %v1416, 2
  %v1982 = vsel %vm1962, %v1979, %v1981
  %v1983 = vrot.slane %v1417, 2
  %v1984 = vrot.slane %v1418, 2
  %v1985 = vsel %vm1962, %v1983, %v1984
  %v1986 = vrot.slane %v1419, 2
  %v1987 = vsel %vm1962, %v1984, %v1986
  %v1988 = vrot.slane %v1420, 2
  %v1989 = vrot.slane %v1421, 2
  %v1990 = vsel %vm1962, %v1988, %v1989
  %v1991 = vrot.slane %v1422, 2
  %v1992 = vsel %vm1962, %v1989, %v1991
  %v1993 = vrot.slane %v1423, 2
  %v1994 = vrot.slane %v1424, 2
  %v1995 = vsel %vm1962, %v1993, %v1994
  %v1996 = vrot.slane %v1425, 2
  %v1997 = vsel %vm1962, %v1994, %v1996
  %v1998 = vrot.slane %v1426, 2
  %v1999 = vrot.slane %v1427, 2
  %v2000 = vsel %vm1962, %v1998, %v1999
  %v2001 = vrot.slane %v1428, 2
  %v2002 = vsel %vm1962, %v1999, %v2001
  %v2003 = vrot.slane %v1429, 2
  %v2004 = vrot.slane %v1430, 2
  %v2005 = vsel %vm1962, %v2003, %v2004
  %v2006 = vrot.slane %v1431, 2
  %v2007 = vsel %vm1962, %v2004, %v2006
  %v2008 = vrot.slane %v1432, 2
  %v2009 = vrot.slane %v1433, 2
  %v2010 = vsel %vm1962, %v2008, %v2009
  %v2011 = vrot.slane %v1434, 2
  %v2012 = vsel %vm1962, %v2009, %v2011
  %v2013 = vrot.slane %v1435, 2
  %v2014 = vrot.slane %v1436, 2
  %v2015 = vsel %vm1962, %v2013, %v2014
  %v2016 = vrot.slane %v1437, 2
  %v2017 = vsel %vm1962, %v2014, %v2016
  %v2018 = vrot.slane %v1438, 2
  %v2019 = vrot.slane %v1439, 2
  %v2020 = vsel %vm1962, %v2018, %v2019
  %v2021 = vrot.slane %v1440, 2
  %v2022 = vsel %vm1962, %v2019, %v2021
  %v2023 = vrot.slane %v1441, 2
  %v2024 = vrot.slane %v1442, 2
  %v2025 = vsel %vm1962, %v2023, %v2024
  %v2026 = vrot.slane %v1443, 2
  %v2027 = vsel %vm1962, %v2024, %v2026
  %v2028 = vrot.slane %v1444, 2
  %v2029 = vrot.slane %v1445, 2
  %v2030 = vsel %vm1962, %v2028, %v2029
  %v2031 = vrot.slane %v1446, 2
  %v2032 = vsel %vm1962, %v2029, %v2031
  %v2033 = vrot.slane %v1447, 2
  %v2034 = vrot.slane %v1448, 2
  %v2035 = vsel %vm1962, %v2033, %v2034
  %v2036 = vrot.slane %v1449, 2
  %v2037 = vsel %vm1962, %v2034, %v2036
  %v2038 = vrot.slane %v1450, 2
  %v2039 = vrot.slane %v1451, 2
  %v2040 = vsel %vm1962, %v2038, %v2039
  %v2041 = vrot.slane %v1452, 2
  %v2042 = vsel %vm1962, %v2039, %v2041
  %v2043 = vrot.slane %v1459, 2
  %v2044 = vrot.slane %v1460, 2
  %v2045 = vsel %vm1962, %v2043, %v2044
  %v2046 = vrot.slane %v1461, 2
  %v2047 = vsel %vm1962, %v2044, %v2046
  %v2048 = vrot.slane %v1462, 2
  %v2049 = vrot.slane %v1463, 2
  %v2050 = vsel %vm1962, %v2048, %v2049
  %v2051 = vrot.slane %v1464, 2
  %v2052 = vsel %vm1962, %v2049, %v2051
  %v2053 = vrot.slane %v1465, 2
  %v2054 = vrot.slane %v1466, 2
  %v2055 = vsel %vm1962, %v2053, %v2054
  %v2056 = vrot.slane %v1467, 2
  %v2057 = vsel %vm1962, %v2054, %v2056
  %v2058 = vrot.slane %v1468, 2
  %v2059 = vrot.slane %v1469, 2
  %v2060 = vsel %vm1962, %v2058, %v2059
  %v2061 = vrot.slane %v1470, 2
  %v2062 = vsel %vm1962, %v2059, %v2061
  %v2063 = vrot.slane %v1471, 2
  %v2064 = vrot.slane %v1472, 2
  %v2065 = vsel %vm1962, %v2063, %v2064
  %v2066 = vrot.slane %v1473, 2
  %v2067 = vsel %vm1962, %v2064, %v2066
  %v2068 = vrot.slane %v1474, 2
  %v2069 = vrot.slane %v1475, 2
  %v2070 = vsel %vm1962, %v2068, %v2069
  %v2071 = vrot.slane %v1476, 2
  %v2072 = vsel %vm1962, %v2069, %v2071
  %v2073 = vrot.slane %v1477, 2
  %v2074 = vrot.slane %v1478, 2
  %v2075 = vsel %vm1962, %v2073, %v2074
  %v2076 = vrot.slane %v1479, 2
  %v2077 = vsel %vm1962, %v2074, %v2076
  %v2078 = vrot.slane %v1480, 2
  %v2079 = vrot.slane %v1481, 2
  %v2080 = vsel %vm1962, %v2078, %v2079
  %v2081 = vrot.slane %v1482, 2
  %v2082 = vsel %vm1962, %v2079, %v2081
  %v2083 = vrot.slane %v1483, 2
  %v2084 = vrot.slane %v1484, 2
  %v2085 = vsel %vm1962, %v2083, %v2084
  %v2086 = vrot.slane %v1485, 2
  %v2087 = vsel %vm1962, %v2084, %v2086
  %v2088 = vrot.slane %v1486, 2
  %v2089 = vrot.slane %v1487, 2
  %v2090 = vsel %vm1962, %v2088, %v2089
  %v2091 = vrot.slane %v1488, 2
  %v2092 = vsel %vm1962, %v2089, %v2091
  %v2093 = vrot.slane %v1489, 2
  %v2094 = vrot.slane %v1490, 2
  %v2095 = vsel %vm1962, %v2093, %v2094
  %v2096 = vrot.slane %v1491, 2
  %v2097 = vsel %vm1962, %v2094, %v2096
  %v2098 = vrot.slane %v1492, 2
  %v2099 = vrot.slane %v1493, 2
  %v2100 = vsel %vm1962, %v2098, %v2099
  %v2101 = vrot.slane %v1494, 2
  %v2102 = vsel %vm1962, %v2099, %v2101
  %v2103 = vrot.slane %v1495, 2
  %v2104 = vrot.slane %v1496, 2
  %v2105 = vsel %vm1962, %v2103, %v2104
  %v2106 = vrot.slane %v1497, 2
  %v2107 = vsel %vm1962, %v2104, %v2106
  %v2108 = vrot.slane %v1498, 2
  %v2109 = vrot.slane %v1499, 2
  %v2110 = vsel %vm1962, %v2108, %v2109
  %v2111 = vrot.slane %v1500, 2
  %v2112 = vsel %vm1962, %v2109, %v2111
  %v2113 = vrot.slane %v1501, 2
  %v2114 = vrot.slane %v1502, 2
  %v2115 = vsel %vm1962, %v2113, %v2114
  %v2116 = vrot.slane %v1503, 2
  %v2117 = vsel %vm1962, %v2114, %v2116
  %v2118 = vrot.slane %v1504, 2
  %v2119 = vrot.slane %v1505, 2
  %v2120 = vsel %vm1962, %v2118, %v2119
  %v2121 = vrot.slane %v1506, 2
  %v2122 = vsel %vm1962, %v2119, %v2121
  %2123 = vrot.lane.b32.xlu0 %v1965, 8
  %v2124 = vpop.permute.xlu0 %2123
  %2125 = vrot.lane.b32.xlu0 %v1967, 8
  %v2126 = vpop.permute.xlu0 %2125
  %2127 = vrot.lane.b32.xlu0 %v1970, 8
  %v2128 = vpop.permute.xlu0 %2127
  %2129 = vrot.lane.b32.xlu0 %v1972, 8
  %v2130 = vpop.permute.xlu0 %2129
  %2131 = vrot.lane.b32.xlu0 %v1975, 8
  %v2132 = vpop.permute.xlu0 %2131
  %2133 = vrot.lane.b32.xlu0 %v1977, 8
  %v2134 = vpop.permute.xlu0 %2133
  %2135 = vrot.lane.b32.xlu0 %v1980, 8
  %v2136 = vpop.permute.xlu0 %2135
  %2137 = vrot.lane.b32.xlu0 %v1982, 8
  %v2138 = vpop.permute.xlu0 %2137
  %2139 = vrot.lane.b32.xlu0 %v1985, 8
  %v2140 = vpop.permute.xlu0 %2139
  %2141 = vrot.lane.b32.xlu0 %v1987, 8
  %v2142 = vpop.permute.xlu0 %2141
  %2143 = vrot.lane.b32.xlu0 %v1990, 8
  %v2144 = vpop.permute.xlu0 %2143
  %2145 = vrot.lane.b32.xlu0 %v1992, 8
  %v2146 = vpop.permute.xlu0 %2145
  %2147 = vrot.lane.b32.xlu0 %v1995, 8
  %v2148 = vpop.permute.xlu0 %2147
  %2149 = vrot.lane.b32.xlu0 %v1997, 8
  %v2150 = vpop.permute.xlu0 %2149
  %2151 = vrot.lane.b32.xlu0 %v2000, 8
  %v2152 = vpop.permute.xlu0 %2151
  %2153 = vrot.lane.b32.xlu0 %v2002, 8
  %v2154 = vpop.permute.xlu0 %2153
  %2155 = vrot.lane.b32.xlu0 %v2005, 8
  %v2156 = vpop.permute.xlu0 %2155
  %2157 = vrot.lane.b32.xlu0 %v2007, 8
  %v2158 = vpop.permute.xlu0 %2157
  %2159 = vrot.lane.b32.xlu0 %v2010, 8
  %v2160 = vpop.permute.xlu0 %2159
  %2161 = vrot.lane.b32.xlu0 %v2012, 8
  %v2162 = vpop.permute.xlu0 %2161
  %2163 = vrot.lane.b32.xlu0 %v2015, 8
  %v2164 = vpop.permute.xlu0 %2163
  %2165 = vrot.lane.b32.xlu0 %v2017, 8
  %v2166 = vpop.permute.xlu0 %2165
  %2167 = vrot.lane.b32.xlu0 %v2020, 8
  %v2168 = vpop.permute.xlu0 %2167
  %2169 = vrot.lane.b32.xlu0 %v2022, 8
  %v2170 = vpop.permute.xlu0 %2169
  %2171 = vrot.lane.b32.xlu0 %v2025, 8
  %v2172 = vpop.permute.xlu0 %2171
  %2173 = vrot.lane.b32.xlu0 %v2027, 8
  %v2174 = vpop.permute.xlu0 %2173
  %2175 = vrot.lane.b32.xlu0 %v2030, 8
  %v2176 = vpop.permute.xlu0 %2175
  %2177 = vrot.lane.b32.xlu0 %v2032, 8
  %v2178 = vpop.permute.xlu0 %2177
  %2179 = vrot.lane.b32.xlu0 %v2035, 8
  %v2180 = vpop.permute.xlu0 %2179
  %2181 = vrot.lane.b32.xlu0 %v2037, 8
  %v2182 = vpop.permute.xlu0 %2181
  %2183 = vrot.lane.b32.xlu0 %v2040, 8
  %v2184 = vpop.permute.xlu0 %2183
  %2185 = vrot.lane.b32.xlu0 %v2042, 8
  %v2186 = vpop.permute.xlu0 %2185
  %2187 = vrot.lane.b32.xlu0 %v2045, 8
  %v2188 = vpop.permute.xlu0 %2187
  %2189 = vrot.lane.b32.xlu0 %v2047, 8
  %v2190 = vpop.permute.xlu0 %2189
  %2191 = vrot.lane.b32.xlu0 %v2050, 8
  %v2192 = vpop.permute.xlu0 %2191
  %2193 = vrot.lane.b32.xlu0 %v2052, 8
  %v2194 = vpop.permute.xlu0 %2193
  %2195 = vrot.lane.b32.xlu0 %v2055, 8
  %v2196 = vpop.permute.xlu0 %2195
  %2197 = vrot.lane.b32.xlu0 %v2057, 8
  %v2198 = vpop.permute.xlu0 %2197
  %2199 = vrot.lane.b32.xlu0 %v2060, 8
  %v2200 = vpop.permute.xlu0 %2199
  %2201 = vrot.lane.b32.xlu0 %v2062, 8
  %v2202 = vpop.permute.xlu0 %2201
  %2203 = vrot.lane.b32.xlu0 %v2065, 8
  %v2204 = vpop.permute.xlu0 %2203
  %2205 = vrot.lane.b32.xlu0 %v2067, 8
  %v2206 = vpop.permute.xlu0 %2205
  %2207 = vrot.lane.b32.xlu0 %v2070, 8
  %v2208 = vpop.permute.xlu0 %2207
  %2209 = vrot.lane.b32.xlu0 %v2072, 8
  %v2210 = vpop.permute.xlu0 %2209
  %2211 = vrot.lane.b32.xlu0 %v2075, 8
  %v2212 = vpop.permute.xlu0 %2211
  %2213 = vrot.lane.b32.xlu0 %v2077, 8
  %v2214 = vpop.permute.xlu0 %2213
  %2215 = vrot.lane.b32.xlu0 %v2080, 8
  %v2216 = vpop.permute.xlu0 %2215
  %2217 = vrot.lane.b32.xlu0 %v2082, 8
  %v2218 = vpop.permute.xlu0 %2217
  %2219 = vrot.lane.b32.xlu0 %v2085, 8
  %v2220 = vpop.permute.xlu0 %2219
  %2221 = vrot.lane.b32.xlu0 %v2087, 8
  %v2222 = vpop.permute.xlu0 %2221
  %2223 = vrot.lane.b32.xlu0 %v2090, 8
  %v2224 = vpop.permute.xlu0 %2223
  %2225 = vrot.lane.b32.xlu0 %v2092, 8
  %v2226 = vpop.permute.xlu0 %2225
  %2227 = vrot.lane.b32.xlu0 %v2095, 8
  %v2228 = vpop.permute.xlu0 %2227
  %2229 = vrot.lane.b32.xlu0 %v2097, 8
  %v2230 = vpop.permute.xlu0 %2229
  %2231 = vrot.lane.b32.xlu0 %v2100, 8
  %v2232 = vpop.permute.xlu0 %2231
  %2233 = vrot.lane.b32.xlu0 %v2102, 8
  %v2234 = vpop.permute.xlu0 %2233
  %2235 = vrot.lane.b32.xlu0 %v2105, 8
  %v2236 = vpop.permute.xlu0 %2235
  %2237 = vrot.lane.b32.xlu0 %v2107, 8
  %v2238 = vpop.permute.xlu0 %2237
  %2239 = vrot.lane.b32.xlu0 %v2110, 8
  %v2240 = vpop.permute.xlu0 %2239
  %2241 = vrot.lane.b32.xlu0 %v2112, 8
  %v2242 = vpop.permute.xlu0 %2241
  %2243 = vrot.lane.b32.xlu0 %v2115, 8
  %v2244 = vpop.permute.xlu0 %2243
  %2245 = vrot.lane.b32.xlu0 %v2117, 8
  %v2246 = vpop.permute.xlu0 %2245
  %2247 = vrot.lane.b32.xlu0 %v2120, 8
  %v2248 = vpop.permute.xlu0 %2247
  %2249 = vrot.lane.b32.xlu0 %v2122, 8
  %v2250 = vpop.permute.xlu0 %2249
  %2319 = vrot.lane.b32.xlu0 %v1408, 12
  %v2320 = vpop.permute.xlu0 %2319
  %2321 = vrot.lane.b32.xlu0 %v1409, 12
  %v2322 = vpop.permute.xlu0 %2321
  %2323 = vrot.lane.b32.xlu0 %v1411, 12
  %v2324 = vpop.permute.xlu0 %2323
  %2325 = vrot.lane.b32.xlu0 %v1412, 12
  %v2326 = vpop.permute.xlu0 %2325
  %2327 = vrot.lane.b32.xlu0 %v1414, 12
  %v2328 = vpop.permute.xlu0 %2327
  %2329 = vrot.lane.b32.xlu0 %v1415, 12
  %v2330 = vpop.permute.xlu0 %2329
  %2331 = vrot.lane.b32.xlu0 %v1417, 12
  %v2332 = vpop.permute.xlu0 %2331
  %2333 = vrot.lane.b32.xlu0 %v1418, 12
  %v2334 = vpop.permute.xlu0 %2333
  %2335 = vrot.lane.b32.xlu0 %v1420, 12
  %v2336 = vpop.permute.xlu0 %2335
  %2337 = vrot.lane.b32.xlu0 %v1421, 12
  %v2338 = vpop.permute.xlu0 %2337
  %2339 = vrot.lane.b32.xlu0 %v1423, 12
  %v2340 = vpop.permute.xlu0 %2339
  %2341 = vrot.lane.b32.xlu0 %v1424, 12
  %v2342 = vpop.permute.xlu0 %2341
  %2343 = vrot.lane.b32.xlu0 %v1426, 12
  %v2344 = vpop.permute.xlu0 %2343
  %2345 = vrot.lane.b32.xlu0 %v1427, 12
  %v2346 = vpop.permute.xlu0 %2345
  %2347 = vrot.lane.b32.xlu0 %v1429, 12
  %v2348 = vpop.permute.xlu0 %2347
  %2349 = vrot.lane.b32.xlu0 %v1430, 12
  %v2350 = vpop.permute.xlu0 %2349
  %2351 = vrot.lane.b32.xlu0 %v1432, 12
  %v2352 = vpop.permute.xlu0 %2351
  %2353 = vrot.lane.b32.xlu0 %v1433, 12
  %v2354 = vpop.permute.xlu0 %2353
  %2355 = vrot.lane.b32.xlu0 %v1435, 12
  %v2356 = vpop.permute.xlu0 %2355
  %2357 = vrot.lane.b32.xlu0 %v1436, 12
  %v2358 = vpop.permute.xlu0 %2357
  %2359 = vrot.lane.b32.xlu0 %v1438, 12
  %v2360 = vpop.permute.xlu0 %2359
  %2361 = vrot.lane.b32.xlu0 %v1439, 12
  %v2362 = vpop.permute.xlu0 %2361
  %2363 = vrot.lane.b32.xlu0 %v1441, 12
  %v2364 = vpop.permute.xlu0 %2363
  %2365 = vrot.lane.b32.xlu0 %v1442, 12
  %v2366 = vpop.permute.xlu0 %2365
  %2367 = vrot.lane.b32.xlu0 %v1444, 12
  %v2368 = vpop.permute.xlu0 %2367
  %2369 = vrot.lane.b32.xlu0 %v1445, 12
  %v2370 = vpop.permute.xlu0 %2369
  %2371 = vrot.lane.b32.xlu0 %v1447, 12
  %v2372 = vpop.permute.xlu0 %2371
  %2373 = vrot.lane.b32.xlu0 %v1448, 12
  %v2374 = vpop.permute.xlu0 %2373
  %2375 = vrot.lane.b32.xlu0 %v1450, 12
  %v2376 = vpop.permute.xlu0 %2375
  %2377 = vrot.lane.b32.xlu0 %v1451, 12
  %v2378 = vpop.permute.xlu0 %2377
  %2379 = vrot.lane.b32.xlu0 %v1453, 12
  %v2380 = vpop.permute.xlu0 %2379
  %2381 = vrot.lane.b32.xlu0 %v1454, 12
  %v2382 = vpop.permute.xlu0 %2381
  %2383 = vrot.lane.b32.xlu0 %v1462, 12
  %v2384 = vpop.permute.xlu0 %2383
  %2385 = vrot.lane.b32.xlu0 %v1463, 12
  %v2386 = vpop.permute.xlu0 %2385
  %2387 = vrot.lane.b32.xlu0 %v1465, 12
  %v2388 = vpop.permute.xlu0 %2387
  %2389 = vrot.lane.b32.xlu0 %v1466, 12
  %v2390 = vpop.permute.xlu0 %2389
  %2391 = vrot.lane.b32.xlu0 %v1468, 12
  %v2392 = vpop.permute.xlu0 %2391
  %2393 = vrot.lane.b32.xlu0 %v1469, 12
  %v2394 = vpop.permute.xlu0 %2393
  %2395 = vrot.lane.b32.xlu0 %v1471, 12
  %v2396 = vpop.permute.xlu0 %2395
  %2397 = vrot.lane.b32.xlu0 %v1472, 12
  %v2398 = vpop.permute.xlu0 %2397
  %2399 = vrot.lane.b32.xlu0 %v1474, 12
  %v2400 = vpop.permute.xlu0 %2399
  %2401 = vrot.lane.b32.xlu0 %v1475, 12
  %v2402 = vpop.permute.xlu0 %2401
  %2403 = vrot.lane.b32.xlu0 %v1477, 12
  %v2404 = vpop.permute.xlu0 %2403
  %2405 = vrot.lane.b32.xlu0 %v1478, 12
  %v2406 = vpop.permute.xlu0 %2405
  %2407 = vrot.lane.b32.xlu0 %v1480, 12
  %v2408 = vpop.permute.xlu0 %2407
  %2409 = vrot.lane.b32.xlu0 %v1481, 12
  %v2410 = vpop.permute.xlu0 %2409
  %2411 = vrot.lane.b32.xlu0 %v1483, 12
  %v2412 = vpop.permute.xlu0 %2411
  %2413 = vrot.lane.b32.xlu0 %v1484, 12
  %v2414 = vpop.permute.xlu0 %2413
  %2415 = vrot.lane.b32.xlu0 %v1486, 12
  %v2416 = vpop.permute.xlu0 %2415
  %2417 = vrot.lane.b32.xlu0 %v1487, 12
  %v2418 = vpop.permute.xlu0 %2417
  %2419 = vrot.lane.b32.xlu0 %v1489, 12
  %v2420 = vpop.permute.xlu0 %2419
  %2421 = vrot.lane.b32.xlu0 %v1490, 12
  %v2422 = vpop.permute.xlu0 %2421
  %2423 = vrot.lane.b32.xlu0 %v1492, 12
  %v2424 = vpop.permute.xlu0 %2423
  %2425 = vrot.lane.b32.xlu0 %v1493, 12
  %v2426 = vpop.permute.xlu0 %2425
  %2427 = vrot.lane.b32.xlu0 %v1495, 12
  %v2428 = vpop.permute.xlu0 %2427
  %2429 = vrot.lane.b32.xlu0 %v1496, 12
  %v2430 = vpop.permute.xlu0 %2429
  %2431 = vrot.lane.b32.xlu0 %v1498, 12
  %v2432 = vpop.permute.xlu0 %2431
  %2433 = vrot.lane.b32.xlu0 %v1499, 12
  %v2434 = vpop.permute.xlu0 %2433
  %2435 = vrot.lane.b32.xlu0 %v1501, 12
  %v2436 = vpop.permute.xlu0 %2435
  %2437 = vrot.lane.b32.xlu0 %v1502, 12
  %v2438 = vpop.permute.xlu0 %2437
  %2439 = vrot.lane.b32.xlu0 %v1504, 12
  %v2440 = vpop.permute.xlu0 %2439
  %2441 = vrot.lane.b32.xlu0 %v1505, 12
  %v2442 = vpop.permute.xlu0 %2441
  %2443 = vrot.lane.b32.xlu0 %v1507, 12
  %v2444 = vpop.permute.xlu0 %2443
  %2445 = vrot.lane.b32.xlu0 %v1508, 12
  %v2446 = vpop.permute.xlu0 %2445
  %v2513 = vrot.slane %v1453, 1
  %v2514 = vrot.slane %v1454, 1
  %v2515 = vsel %vm1609, %v2513, %v2514
  %v2516 = vrot.slane %v1455, 1
  %v2517 = vsel %vm1609, %v2514, %v2516
  %v2518 = vrot.slane %v1507, 1
  %v2519 = vrot.slane %v1508, 1
  %v2520 = vsel %vm1609, %v2518, %v2519
  %v2521 = vrot.slane %v1509, 1
  %v2522 = vsel %vm1609, %v2519, %v2521
  %2523 = vrot.lane.b32.xlu0 %v1617, 16
  %v2524 = vpop.permute.xlu0 %2523
  %2525 = vrot.lane.b32.xlu0 %v1619, 16
  %v2526 = vpop.permute.xlu0 %2525
  %2527 = vrot.lane.b32.xlu0 %v1622, 16
  %v2528 = vpop.permute.xlu0 %2527
  %2529 = vrot.lane.b32.xlu0 %v1624, 16
  %v2530 = vpop.permute.xlu0 %2529
  %2531 = vrot.lane.b32.xlu0 %v1627, 16
  %v2532 = vpop.permute.xlu0 %2531
  %2533 = vrot.lane.b32.xlu0 %v1629, 16
  %v2534 = vpop.permute.xlu0 %2533
  %2535 = vrot.lane.b32.xlu0 %v1632, 16
  %v2536 = vpop.permute.xlu0 %2535
  %2537 = vrot.lane.b32.xlu0 %v1634, 16
  %v2538 = vpop.permute.xlu0 %2537
  %2539 = vrot.lane.b32.xlu0 %v1637, 16
  %v2540 = vpop.permute.xlu0 %2539
  %2541 = vrot.lane.b32.xlu0 %v1639, 16
  %v2542 = vpop.permute.xlu0 %2541
  %2543 = vrot.lane.b32.xlu0 %v1642, 16
  %v2544 = vpop.permute.xlu0 %2543
  %2545 = vrot.lane.b32.xlu0 %v1644, 16
  %v2546 = vpop.permute.xlu0 %2545
  %2547 = vrot.lane.b32.xlu0 %v1647, 16
  %v2548 = vpop.permute.xlu0 %2547
  %2549 = vrot.lane.b32.xlu0 %v1649, 16
  %v2550 = vpop.permute.xlu0 %2549
  %2551 = vrot.lane.b32.xlu0 %v1652, 16
  %v2552 = vpop.permute.xlu0 %2551
  %2553 = vrot.lane.b32.xlu0 %v1654, 16
  %v2554 = vpop.permute.xlu0 %2553
  %2555 = vrot.lane.b32.xlu0 %v1657, 16
  %v2556 = vpop.permute.xlu0 %2555
  %2557 = vrot.lane.b32.xlu0 %v1659, 16
  %v2558 = vpop.permute.xlu0 %2557
  %2559 = vrot.lane.b32.xlu0 %v1662, 16
  %v2560 = vpop.permute.xlu0 %2559
  %2561 = vrot.lane.b32.xlu0 %v1664, 16
  %v2562 = vpop.permute.xlu0 %2561
  %2563 = vrot.lane.b32.xlu0 %v1667, 16
  %v2564 = vpop.permute.xlu0 %2563
  %2565 = vrot.lane.b32.xlu0 %v1669, 16
  %v2566 = vpop.permute.xlu0 %2565
  %2567 = vrot.lane.b32.xlu0 %v1672, 16
  %v2568 = vpop.permute.xlu0 %2567
  %2569 = vrot.lane.b32.xlu0 %v1674, 16
  %v2570 = vpop.permute.xlu0 %2569
  %2571 = vrot.lane.b32.xlu0 %v1677, 16
  %v2572 = vpop.permute.xlu0 %2571
  %2573 = vrot.lane.b32.xlu0 %v1679, 16
  %v2574 = vpop.permute.xlu0 %2573
  %2575 = vrot.lane.b32.xlu0 %v1682, 16
  %v2576 = vpop.permute.xlu0 %2575
  %2577 = vrot.lane.b32.xlu0 %v1684, 16
  %v2578 = vpop.permute.xlu0 %2577
  %2579 = vrot.lane.b32.xlu0 %v1687, 16
  %v2580 = vpop.permute.xlu0 %2579
  %2581 = vrot.lane.b32.xlu0 %v1689, 16
  %v2582 = vpop.permute.xlu0 %2581
  %2583 = vrot.lane.b32.xlu0 %v2515, 16
  %v2584 = vpop.permute.xlu0 %2583
  %2585 = vrot.lane.b32.xlu0 %v2517, 16
  %v2586 = vpop.permute.xlu0 %2585
  %2587 = vrot.lane.b32.xlu0 %v1697, 16
  %v2588 = vpop.permute.xlu0 %2587
  %2589 = vrot.lane.b32.xlu0 %v1699, 16
  %v2590 = vpop.permute.xlu0 %2589
  %2591 = vrot.lane.b32.xlu0 %v1702, 16
  %v2592 = vpop.permute.xlu0 %2591
  %2593 = vrot.lane.b32.xlu0 %v1704, 16
  %v2594 = vpop.permute.xlu0 %2593
  %2595 = vrot.lane.b32.xlu0 %v1707, 16
  %v2596 = vpop.permute.xlu0 %2595
  %2597 = vrot.lane.b32.xlu0 %v1709, 16
  %v2598 = vpop.permute.xlu0 %2597
  %2599 = vrot.lane.b32.xlu0 %v1712, 16
  %v2600 = vpop.permute.xlu0 %2599
  %2601 = vrot.lane.b32.xlu0 %v1714, 16
  %v2602 = vpop.permute.xlu0 %2601
  %2603 = vrot.lane.b32.xlu0 %v1717, 16
  %v2604 = vpop.permute.xlu0 %2603
  %2605 = vrot.lane.b32.xlu0 %v1719, 16
  %v2606 = vpop.permute.xlu0 %2605
  %2607 = vrot.lane.b32.xlu0 %v1722, 16
  %v2608 = vpop.permute.xlu0 %2607
  %2609 = vrot.lane.b32.xlu0 %v1724, 16
  %v2610 = vpop.permute.xlu0 %2609
  %2611 = vrot.lane.b32.xlu0 %v1727, 16
  %v2612 = vpop.permute.xlu0 %2611
  %2613 = vrot.lane.b32.xlu0 %v1729, 16
  %v2614 = vpop.permute.xlu0 %2613
  %2615 = vrot.lane.b32.xlu0 %v1732, 16
  %v2616 = vpop.permute.xlu0 %2615
  %2617 = vrot.lane.b32.xlu0 %v1734, 16
  %v2618 = vpop.permute.xlu0 %2617
  %2619 = vrot.lane.b32.xlu0 %v1737, 16
  %v2620 = vpop.permute.xlu0 %2619
  %2621 = vrot.lane.b32.xlu0 %v1739, 16
  %v2622 = vpop.permute.xlu0 %2621
  %2623 = vrot.lane.b32.xlu0 %v1742, 16
  %v2624 = vpop.permute.xlu0 %2623
  %2625 = vrot.lane.b32.xlu0 %v1744, 16
  %v2626 = vpop.permute.xlu0 %2625
  %2627 = vrot.lane.b32.xlu0 %v1747, 16
  %v2628 = vpop.permute.xlu0 %2627
  %2629 = vrot.lane.b32.xlu0 %v1749, 16
  %v2630 = vpop.permute.xlu0 %2629
  %2631 = vrot.lane.b32.xlu0 %v1752, 16
  %v2632 = vpop.permute.xlu0 %2631
  %2633 = vrot.lane.b32.xlu0 %v1754, 16
  %v2634 = vpop.permute.xlu0 %2633
  %2635 = vrot.lane.b32.xlu0 %v1757, 16
  %v2636 = vpop.permute.xlu0 %2635
  %2637 = vrot.lane.b32.xlu0 %v1759, 16
  %v2638 = vpop.permute.xlu0 %2637
  %2639 = vrot.lane.b32.xlu0 %v1762, 16
  %v2640 = vpop.permute.xlu0 %2639
  %2641 = vrot.lane.b32.xlu0 %v1764, 16
  %v2642 = vpop.permute.xlu0 %2641
  %2643 = vrot.lane.b32.xlu0 %v1767, 16
  %v2644 = vpop.permute.xlu0 %2643
  %2645 = vrot.lane.b32.xlu0 %v1769, 16
  %v2646 = vpop.permute.xlu0 %2645
  %2647 = vrot.lane.b32.xlu0 %v2520, 16
  %v2648 = vpop.permute.xlu0 %2647
  %2649 = vrot.lane.b32.xlu0 %v2522, 16
  %v2650 = vpop.permute.xlu0 %2649
  %v2715 = vrot.slane %v1453, 2
  %v2716 = vrot.slane %v1454, 2
  %v2717 = vsel %vm1962, %v2715, %v2716
  %v2718 = vrot.slane %v1455, 2
  %v2719 = vsel %vm1962, %v2716, %v2718
  %v2720 = vrot.slane %v1507, 2
  %v2721 = vrot.slane %v1508, 2
  %v2722 = vsel %vm1962, %v2720, %v2721
  %v2723 = vrot.slane %v1509, 2
  %v2724 = vsel %vm1962, %v2721, %v2723
  %2725 = vrot.lane.b32.xlu0 %v1970, 20
  %v2726 = vpop.permute.xlu0 %2725
  %2727 = vrot.lane.b32.xlu0 %v1972, 20
  %v2728 = vpop.permute.xlu0 %2727
  %2729 = vrot.lane.b32.xlu0 %v1975, 20
  %v2730 = vpop.permute.xlu0 %2729
  %2731 = vrot.lane.b32.xlu0 %v1977, 20
  %v2732 = vpop.permute.xlu0 %2731
  %2733 = vrot.lane.b32.xlu0 %v1980, 20
  %v2734 = vpop.permute.xlu0 %2733
  %2735 = vrot.lane.b32.xlu0 %v1982, 20
  %v2736 = vpop.permute.xlu0 %2735
  %2737 = vrot.lane.b32.xlu0 %v1985, 20
  %v2738 = vpop.permute.xlu0 %2737
  %2739 = vrot.lane.b32.xlu0 %v1987, 20
  %v2740 = vpop.permute.xlu0 %2739
  %2741 = vrot.lane.b32.xlu0 %v1990, 20
  %v2742 = vpop.permute.xlu0 %2741
  %2743 = vrot.lane.b32.xlu0 %v1992, 20
  %v2744 = vpop.permute.xlu0 %2743
  %2745 = vrot.lane.b32.xlu0 %v1995, 20
  %v2746 = vpop.permute.xlu0 %2745
  %2747 = vrot.lane.b32.xlu0 %v1997, 20
  %v2748 = vpop.permute.xlu0 %2747
  %2749 = vrot.lane.b32.xlu0 %v2000, 20
  %v2750 = vpop.permute.xlu0 %2749
  %2751 = vrot.lane.b32.xlu0 %v2002, 20
  %v2752 = vpop.permute.xlu0 %2751
  %2753 = vrot.lane.b32.xlu0 %v2005, 20
  %v2754 = vpop.permute.xlu0 %2753
  %2755 = vrot.lane.b32.xlu0 %v2007, 20
  %v2756 = vpop.permute.xlu0 %2755
  %2757 = vrot.lane.b32.xlu0 %v2010, 20
  %v2758 = vpop.permute.xlu0 %2757
  %2759 = vrot.lane.b32.xlu0 %v2012, 20
  %v2760 = vpop.permute.xlu0 %2759
  %2761 = vrot.lane.b32.xlu0 %v2015, 20
  %v2762 = vpop.permute.xlu0 %2761
  %2763 = vrot.lane.b32.xlu0 %v2017, 20
  %v2764 = vpop.permute.xlu0 %2763
  %2765 = vrot.lane.b32.xlu0 %v2020, 20
  %v2766 = vpop.permute.xlu0 %2765
  %2767 = vrot.lane.b32.xlu0 %v2022, 20
  %v2768 = vpop.permute.xlu0 %2767
  %2769 = vrot.lane.b32.xlu0 %v2025, 20
  %v2770 = vpop.permute.xlu0 %2769
  %2771 = vrot.lane.b32.xlu0 %v2027, 20
  %v2772 = vpop.permute.xlu0 %2771
  %2773 = vrot.lane.b32.xlu0 %v2030, 20
  %v2774 = vpop.permute.xlu0 %2773
  %2775 = vrot.lane.b32.xlu0 %v2032, 20
  %v2776 = vpop.permute.xlu0 %2775
  %2777 = vrot.lane.b32.xlu0 %v2035, 20
  %v2778 = vpop.permute.xlu0 %2777
  %2779 = vrot.lane.b32.xlu0 %v2037, 20
  %v2780 = vpop.permute.xlu0 %2779
  %2781 = vrot.lane.b32.xlu0 %v2040, 20
  %v2782 = vpop.permute.xlu0 %2781
  %2783 = vrot.lane.b32.xlu0 %v2042, 20
  %v2784 = vpop.permute.xlu0 %2783
  %2785 = vrot.lane.b32.xlu0 %v2717, 20
  %v2786 = vpop.permute.xlu0 %2785
  %2787 = vrot.lane.b32.xlu0 %v2719, 20
  %v2788 = vpop.permute.xlu0 %2787
  %2789 = vrot.lane.b32.xlu0 %v2050, 20
  %v2790 = vpop.permute.xlu0 %2789
  %2791 = vrot.lane.b32.xlu0 %v2052, 20
  %v2792 = vpop.permute.xlu0 %2791
  %2793 = vrot.lane.b32.xlu0 %v2055, 20
  %v2794 = vpop.permute.xlu0 %2793
  %2795 = vrot.lane.b32.xlu0 %v2057, 20
  %v2796 = vpop.permute.xlu0 %2795
  %2797 = vrot.lane.b32.xlu0 %v2060, 20
  %v2798 = vpop.permute.xlu0 %2797
  %2799 = vrot.lane.b32.xlu0 %v2062, 20
  %v2800 = vpop.permute.xlu0 %2799
  %2801 = vrot.lane.b32.xlu0 %v2065, 20
  %v2802 = vpop.permute.xlu0 %2801
  %2803 = vrot.lane.b32.xlu0 %v2067, 20
  %v2804 = vpop.permute.xlu0 %2803
  %2805 = vrot.lane.b32.xlu0 %v2070, 20
  %v2806 = vpop.permute.xlu0 %2805
  %2807 = vrot.lane.b32.xlu0 %v2072, 20
  %v2808 = vpop.permute.xlu0 %2807
  %2809 = vrot.lane.b32.xlu0 %v2075, 20
  %v2810 = vpop.permute.xlu0 %2809
  %2811 = vrot.lane.b32.xlu0 %v2077, 20
  %v2812 = vpop.permute.xlu0 %2811
  %2813 = vrot.lane.b32.xlu0 %v2080, 20
  %v2814 = vpop.permute.xlu0 %2813
  %2815 = vrot.lane.b32.xlu0 %v2082, 20
  %v2816 = vpop.permute.xlu0 %2815
  %2817 = vrot.lane.b32.xlu0 %v2085, 20
  %v2818 = vpop.permute.xlu0 %2817
  %2819 = vrot.lane.b32.xlu0 %v2087, 20
  %v2820 = vpop.permute.xlu0 %2819
  %2821 = vrot.lane.b32.xlu0 %v2090, 20
  %v2822 = vpop.permute.xlu0 %2821
  %2823 = vrot.lane.b32.xlu0 %v2092, 20
  %v2824 = vpop.permute.xlu0 %2823
  %2825 = vrot.lane.b32.xlu0 %v2095, 20
  %v2826 = vpop.permute.xlu0 %2825
  %2827 = vrot.lane.b32.xlu0 %v2097, 20
  %v2828 = vpop.permute.xlu0 %2827
  %2829 = vrot.lane.b32.xlu0 %v2100, 20
  %v2830 = vpop.permute.xlu0 %2829
  %2831 = vrot.lane.b32.xlu0 %v2102, 20
  %v2832 = vpop.permute.xlu0 %2831
  %2833 = vrot.lane.b32.xlu0 %v2105, 20
  %v2834 = vpop.permute.xlu0 %2833
  %2835 = vrot.lane.b32.xlu0 %v2107, 20
  %v2836 = vpop.permute.xlu0 %2835
  %2837 = vrot.lane.b32.xlu0 %v2110, 20
  %v2838 = vpop.permute.xlu0 %2837
  %2839 = vrot.lane.b32.xlu0 %v2112, 20
  %v2840 = vpop.permute.xlu0 %2839
  %2841 = vrot.lane.b32.xlu0 %v2115, 20
  %v2842 = vpop.permute.xlu0 %2841
  %2843 = vrot.lane.b32.xlu0 %v2117, 20
  %v2844 = vpop.permute.xlu0 %2843
  %2845 = vrot.lane.b32.xlu0 %v2120, 20
  %v2846 = vpop.permute.xlu0 %2845
  %2847 = vrot.lane.b32.xlu0 %v2122, 20
  %v2848 = vpop.permute.xlu0 %2847
  %2849 = vrot.lane.b32.xlu0 %v2722, 20
  %v2850 = vpop.permute.xlu0 %2849
  %2851 = vrot.lane.b32.xlu0 %v2724, 20
  %v2852 = vpop.permute.xlu0 %2851
  %2921 = vrot.lane.b32.xlu0 %v1411, 24
  %v2922 = vpop.permute.xlu0 %2921
  %2923 = vrot.lane.b32.xlu0 %v1412, 24
  %v2924 = vpop.permute.xlu0 %2923
  %2925 = vrot.lane.b32.xlu0 %v1414, 24
  %v2926 = vpop.permute.xlu0 %2925
  %2927 = vrot.lane.b32.xlu0 %v1415, 24
  %v2928 = vpop.permute.xlu0 %2927
  %2929 = vrot.lane.b32.xlu0 %v1417, 24
  %v2930 = vpop.permute.xlu0 %2929
  %2931 = vrot.lane.b32.xlu0 %v1418, 24
  %v2932 = vpop.permute.xlu0 %2931
  %2933 = vrot.lane.b32.xlu0 %v1420, 24
  %v2934 = vpop.permute.xlu0 %2933
  %2935 = vrot.lane.b32.xlu0 %v1421, 24
  %v2936 = vpop.permute.xlu0 %2935
  %2937 = vrot.lane.b32.xlu0 %v1423, 24
  %v2938 = vpop.permute.xlu0 %2937
  %2939 = vrot.lane.b32.xlu0 %v1424, 24
  %v2940 = vpop.permute.xlu0 %2939
  %2941 = vrot.lane.b32.xlu0 %v1426, 24
  %v2942 = vpop.permute.xlu0 %2941
  %2943 = vrot.lane.b32.xlu0 %v1427, 24
  %v2944 = vpop.permute.xlu0 %2943
  %2945 = vrot.lane.b32.xlu0 %v1429, 24
  %v2946 = vpop.permute.xlu0 %2945
  %2947 = vrot.lane.b32.xlu0 %v1430, 24
  %v2948 = vpop.permute.xlu0 %2947
  %2949 = vrot.lane.b32.xlu0 %v1432, 24
  %v2950 = vpop.permute.xlu0 %2949
  %2951 = vrot.lane.b32.xlu0 %v1433, 24
  %v2952 = vpop.permute.xlu0 %2951
  %2953 = vrot.lane.b32.xlu0 %v1435, 24
  %v2954 = vpop.permute.xlu0 %2953
  %2955 = vrot.lane.b32.xlu0 %v1436, 24
  %v2956 = vpop.permute.xlu0 %2955
  %2957 = vrot.lane.b32.xlu0 %v1438, 24
  %v2958 = vpop.permute.xlu0 %2957
  %2959 = vrot.lane.b32.xlu0 %v1439, 24
  %v2960 = vpop.permute.xlu0 %2959
  %2961 = vrot.lane.b32.xlu0 %v1441, 24
  %v2962 = vpop.permute.xlu0 %2961
  %2963 = vrot.lane.b32.xlu0 %v1442, 24
  %v2964 = vpop.permute.xlu0 %2963
  %2965 = vrot.lane.b32.xlu0 %v1444, 24
  %v2966 = vpop.permute.xlu0 %2965
  %2967 = vrot.lane.b32.xlu0 %v1445, 24
  %v2968 = vpop.permute.xlu0 %2967
  %2969 = vrot.lane.b32.xlu0 %v1447, 24
  %v2970 = vpop.permute.xlu0 %2969
  %2971 = vrot.lane.b32.xlu0 %v1448, 24
  %v2972 = vpop.permute.xlu0 %2971
  %2973 = vrot.lane.b32.xlu0 %v1450, 24
  %v2974 = vpop.permute.xlu0 %2973
  %2975 = vrot.lane.b32.xlu0 %v1451, 24
  %v2976 = vpop.permute.xlu0 %2975
  %2977 = vrot.lane.b32.xlu0 %v1453, 24
  %v2978 = vpop.permute.xlu0 %2977
  %2979 = vrot.lane.b32.xlu0 %v1454, 24
  %v2980 = vpop.permute.xlu0 %2979
  %2981 = vrot.lane.b32.xlu0 %v1456, 24
  %v2982 = vpop.permute.xlu0 %2981
  %2983 = vrot.lane.b32.xlu0 %v1457, 24
  %v2984 = vpop.permute.xlu0 %2983
  %2985 = vrot.lane.b32.xlu0 %v1465, 24
  %v2986 = vpop.permute.xlu0 %2985
  %2987 = vrot.lane.b32.xlu0 %v1466, 24
  %v2988 = vpop.permute.xlu0 %2987
  %2989 = vrot.lane.b32.xlu0 %v1468, 24
  %v2990 = vpop.permute.xlu0 %2989
  %2991 = vrot.lane.b32.xlu0 %v1469, 24
  %v2992 = vpop.permute.xlu0 %2991
  %2993 = vrot.lane.b32.xlu0 %v1471, 24
  %v2994 = vpop.permute.xlu0 %2993
  %2995 = vrot.lane.b32.xlu0 %v1472, 24
  %v2996 = vpop.permute.xlu0 %2995
  %2997 = vrot.lane.b32.xlu0 %v1474, 24
  %v2998 = vpop.permute.xlu0 %2997
  %2999 = vrot.lane.b32.xlu0 %v1475, 24
  %v3000 = vpop.permute.xlu0 %2999
  %3001 = vrot.lane.b32.xlu0 %v1477, 24
  %v3002 = vpop.permute.xlu0 %3001
  %3003 = vrot.lane.b32.xlu0 %v1478, 24
  %v3004 = vpop.permute.xlu0 %3003
  %3005 = vrot.lane.b32.xlu0 %v1480, 24
  %v3006 = vpop.permute.xlu0 %3005
  %3007 = vrot.lane.b32.xlu0 %v1481, 24
  %v3008 = vpop.permute.xlu0 %3007
  %3009 = vrot.lane.b32.xlu0 %v1483, 24
  %v3010 = vpop.permute.xlu0 %3009
  %3011 = vrot.lane.b32.xlu0 %v1484, 24
  %v3012 = vpop.permute.xlu0 %3011
  %3013 = vrot.lane.b32.xlu0 %v1486, 24
  %v3014 = vpop.permute.xlu0 %3013
  %3015 = vrot.lane.b32.xlu0 %v1487, 24
  %v3016 = vpop.permute.xlu0 %3015
  %3017 = vrot.lane.b32.xlu0 %v1489, 24
  %v3018 = vpop.permute.xlu0 %3017
  %3019 = vrot.lane.b32.xlu0 %v1490, 24
  %v3020 = vpop.permute.xlu0 %3019
  %3021 = vrot.lane.b32.xlu0 %v1492, 24
  %v3022 = vpop.permute.xlu0 %3021
  %3023 = vrot.lane.b32.xlu0 %v1493, 24
  %v3024 = vpop.permute.xlu0 %3023
  %3025 = vrot.lane.b32.xlu0 %v1495, 24
  %v3026 = vpop.permute.xlu0 %3025
  %3027 = vrot.lane.b32.xlu0 %v1496, 24
  %v3028 = vpop.permute.xlu0 %3027
  %3029 = vrot.lane.b32.xlu0 %v1498, 24
  %v3030 = vpop.permute.xlu0 %3029
  %3031 = vrot.lane.b32.xlu0 %v1499, 24
  %v3032 = vpop.permute.xlu0 %3031
  %3033 = vrot.lane.b32.xlu0 %v1501, 24
  %v3034 = vpop.permute.xlu0 %3033
  %3035 = vrot.lane.b32.xlu0 %v1502, 24
  %v3036 = vpop.permute.xlu0 %3035
  %3037 = vrot.lane.b32.xlu0 %v1504, 24
  %v3038 = vpop.permute.xlu0 %3037
  %3039 = vrot.lane.b32.xlu0 %v1505, 24
  %v3040 = vpop.permute.xlu0 %3039
  %3041 = vrot.lane.b32.xlu0 %v1507, 24
  %v3042 = vpop.permute.xlu0 %3041
  %3043 = vrot.lane.b32.xlu0 %v1508, 24
  %v3044 = vpop.permute.xlu0 %3043
  %3045 = vrot.lane.b32.xlu0 %v1510, 24
  %v3046 = vpop.permute.xlu0 %3045
  %3047 = vrot.lane.b32.xlu0 %v1511, 24
  %v3048 = vpop.permute.xlu0 %3047
  %v3115 = vrot.slane %v1456, 1
  %v3116 = vrot.slane %v1457, 1
  %v3117 = vsel %vm1609, %v3115, %v3116
  %v3118 = vrot.slane %v1458, 1
  %v3119 = vsel %vm1609, %v3116, %v3118
  %v3120 = vrot.slane %v1510, 1
  %v3121 = vrot.slane %v1511, 1
  %v3122 = vsel %vm1609, %v3120, %v3121
  %v3123 = vrot.slane %v1512, 1
  %v3124 = vsel %vm1609, %v3121, %v3123
  %3125 = vrot.lane.b32.xlu0 %v1622, 28
  %v3126 = vpop.permute.xlu0 %3125
  %3127 = vrot.lane.b32.xlu0 %v1624, 28
  %v3128 = vpop.permute.xlu0 %3127
  %3129 = vrot.lane.b32.xlu0 %v1627, 28
  %v3130 = vpop.permute.xlu0 %3129
  %3131 = vrot.lane.b32.xlu0 %v1629, 28
  %v3132 = vpop.permute.xlu0 %3131
  %3133 = vrot.lane.b32.xlu0 %v1632, 28
  %v3134 = vpop.permute.xlu0 %3133
  %3135 = vrot.lane.b32.xlu0 %v1634, 28
  %v3136 = vpop.permute.xlu0 %3135
  %3137 = vrot.lane.b32.xlu0 %v1637, 28
  %v3138 = vpop.permute.xlu0 %3137
  %3139 = vrot.lane.b32.xlu0 %v1639, 28
  %v3140 = vpop.permute.xlu0 %3139
  %3141 = vrot.lane.b32.xlu0 %v1642, 28
  %v3142 = vpop.permute.xlu0 %3141
  %3143 = vrot.lane.b32.xlu0 %v1644, 28
  %v3144 = vpop.permute.xlu0 %3143
  %3145 = vrot.lane.b32.xlu0 %v1647, 28
  %v3146 = vpop.permute.xlu0 %3145
  %3147 = vrot.lane.b32.xlu0 %v1649, 28
  %v3148 = vpop.permute.xlu0 %3147
  %3149 = vrot.lane.b32.xlu0 %v1652, 28
  %v3150 = vpop.permute.xlu0 %3149
  %3151 = vrot.lane.b32.xlu0 %v1654, 28
  %v3152 = vpop.permute.xlu0 %3151
  %3153 = vrot.lane.b32.xlu0 %v1657, 28
  %v3154 = vpop.permute.xlu0 %3153
  %3155 = vrot.lane.b32.xlu0 %v1659, 28
  %v3156 = vpop.permute.xlu0 %3155
  %3157 = vrot.lane.b32.xlu0 %v1662, 28
  %v3158 = vpop.permute.xlu0 %3157
  %3159 = vrot.lane.b32.xlu0 %v1664, 28
  %v3160 = vpop.permute.xlu0 %3159
  %3161 = vrot.lane.b32.xlu0 %v1667, 28
  %v3162 = vpop.permute.xlu0 %3161
  %3163 = vrot.lane.b32.xlu0 %v1669, 28
  %v3164 = vpop.permute.xlu0 %3163
  %3165 = vrot.lane.b32.xlu0 %v1672, 28
  %v3166 = vpop.permute.xlu0 %3165
  %3167 = vrot.lane.b32.xlu0 %v1674, 28
  %v3168 = vpop.permute.xlu0 %3167
  %3169 = vrot.lane.b32.xlu0 %v1677, 28
  %v3170 = vpop.permute.xlu0 %3169
  %3171 = vrot.lane.b32.xlu0 %v1679, 28
  %v3172 = vpop.permute.xlu0 %3171
  %3173 = vrot.lane.b32.xlu0 %v1682, 28
  %v3174 = vpop.permute.xlu0 %3173
  %3175 = vrot.lane.b32.xlu0 %v1684, 28
  %v3176 = vpop.permute.xlu0 %3175
  %3177 = vrot.lane.b32.xlu0 %v1687, 28
  %v3178 = vpop.permute.xlu0 %3177
  %3179 = vrot.lane.b32.xlu0 %v1689, 28
  %v3180 = vpop.permute.xlu0 %3179
  %3181 = vrot.lane.b32.xlu0 %v2515, 28
  %v3182 = vpop.permute.xlu0 %3181
  %3183 = vrot.lane.b32.xlu0 %v2517, 28
  %v3184 = vpop.permute.xlu0 %3183
  %3185 = vrot.lane.b32.xlu0 %v3117, 28
  %v3186 = vpop.permute.xlu0 %3185
  %3187 = vrot.lane.b32.xlu0 %v3119, 28
  %v3188 = vpop.permute.xlu0 %3187
  %3189 = vrot.lane.b32.xlu0 %v1702, 28
  %v3190 = vpop.permute.xlu0 %3189
  %3191 = vrot.lane.b32.xlu0 %v1704, 28
  %v3192 = vpop.permute.xlu0 %3191
  %3193 = vrot.lane.b32.xlu0 %v1707, 28
  %v3194 = vpop.permute.xlu0 %3193
  %3195 = vrot.lane.b32.xlu0 %v1709, 28
  %v3196 = vpop.permute.xlu0 %3195
  %3197 = vrot.lane.b32.xlu0 %v1712, 28
  %v3198 = vpop.permute.xlu0 %3197
  %3199 = vrot.lane.b32.xlu0 %v1714, 28
  %v3200 = vpop.permute.xlu0 %3199
  %3201 = vrot.lane.b32.xlu0 %v1717, 28
  %v3202 = vpop.permute.xlu0 %3201
  %3203 = vrot.lane.b32.xlu0 %v1719, 28
  %v3204 = vpop.permute.xlu0 %3203
  %3205 = vrot.lane.b32.xlu0 %v1722, 28
  %v3206 = vpop.permute.xlu0 %3205
  %3207 = vrot.lane.b32.xlu0 %v1724, 28
  %v3208 = vpop.permute.xlu0 %3207
  %3209 = vrot.lane.b32.xlu0 %v1727, 28
  %v3210 = vpop.permute.xlu0 %3209
  %3211 = vrot.lane.b32.xlu0 %v1729, 28
  %v3212 = vpop.permute.xlu0 %3211
  %3213 = vrot.lane.b32.xlu0 %v1732, 28
  %v3214 = vpop.permute.xlu0 %3213
  %3215 = vrot.lane.b32.xlu0 %v1734, 28
  %v3216 = vpop.permute.xlu0 %3215
  %3217 = vrot.lane.b32.xlu0 %v1737, 28
  %v3218 = vpop.permute.xlu0 %3217
  %3219 = vrot.lane.b32.xlu0 %v1739, 28
  %v3220 = vpop.permute.xlu0 %3219
  %3221 = vrot.lane.b32.xlu0 %v1742, 28
  %v3222 = vpop.permute.xlu0 %3221
  %3223 = vrot.lane.b32.xlu0 %v1744, 28
  %v3224 = vpop.permute.xlu0 %3223
  %3225 = vrot.lane.b32.xlu0 %v1747, 28
  %v3226 = vpop.permute.xlu0 %3225
  %3227 = vrot.lane.b32.xlu0 %v1749, 28
  %v3228 = vpop.permute.xlu0 %3227
  %3229 = vrot.lane.b32.xlu0 %v1752, 28
  %v3230 = vpop.permute.xlu0 %3229
  %3231 = vrot.lane.b32.xlu0 %v1754, 28
  %v3232 = vpop.permute.xlu0 %3231
  %3233 = vrot.lane.b32.xlu0 %v1757, 28
  %v3234 = vpop.permute.xlu0 %3233
  %3235 = vrot.lane.b32.xlu0 %v1759, 28
  %v3236 = vpop.permute.xlu0 %3235
  %3237 = vrot.lane.b32.xlu0 %v1762, 28
  %v3238 = vpop.permute.xlu0 %3237
  %3239 = vrot.lane.b32.xlu0 %v1764, 28
  %v3240 = vpop.permute.xlu0 %3239
  %3241 = vrot.lane.b32.xlu0 %v1767, 28
  %v3242 = vpop.permute.xlu0 %3241
  %3243 = vrot.lane.b32.xlu0 %v1769, 28
  %v3244 = vpop.permute.xlu0 %3243
  %3245 = vrot.lane.b32.xlu0 %v2520, 28
  %v3246 = vpop.permute.xlu0 %3245
  %3247 = vrot.lane.b32.xlu0 %v2522, 28
  %v3248 = vpop.permute.xlu0 %3247
  %3249 = vrot.lane.b32.xlu0 %v3122, 28
  %v3250 = vpop.permute.xlu0 %3249
  %3251 = vrot.lane.b32.xlu0 %v3124, 28
  %v3252 = vpop.permute.xlu0 %3251
  %v3317 = vrot.slane %v1456, 2
  %v3318 = vrot.slane %v1457, 2
  %v3319 = vsel %vm1962, %v3317, %v3318
  %v3320 = vrot.slane %v1458, 2
  %v3321 = vsel %vm1962, %v3318, %v3320
  %v3322 = vrot.slane %v1510, 2
  %v3323 = vrot.slane %v1511, 2
  %v3324 = vsel %vm1962, %v3322, %v3323
  %v3325 = vrot.slane %v1512, 2
  %v3326 = vsel %vm1962, %v3323, %v3325
  %3327 = vrot.lane.b32.xlu0 %v1975, 32
  %v3328 = vpop.permute.xlu0 %3327
  %3329 = vrot.lane.b32.xlu0 %v1977, 32
  %v3330 = vpop.permute.xlu0 %3329
  %3331 = vrot.lane.b32.xlu0 %v1980, 32
  %v3332 = vpop.permute.xlu0 %3331
  %3333 = vrot.lane.b32.xlu0 %v1982, 32
  %v3334 = vpop.permute.xlu0 %3333
  %3335 = vrot.lane.b32.xlu0 %v1985, 32
  %v3336 = vpop.permute.xlu0 %3335
  %3337 = vrot.lane.b32.xlu0 %v1987, 32
  %v3338 = vpop.permute.xlu0 %3337
  %3339 = vrot.lane.b32.xlu0 %v1990, 32
  %v3340 = vpop.permute.xlu0 %3339
  %3341 = vrot.lane.b32.xlu0 %v1992, 32
  %v3342 = vpop.permute.xlu0 %3341
  %3343 = vrot.lane.b32.xlu0 %v1995, 32
  %v3344 = vpop.permute.xlu0 %3343
  %3345 = vrot.lane.b32.xlu0 %v1997, 32
  %v3346 = vpop.permute.xlu0 %3345
  %3347 = vrot.lane.b32.xlu0 %v2000, 32
  %v3348 = vpop.permute.xlu0 %3347
  %3349 = vrot.lane.b32.xlu0 %v2002, 32
  %v3350 = vpop.permute.xlu0 %3349
  %3351 = vrot.lane.b32.xlu0 %v2005, 32
  %v3352 = vpop.permute.xlu0 %3351
  %3353 = vrot.lane.b32.xlu0 %v2007, 32
  %v3354 = vpop.permute.xlu0 %3353
  %3355 = vrot.lane.b32.xlu0 %v2010, 32
  %v3356 = vpop.permute.xlu0 %3355
  %3357 = vrot.lane.b32.xlu0 %v2012, 32
  %v3358 = vpop.permute.xlu0 %3357
  %3359 = vrot.lane.b32.xlu0 %v2015, 32
  %v3360 = vpop.permute.xlu0 %3359
  %3361 = vrot.lane.b32.xlu0 %v2017, 32
  %v3362 = vpop.permute.xlu0 %3361
  %3363 = vrot.lane.b32.xlu0 %v2020, 32
  %v3364 = vpop.permute.xlu0 %3363
  %3365 = vrot.lane.b32.xlu0 %v2022, 32
  %v3366 = vpop.permute.xlu0 %3365
  %3367 = vrot.lane.b32.xlu0 %v2025, 32
  %v3368 = vpop.permute.xlu0 %3367
  %3369 = vrot.lane.b32.xlu0 %v2027, 32
  %v3370 = vpop.permute.xlu0 %3369
  %3371 = vrot.lane.b32.xlu0 %v2030, 32
  %v3372 = vpop.permute.xlu0 %3371
  %3373 = vrot.lane.b32.xlu0 %v2032, 32
  %v3374 = vpop.permute.xlu0 %3373
  %3375 = vrot.lane.b32.xlu0 %v2035, 32
  %v3376 = vpop.permute.xlu0 %3375
  %3377 = vrot.lane.b32.xlu0 %v2037, 32
  %v3378 = vpop.permute.xlu0 %3377
  %3379 = vrot.lane.b32.xlu0 %v2040, 32
  %v3380 = vpop.permute.xlu0 %3379
  %3381 = vrot.lane.b32.xlu0 %v2042, 32
  %v3382 = vpop.permute.xlu0 %3381
  %3383 = vrot.lane.b32.xlu0 %v2717, 32
  %v3384 = vpop.permute.xlu0 %3383
  %3385 = vrot.lane.b32.xlu0 %v2719, 32
  %v3386 = vpop.permute.xlu0 %3385
  %3387 = vrot.lane.b32.xlu0 %v3319, 32
  %v3388 = vpop.permute.xlu0 %3387
  %3389 = vrot.lane.b32.xlu0 %v3321, 32
  %v3390 = vpop.permute.xlu0 %3389
  %3391 = vrot.lane.b32.xlu0 %v2055, 32
  %v3392 = vpop.permute.xlu0 %3391
  %3393 = vrot.lane.b32.xlu0 %v2057, 32
  %v3394 = vpop.permute.xlu0 %3393
  %3395 = vrot.lane.b32.xlu0 %v2060, 32
  %v3396 = vpop.permute.xlu0 %3395
  %3397 = vrot.lane.b32.xlu0 %v2062, 32
  %v3398 = vpop.permute.xlu0 %3397
  %3399 = vrot.lane.b32.xlu0 %v2065, 32
  %v3400 = vpop.permute.xlu0 %3399
  %3401 = vrot.lane.b32.xlu0 %v2067, 32
  %v3402 = vpop.permute.xlu0 %3401
  %3403 = vrot.lane.b32.xlu0 %v2070, 32
  %v3404 = vpop.permute.xlu0 %3403
  %3405 = vrot.lane.b32.xlu0 %v2072, 32
  %v3406 = vpop.permute.xlu0 %3405
  %3407 = vrot.lane.b32.xlu0 %v2075, 32
  %v3408 = vpop.permute.xlu0 %3407
  %3409 = vrot.lane.b32.xlu0 %v2077, 32
  %v3410 = vpop.permute.xlu0 %3409
  %3411 = vrot.lane.b32.xlu0 %v2080, 32
  %v3412 = vpop.permute.xlu0 %3411
  %3413 = vrot.lane.b32.xlu0 %v2082, 32
  %v3414 = vpop.permute.xlu0 %3413
  %3415 = vrot.lane.b32.xlu0 %v2085, 32
  %v3416 = vpop.permute.xlu0 %3415
  %3417 = vrot.lane.b32.xlu0 %v2087, 32
  %v3418 = vpop.permute.xlu0 %3417
  %3419 = vrot.lane.b32.xlu0 %v2090, 32
  %v3420 = vpop.permute.xlu0 %3419
  %3421 = vrot.lane.b32.xlu0 %v2092, 32
  %v3422 = vpop.permute.xlu0 %3421
  %3423 = vrot.lane.b32.xlu0 %v2095, 32
  %v3424 = vpop.permute.xlu0 %3423
  %3425 = vrot.lane.b32.xlu0 %v2097, 32
  %v3426 = vpop.permute.xlu0 %3425
  %3427 = vrot.lane.b32.xlu0 %v2100, 32
  %v3428 = vpop.permute.xlu0 %3427
  %3429 = vrot.lane.b32.xlu0 %v2102, 32
  %v3430 = vpop.permute.xlu0 %3429
  %3431 = vrot.lane.b32.xlu0 %v2105, 32
  %v3432 = vpop.permute.xlu0 %3431
  %3433 = vrot.lane.b32.xlu0 %v2107, 32
  %v3434 = vpop.permute.xlu0 %3433
  %3435 = vrot.lane.b32.xlu0 %v2110, 32
  %v3436 = vpop.permute.xlu0 %3435
  %3437 = vrot.lane.b32.xlu0 %v2112, 32
  %v3438 = vpop.permute.xlu0 %3437
  %3439 = vrot.lane.b32.xlu0 %v2115, 32
  %v3440 = vpop.permute.xlu0 %3439
  %3441 = vrot.lane.b32.xlu0 %v2117, 32
  %v3442 = vpop.permute.xlu0 %3441
  %3443 = vrot.lane.b32.xlu0 %v2120, 32
  %v3444 = vpop.permute.xlu0 %3443
  %3445 = vrot.lane.b32.xlu0 %v2122, 32
  %v3446 = vpop.permute.xlu0 %3445
  %3447 = vrot.lane.b32.xlu0 %v2722, 32
  %v3448 = vpop.permute.xlu0 %3447
  %3449 = vrot.lane.b32.xlu0 %v2724, 32
  %v3450 = vpop.permute.xlu0 %3449
  %3451 = vrot.lane.b32.xlu0 %v3324, 32
  %v3452 = vpop.permute.xlu0 %3451
  %3453 = vrot.lane.b32.xlu0 %v3326, 32
  %v3454 = vpop.permute.xlu0 %3453
  %v3519 = vsel %vm687, %v1405, %v1771
  %v3520 = vsel %vm687, %v1406, %v1773
  %v3521 = vsel %vm687, %v1408, %v1775
  %v3522 = vsel %vm687, %v1409, %v1777
  %v3523 = vsel %vm687, %v1411, %v1779
  %v3524 = vsel %vm687, %v1412, %v1781
  %v3525 = vsel %vm687, %v1414, %v1783
  %v3526 = vsel %vm687, %v1415, %v1785
  %v3527 = vsel %vm687, %v1417, %v1787
  %v3528 = vsel %vm687, %v1418, %v1789
  %v3529 = vsel %vm687, %v1420, %v1791
  %v3530 = vsel %vm687, %v1421, %v1793
  %v3531 = vsel %vm687, %v1423, %v1795
  %v3532 = vsel %vm687, %v1424, %v1797
  %v3533 = vsel %vm687, %v1426, %v1799
  %v3534 = vsel %vm687, %v1427, %v1801
  %v3535 = vsel %vm687, %v1429, %v1803
  %v3536 = vsel %vm687, %v1430, %v1805
  %v3537 = vsel %vm687, %v1432, %v1807
  %v3538 = vsel %vm687, %v1433, %v1809
  %v3539 = vsel %vm687, %v1435, %v1811
  %v3540 = vsel %vm687, %v1436, %v1813
  %v3541 = vsel %vm687, %v1438, %v1815
  %v3542 = vsel %vm687, %v1439, %v1817
  %v3543 = vsel %vm687, %v1441, %v1819
  %v3544 = vsel %vm687, %v1442, %v1821
  %v3545 = vsel %vm687, %v1444, %v1823
  %v3546 = vsel %vm687, %v1445, %v1825
  %v3547 = vsel %vm687, %v1447, %v1827
  %v3548 = vsel %vm687, %v1448, %v1829
  %v3549 = vsel %vm687, %v1450, %v1831
  %v3550 = vsel %vm687, %v1451, %v1833
  %v3551 = vsel %vm687, %v1459, %v1835
  %v3552 = vsel %vm687, %v1460, %v1837
  %v3553 = vsel %vm687, %v1462, %v1839
  %v3554 = vsel %vm687, %v1463, %v1841
  %v3555 = vsel %vm687, %v1465, %v1843
  %v3556 = vsel %vm687, %v1466, %v1845
  %v3557 = vsel %vm687, %v1468, %v1847
  %v3558 = vsel %vm687, %v1469, %v1849
  %v3559 = vsel %vm687, %v1471, %v1851
  %v3560 = vsel %vm687, %v1472, %v1853
  %v3561 = vsel %vm687, %v1474, %v1855
  %v3562 = vsel %vm687, %v1475, %v1857
  %v3563 = vsel %vm687, %v1477, %v1859
  %v3564 = vsel %vm687, %v1478, %v1861
  %v3565 = vsel %vm687, %v1480, %v1863
  %v3566 = vsel %vm687, %v1481, %v1865
  %v3567 = vsel %vm687, %v1483, %v1867
  %v3568 = vsel %vm687, %v1484, %v1869
  %v3569 = vsel %vm687, %v1486, %v1871
  %v3570 = vsel %vm687, %v1487, %v1873
  %v3571 = vsel %vm687, %v1489, %v1875
  %v3572 = vsel %vm687, %v1490, %v1877
  %v3573 = vsel %vm687, %v1492, %v1879
  %v3574 = vsel %vm687, %v1493, %v1881
  %v3575 = vsel %vm687, %v1495, %v1883
  %v3576 = vsel %vm687, %v1496, %v1885
  %v3577 = vsel %vm687, %v1498, %v1887
  %v3578 = vsel %vm687, %v1499, %v1889
  %v3579 = vsel %vm687, %v1501, %v1891
  %v3580 = vsel %vm687, %v1502, %v1893
  %v3581 = vsel %vm687, %v1504, %v1895
  %v3582 = vsel %vm687, %v1505, %v1897
  %vm3583 = vcmask 64512
  %v3584 = vsel %vm3583, %v3519, %v2124
  %v3585 = vsel %vm3583, %v3520, %v2126
  %v3586 = vsel %vm3583, %v3521, %v2128
  %v3587 = vsel %vm3583, %v3522, %v2130
  %v3588 = vsel %vm3583, %v3523, %v2132
  %v3589 = vsel %vm3583, %v3524, %v2134
  %v3590 = vsel %vm3583, %v3525, %v2136
  %v3591 = vsel %vm3583, %v3526, %v2138
  %v3592 = vsel %vm3583, %v3527, %v2140
  %v3593 = vsel %vm3583, %v3528, %v2142
  %v3594 = vsel %vm3583, %v3529, %v2144
  %v3595 = vsel %vm3583, %v3530, %v2146
  %v3596 = vsel %vm3583, %v3531, %v2148
  %v3597 = vsel %vm3583, %v3532, %v2150
  %v3598 = vsel %vm3583, %v3533, %v2152
  %v3599 = vsel %vm3583, %v3534, %v2154
  %v3600 = vsel %vm3583, %v3535, %v2156
  %v3601 = vsel %vm3583, %v3536, %v2158
  %v3602 = vsel %vm3583, %v3537, %v2160
  %v3603 = vsel %vm3583, %v3538, %v2162
  %v3604 = vsel %vm3583, %v3539, %v2164
  %v3605 = vsel %vm3583, %v3540, %v2166
  %v3606 = vsel %vm3583, %v3541, %v2168
  %v3607 = vsel %vm3583, %v3542, %v2170
  %v3608 = vsel %vm3583, %v3543, %v2172
  %v3609 = vsel %vm3583, %v3544, %v2174
  %v3610 = vsel %vm3583, %v3545, %v2176
  %v3611 = vsel %vm3583, %v3546, %v2178
  %v3612 = vsel %vm3583, %v3547, %v2180
  %v3613 = vsel %vm3583, %v3548, %v2182
  %v3614 = vsel %vm3583, %v3549, %v2184
  %v3615 = vsel %vm3583, %v3550, %v2186
  %v3616 = vsel %vm3583, %v3551, %v2188
  %v3617 = vsel %vm3583, %v3552, %v2190
  %v3618 = vsel %vm3583, %v3553, %v2192
  %v3619 = vsel %vm3583, %v3554, %v2194
  %v3620 = vsel %vm3583, %v3555, %v2196
  %v3621 = vsel %vm3583, %v3556, %v2198
  %v3622 = vsel %vm3583, %v3557, %v2200
  %v3623 = vsel %vm3583, %v3558, %v2202
  %v3624 = vsel %vm3583, %v3559, %v2204
  %v3625 = vsel %vm3583, %v3560, %v2206
  %v3626 = vsel %vm3583, %v3561, %v2208
  %v3627 = vsel %vm3583, %v3562, %v2210
  %v3628 = vsel %vm3583, %v3563, %v2212
  %v3629 = vsel %vm3583, %v3564, %v2214
  %v3630 = vsel %vm3583, %v3565, %v2216
  %v3631 = vsel %vm3583, %v3566, %v2218
  %v3632 = vsel %vm3583, %v3567, %v2220
  %v3633 = vsel %vm3583, %v3568, %v2222
  %v3634 = vsel %vm3583, %v3569, %v2224
  %v3635 = vsel %vm3583, %v3570, %v2226
  %v3636 = vsel %vm3583, %v3571, %v2228
  %v3637 = vsel %vm3583, %v3572, %v2230
  %v3638 = vsel %vm3583, %v3573, %v2232
  %v3639 = vsel %vm3583, %v3574, %v2234
  %v3640 = vsel %vm3583, %v3575, %v2236
  %v3641 = vsel %vm3583, %v3576, %v2238
  %v3642 = vsel %vm3583, %v3577, %v2240
  %v3643 = vsel %vm3583, %v3578, %v2242
  %v3644 = vsel %vm3583, %v3579, %v2244
  %v3645 = vsel %vm3583, %v3580, %v2246
  %v3646 = vsel %vm3583, %v3581, %v2248
  %v3647 = vsel %vm3583, %v3582, %v2250
  %vm3648 = vcmask 97280
  %v3649 = vsel %vm3648, %v3584, %v2320
  %v3650 = vsel %vm3648, %v3585, %v2322
  %v3651 = vsel %vm3648, %v3586, %v2324
  %v3652 = vsel %vm3648, %v3587, %v2326
  %v3653 = vsel %vm3648, %v3588, %v2328
  %v3654 = vsel %vm3648, %v3589, %v2330
  %v3655 = vsel %vm3648, %v3590, %v2332
  %v3656 = vsel %vm3648, %v3591, %v2334
  %v3657 = vsel %vm3648, %v3592, %v2336
  %v3658 = vsel %vm3648, %v3593, %v2338
  %v3659 = vsel %vm3648, %v3594, %v2340
  %v3660 = vsel %vm3648, %v3595, %v2342
  %v3661 = vsel %vm3648, %v3596, %v2344
  %v3662 = vsel %vm3648, %v3597, %v2346
  %v3663 = vsel %vm3648, %v3598, %v2348
  %v3664 = vsel %vm3648, %v3599, %v2350
  %v3665 = vsel %vm3648, %v3600, %v2352
  %v3666 = vsel %vm3648, %v3601, %v2354
  %v3667 = vsel %vm3648, %v3602, %v2356
  %v3668 = vsel %vm3648, %v3603, %v2358
  %v3669 = vsel %vm3648, %v3604, %v2360
  %v3670 = vsel %vm3648, %v3605, %v2362
  %v3671 = vsel %vm3648, %v3606, %v2364
  %v3672 = vsel %vm3648, %v3607, %v2366
  %v3673 = vsel %vm3648, %v3608, %v2368
  %v3674 = vsel %vm3648, %v3609, %v2370
  %v3675 = vsel %vm3648, %v3610, %v2372
  %v3676 = vsel %vm3648, %v3611, %v2374
  %v3677 = vsel %vm3648, %v3612, %v2376
  %v3678 = vsel %vm3648, %v3613, %v2378
  %v3679 = vsel %vm3648, %v3614, %v2380
  %v3680 = vsel %vm3648, %v3615, %v2382
  %v3681 = vsel %vm3648, %v3616, %v2384
  %v3682 = vsel %vm3648, %v3617, %v2386
  %v3683 = vsel %vm3648, %v3618, %v2388
  %v3684 = vsel %vm3648, %v3619, %v2390
  %v3685 = vsel %vm3648, %v3620, %v2392
  %v3686 = vsel %vm3648, %v3621, %v2394
  %v3687 = vsel %vm3648, %v3622, %v2396
  %v3688 = vsel %vm3648, %v3623, %v2398
  %v3689 = vsel %vm3648, %v3624, %v2400
  %v3690 = vsel %vm3648, %v3625, %v2402
  %v3691 = vsel %vm3648, %v3626, %v2404
  %v3692 = vsel %vm3648, %v3627, %v2406
  %v3693 = vsel %vm3648, %v3628, %v2408
  %v3694 = vsel %vm3648, %v3629, %v2410
  %v3695 = vsel %vm3648, %v3630, %v2412
  %v3696 = vsel %vm3648, %v3631, %v2414
  %v3697 = vsel %vm3648, %v3632, %v2416
  %v3698 = vsel %vm3648, %v3633, %v2418
  %v3699 = vsel %vm3648, %v3634, %v2420
  %v3700 = vsel %vm3648, %v3635, %v2422
  %v3701 = vsel %vm3648, %v3636, %v2424
  %v3702 = vsel %vm3648, %v3637, %v2426
  %v3703 = vsel %vm3648, %v3638, %v2428
  %v3704 = vsel %vm3648, %v3639, %v2430
  %v3705 = vsel %vm3648, %v3640, %v2432
  %v3706 = vsel %vm3648, %v3641, %v2434
  %v3707 = vsel %vm3648, %v3642, %v2436
  %v3708 = vsel %vm3648, %v3643, %v2438
  %v3709 = vsel %vm3648, %v3644, %v2440
  %v3710 = vsel %vm3648, %v3645, %v2442
  %v3711 = vsel %vm3648, %v3646, %v2444
  %v3712 = vsel %vm3648, %v3647, %v2446
  %v3713 = vsel %vm107, %v3649, %v2524
  %v3714 = vsel %vm107, %v3650, %v2526
  %v3715 = vsel %vm107, %v3651, %v2528
  %v3716 = vsel %vm107, %v3652, %v2530
  %v3717 = vsel %vm107, %v3653, %v2532
  %v3718 = vsel %vm107, %v3654, %v2534
  %v3719 = vsel %vm107, %v3655, %v2536
  %v3720 = vsel %vm107, %v3656, %v2538
  %v3721 = vsel %vm107, %v3657, %v2540
  %v3722 = vsel %vm107, %v3658, %v2542
  %v3723 = vsel %vm107, %v3659, %v2544
  %v3724 = vsel %vm107, %v3660, %v2546
  %v3725 = vsel %vm107, %v3661, %v2548
  %v3726 = vsel %vm107, %v3662, %v2550
  %v3727 = vsel %vm107, %v3663, %v2552
  %v3728 = vsel %vm107, %v3664, %v2554
  %v3729 = vsel %vm107, %v3665, %v2556
  %v3730 = vsel %vm107, %v3666, %v2558
  %v3731 = vsel %vm107, %v3667, %v2560
  %v3732 = vsel %vm107, %v3668, %v2562
  %v3733 = vsel %vm107, %v3669, %v2564
  %v3734 = vsel %vm107, %v3670, %v2566
  %v3735 = vsel %vm107, %v3671, %v2568
  %v3736 = vsel %vm107, %v3672, %v2570
  %v3737 = vsel %vm107, %v3673, %v2572
  %v3738 = vsel %vm107, %v3674, %v2574
  %v3739 = vsel %vm107, %v3675, %v2576
  %v3740 = vsel %vm107, %v3676, %v2578
  %v3741 = vsel %vm107, %v3677, %v2580
  %v3742 = vsel %vm107, %v3678, %v2582
  %v3743 = vsel %vm107, %v3679, %v2584
  %v3744 = vsel %vm107, %v3680, %v2586
  %v3745 = vsel %vm107, %v3681, %v2588
  %v3746 = vsel %vm107, %v3682, %v2590
  %v3747 = vsel %vm107, %v3683, %v2592
  %v3748 = vsel %vm107, %v3684, %v2594
  %v3749 = vsel %vm107, %v3685, %v2596
  %v3750 = vsel %vm107, %v3686, %v2598
  %v3751 = vsel %vm107, %v3687, %v2600
  %v3752 = vsel %vm107, %v3688, %v2602
  %v3753 = vsel %vm107, %v3689, %v2604
  %v3754 = vsel %vm107, %v3690, %v2606
  %v3755 = vsel %vm107, %v3691, %v2608
  %v3756 = vsel %vm107, %v3692, %v2610
  %v3757 = vsel %vm107, %v3693, %v2612
  %v3758 = vsel %vm107, %v3694, %v2614
  %v3759 = vsel %vm107, %v3695, %v2616
  %v3760 = vsel %vm107, %v3696, %v2618
  %v3761 = vsel %vm107, %v3697, %v2620
  %v3762 = vsel %vm107, %v3698, %v2622
  %v3763 = vsel %vm107, %v3699, %v2624
  %v3764 = vsel %vm107, %v3700, %v2626
  %v3765 = vsel %vm107, %v3701, %v2628
  %v3766 = vsel %vm107, %v3702, %v2630
  %v3767 = vsel %vm107, %v3703, %v2632
  %v3768 = vsel %vm107, %v3704, %v2634
  %v3769 = vsel %vm107, %v3705, %v2636
  %v3770 = vsel %vm107, %v3706, %v2638
  %v3771 = vsel %vm107, %v3707, %v2640
  %v3772 = vsel %vm107, %v3708, %v2642
  %v3773 = vsel %vm107, %v3709, %v2644
  %v3774 = vsel %vm107, %v3710, %v2646
  %v3775 = vsel %vm107, %v3711, %v2648
  %v3776 = vsel %vm107, %v3712, %v2650
  %vm3777 = vcmask 162816
  %v3778 = vsel %vm3777, %v3713, %v2726
  %v3779 = vsel %vm3777, %v3714, %v2728
  %v3780 = vsel %vm3777, %v3715, %v2730
  %v3781 = vsel %vm3777, %v3716, %v2732
  %v3782 = vsel %vm3777, %v3717, %v2734
  %v3783 = vsel %vm3777, %v3718, %v2736
  %v3784 = vsel %vm3777, %v3719, %v2738
  %v3785 = vsel %vm3777, %v3720, %v2740
  %v3786 = vsel %vm3777, %v3721, %v2742
  %v3787 = vsel %vm3777, %v3722, %v2744
  %v3788 = vsel %vm3777, %v3723, %v2746
  %v3789 = vsel %vm3777, %v3724, %v2748
  %v3790 = vsel %vm3777, %v3725, %v2750
  %v3791 = vsel %vm3777, %v3726, %v2752
  %v3792 = vsel %vm3777, %v3727, %v2754
  %v3793 = vsel %vm3777, %v3728, %v2756
  %v3794 = vsel %vm3777, %v3729, %v2758
  %v3795 = vsel %vm3777, %v3730, %v2760
  %v3796 = vsel %vm3777, %v3731, %v2762
  %v3797 = vsel %vm3777, %v3732, %v2764
  %v3798 = vsel %vm3777, %v3733, %v2766
  %v3799 = vsel %vm3777, %v3734, %v2768
  %v3800 = vsel %vm3777, %v3735, %v2770
  %v3801 = vsel %vm3777, %v3736, %v2772
  %v3802 = vsel %vm3777, %v3737, %v2774
  %v3803 = vsel %vm3777, %v3738, %v2776
  %v3804 = vsel %vm3777, %v3739, %v2778
  %v3805 = vsel %vm3777, %v3740, %v2780
  %v3806 = vsel %vm3777, %v3741, %v2782
  %v3807 = vsel %vm3777, %v3742, %v2784
  %v3808 = vsel %vm3777, %v3743, %v2786
  %v3809 = vsel %vm3777, %v3744, %v2788
  %v3810 = vsel %vm3777, %v3745, %v2790
  %v3811 = vsel %vm3777, %v3746, %v2792
  %v3812 = vsel %vm3777, %v3747, %v2794
  %v3813 = vsel %vm3777, %v3748, %v2796
  %v3814 = vsel %vm3777, %v3749, %v2798
  %v3815 = vsel %vm3777, %v3750, %v2800
  %v3816 = vsel %vm3777, %v3751, %v2802
  %v3817 = vsel %vm3777, %v3752, %v2804
  %v3818 = vsel %vm3777, %v3753, %v2806
  %v3819 = vsel %vm3777, %v3754, %v2808
  %v3820 = vsel %vm3777, %v3755, %v2810
  %v3821 = vsel %vm3777, %v3756, %v2812
  %v3822 = vsel %vm3777, %v3757, %v2814
  %v3823 = vsel %vm3777, %v3758, %v2816
  %v3824 = vsel %vm3777, %v3759, %v2818
  %v3825 = vsel %vm3777, %v3760, %v2820
  %v3826 = vsel %vm3777, %v3761, %v2822
  %v3827 = vsel %vm3777, %v3762, %v2824
  %v3828 = vsel %vm3777, %v3763, %v2826
  %v3829 = vsel %vm3777, %v3764, %v2828
  %v3830 = vsel %vm3777, %v3765, %v2830
  %v3831 = vsel %vm3777, %v3766, %v2832
  %v3832 = vsel %vm3777, %v3767, %v2834
  %v3833 = vsel %vm3777, %v3768, %v2836
  %v3834 = vsel %vm3777, %v3769, %v2838
  %v3835 = vsel %vm3777, %v3770, %v2840
  %v3836 = vsel %vm3777, %v3771, %v2842
  %v3837 = vsel %vm3777, %v3772, %v2844
  %v3838 = vsel %vm3777, %v3773, %v2846
  %v3839 = vsel %vm3777, %v3774, %v2848
  %v3840 = vsel %vm3777, %v3775, %v2850
  %v3841 = vsel %vm3777, %v3776, %v2852
  %vm3842 = vcmask 195584
  %v3843 = vsel %vm3842, %v3778, %v2922
  %v3844 = vsel %vm3842, %v3779, %v2924
  %v3845 = vsel %vm3842, %v3780, %v2926
  %v3846 = vsel %vm3842, %v3781, %v2928
  %v3847 = vsel %vm3842, %v3782, %v2930
  %v3848 = vsel %vm3842, %v3783, %v2932
  %v3849 = vsel %vm3842, %v3784, %v2934
  %v3850 = vsel %vm3842, %v3785, %v2936
  %v3851 = vsel %vm3842, %v3786, %v2938
  %v3852 = vsel %vm3842, %v3787, %v2940
  %v3853 = vsel %vm3842, %v3788, %v2942
  %v3854 = vsel %vm3842, %v3789, %v2944
  %v3855 = vsel %vm3842, %v3790, %v2946
  %v3856 = vsel %vm3842, %v3791, %v2948
  %v3857 = vsel %vm3842, %v3792, %v2950
  %v3858 = vsel %vm3842, %v3793, %v2952
  %v3859 = vsel %vm3842, %v3794, %v2954
  %v3860 = vsel %vm3842, %v3795, %v2956
  %v3861 = vsel %vm3842, %v3796, %v2958
  %v3862 = vsel %vm3842, %v3797, %v2960
  %v3863 = vsel %vm3842, %v3798, %v2962
  %v3864 = vsel %vm3842, %v3799, %v2964
  %v3865 = vsel %vm3842, %v3800, %v2966
  %v3866 = vsel %vm3842, %v3801, %v2968
  %v3867 = vsel %vm3842, %v3802, %v2970
  %v3868 = vsel %vm3842, %v3803, %v2972
  %v3869 = vsel %vm3842, %v3804, %v2974
  %v3870 = vsel %vm3842, %v3805, %v2976
  %v3871 = vsel %vm3842, %v3806, %v2978
  %v3872 = vsel %vm3842, %v3807, %v2980
  %v3873 = vsel %vm3842, %v3808, %v2982
  %v3874 = vsel %vm3842, %v3809, %v2984
  %v3875 = vsel %vm3842, %v3810, %v2986
  %v3876 = vsel %vm3842, %v3811, %v2988
  %v3877 = vsel %vm3842, %v3812, %v2990
  %v3878 = vsel %vm3842, %v3813, %v2992
  %v3879 = vsel %vm3842, %v3814, %v2994
  %v3880 = vsel %vm3842, %v3815, %v2996
  %v3881 = vsel %vm3842, %v3816, %v2998
  %v3882 = vsel %vm3842, %v3817, %v3000
  %v3883 = vsel %vm3842, %v3818, %v3002
  %v3884 = vsel %vm3842, %v3819, %v3004
  %v3885 = vsel %vm3842, %v3820, %v3006
  %v3886 = vsel %vm3842, %v3821, %v3008
  %v3887 = vsel %vm3842, %v3822, %v3010
  %v3888 = vsel %vm3842, %v3823, %v3012
  %v3889 = vsel %vm3842, %v3824, %v3014
  %v3890 = vsel %vm3842, %v3825, %v3016
  %v3891 = vsel %vm3842, %v3826, %v3018
  %v3892 = vsel %vm3842, %v3827, %v3020
  %v3893 = vsel %vm3842, %v3828, %v3022
  %v3894 = vsel %vm3842, %v3829, %v3024
  %v3895 = vsel %vm3842, %v3830, %v3026
  %v3896 = vsel %vm3842, %v3831, %v3028
  %v3897 = vsel %vm3842, %v3832, %v3030
  %v3898 = vsel %vm3842, %v3833, %v3032
  %v3899 = vsel %vm3842, %v3834, %v3034
  %v3900 = vsel %vm3842, %v3835, %v3036
  %v3901 = vsel %vm3842, %v3836, %v3038
  %v3902 = vsel %vm3842, %v3837, %v3040
  %v3903 = vsel %vm3842, %v3838, %v3042
  %v3904 = vsel %vm3842, %v3839, %v3044
  %v3905 = vsel %vm3842, %v3840, %v3046
  %v3906 = vsel %vm3842, %v3841, %v3048
  %vm3907 = vcmask 228352
  %v3908 = vsel %vm3907, %v3843, %v3126
  %v3909 = vsel %vm3907, %v3844, %v3128
  %v3910 = vsel %vm3907, %v3845, %v3130
  %v3911 = vsel %vm3907, %v3846, %v3132
  %v3912 = vsel %vm3907, %v3847, %v3134
  %v3913 = vsel %vm3907, %v3848, %v3136
  %v3914 = vsel %vm3907, %v3849, %v3138
  %v3915 = vsel %vm3907, %v3850, %v3140
  %v3916 = vsel %vm3907, %v3851, %v3142
  %v3917 = vsel %vm3907, %v3852, %v3144
  %v3918 = vsel %vm3907, %v3853, %v3146
  %v3919 = vsel %vm3907, %v3854, %v3148
  %v3920 = vsel %vm3907, %v3855, %v3150
  %v3921 = vsel %vm3907, %v3856, %v3152
  %v3922 = vsel %vm3907, %v3857, %v3154
  %v3923 = vsel %vm3907, %v3858, %v3156
  %v3924 = vsel %vm3907, %v3859, %v3158
  %v3925 = vsel %vm3907, %v3860, %v3160
  %v3926 = vsel %vm3907, %v3861, %v3162
  %v3927 = vsel %vm3907, %v3862, %v3164
  %v3928 = vsel %vm3907, %v3863, %v3166
  %v3929 = vsel %vm3907, %v3864, %v3168
  %v3930 = vsel %vm3907, %v3865, %v3170
  %v3931 = vsel %vm3907, %v3866, %v3172
  %v3932 = vsel %vm3907, %v3867, %v3174
  %v3933 = vsel %vm3907, %v3868, %v3176
  %v3934 = vsel %vm3907, %v3869, %v3178
  %v3935 = vsel %vm3907, %v3870, %v3180
  %v3936 = vsel %vm3907, %v3871, %v3182
  %v3937 = vsel %vm3907, %v3872, %v3184
  %v3938 = vsel %vm3907, %v3873, %v3186
  %v3939 = vsel %vm3907, %v3874, %v3188
  %v3940 = vsel %vm3907, %v3875, %v3190
  %v3941 = vsel %vm3907, %v3876, %v3192
  %v3942 = vsel %vm3907, %v3877, %v3194
  %v3943 = vsel %vm3907, %v3878, %v3196
  %v3944 = vsel %vm3907, %v3879, %v3198
  %v3945 = vsel %vm3907, %v3880, %v3200
  %v3946 = vsel %vm3907, %v3881, %v3202
  %v3947 = vsel %vm3907, %v3882, %v3204
  %v3948 = vsel %vm3907, %v3883, %v3206
  %v3949 = vsel %vm3907, %v3884, %v3208
  %v3950 = vsel %vm3907, %v3885, %v3210
  %v3951 = vsel %vm3907, %v3886, %v3212
  %v3952 = vsel %vm3907, %v3887, %v3214
  %v3953 = vsel %vm3907, %v3888, %v3216
  %v3954 = vsel %vm3907, %v3889, %v3218
  %v3955 = vsel %vm3907, %v3890, %v3220
  %v3956 = vsel %vm3907, %v3891, %v3222
  %v3957 = vsel %vm3907, %v3892, %v3224
  %v3958 = vsel %vm3907, %v3893, %v3226
  %v3959 = vsel %vm3907, %v3894, %v3228
  %v3960 = vsel %vm3907, %v3895, %v3230
  %v3961 = vsel %vm3907, %v3896, %v3232
  %v3962 = vsel %vm3907, %v3897, %v3234
  %v3963 = vsel %vm3907, %v3898, %v3236
  %v3964 = vsel %vm3907, %v3899, %v3238
  %v3965 = vsel %vm3907, %v3900, %v3240
  %v3966 = vsel %vm3907, %v3901, %v3242
  %v3967 = vsel %vm3907, %v3902, %v3244
  %v3968 = vsel %vm3907, %v3903, %v3246
  %v3969 = vsel %vm3907, %v3904, %v3248
  %v3970 = vsel %vm3907, %v3905, %v3250
  %v3971 = vsel %vm3907, %v3906, %v3252
  %vm3972 = vcmask 261120
  %v3973 = vsel %vm3972, %v3908, %v3328
  %v3974 = vsel %vm3972, %v3909, %v3330
  %v3975 = vsel %vm3972, %v3910, %v3332
  %v3976 = vsel %vm3972, %v3911, %v3334
  %v3977 = vsel %vm3972, %v3912, %v3336
  %v3978 = vsel %vm3972, %v3913, %v3338
  %v3979 = vsel %vm3972, %v3914, %v3340
  %v3980 = vsel %vm3972, %v3915, %v3342
  %v3981 = vsel %vm3972, %v3916, %v3344
  %v3982 = vsel %vm3972, %v3917, %v3346
  %v3983 = vsel %vm3972, %v3918, %v3348
  %v3984 = vsel %vm3972, %v3919, %v3350
  %v3985 = vsel %vm3972, %v3920, %v3352
  %v3986 = vsel %vm3972, %v3921, %v3354
  %v3987 = vsel %vm3972, %v3922, %v3356
  %v3988 = vsel %vm3972, %v3923, %v3358
  %v3989 = vsel %vm3972, %v3924, %v3360
  %v3990 = vsel %vm3972, %v3925, %v3362
  %v3991 = vsel %vm3972, %v3926, %v3364
  %v3992 = vsel %vm3972, %v3927, %v3366
  %v3993 = vsel %vm3972, %v3928, %v3368
  %v3994 = vsel %vm3972, %v3929, %v3370
  %v3995 = vsel %vm3972, %v3930, %v3372
  %v3996 = vsel %vm3972, %v3931, %v3374
  %v3997 = vsel %vm3972, %v3932, %v3376
  %v3998 = vsel %vm3972, %v3933, %v3378
  %v3999 = vsel %vm3972, %v3934, %v3380
  %v4000 = vsel %vm3972, %v3935, %v3382
  %v4001 = vsel %vm3972, %v3936, %v3384
  %v4002 = vsel %vm3972, %v3937, %v3386
  %v4003 = vsel %vm3972, %v3938, %v3388
  %v4004 = vsel %vm3972, %v3939, %v3390
  %v4005 = vsel %vm3972, %v3940, %v3392
  %v4006 = vsel %vm3972, %v3941, %v3394
  %v4007 = vsel %vm3972, %v3942, %v3396
  %v4008 = vsel %vm3972, %v3943, %v3398
  %v4009 = vsel %vm3972, %v3944, %v3400
  %v4010 = vsel %vm3972, %v3945, %v3402
  %v4011 = vsel %vm3972, %v3946, %v3404
  %v4012 = vsel %vm3972, %v3947, %v3406
  %v4013 = vsel %vm3972, %v3948, %v3408
  %v4014 = vsel %vm3972, %v3949, %v3410
  %v4015 = vsel %vm3972, %v3950, %v3412
  %v4016 = vsel %vm3972, %v3951, %v3414
  %v4017 = vsel %vm3972, %v3952, %v3416
  %v4018 = vsel %vm3972, %v3953, %v3418
  %v4019 = vsel %vm3972, %v3954, %v3420
  %v4020 = vsel %vm3972, %v3955, %v3422
  %v4021 = vsel %vm3972, %v3956, %v3424
  %v4022 = vsel %vm3972, %v3957, %v3426
  %v4023 = vsel %vm3972, %v3958, %v3428
  %v4024 = vsel %vm3972, %v3959, %v3430
  %v4025 = vsel %vm3972, %v3960, %v3432
  %v4026 = vsel %vm3972, %v3961, %v3434
  %v4027 = vsel %vm3972, %v3962, %v3436
  %v4028 = vsel %vm3972, %v3963, %v3438
  %v4029 = vsel %vm3972, %v3964, %v3440
  %v4030 = vsel %vm3972, %v3965, %v3442
  %v4031 = vsel %vm3972, %v3966, %v3444
  %v4032 = vsel %vm3972, %v3967, %v3446
  %v4033 = vsel %vm3972, %v3968, %v3448
  %v4034 = vsel %vm3972, %v3969, %v3450
  %v4035 = vsel %vm3972, %v3970, %v3452
  %v4036 = vsel %vm3972, %v3971, %v3454
  %v4037 = vld [vmem:[%s6] sm:$0xff]
  %v4038 = vld [vmem:[%s6 + $0x8] sm:$0xff]
  %v4039 = vld [vmem:[%s6 + $0x10] sm:$0xff]
  %v4040 = vld [vmem:[%s6 + $0x18] sm:$0xff]
  %v4041 = vld [vmem:[%s6 + $0x20] sm:$0xf]
  %vm4042 = vcmask 293888
  %v4044 = vsel %vm4042, %v3973, 0
  %v4047 = vsel %vm4042, %v3974, 0
  %v4050 = vsel %vm4042, %v3975, 0
  %v4053 = vsel %vm4042, %v3976, 0
  %v4056 = vsel %vm4042, %v3977, 0
  %v4059 = vsel %vm4042, %v3978, 0
  %v4062 = vsel %vm4042, %v3979, 0
  %v4065 = vsel %vm4042, %v3980, 0
  %v4068 = vsel %vm4042, %v3981, 0
  %v4071 = vsel %vm4042, %v3982, 0
  %v4074 = vsel %vm4042, %v3983, 0
  %v4077 = vsel %vm4042, %v3984, 0
  %v4080 = vsel %vm4042, %v3985, 0
  %v4083 = vsel %vm4042, %v3986, 0
  %v4086 = vsel %vm4042, %v3987, 0
  %v4089 = vsel %vm4042, %v3988, 0
  %v4092 = vsel %vm4042, %v3989, 0
  %v4095 = vsel %vm4042, %v3990, 0
  %v4098 = vsel %vm4042, %v3991, 0
  %v4101 = vsel %vm4042, %v3992, 0
  %v4104 = vsel %vm4042, %v3993, 0
  %v4107 = vsel %vm4042, %v3994, 0
  %v4110 = vsel %vm4042, %v3995, 0
  %v4113 = vsel %vm4042, %v3996, 0
  %v4116 = vsel %vm4042, %v3997, 0
  %v4119 = vsel %vm4042, %v3998, 0
  %v4122 = vsel %vm4042, %v3999, 0
  %v4125 = vsel %vm4042, %v4000, 0
  %v4128 = vsel %vm4042, %v4001, 0
  %v4131 = vsel %vm4042, %v4002, 0
  %v4134 = vsel %vm4042, %v4003, 0
  %v4137 = vsel %vm4042, %v4004, 0
  %v4140 = vsel %vm4042, %v4005, 0
  %v4143 = vsel %vm4042, %v4006, 0
  %v4146 = vsel %vm4042, %v4007, 0
  %v4149 = vsel %vm4042, %v4008, 0
  %v4152 = vsel %vm4042, %v4009, 0
  %v4155 = vsel %vm4042, %v4010, 0
  %v4158 = vsel %vm4042, %v4011, 0
  %v4161 = vsel %vm4042, %v4012, 0
  %v4164 = vsel %vm4042, %v4013, 0
  %v4167 = vsel %vm4042, %v4014, 0
  %v4170 = vsel %vm4042, %v4015, 0
  %v4173 = vsel %vm4042, %v4016, 0
  %v4176 = vsel %vm4042, %v4017, 0
  %v4179 = vsel %vm4042, %v4018, 0
  %v4182 = vsel %vm4042, %v4019, 0
  %v4185 = vsel %vm4042, %v4020, 0
  %v4188 = vsel %vm4042, %v4021, 0
  %v4191 = vsel %vm4042, %v4022, 0
  %v4194 = vsel %vm4042, %v4023, 0
  %v4197 = vsel %vm4042, %v4024, 0
  %v4200 = vsel %vm4042, %v4025, 0
  %v4203 = vsel %vm4042, %v4026, 0
  %v4206 = vsel %vm4042, %v4027, 0
  %v4209 = vsel %vm4042, %v4028, 0
  %v4212 = vsel %vm4042, %v4029, 0
  %v4215 = vsel %vm4042, %v4030, 0
  %v4218 = vsel %vm4042, %v4031, 0
  %v4221 = vsel %vm4042, %v4032, 0
  %v4224 = vsel %vm4042, %v4033, 0
  %v4227 = vsel %vm4042, %v4034, 0
  %v4230 = vsel %vm4042, %v4035, 0
  %v4233 = vsel %vm4042, %v4036, 0
  %vm4235 = vcmask 1043456
  %v4237 = vsel %vm4235, %v4041, 0
  %4239 = vmatprep.subr.mxu0 0.0
  %4240 = vmatpush1.msra.mxu0 %v4037
  %4241 = vmatprep.subr.mxu0 0.0
  %4242 = vmatpush1.msra.mxu0 %v4038
  %4243 = vmatprep.subr.mxu0 0.0
  %4244 = vmatpush1.msra.mxu0 %v4039
  %4245 = vmatprep.subr.mxu0 0.0
  %4246 = vmatpush1.msra.mxu0 %v4040
  %4247 = vmatprep.subr.mxu0 0.0
  %4248 = vmatpush1.msra.mxu0 %v4237
  %4249 = vmatprep.subr.mxu0 0.0
  %4250 = vmatpush1.msra.mxu0 0.0
  %4251 = vmatprep.subr.mxu0 0.0
  %4252 = vmatpush1.msra.mxu0 0.0
  %4253 = vmatprep.subr.mxu0 0.0
  %4254 = vmatpush1.msra.mxu0 0.0
  %4255 = vmatprep.subr.mxu0 0.0
  %4256 = vmatpush1.msra.mxu0 0.0
  %4257 = vmatprep.subr.mxu0 0.0
  %4258 = vmatpush1.msra.mxu0 0.0
  %4259 = vmatprep.subr.mxu0 0.0
  %4260 = vmatpush1.msra.mxu0 0.0
  %4261 = vmatprep.subr.mxu0 0.0
  %4262 = vmatpush1.msra.mxu0 0.0
  %4263 = vmatprep.subr.mxu0 0.0
  %4264 = vmatpush1.msra.mxu0 0.0
  %4265 = vmatprep.subr.mxu0 0.0
  %4266 = vmatpush1.msra.mxu0 0.0
  %4267 = vmatprep.subr.mxu0 0.0
  %4268 = vmatpush1.msra.mxu0 0.0
  %4269 = vmatprep.subr.mxu0 0.0
  %4270 = vmatpush1.msra.mxu0 0.0
  %4271 = vmatprep.subr.mxu0 0.0
  %4272 = vmatpush1.msra.mxu0 0.0
  %4273 = vmatprep.subr.mxu0 0.0
  %4274 = vmatpush1.msra.mxu0 0.0
  %4275 = vmatprep.subr.mxu0 0.0
  %4276 = vmatpush1.msra.mxu0 0.0
  %4277 = vmatprep.subr.mxu0 0.0
  %4278 = vmatpush1.msra.mxu0 0.0
  %4279 = vmatprep.subr.mxu0 0.0
  %4280 = vmatpush1.msra.mxu0 0.0
  %4281 = vmatprep.subr.mxu0 0.0
  %4282 = vmatpush1.msra.mxu0 0.0
  %4283 = vmatprep.subr.mxu0 0.0
  %4284 = vmatpush1.msra.mxu0 0.0
  %4285 = vmatprep.subr.mxu0 0.0
  %4286 = vmatpush1.msra.mxu0 0.0
  %4287 = vmatprep.subr.mxu0 0.0
  %4288 = vmatpush1.msra.mxu0 0.0
  %4289 = vmatprep.subr.mxu0 0.0
  %4290 = vmatpush1.msra.mxu0 0.0
  %4291 = vmatprep.subr.mxu0 0.0
  %4292 = vmatpush1.msra.mxu0 0.0
  %4293 = vmatprep.subr.mxu0 0.0
  %4294 = vmatpush1.msra.mxu0 0.0
  %4295 = vmatprep.subr.mxu0 0.0
  %4296 = vmatpush1.msra.mxu0 0.0
  %4297 = vmatprep.subr.mxu0 0.0
  %4298 = vmatpush1.msra.mxu0 0.0
  %4299 = vmatprep.subr.mxu0 0.0
  %4300 = vmatpush1.msra.mxu0 0.0
  %4301 = vmatprep.subr.mxu0 0.0
  %4302 = vmatpush1.msra.mxu0 0.0
  %4303 = vmatprep.mubr.f32.mxu0 0.0
  %4304 = vmatmul.mubr.f32.gmra.mrb[0].mxu0 %v4044
  %v4305 = vpop.f32.mrb[0].mxu0
  %v4306 = vadd.f32 0.0, %v4305
  %v4307 = vpop.f32.mrb[0].mxu0
  %4308 = vmatprep.mubr.f32.mxu0 0.0
  %4309 = vmatmul.mubr.f32.gmra.mrb[0].mxu0 %v4047
  %v4310 = vpop.f32.mrb[0].mxu0
  %v4311 = vadd.f32 0.0, %v4310
  %v4312 = vpop.f32.mrb[0].mxu0
  %4313 = vmatprep.mubr.f32.mxu0 0.0
  %4314 = vmatmul.mubr.f32.gmra.mrb[0].mxu0 %v4050
  %v4315 = vpop.f32.mrb[0].mxu0
  %v4316 = vadd.f32 0.0, %v4315
  %v4317 = vpop.f32.mrb[0].mxu0
  %4318 = vmatprep.mubr.f32.mxu0 0.0
  %4319 = vmatmul.mubr.f32.gmra.mrb[0].mxu0 %v4053
  %v4320 = vpop.f32.mrb[0].mxu0
  %v4321 = vadd.f32 0.0, %v4320
  %v4322 = vpop.f32.mrb[0].mxu0
  %4323 = vmatprep.mubr.f32.mxu0 0.0
  %4324 = vmatmul.mubr.f32.gmra.mrb[0].mxu0 %v4056
  %v4325 = vpop.f32.mrb[0].mxu0
  %v4326 = vadd.f32 0.0, %v4325
  %v4327 = vpop.f32.mrb[0].mxu0
  %4328 = vmatprep.mubr.f32.mxu0 0.0
  %4329 = vmatmul.mubr.f32.gmra.mrb[0].mxu0 %v4059
  %v4330 = vpop.f32.mrb[0].mxu0
  %v4331 = vadd.f32 0.0, %v4330
  %v4332 = vpop.f32.mrb[0].mxu0
  %4333 = vmatprep.mubr.f32.mxu0 0.0
  %4334 = vmatmul.mubr.f32.gmra.mrb[0].mxu0 %v4062
  %v4335 = vpop.f32.mrb[0].mxu0
  %v4336 = vadd.f32 0.0, %v4335
  %v4337 = vpop.f32.mrb[0].mxu0
  %4338 = vmatprep.mubr.f32.mxu0 0.0
  %4339 = vmatmul.mubr.f32.gmra.mrb[0].mxu0 %v4065
  %v4340 = vpop.f32.mrb[0].mxu0
  %v4341 = vadd.f32 0.0, %v4340
  %v4342 = vpop.f32.mrb[0].mxu0
  %4343 = vmatprep.mubr.f32.mxu0 0.0
  %4344 = vmatmul.mubr.f32.gmra.mrb[0].mxu0 %v4068
  %v4345 = vpop.f32.mrb[0].mxu0
  %v4346 = vadd.f32 0.0, %v4345
  %v4347 = vpop.f32.mrb[0].mxu0
  %4348 = vmatprep.mubr.f32.mxu0 0.0
  %4349 = vmatmul.mubr.f32.gmra.mrb[0].mxu0 %v4071
  %v4350 = vpop.f32.mrb[0].mxu0
  %v4351 = vadd.f32 0.0, %v4350
  %v4352 = vpop.f32.mrb[0].mxu0
  %4353 = vmatprep.mubr.f32.mxu0 0.0
  %4354 = vmatmul.mubr.f32.gmra.mrb[0].mxu0 %v4074
  %v4355 = vpop.f32.mrb[0].mxu0
  %v4356 = vadd.f32 0.0, %v4355
  %v4357 = vpop.f32.mrb[0].mxu0
  %4358 = vmatprep.mubr.f32.mxu0 0.0
  %4359 = vmatmul.mubr.f32.gmra.mrb[0].mxu0 %v4077
  %v4360 = vpop.f32.mrb[0].mxu0
  %v4361 = vadd.f32 0.0, %v4360
  %v4362 = vpop.f32.mrb[0].mxu0
  %4363 = vmatprep.mubr.f32.mxu0 0.0
  %4364 = vmatmul.mubr.f32.gmra.mrb[0].mxu0 %v4080
  %v4365 = vpop.f32.mrb[0].mxu0
  %v4366 = vadd.f32 0.0, %v4365
  %v4367 = vpop.f32.mrb[0].mxu0
  %4368 = vmatprep.mubr.f32.mxu0 0.0
  %4369 = vmatmul.mubr.f32.gmra.mrb[0].mxu0 %v4083
  %v4370 = vpop.f32.mrb[0].mxu0
  %v4371 = vadd.f32 0.0, %v4370
  %v4372 = vpop.f32.mrb[0].mxu0
  %4373 = vmatprep.mubr.f32.mxu0 0.0
  %4374 = vmatmul.mubr.f32.gmra.mrb[0].mxu0 %v4086
  %v4375 = vpop.f32.mrb[0].mxu0
  %v4376 = vadd.f32 0.0, %v4375
  %v4377 = vpop.f32.mrb[0].mxu0
  %4378 = vmatprep.mubr.f32.mxu0 0.0
  %4379 = vmatmul.mubr.f32.gmra.mrb[0].mxu0 %v4089
  %v4380 = vpop.f32.mrb[0].mxu0
  %v4381 = vadd.f32 0.0, %v4380
  %v4382 = vpop.f32.mrb[0].mxu0
  %4383 = vmatprep.mubr.f32.mxu0 0.0
  %4384 = vmatmul.mubr.f32.gmra.mrb[0].mxu0 %v4092
  %v4385 = vpop.f32.mrb[0].mxu0
  %v4386 = vadd.f32 0.0, %v4385
  %v4387 = vpop.f32.mrb[0].mxu0
  %4388 = vmatprep.mubr.f32.mxu0 0.0
  %4389 = vmatmul.mubr.f32.gmra.mrb[0].mxu0 %v4095
  %v4390 = vpop.f32.mrb[0].mxu0
  %v4391 = vadd.f32 0.0, %v4390
  %v4392 = vpop.f32.mrb[0].mxu0
  %4393 = vmatprep.mubr.f32.mxu0 0.0
  %4394 = vmatmul.mubr.f32.gmra.mrb[0].mxu0 %v4098
  %v4395 = vpop.f32.mrb[0].mxu0
  %v4396 = vadd.f32 0.0, %v4395
  %v4397 = vpop.f32.mrb[0].mxu0
  %4398 = vmatprep.mubr.f32.mxu0 0.0
  %4399 = vmatmul.mubr.f32.gmra.mrb[0].mxu0 %v4101
  %v4400 = vpop.f32.mrb[0].mxu0
  %v4401 = vadd.f32 0.0, %v4400
  %v4402 = vpop.f32.mrb[0].mxu0
  %4403 = vmatprep.mubr.f32.mxu0 0.0
  %4404 = vmatmul.mubr.f32.gmra.mrb[0].mxu0 %v4104
  %v4405 = vpop.f32.mrb[0].mxu0
  %v4406 = vadd.f32 0.0, %v4405
  %v4407 = vpop.f32.mrb[0].mxu0
  %4408 = vmatprep.mubr.f32.mxu0 0.0
  %4409 = vmatmul.mubr.f32.gmra.mrb[0].mxu0 %v4107
  %v4410 = vpop.f32.mrb[0].mxu0
  %v4411 = vadd.f32 0.0, %v4410
  %v4412 = vpop.f32.mrb[0].mxu0
  %4413 = vmatprep.mubr.f32.mxu0 0.0
  %4414 = vmatmul.mubr.f32.gmra.mrb[0].mxu0 %v4110
  %v4415 = vpop.f32.mrb[0].mxu0
  %v4416 = vadd.f32 0.0, %v4415
  %v4417 = vpop.f32.mrb[0].mxu0
  %4418 = vmatprep.mubr.f32.mxu0 0.0
  %4419 = vmatmul.mubr.f32.gmra.mrb[0].mxu0 %v4113
  %v4420 = vpop.f32.mrb[0].mxu0
  %v4421 = vadd.f32 0.0, %v4420
  %v4422 = vpop.f32.mrb[0].mxu0
  %4423 = vmatprep.mubr.f32.mxu0 0.0
  %4424 = vmatmul.mubr.f32.gmra.mrb[0].mxu0 %v4116
  %v4425 = vpop.f32.mrb[0].mxu0
  %v4426 = vadd.f32 0.0, %v4425
  %v4427 = vpop.f32.mrb[0].mxu0
  %4428 = vmatprep.mubr.f32.mxu0 0.0
  %4429 = vmatmul.mubr.f32.gmra.mrb[0].mxu0 %v4119
  %v4430 = vpop.f32.mrb[0].mxu0
  %v4431 = vadd.f32 0.0, %v4430
  %v4432 = vpop.f32.mrb[0].mxu0
  %4433 = vmatprep.mubr.f32.mxu0 0.0
  %4434 = vmatmul.mubr.f32.gmra.mrb[0].mxu0 %v4122
  %v4435 = vpop.f32.mrb[0].mxu0
  %v4436 = vadd.f32 0.0, %v4435
  %v4437 = vpop.f32.mrb[0].mxu0
  %4438 = vmatprep.mubr.f32.mxu0 0.0
  %4439 = vmatmul.mubr.f32.gmra.mrb[0].mxu0 %v4125
  %v4440 = vpop.f32.mrb[0].mxu0
  %v4441 = vadd.f32 0.0, %v4440
  %v4442 = vpop.f32.mrb[0].mxu0
  %4443 = vmatprep.mubr.f32.mxu0 0.0
  %4444 = vmatmul.mubr.f32.gmra.mrb[0].mxu0 %v4128
  %v4445 = vpop.f32.mrb[0].mxu0
  %v4446 = vadd.f32 0.0, %v4445
  %v4447 = vpop.f32.mrb[0].mxu0
  %4448 = vmatprep.mubr.f32.mxu0 0.0
  %4449 = vmatmul.mubr.f32.gmra.mrb[0].mxu0 %v4131
  %v4450 = vpop.f32.mrb[0].mxu0
  %v4451 = vadd.f32 0.0, %v4450
  %v4452 = vpop.f32.mrb[0].mxu0
  %4453 = vmatprep.mubr.f32.mxu0 0.0
  %4454 = vmatmul.mubr.f32.gmra.mrb[0].mxu0 %v4134
  %v4455 = vpop.f32.mrb[0].mxu0
  %v4456 = vadd.f32 0.0, %v4455
  %v4457 = vpop.f32.mrb[0].mxu0
  %4458 = vmatprep.mubr.f32.mxu0 0.0
  %4459 = vmatmul.mubr.f32.gmra.mrb[0].mxu0 %v4137
  %v4460 = vpop.f32.mrb[0].mxu0
  %v4461 = vadd.f32 0.0, %v4460
  %v4462 = vpop.f32.mrb[0].mxu0
  %4463 = vmatprep.mubr.f32.mxu0 0.0
  %4464 = vmatmul.mubr.f32.gmra.mrb[0].mxu0 %v4140
  %v4465 = vpop.f32.mrb[0].mxu0
  %v4466 = vadd.f32 0.0, %v4465
  %v4467 = vpop.f32.mrb[0].mxu0
  %4468 = vmatprep.mubr.f32.mxu0 0.0
  %4469 = vmatmul.mubr.f32.gmra.mrb[0].mxu0 %v4143
  %v4470 = vpop.f32.mrb[0].mxu0
  %v4471 = vadd.f32 0.0, %v4470
  %v4472 = vpop.f32.mrb[0].mxu0
  %4473 = vmatprep.mubr.f32.mxu0 0.0
  %4474 = vmatmul.mubr.f32.gmra.mrb[0].mxu0 %v4146
  %v4475 = vpop.f32.mrb[0].mxu0
  %v4476 = vadd.f32 0.0, %v4475
  %v4477 = vpop.f32.mrb[0].mxu0
  %4478 = vmatprep.mubr.f32.mxu0 0.0
  %4479 = vmatmul.mubr.f32.gmra.mrb[0].mxu0 %v4149
  %v4480 = vpop.f32.mrb[0].mxu0
  %v4481 = vadd.f32 0.0, %v4480
  %v4482 = vpop.f32.mrb[0].mxu0
  %4483 = vmatprep.mubr.f32.mxu0 0.0
  %4484 = vmatmul.mubr.f32.gmra.mrb[0].mxu0 %v4152
  %v4485 = vpop.f32.mrb[0].mxu0
  %v4486 = vadd.f32 0.0, %v4485
  %v4487 = vpop.f32.mrb[0].mxu0
  %4488 = vmatprep.mubr.f32.mxu0 0.0
  %4489 = vmatmul.mubr.f32.gmra.mrb[0].mxu0 %v4155
  %v4490 = vpop.f32.mrb[0].mxu0
  %v4491 = vadd.f32 0.0, %v4490
  %v4492 = vpop.f32.mrb[0].mxu0
  %4493 = vmatprep.mubr.f32.mxu0 0.0
  %4494 = vmatmul.mubr.f32.gmra.mrb[0].mxu0 %v4158
  %v4495 = vpop.f32.mrb[0].mxu0
  %v4496 = vadd.f32 0.0, %v4495
  %v4497 = vpop.f32.mrb[0].mxu0
  %4498 = vmatprep.mubr.f32.mxu0 0.0
  %4499 = vmatmul.mubr.f32.gmra.mrb[0].mxu0 %v4161
  %v4500 = vpop.f32.mrb[0].mxu0
  %v4501 = vadd.f32 0.0, %v4500
  %v4502 = vpop.f32.mrb[0].mxu0
  %4503 = vmatprep.mubr.f32.mxu0 0.0
  %4504 = vmatmul.mubr.f32.gmra.mrb[0].mxu0 %v4164
  %v4505 = vpop.f32.mrb[0].mxu0
  %v4506 = vadd.f32 0.0, %v4505
  %v4507 = vpop.f32.mrb[0].mxu0
  %4508 = vmatprep.mubr.f32.mxu0 0.0
  %4509 = vmatmul.mubr.f32.gmra.mrb[0].mxu0 %v4167
  %v4510 = vpop.f32.mrb[0].mxu0
  %v4511 = vadd.f32 0.0, %v4510
  %v4512 = vpop.f32.mrb[0].mxu0
  %4513 = vmatprep.mubr.f32.mxu0 0.0
  %4514 = vmatmul.mubr.f32.gmra.mrb[0].mxu0 %v4170
  %v4515 = vpop.f32.mrb[0].mxu0
  %v4516 = vadd.f32 0.0, %v4515
  %v4517 = vpop.f32.mrb[0].mxu0
  %4518 = vmatprep.mubr.f32.mxu0 0.0
  %4519 = vmatmul.mubr.f32.gmra.mrb[0].mxu0 %v4173
  %v4520 = vpop.f32.mrb[0].mxu0
  %v4521 = vadd.f32 0.0, %v4520
  %v4522 = vpop.f32.mrb[0].mxu0
  %4523 = vmatprep.mubr.f32.mxu0 0.0
  %4524 = vmatmul.mubr.f32.gmra.mrb[0].mxu0 %v4176
  %v4525 = vpop.f32.mrb[0].mxu0
  %v4526 = vadd.f32 0.0, %v4525
  %v4527 = vpop.f32.mrb[0].mxu0
  %4528 = vmatprep.mubr.f32.mxu0 0.0
  %4529 = vmatmul.mubr.f32.gmra.mrb[0].mxu0 %v4179
  %v4530 = vpop.f32.mrb[0].mxu0
  %v4531 = vadd.f32 0.0, %v4530
  %v4532 = vpop.f32.mrb[0].mxu0
  %4533 = vmatprep.mubr.f32.mxu0 0.0
  %4534 = vmatmul.mubr.f32.gmra.mrb[0].mxu0 %v4182
  %v4535 = vpop.f32.mrb[0].mxu0
  %v4536 = vadd.f32 0.0, %v4535
  %v4537 = vpop.f32.mrb[0].mxu0
  %4538 = vmatprep.mubr.f32.mxu0 0.0
  %4539 = vmatmul.mubr.f32.gmra.mrb[0].mxu0 %v4185
  %v4540 = vpop.f32.mrb[0].mxu0
  %v4541 = vadd.f32 0.0, %v4540
  %v4542 = vpop.f32.mrb[0].mxu0
  %4543 = vmatprep.mubr.f32.mxu0 0.0
  %4544 = vmatmul.mubr.f32.gmra.mrb[0].mxu0 %v4188
  %v4545 = vpop.f32.mrb[0].mxu0
  %v4546 = vadd.f32 0.0, %v4545
  %v4547 = vpop.f32.mrb[0].mxu0
  %4548 = vmatprep.mubr.f32.mxu0 0.0
  %4549 = vmatmul.mubr.f32.gmra.mrb[0].mxu0 %v4191
  %v4550 = vpop.f32.mrb[0].mxu0
  %v4551 = vadd.f32 0.0, %v4550
  %v4552 = vpop.f32.mrb[0].mxu0
  %4553 = vmatprep.mubr.f32.mxu0 0.0
  %4554 = vmatmul.mubr.f32.gmra.mrb[0].mxu0 %v4194
  %v4555 = vpop.f32.mrb[0].mxu0
  %v4556 = vadd.f32 0.0, %v4555
  %v4557 = vpop.f32.mrb[0].mxu0
  %4558 = vmatprep.mubr.f32.mxu0 0.0
  %4559 = vmatmul.mubr.f32.gmra.mrb[0].mxu0 %v4197
  %v4560 = vpop.f32.mrb[0].mxu0
  %v4561 = vadd.f32 0.0, %v4560
  %v4562 = vpop.f32.mrb[0].mxu0
  %4563 = vmatprep.mubr.f32.mxu0 0.0
  %4564 = vmatmul.mubr.f32.gmra.mrb[0].mxu0 %v4200
  %v4565 = vpop.f32.mrb[0].mxu0
  %v4566 = vadd.f32 0.0, %v4565
  %v4567 = vpop.f32.mrb[0].mxu0
  %4568 = vmatprep.mubr.f32.mxu0 0.0
  %4569 = vmatmul.mubr.f32.gmra.mrb[0].mxu0 %v4203
  %v4570 = vpop.f32.mrb[0].mxu0
  %v4571 = vadd.f32 0.0, %v4570
  %v4572 = vpop.f32.mrb[0].mxu0
  %4573 = vmatprep.mubr.f32.mxu0 0.0
  %4574 = vmatmul.mubr.f32.gmra.mrb[0].mxu0 %v4206
  %v4575 = vpop.f32.mrb[0].mxu0
  %v4576 = vadd.f32 0.0, %v4575
  %v4577 = vpop.f32.mrb[0].mxu0
  %4578 = vmatprep.mubr.f32.mxu0 0.0
  %4579 = vmatmul.mubr.f32.gmra.mrb[0].mxu0 %v4209
  %v4580 = vpop.f32.mrb[0].mxu0
  %v4581 = vadd.f32 0.0, %v4580
  %v4582 = vpop.f32.mrb[0].mxu0
  %4583 = vmatprep.mubr.f32.mxu0 0.0
  %4584 = vmatmul.mubr.f32.gmra.mrb[0].mxu0 %v4212
  %v4585 = vpop.f32.mrb[0].mxu0
  %v4586 = vadd.f32 0.0, %v4585
  %v4587 = vpop.f32.mrb[0].mxu0
  %4588 = vmatprep.mubr.f32.mxu0 0.0
  %4589 = vmatmul.mubr.f32.gmra.mrb[0].mxu0 %v4215
  %v4590 = vpop.f32.mrb[0].mxu0
  %v4591 = vadd.f32 0.0, %v4590
  %v4592 = vpop.f32.mrb[0].mxu0
  %4593 = vmatprep.mubr.f32.mxu0 0.0
  %4594 = vmatmul.mubr.f32.gmra.mrb[0].mxu0 %v4218
  %v4595 = vpop.f32.mrb[0].mxu0
  %v4596 = vadd.f32 0.0, %v4595
  %v4597 = vpop.f32.mrb[0].mxu0
  %4598 = vmatprep.mubr.f32.mxu0 0.0
  %4599 = vmatmul.mubr.f32.gmra.mrb[0].mxu0 %v4221
  %v4600 = vpop.f32.mrb[0].mxu0
  %v4601 = vadd.f32 0.0, %v4600
  %v4602 = vpop.f32.mrb[0].mxu0
  %4603 = vmatprep.mubr.f32.mxu0 0.0
  %4604 = vmatmul.mubr.f32.gmra.mrb[0].mxu0 %v4224
  %v4605 = vpop.f32.mrb[0].mxu0
  %v4606 = vadd.f32 0.0, %v4605
  %v4607 = vpop.f32.mrb[0].mxu0
  %4608 = vmatprep.mubr.f32.mxu0 0.0
  %4609 = vmatmul.mubr.f32.gmra.mrb[0].mxu0 %v4227
  %v4610 = vpop.f32.mrb[0].mxu0
  %v4611 = vadd.f32 0.0, %v4610
  %v4612 = vpop.f32.mrb[0].mxu0
  %4613 = vmatprep.mubr.f32.mxu0 0.0
  %4614 = vmatmul.mubr.f32.gmra.mrb[0].mxu0 %v4230
  %v4615 = vpop.f32.mrb[0].mxu0
  %v4616 = vadd.f32 0.0, %v4615
  %v4617 = vpop.f32.mrb[0].mxu0
  %4618 = vmatprep.mubr.f32.mxu0 0.0
  %4619 = vmatmul.mubr.f32.gmra.mrb[0].mxu0 %v4233
  %v4620 = vpop.f32.mrb[0].mxu0
  %v4621 = vadd.f32 0.0, %v4620
  %v4622 = vpop.f32.mrb[0].mxu0
  %4623 = vdwg.mxu0
  %v4624 = vld [vmem:[%s7] sm:$0x1]
  %v4625 = vld [vmem:[%s8] sm:$0x1]
  %v4626 = vsel %vm687, %v4306, 0.0
  %v4627 = vsel %vm687, %v4311, 0.0
  %v4628 = vadd.f32 %v4626, %v4627
  %v4629 = vsel %vm687, %v4316, 0.0
  %v4630 = vadd.f32 %v4628, %v4629
  %v4631 = vsel %vm687, %v4321, 0.0
  %v4632 = vadd.f32 %v4630, %v4631
  %v4633 = vsel %vm687, %v4326, 0.0
  %v4634 = vadd.f32 %v4632, %v4633
  %v4635 = vsel %vm687, %v4331, 0.0
  %v4636 = vadd.f32 %v4634, %v4635
  %v4637 = vsel %vm687, %v4336, 0.0
  %v4638 = vadd.f32 %v4636, %v4637
  %v4639 = vsel %vm687, %v4341, 0.0
  %v4640 = vadd.f32 %v4638, %v4639
  %v4641 = vsel %vm687, %v4346, 0.0
  %v4642 = vadd.f32 %v4640, %v4641
  %v4643 = vsel %vm687, %v4351, 0.0
  %v4644 = vadd.f32 %v4642, %v4643
  %v4645 = vsel %vm687, %v4356, 0.0
  %v4646 = vadd.f32 %v4644, %v4645
  %v4647 = vsel %vm687, %v4361, 0.0
  %v4648 = vadd.f32 %v4646, %v4647
  %v4649 = vsel %vm687, %v4366, 0.0
  %v4650 = vadd.f32 %v4648, %v4649
  %v4651 = vsel %vm687, %v4371, 0.0
  %v4652 = vadd.f32 %v4650, %v4651
  %v4653 = vsel %vm687, %v4376, 0.0
  %v4654 = vadd.f32 %v4652, %v4653
  %v4655 = vsel %vm687, %v4381, 0.0
  %v4656 = vadd.f32 %v4654, %v4655
  %v4657 = vsel %vm687, %v4386, 0.0
  %v4658 = vadd.f32 %v4656, %v4657
  %v4659 = vsel %vm687, %v4391, 0.0
  %v4660 = vadd.f32 %v4658, %v4659
  %v4661 = vsel %vm687, %v4396, 0.0
  %v4662 = vadd.f32 %v4660, %v4661
  %v4663 = vsel %vm687, %v4401, 0.0
  %v4664 = vadd.f32 %v4662, %v4663
  %v4665 = vsel %vm687, %v4406, 0.0
  %v4666 = vadd.f32 %v4664, %v4665
  %v4667 = vsel %vm687, %v4411, 0.0
  %v4668 = vadd.f32 %v4666, %v4667
  %v4669 = vsel %vm687, %v4416, 0.0
  %v4670 = vadd.f32 %v4668, %v4669
  %v4671 = vsel %vm687, %v4421, 0.0
  %v4672 = vadd.f32 %v4670, %v4671
  %v4673 = vsel %vm687, %v4426, 0.0
  %v4674 = vadd.f32 %v4672, %v4673
  %v4675 = vsel %vm687, %v4431, 0.0
  %v4676 = vadd.f32 %v4674, %v4675
  %v4677 = vsel %vm687, %v4436, 0.0
  %v4678 = vadd.f32 %v4676, %v4677
  %v4679 = vsel %vm687, %v4441, 0.0
  %v4680 = vadd.f32 %v4678, %v4679
  %v4681 = vsel %vm687, %v4446, 0.0
  %v4682 = vadd.f32 %v4680, %v4681
  %v4683 = vsel %vm687, %v4451, 0.0
  %v4684 = vadd.f32 %v4682, %v4683
  %v4685 = vsel %vm687, %v4456, 0.0
  %v4686 = vadd.f32 %v4684, %v4685
  %v4687 = vsel %vm687, %v4461, 0.0
  %v4688 = vadd.f32 %v4686, %v4687
  %v4689 = vsel %vm687, %v4466, 0.0
  %v4690 = vadd.f32 %v4688, %v4689
  %v4691 = vsel %vm687, %v4471, 0.0
  %v4692 = vadd.f32 %v4690, %v4691
  %v4693 = vsel %vm687, %v4476, 0.0
  %v4694 = vadd.f32 %v4692, %v4693
  %v4695 = vsel %vm687, %v4481, 0.0
  %v4696 = vadd.f32 %v4694, %v4695
  %v4697 = vsel %vm687, %v4486, 0.0
  %v4698 = vadd.f32 %v4696, %v4697
  %v4699 = vsel %vm687, %v4491, 0.0
  %v4700 = vadd.f32 %v4698, %v4699
  %v4701 = vsel %vm687, %v4496, 0.0
  %v4702 = vadd.f32 %v4700, %v4701
  %v4703 = vsel %vm687, %v4501, 0.0
  %v4704 = vadd.f32 %v4702, %v4703
  %v4705 = vsel %vm687, %v4506, 0.0
  %v4706 = vadd.f32 %v4704, %v4705
  %v4707 = vsel %vm687, %v4511, 0.0
  %v4708 = vadd.f32 %v4706, %v4707
  %v4709 = vsel %vm687, %v4516, 0.0
  %v4710 = vadd.f32 %v4708, %v4709
  %v4711 = vsel %vm687, %v4521, 0.0
  %v4712 = vadd.f32 %v4710, %v4711
  %v4713 = vsel %vm687, %v4526, 0.0
  %v4714 = vadd.f32 %v4712, %v4713
  %v4715 = vsel %vm687, %v4531, 0.0
  %v4716 = vadd.f32 %v4714, %v4715
  %v4717 = vsel %vm687, %v4536, 0.0
  %v4718 = vadd.f32 %v4716, %v4717
  %v4719 = vsel %vm687, %v4541, 0.0
  %v4720 = vadd.f32 %v4718, %v4719
  %v4721 = vsel %vm687, %v4546, 0.0
  %v4722 = vadd.f32 %v4720, %v4721
  %v4723 = vsel %vm687, %v4551, 0.0
  %v4724 = vadd.f32 %v4722, %v4723
  %v4725 = vsel %vm687, %v4556, 0.0
  %v4726 = vadd.f32 %v4724, %v4725
  %v4727 = vsel %vm687, %v4561, 0.0
  %v4728 = vadd.f32 %v4726, %v4727
  %v4729 = vsel %vm687, %v4566, 0.0
  %v4730 = vadd.f32 %v4728, %v4729
  %v4731 = vsel %vm687, %v4571, 0.0
  %v4732 = vadd.f32 %v4730, %v4731
  %v4733 = vsel %vm687, %v4576, 0.0
  %v4734 = vadd.f32 %v4732, %v4733
  %v4735 = vsel %vm687, %v4581, 0.0
  %v4736 = vadd.f32 %v4734, %v4735
  %v4737 = vsel %vm687, %v4586, 0.0
  %v4738 = vadd.f32 %v4736, %v4737
  %v4739 = vsel %vm687, %v4591, 0.0
  %v4740 = vadd.f32 %v4738, %v4739
  %v4741 = vsel %vm687, %v4596, 0.0
  %v4742 = vadd.f32 %v4740, %v4741
  %v4743 = vsel %vm687, %v4601, 0.0
  %v4744 = vadd.f32 %v4742, %v4743
  %v4745 = vsel %vm687, %v4606, 0.0
  %v4746 = vadd.f32 %v4744, %v4745
  %v4747 = vsel %vm687, %v4611, 0.0
  %v4748 = vadd.f32 %v4746, %v4747
  %v4749 = vsel %vm687, %v4616, 0.0
  %v4750 = vadd.f32 %v4748, %v4749
  %v4751 = vsel %vm687, %v4621, 0.0
  %v4752 = vadd.f32 %v4750, %v4751
  %v4753 = vrot.slane %v4752, 4
  %v4754 = vadd.f32 %v4752, %v4753
  %v4755 = vrot.slane %v4754, 2
  %v4756 = vadd.f32 %v4754, %v4755
  %v4757 = vrot.slane %v4756, 1
  %v4758 = vadd.f32 %v4756, %v4757
  %v4759 = vmul.f32 %v4758, 0.001953125
  %v4760 = vmul.f32 %v4306, %v4306
  %v4761 = vmul.f32 %v4311, %v4311
  %v4762 = vmul.f32 %v4316, %v4316
  %v4763 = vmul.f32 %v4321, %v4321
  %v4764 = vmul.f32 %v4326, %v4326
  %v4765 = vmul.f32 %v4331, %v4331
  %v4766 = vmul.f32 %v4336, %v4336
  %v4767 = vmul.f32 %v4341, %v4341
  %v4768 = vmul.f32 %v4346, %v4346
  %v4769 = vmul.f32 %v4351, %v4351
  %v4770 = vmul.f32 %v4356, %v4356
  %v4771 = vmul.f32 %v4361, %v4361
  %v4772 = vmul.f32 %v4366, %v4366
  %v4773 = vmul.f32 %v4371, %v4371
  %v4774 = vmul.f32 %v4376, %v4376
  %v4775 = vmul.f32 %v4381, %v4381
  %v4776 = vmul.f32 %v4386, %v4386
  %v4777 = vmul.f32 %v4391, %v4391
  %v4778 = vmul.f32 %v4396, %v4396
  %v4779 = vmul.f32 %v4401, %v4401
  %v4780 = vmul.f32 %v4406, %v4406
  %v4781 = vmul.f32 %v4411, %v4411
  %v4782 = vmul.f32 %v4416, %v4416
  %v4783 = vmul.f32 %v4421, %v4421
  %v4784 = vmul.f32 %v4426, %v4426
  %v4785 = vmul.f32 %v4431, %v4431
  %v4786 = vmul.f32 %v4436, %v4436
  %v4787 = vmul.f32 %v4441, %v4441
  %v4788 = vmul.f32 %v4446, %v4446
  %v4789 = vmul.f32 %v4451, %v4451
  %v4790 = vmul.f32 %v4456, %v4456
  %v4791 = vmul.f32 %v4461, %v4461
  %v4792 = vmul.f32 %v4466, %v4466
  %v4793 = vmul.f32 %v4471, %v4471
  %v4794 = vmul.f32 %v4476, %v4476
  %v4795 = vmul.f32 %v4481, %v4481
  %v4796 = vmul.f32 %v4486, %v4486
  %v4797 = vmul.f32 %v4491, %v4491
  %v4798 = vmul.f32 %v4496, %v4496
  %v4799 = vmul.f32 %v4501, %v4501
  %v4800 = vmul.f32 %v4506, %v4506
  %v4801 = vmul.f32 %v4511, %v4511
  %v4802 = vmul.f32 %v4516, %v4516
  %v4803 = vmul.f32 %v4521, %v4521
  %v4804 = vmul.f32 %v4526, %v4526
  %v4805 = vmul.f32 %v4531, %v4531
  %v4806 = vmul.f32 %v4536, %v4536
  %v4807 = vmul.f32 %v4541, %v4541
  %v4808 = vmul.f32 %v4546, %v4546
  %v4809 = vmul.f32 %v4551, %v4551
  %v4810 = vmul.f32 %v4556, %v4556
  %v4811 = vmul.f32 %v4561, %v4561
  %v4812 = vmul.f32 %v4566, %v4566
  %v4813 = vmul.f32 %v4571, %v4571
  %v4814 = vmul.f32 %v4576, %v4576
  %v4815 = vmul.f32 %v4581, %v4581
  %v4816 = vmul.f32 %v4586, %v4586
  %v4817 = vmul.f32 %v4591, %v4591
  %v4818 = vmul.f32 %v4596, %v4596
  %v4819 = vmul.f32 %v4601, %v4601
  %v4820 = vmul.f32 %v4606, %v4606
  %v4821 = vmul.f32 %v4611, %v4611
  %v4822 = vmul.f32 %v4616, %v4616
  %v4823 = vmul.f32 %v4621, %v4621
  %v4824 = vsel %vm687, %v4760, 0.0
  %v4825 = vsel %vm687, %v4761, 0.0
  %v4826 = vadd.f32 %v4824, %v4825
  %v4827 = vsel %vm687, %v4762, 0.0
  %v4828 = vadd.f32 %v4826, %v4827
  %v4829 = vsel %vm687, %v4763, 0.0
  %v4830 = vadd.f32 %v4828, %v4829
  %v4831 = vsel %vm687, %v4764, 0.0
  %v4832 = vadd.f32 %v4830, %v4831
  %v4833 = vsel %vm687, %v4765, 0.0
  %v4834 = vadd.f32 %v4832, %v4833
  %v4835 = vsel %vm687, %v4766, 0.0
  %v4836 = vadd.f32 %v4834, %v4835
  %v4837 = vsel %vm687, %v4767, 0.0
  %v4838 = vadd.f32 %v4836, %v4837
  %v4839 = vsel %vm687, %v4768, 0.0
  %v4840 = vadd.f32 %v4838, %v4839
  %v4841 = vsel %vm687, %v4769, 0.0
  %v4842 = vadd.f32 %v4840, %v4841
  %v4843 = vsel %vm687, %v4770, 0.0
  %v4844 = vadd.f32 %v4842, %v4843
  %v4845 = vsel %vm687, %v4771, 0.0
  %v4846 = vadd.f32 %v4844, %v4845
  %v4847 = vsel %vm687, %v4772, 0.0
  %v4848 = vadd.f32 %v4846, %v4847
  %v4849 = vsel %vm687, %v4773, 0.0
  %v4850 = vadd.f32 %v4848, %v4849
  %v4851 = vsel %vm687, %v4774, 0.0
  %v4852 = vadd.f32 %v4850, %v4851
  %v4853 = vsel %vm687, %v4775, 0.0
  %v4854 = vadd.f32 %v4852, %v4853
  %v4855 = vsel %vm687, %v4776, 0.0
  %v4856 = vadd.f32 %v4854, %v4855
  %v4857 = vsel %vm687, %v4777, 0.0
  %v4858 = vadd.f32 %v4856, %v4857
  %v4859 = vsel %vm687, %v4778, 0.0
  %v4860 = vadd.f32 %v4858, %v4859
  %v4861 = vsel %vm687, %v4779, 0.0
  %v4862 = vadd.f32 %v4860, %v4861
  %v4863 = vsel %vm687, %v4780, 0.0
  %v4864 = vadd.f32 %v4862, %v4863
  %v4865 = vsel %vm687, %v4781, 0.0
  %v4866 = vadd.f32 %v4864, %v4865
  %v4867 = vsel %vm687, %v4782, 0.0
  %v4868 = vadd.f32 %v4866, %v4867
  %v4869 = vsel %vm687, %v4783, 0.0
  %v4870 = vadd.f32 %v4868, %v4869
  %v4871 = vsel %vm687, %v4784, 0.0
  %v4872 = vadd.f32 %v4870, %v4871
  %v4873 = vsel %vm687, %v4785, 0.0
  %v4874 = vadd.f32 %v4872, %v4873
  %v4875 = vsel %vm687, %v4786, 0.0
  %v4876 = vadd.f32 %v4874, %v4875
  %v4877 = vsel %vm687, %v4787, 0.0
  %v4878 = vadd.f32 %v4876, %v4877
  %v4879 = vsel %vm687, %v4788, 0.0
  %v4880 = vadd.f32 %v4878, %v4879
  %v4881 = vsel %vm687, %v4789, 0.0
  %v4882 = vadd.f32 %v4880, %v4881
  %v4883 = vsel %vm687, %v4790, 0.0
  %v4884 = vadd.f32 %v4882, %v4883
  %v4885 = vsel %vm687, %v4791, 0.0
  %v4886 = vadd.f32 %v4884, %v4885
  %v4887 = vsel %vm687, %v4792, 0.0
  %v4888 = vadd.f32 %v4886, %v4887
  %v4889 = vsel %vm687, %v4793, 0.0
  %v4890 = vadd.f32 %v4888, %v4889
  %v4891 = vsel %vm687, %v4794, 0.0
  %v4892 = vadd.f32 %v4890, %v4891
  %v4893 = vsel %vm687, %v4795, 0.0
  %v4894 = vadd.f32 %v4892, %v4893
  %v4895 = vsel %vm687, %v4796, 0.0
  %v4896 = vadd.f32 %v4894, %v4895
  %v4897 = vsel %vm687, %v4797, 0.0
  %v4898 = vadd.f32 %v4896, %v4897
  %v4899 = vsel %vm687, %v4798, 0.0
  %v4900 = vadd.f32 %v4898, %v4899
  %v4901 = vsel %vm687, %v4799, 0.0
  %v4902 = vadd.f32 %v4900, %v4901
  %v4903 = vsel %vm687, %v4800, 0.0
  %v4904 = vadd.f32 %v4902, %v4903
  %v4905 = vsel %vm687, %v4801, 0.0
  %v4906 = vadd.f32 %v4904, %v4905
  %v4907 = vsel %vm687, %v4802, 0.0
  %v4908 = vadd.f32 %v4906, %v4907
  %v4909 = vsel %vm687, %v4803, 0.0
  %v4910 = vadd.f32 %v4908, %v4909
  %v4911 = vsel %vm687, %v4804, 0.0
  %v4912 = vadd.f32 %v4910, %v4911
  %v4913 = vsel %vm687, %v4805, 0.0
  %v4914 = vadd.f32 %v4912, %v4913
  %v4915 = vsel %vm687, %v4806, 0.0
  %v4916 = vadd.f32 %v4914, %v4915
  %v4917 = vsel %vm687, %v4807, 0.0
  %v4918 = vadd.f32 %v4916, %v4917
  %v4919 = vsel %vm687, %v4808, 0.0
  %v4920 = vadd.f32 %v4918, %v4919
  %v4921 = vsel %vm687, %v4809, 0.0
  %v4922 = vadd.f32 %v4920, %v4921
  %v4923 = vsel %vm687, %v4810, 0.0
  %v4924 = vadd.f32 %v4922, %v4923
  %v4925 = vsel %vm687, %v4811, 0.0
  %v4926 = vadd.f32 %v4924, %v4925
  %v4927 = vsel %vm687, %v4812, 0.0
  %v4928 = vadd.f32 %v4926, %v4927
  %v4929 = vsel %vm687, %v4813, 0.0
  %v4930 = vadd.f32 %v4928, %v4929
  %v4931 = vsel %vm687, %v4814, 0.0
  %v4932 = vadd.f32 %v4930, %v4931
  %v4933 = vsel %vm687, %v4815, 0.0
  %v4934 = vadd.f32 %v4932, %v4933
  %v4935 = vsel %vm687, %v4816, 0.0
  %v4936 = vadd.f32 %v4934, %v4935
  %v4937 = vsel %vm687, %v4817, 0.0
  %v4938 = vadd.f32 %v4936, %v4937
  %v4939 = vsel %vm687, %v4818, 0.0
  %v4940 = vadd.f32 %v4938, %v4939
  %v4941 = vsel %vm687, %v4819, 0.0
  %v4942 = vadd.f32 %v4940, %v4941
  %v4943 = vsel %vm687, %v4820, 0.0
  %v4944 = vadd.f32 %v4942, %v4943
  %v4945 = vsel %vm687, %v4821, 0.0
  %v4946 = vadd.f32 %v4944, %v4945
  %v4947 = vsel %vm687, %v4822, 0.0
  %v4948 = vadd.f32 %v4946, %v4947
  %v4949 = vsel %vm687, %v4823, 0.0
  %v4950 = vadd.f32 %v4948, %v4949
  %v4951 = vrot.slane %v4950, 4
  %v4952 = vadd.f32 %v4950, %v4951
  %v4953 = vrot.slane %v4952, 2
  %v4954 = vadd.f32 %v4952, %v4953
  %v4955 = vrot.slane %v4954, 1
  %v4956 = vadd.f32 %v4954, %v4955
  %v4957 = vmul.f32 %v4956, 0.001953125
  %v4958 = vmul.f32 %v4759, %v4759
  %v4959 = vsub.f32 %v4957, %v4958
  %v4960 = vadd.f32 %v4959, 1e-05
  %v4961 = vrsqrt.pop %v4960
  %v4962 = vmul.f32 %v4624, %v4961
  %v4963 = vmul.f32 %v4759, %v4962
  %v4964 = vsub.f32 %v4625, %v4963
  %v4966 = vlaneseq
  %v4967 = vshrl.u32 %v4966, 7
  %v4968 = vsub.s32 0, %v4967
  %v4969 = vrot.slane %v4962, %v4968
  %v4971 = vmul.f32 %v4306, %v4969
  %v4972 = vmul.f32 %v4311, %v4969
  %v4973 = vmul.f32 %v4316, %v4969
  %v4974 = vmul.f32 %v4321, %v4969
  %v4975 = vmul.f32 %v4326, %v4969
  %v4976 = vmul.f32 %v4331, %v4969
  %v4977 = vmul.f32 %v4336, %v4969
  %v4978 = vmul.f32 %v4341, %v4969
  %v4979 = vmul.f32 %v4346, %v4969
  %v4980 = vmul.f32 %v4351, %v4969
  %v4981 = vmul.f32 %v4356, %v4969
  %v4982 = vmul.f32 %v4361, %v4969
  %v4983 = vmul.f32 %v4366, %v4969
  %v4984 = vmul.f32 %v4371, %v4969
  %v4985 = vmul.f32 %v4376, %v4969
  %v4986 = vmul.f32 %v4381, %v4969
  %v4987 = vmul.f32 %v4386, %v4969
  %v4988 = vmul.f32 %v4391, %v4969
  %v4989 = vmul.f32 %v4396, %v4969
  %v4990 = vmul.f32 %v4401, %v4969
  %v4991 = vmul.f32 %v4406, %v4969
  %v4992 = vmul.f32 %v4411, %v4969
  %v4993 = vmul.f32 %v4416, %v4969
  %v4994 = vmul.f32 %v4421, %v4969
  %v4995 = vmul.f32 %v4426, %v4969
  %v4996 = vmul.f32 %v4431, %v4969
  %v4997 = vmul.f32 %v4436, %v4969
  %v4998 = vmul.f32 %v4441, %v4969
  %v4999 = vmul.f32 %v4446, %v4969
  %v5000 = vmul.f32 %v4451, %v4969
  %v5001 = vmul.f32 %v4456, %v4969
  %v5002 = vmul.f32 %v4461, %v4969
  %v5003 = vmul.f32 %v4466, %v4969
  %v5004 = vmul.f32 %v4471, %v4969
  %v5005 = vmul.f32 %v4476, %v4969
  %v5006 = vmul.f32 %v4481, %v4969
  %v5007 = vmul.f32 %v4486, %v4969
  %v5008 = vmul.f32 %v4491, %v4969
  %v5009 = vmul.f32 %v4496, %v4969
  %v5010 = vmul.f32 %v4501, %v4969
  %v5011 = vmul.f32 %v4506, %v4969
  %v5012 = vmul.f32 %v4511, %v4969
  %v5013 = vmul.f32 %v4516, %v4969
  %v5014 = vmul.f32 %v4521, %v4969
  %v5015 = vmul.f32 %v4526, %v4969
  %v5016 = vmul.f32 %v4531, %v4969
  %v5017 = vmul.f32 %v4536, %v4969
  %v5018 = vmul.f32 %v4541, %v4969
  %v5019 = vmul.f32 %v4546, %v4969
  %v5020 = vmul.f32 %v4551, %v4969
  %v5021 = vmul.f32 %v4556, %v4969
  %v5022 = vmul.f32 %v4561, %v4969
  %v5023 = vmul.f32 %v4566, %v4969
  %v5024 = vmul.f32 %v4571, %v4969
  %v5025 = vmul.f32 %v4576, %v4969
  %v5026 = vmul.f32 %v4581, %v4969
  %v5027 = vmul.f32 %v4586, %v4969
  %v5028 = vmul.f32 %v4591, %v4969
  %v5029 = vmul.f32 %v4596, %v4969
  %v5030 = vmul.f32 %v4601, %v4969
  %v5031 = vmul.f32 %v4606, %v4969
  %v5032 = vmul.f32 %v4611, %v4969
  %v5033 = vmul.f32 %v4616, %v4969
  %v5034 = vmul.f32 %v4621, %v4969
  %v5036 = vlaneseq
  %v5037 = vshrl.u32 %v5036, 7
  %v5038 = vsub.s32 0, %v5037
  %v5039 = vrot.slane %v4964, %v5038
  %v5041 = vadd.f32 %v4971, %v5039
  %v5042 = vadd.f32 %v4972, %v5039
  %v5043 = vadd.f32 %v4973, %v5039
  %v5044 = vadd.f32 %v4974, %v5039
  %v5045 = vadd.f32 %v4975, %v5039
  %v5046 = vadd.f32 %v4976, %v5039
  %v5047 = vadd.f32 %v4977, %v5039
  %v5048 = vadd.f32 %v4978, %v5039
  %v5049 = vadd.f32 %v4979, %v5039
  %v5050 = vadd.f32 %v4980, %v5039
  %v5051 = vadd.f32 %v4981, %v5039
  %v5052 = vadd.f32 %v4982, %v5039
  %v5053 = vadd.f32 %v4983, %v5039
  %v5054 = vadd.f32 %v4984, %v5039
  %v5055 = vadd.f32 %v4985, %v5039
  %v5056 = vadd.f32 %v4986, %v5039
  %v5057 = vadd.f32 %v4987, %v5039
  %v5058 = vadd.f32 %v4988, %v5039
  %v5059 = vadd.f32 %v4989, %v5039
  %v5060 = vadd.f32 %v4990, %v5039
  %v5061 = vadd.f32 %v4991, %v5039
  %v5062 = vadd.f32 %v4992, %v5039
  %v5063 = vadd.f32 %v4993, %v5039
  %v5064 = vadd.f32 %v4994, %v5039
  %v5065 = vadd.f32 %v4995, %v5039
  %v5066 = vadd.f32 %v4996, %v5039
  %v5067 = vadd.f32 %v4997, %v5039
  %v5068 = vadd.f32 %v4998, %v5039
  %v5069 = vadd.f32 %v4999, %v5039
  %v5070 = vadd.f32 %v5000, %v5039
  %v5071 = vadd.f32 %v5001, %v5039
  %v5072 = vadd.f32 %v5002, %v5039
  %v5073 = vadd.f32 %v5003, %v5039
  %v5074 = vadd.f32 %v5004, %v5039
  %v5075 = vadd.f32 %v5005, %v5039
  %v5076 = vadd.f32 %v5006, %v5039
  %v5077 = vadd.f32 %v5007, %v5039
  %v5078 = vadd.f32 %v5008, %v5039
  %v5079 = vadd.f32 %v5009, %v5039
  %v5080 = vadd.f32 %v5010, %v5039
  %v5081 = vadd.f32 %v5011, %v5039
  %v5082 = vadd.f32 %v5012, %v5039
  %v5083 = vadd.f32 %v5013, %v5039
  %v5084 = vadd.f32 %v5014, %v5039
  %v5085 = vadd.f32 %v5015, %v5039
  %v5086 = vadd.f32 %v5016, %v5039
  %v5087 = vadd.f32 %v5017, %v5039
  %v5088 = vadd.f32 %v5018, %v5039
  %v5089 = vadd.f32 %v5019, %v5039
  %v5090 = vadd.f32 %v5020, %v5039
  %v5091 = vadd.f32 %v5021, %v5039
  %v5092 = vadd.f32 %v5022, %v5039
  %v5093 = vadd.f32 %v5023, %v5039
  %v5094 = vadd.f32 %v5024, %v5039
  %v5095 = vadd.f32 %v5025, %v5039
  %v5096 = vadd.f32 %v5026, %v5039
  %v5097 = vadd.f32 %v5027, %v5039
  %v5098 = vadd.f32 %v5028, %v5039
  %v5099 = vadd.f32 %v5029, %v5039
  %v5100 = vadd.f32 %v5030, %v5039
  %v5101 = vadd.f32 %v5031, %v5039
  %v5102 = vadd.f32 %v5032, %v5039
  %v5103 = vadd.f32 %v5033, %v5039
  %v5104 = vadd.f32 %v5034, %v5039
  %v5105 = vmax.f32 %v5041, 0.0
  %v5106 = vmax.f32 %v5042, 0.0
  %v5107 = vmax.f32 %v5043, 0.0
  %v5108 = vmax.f32 %v5044, 0.0
  %v5109 = vmax.f32 %v5045, 0.0
  %v5110 = vmax.f32 %v5046, 0.0
  %v5111 = vmax.f32 %v5047, 0.0
  %v5112 = vmax.f32 %v5048, 0.0
  %v5113 = vmax.f32 %v5049, 0.0
  %v5114 = vmax.f32 %v5050, 0.0
  %v5115 = vmax.f32 %v5051, 0.0
  %v5116 = vmax.f32 %v5052, 0.0
  %v5117 = vmax.f32 %v5053, 0.0
  %v5118 = vmax.f32 %v5054, 0.0
  %v5119 = vmax.f32 %v5055, 0.0
  %v5120 = vmax.f32 %v5056, 0.0
  %v5121 = vmax.f32 %v5057, 0.0
  %v5122 = vmax.f32 %v5058, 0.0
  %v5123 = vmax.f32 %v5059, 0.0
  %v5124 = vmax.f32 %v5060, 0.0
  %v5125 = vmax.f32 %v5061, 0.0
  %v5126 = vmax.f32 %v5062, 0.0
  %v5127 = vmax.f32 %v5063, 0.0
  %v5128 = vmax.f32 %v5064, 0.0
  %v5129 = vmax.f32 %v5065, 0.0
  %v5130 = vmax.f32 %v5066, 0.0
  %v5131 = vmax.f32 %v5067, 0.0
  %v5132 = vmax.f32 %v5068, 0.0
  %v5133 = vmax.f32 %v5069, 0.0
  %v5134 = vmax.f32 %v5070, 0.0
  %v5135 = vmax.f32 %v5071, 0.0
  %v5136 = vmax.f32 %v5072, 0.0
  %v5137 = vmax.f32 %v5073, 0.0
  %v5138 = vmax.f32 %v5074, 0.0
  %v5139 = vmax.f32 %v5075, 0.0
  %v5140 = vmax.f32 %v5076, 0.0
  %v5141 = vmax.f32 %v5077, 0.0
  %v5142 = vmax.f32 %v5078, 0.0
  %v5143 = vmax.f32 %v5079, 0.0
  %v5144 = vmax.f32 %v5080, 0.0
  %v5145 = vmax.f32 %v5081, 0.0
  %v5146 = vmax.f32 %v5082, 0.0
  %v5147 = vmax.f32 %v5083, 0.0
  %v5148 = vmax.f32 %v5084, 0.0
  %v5149 = vmax.f32 %v5085, 0.0
  %v5150 = vmax.f32 %v5086, 0.0
  %v5151 = vmax.f32 %v5087, 0.0
  %v5152 = vmax.f32 %v5088, 0.0
  %v5153 = vmax.f32 %v5089, 0.0
  %v5154 = vmax.f32 %v5090, 0.0
  %v5155 = vmax.f32 %v5091, 0.0
  %v5156 = vmax.f32 %v5092, 0.0
  %v5157 = vmax.f32 %v5093, 0.0
  %v5158 = vmax.f32 %v5094, 0.0
  %v5159 = vmax.f32 %v5095, 0.0
  %v5160 = vmax.f32 %v5096, 0.0
  %v5161 = vmax.f32 %v5097, 0.0
  %v5162 = vmax.f32 %v5098, 0.0
  %v5163 = vmax.f32 %v5099, 0.0
  %v5164 = vmax.f32 %v5100, 0.0
  %v5165 = vmax.f32 %v5101, 0.0
  %v5166 = vmax.f32 %v5102, 0.0
  %v5167 = vmax.f32 %v5103, 0.0
  %v5168 = vmax.f32 %v5104, 0.0
  %v5169 = vld [vmem:[%s9] sm:$0xf]
  %v5171 = vsel %vm687, %v1167, 0
  %v5174 = vsel %vm687, %v1168, 0
  %v5177 = vsel %vm687, %v1169, 0
  %v5180 = vsel %vm687, %v1170, 0
  %v5183 = vsel %vm687, %v1171, 0
  %v5186 = vsel %vm687, %v1172, 0
  %v5189 = vsel %vm687, %v1173, 0
  %v5192 = vsel %vm687, %v1174, 0
  %v5195 = vsel %vm687, %v1175, 0
  %v5198 = vsel %vm687, %v1176, 0
  %v5201 = vsel %vm687, %v1177, 0
  %v5204 = vsel %vm687, %v1178, 0
  %v5207 = vsel %vm687, %v1179, 0
  %v5210 = vsel %vm687, %v1180, 0
  %v5213 = vsel %vm687, %v1181, 0
  %v5216 = vsel %vm687, %v1182, 0
  %v5219 = vsel %vm687, %v1183, 0
  %v5222 = vsel %vm687, %v1184, 0
  %v5225 = vsel %vm687, %v1185, 0
  %v5228 = vsel %vm687, %v1186, 0
  %v5231 = vsel %vm687, %v1187, 0
  %v5234 = vsel %vm687, %v1188, 0
  %v5237 = vsel %vm687, %v1189, 0
  %v5240 = vsel %vm687, %v1190, 0
  %v5243 = vsel %vm687, %v1191, 0
  %v5246 = vsel %vm687, %v1192, 0
  %v5249 = vsel %vm687, %v1193, 0
  %v5252 = vsel %vm687, %v1194, 0
  %v5255 = vsel %vm687, %v1195, 0
  %v5258 = vsel %vm687, %v1196, 0
  %v5261 = vsel %vm687, %v1197, 0
  %v5264 = vsel %vm687, %v1198, 0
  %v5267 = vsel %vm687, %v1199, 0
  %v5270 = vsel %vm687, %v1200, 0
  %v5273 = vsel %vm687, %v1201, 0
  %v5276 = vsel %vm687, %v1202, 0
  %v5279 = vsel %vm687, %v1203, 0
  %v5282 = vsel %vm687, %v1204, 0
  %v5285 = vsel %vm687, %v1205, 0
  %v5288 = vsel %vm687, %v1206, 0
  %v5291 = vsel %vm687, %v1207, 0
  %v5294 = vsel %vm687, %v1208, 0
  %v5297 = vsel %vm687, %v1209, 0
  %v5300 = vsel %vm687, %v1210, 0
  %v5303 = vsel %vm687, %v1211, 0
  %v5306 = vsel %vm687, %v1212, 0
  %v5309 = vsel %vm687, %v1213, 0
  %v5312 = vsel %vm687, %v1214, 0
  %v5315 = vsel %vm687, %v1215, 0
  %v5318 = vsel %vm687, %v1216, 0
  %v5321 = vsel %vm687, %v1217, 0
  %v5324 = vsel %vm687, %v1218, 0
  %v5327 = vsel %vm687, %v1219, 0
  %v5330 = vsel %vm687, %v1220, 0
  %v5333 = vsel %vm687, %v1221, 0
  %v5336 = vsel %vm687, %v1222, 0
  %v5339 = vsel %vm687, %v1223, 0
  %v5342 = vsel %vm687, %v1224, 0
  %v5345 = vsel %vm687, %v1225, 0
  %v5348 = vsel %vm687, %v1226, 0
  %v5351 = vsel %vm687, %v1227, 0
  %v5354 = vsel %vm687, %v1228, 0
  %v5357 = vsel %vm687, %v1229, 0
  %v5360 = vsel %vm687, %v1230, 0
  %v5363 = vsel %vm4235, %v5169, 0
  %5365 = vmatprep.subr.mxu0 0.0
  %5366 = vmatpush1.msra.mxu0 %v5363
  %5367 = vmatprep.subr.mxu0 0.0
  %5368 = vmatpush1.msra.mxu0 0.0
  %5369 = vmatprep.subr.mxu0 0.0
  %5370 = vmatpush1.msra.mxu0 0.0
  %5371 = vmatprep.subr.mxu0 0.0
  %5372 = vmatpush1.msra.mxu0 0.0
  %5373 = vmatprep.subr.mxu0 0.0
  %5374 = vmatpush1.msra.mxu0 0.0
  %5375 = vmatprep.subr.mxu0 0.0
  %5376 = vmatpush1.msra.mxu0 0.0
  %5377 = vmatprep.subr.mxu0 0.0
  %5378 = vmatpush1.msra.mxu0 0.0
  %5379 = vmatprep.subr.mxu0 0.0
  %5380 = vmatpush1.msra.mxu0 0.0
  %5381 = vmatprep.subr.mxu0 0.0
  %5382 = vmatpush1.msra.mxu0 0.0
  %5383 = vmatprep.subr.mxu0 0.0
  %5384 = vmatpush1.msra.mxu0 0.0
  %5385 = vmatprep.subr.mxu0 0.0
  %5386 = vmatpush1.msra.mxu0 0.0
  %5387 = vmatprep.subr.mxu0 0.0
  %5388 = vmatpush1.msra.mxu0 0.0
  %5389 = vmatprep.subr.mxu0 0.0
  %5390 = vmatpush1.msra.mxu0 0.0
  %5391 = vmatprep.subr.mxu0 0.0
  %5392 = vmatpush1.msra.mxu0 0.0
  %5393 = vmatprep.subr.mxu0 0.0
  %5394 = vmatpush1.msra.mxu0 0.0
  %5395 = vmatprep.subr.mxu0 0.0
  %5396 = vmatpush1.msra.mxu0 0.0
  %5397 = vmatprep.subr.mxu0 0.0
  %5398 = vmatpush1.msra.mxu0 0.0
  %5399 = vmatprep.subr.mxu0 0.0
  %5400 = vmatpush1.msra.mxu0 0.0
  %5401 = vmatprep.subr.mxu0 0.0
  %5402 = vmatpush1.msra.mxu0 0.0
  %5403 = vmatprep.subr.mxu0 0.0
  %5404 = vmatpush1.msra.mxu0 0.0
  %5405 = vmatprep.subr.mxu0 0.0
  %5406 = vmatpush1.msra.mxu0 0.0
  %5407 = vmatprep.subr.mxu0 0.0
  %5408 = vmatpush1.msra.mxu0 0.0
  %5409 = vmatprep.subr.mxu0 0.0
  %5410 = vmatpush1.msra.mxu0 0.0
  %5411 = vmatprep.subr.mxu0 0.0
  %5412 = vmatpush1.msra.mxu0 0.0
  %5413 = vmatprep.subr.mxu0 0.0
  %5414 = vmatpush1.msra.mxu0 0.0
  %5415 = vmatprep.subr.mxu0 0.0
  %5416 = vmatpush1.msra.mxu0 0.0
  %5417 = vmatprep.subr.mxu0 0.0
  %5418 = vmatpush1.msra.mxu0 0.0
  %5419 = vmatprep.subr.mxu0 0.0
  %5420 = vmatpush1.msra.mxu0 0.0
  %5421 = vmatprep.subr.mxu0 0.0
  %5422 = vmatpush1.msra.mxu0 0.0
  %5423 = vmatprep.subr.mxu0 0.0
  %5424 = vmatpush1.msra.mxu0 0.0
  %5425 = vmatprep.subr.mxu0 0.0
  %5426 = vmatpush1.msra.mxu0 0.0
  %5427 = vmatprep.subr.mxu0 0.0
  %5428 = vmatpush1.msra.mxu0 0.0
  %5429 = vmatprep.mubr.f32.mxu0 0.0
  %5430 = vmatmul.mubr.f32.gmra.mrb[0].mxu0 %v5171
  %v5431 = vpop.f32.mrb[0].mxu0
  %v5432 = vadd.f32 0.0, %v5431
  %v5433 = vpop.f32.mrb[0].mxu0
  %5434 = vmatprep.mubr.f32.mxu0 0.0
  %5435 = vmatmul.mubr.f32.gmra.mrb[0].mxu0 %v5174
  %v5436 = vpop.f32.mrb[0].mxu0
  %v5437 = vadd.f32 0.0, %v5436
  %v5438 = vpop.f32.mrb[0].mxu0
  %5439 = vmatprep.mubr.f32.mxu0 0.0
  %5440 = vmatmul.mubr.f32.gmra.mrb[0].mxu0 %v5177
  %v5441 = vpop.f32.mrb[0].mxu0
  %v5442 = vadd.f32 0.0, %v5441
  %v5443 = vpop.f32.mrb[0].mxu0
  %5444 = vmatprep.mubr.f32.mxu0 0.0
  %5445 = vmatmul.mubr.f32.gmra.mrb[0].mxu0 %v5180
  %v5446 = vpop.f32.mrb[0].mxu0
  %v5447 = vadd.f32 0.0, %v5446
  %v5448 = vpop.f32.mrb[0].mxu0
  %5449 = vmatprep.mubr.f32.mxu0 0.0
  %5450 = vmatmul.mubr.f32.gmra.mrb[0].mxu0 %v5183
  %v5451 = vpop.f32.mrb[0].mxu0
  %v5452 = vadd.f32 0.0, %v5451
  %v5453 = vpop.f32.mrb[0].mxu0
  %5454 = vmatprep.mubr.f32.mxu0 0.0
  %5455 = vmatmul.mubr.f32.gmra.mrb[0].mxu0 %v5186
  %v5456 = vpop.f32.mrb[0].mxu0
  %v5457 = vadd.f32 0.0, %v5456
  %v5458 = vpop.f32.mrb[0].mxu0
  %5459 = vmatprep.mubr.f32.mxu0 0.0
  %5460 = vmatmul.mubr.f32.gmra.mrb[0].mxu0 %v5189
  %v5461 = vpop.f32.mrb[0].mxu0
  %v5462 = vadd.f32 0.0, %v5461
  %v5463 = vpop.f32.mrb[0].mxu0
  %5464 = vmatprep.mubr.f32.mxu0 0.0
  %5465 = vmatmul.mubr.f32.gmra.mrb[0].mxu0 %v5192
  %v5466 = vpop.f32.mrb[0].mxu0
  %v5467 = vadd.f32 0.0, %v5466
  %v5468 = vpop.f32.mrb[0].mxu0
  %5469 = vmatprep.mubr.f32.mxu0 0.0
  %5470 = vmatmul.mubr.f32.gmra.mrb[0].mxu0 %v5195
  %v5471 = vpop.f32.mrb[0].mxu0
  %v5472 = vadd.f32 0.0, %v5471
  %v5473 = vpop.f32.mrb[0].mxu0
  %5474 = vmatprep.mubr.f32.mxu0 0.0
  %5475 = vmatmul.mubr.f32.gmra.mrb[0].mxu0 %v5198
  %v5476 = vpop.f32.mrb[0].mxu0
  %v5477 = vadd.f32 0.0, %v5476
  %v5478 = vpop.f32.mrb[0].mxu0
  %5479 = vmatprep.mubr.f32.mxu0 0.0
  %5480 = vmatmul.mubr.f32.gmra.mrb[0].mxu0 %v5201
  %v5481 = vpop.f32.mrb[0].mxu0
  %v5482 = vadd.f32 0.0, %v5481
  %v5483 = vpop.f32.mrb[0].mxu0
  %5484 = vmatprep.mubr.f32.mxu0 0.0
  %5485 = vmatmul.mubr.f32.gmra.mrb[0].mxu0 %v5204
  %v5486 = vpop.f32.mrb[0].mxu0
  %v5487 = vadd.f32 0.0, %v5486
  %v5488 = vpop.f32.mrb[0].mxu0
  %5489 = vmatprep.mubr.f32.mxu0 0.0
  %5490 = vmatmul.mubr.f32.gmra.mrb[0].mxu0 %v5207
  %v5491 = vpop.f32.mrb[0].mxu0
  %v5492 = vadd.f32 0.0, %v5491
  %v5493 = vpop.f32.mrb[0].mxu0
  %5494 = vmatprep.mubr.f32.mxu0 0.0
  %5495 = vmatmul.mubr.f32.gmra.mrb[0].mxu0 %v5210
  %v5496 = vpop.f32.mrb[0].mxu0
  %v5497 = vadd.f32 0.0, %v5496
  %v5498 = vpop.f32.mrb[0].mxu0
  %5499 = vmatprep.mubr.f32.mxu0 0.0
  %5500 = vmatmul.mubr.f32.gmra.mrb[0].mxu0 %v5213
  %v5501 = vpop.f32.mrb[0].mxu0
  %v5502 = vadd.f32 0.0, %v5501
  %v5503 = vpop.f32.mrb[0].mxu0
  %5504 = vmatprep.mubr.f32.mxu0 0.0
  %5505 = vmatmul.mubr.f32.gmra.mrb[0].mxu0 %v5216
  %v5506 = vpop.f32.mrb[0].mxu0
  %v5507 = vadd.f32 0.0, %v5506
  %v5508 = vpop.f32.mrb[0].mxu0
  %5509 = vmatprep.mubr.f32.mxu0 0.0
  %5510 = vmatmul.mubr.f32.gmra.mrb[0].mxu0 %v5219
  %v5511 = vpop.f32.mrb[0].mxu0
  %v5512 = vadd.f32 0.0, %v5511
  %v5513 = vpop.f32.mrb[0].mxu0
  %5514 = vmatprep.mubr.f32.mxu0 0.0
  %5515 = vmatmul.mubr.f32.gmra.mrb[0].mxu0 %v5222
  %v5516 = vpop.f32.mrb[0].mxu0
  %v5517 = vadd.f32 0.0, %v5516
  %v5518 = vpop.f32.mrb[0].mxu0
  %5519 = vmatprep.mubr.f32.mxu0 0.0
  %5520 = vmatmul.mubr.f32.gmra.mrb[0].mxu0 %v5225
  %v5521 = vpop.f32.mrb[0].mxu0
  %v5522 = vadd.f32 0.0, %v5521
  %v5523 = vpop.f32.mrb[0].mxu0
  %5524 = vmatprep.mubr.f32.mxu0 0.0
  %5525 = vmatmul.mubr.f32.gmra.mrb[0].mxu0 %v5228
  %v5526 = vpop.f32.mrb[0].mxu0
  %v5527 = vadd.f32 0.0, %v5526
  %v5528 = vpop.f32.mrb[0].mxu0
  %5529 = vmatprep.mubr.f32.mxu0 0.0
  %5530 = vmatmul.mubr.f32.gmra.mrb[0].mxu0 %v5231
  %v5531 = vpop.f32.mrb[0].mxu0
  %v5532 = vadd.f32 0.0, %v5531
  %v5533 = vpop.f32.mrb[0].mxu0
  %5534 = vmatprep.mubr.f32.mxu0 0.0
  %5535 = vmatmul.mubr.f32.gmra.mrb[0].mxu0 %v5234
  %v5536 = vpop.f32.mrb[0].mxu0
  %v5537 = vadd.f32 0.0, %v5536
  %v5538 = vpop.f32.mrb[0].mxu0
  %5539 = vmatprep.mubr.f32.mxu0 0.0
  %5540 = vmatmul.mubr.f32.gmra.mrb[0].mxu0 %v5237
  %v5541 = vpop.f32.mrb[0].mxu0
  %v5542 = vadd.f32 0.0, %v5541
  %v5543 = vpop.f32.mrb[0].mxu0
  %5544 = vmatprep.mubr.f32.mxu0 0.0
  %5545 = vmatmul.mubr.f32.gmra.mrb[0].mxu0 %v5240
  %v5546 = vpop.f32.mrb[0].mxu0
  %v5547 = vadd.f32 0.0, %v5546
  %v5548 = vpop.f32.mrb[0].mxu0
  %5549 = vmatprep.mubr.f32.mxu0 0.0
  %5550 = vmatmul.mubr.f32.gmra.mrb[0].mxu0 %v5243
  %v5551 = vpop.f32.mrb[0].mxu0
  %v5552 = vadd.f32 0.0, %v5551
  %v5553 = vpop.f32.mrb[0].mxu0
  %5554 = vmatprep.mubr.f32.mxu0 0.0
  %5555 = vmatmul.mubr.f32.gmra.mrb[0].mxu0 %v5246
  %v5556 = vpop.f32.mrb[0].mxu0
  %v5557 = vadd.f32 0.0, %v5556
  %v5558 = vpop.f32.mrb[0].mxu0
  %5559 = vmatprep.mubr.f32.mxu0 0.0
  %5560 = vmatmul.mubr.f32.gmra.mrb[0].mxu0 %v5249
  %v5561 = vpop.f32.mrb[0].mxu0
  %v5562 = vadd.f32 0.0, %v5561
  %v5563 = vpop.f32.mrb[0].mxu0
  %5564 = vmatprep.mubr.f32.mxu0 0.0
  %5565 = vmatmul.mubr.f32.gmra.mrb[0].mxu0 %v5252
  %v5566 = vpop.f32.mrb[0].mxu0
  %v5567 = vadd.f32 0.0, %v5566
  %v5568 = vpop.f32.mrb[0].mxu0
  %5569 = vmatprep.mubr.f32.mxu0 0.0
  %5570 = vmatmul.mubr.f32.gmra.mrb[0].mxu0 %v5255
  %v5571 = vpop.f32.mrb[0].mxu0
  %v5572 = vadd.f32 0.0, %v5571
  %v5573 = vpop.f32.mrb[0].mxu0
  %5574 = vmatprep.mubr.f32.mxu0 0.0
  %5575 = vmatmul.mubr.f32.gmra.mrb[0].mxu0 %v5258
  %v5576 = vpop.f32.mrb[0].mxu0
  %v5577 = vadd.f32 0.0, %v5576
  %v5578 = vpop.f32.mrb[0].mxu0
  %5579 = vmatprep.mubr.f32.mxu0 0.0
  %5580 = vmatmul.mubr.f32.gmra.mrb[0].mxu0 %v5261
  %v5581 = vpop.f32.mrb[0].mxu0
  %v5582 = vadd.f32 0.0, %v5581
  %v5583 = vpop.f32.mrb[0].mxu0
  %5584 = vmatprep.mubr.f32.mxu0 0.0
  %5585 = vmatmul.mubr.f32.gmra.mrb[0].mxu0 %v5264
  %v5586 = vpop.f32.mrb[0].mxu0
  %v5587 = vadd.f32 0.0, %v5586
  %v5588 = vpop.f32.mrb[0].mxu0
  %5589 = vmatprep.mubr.f32.mxu0 0.0
  %5590 = vmatmul.mubr.f32.gmra.mrb[0].mxu0 %v5267
  %v5591 = vpop.f32.mrb[0].mxu0
  %v5592 = vadd.f32 0.0, %v5591
  %v5593 = vpop.f32.mrb[0].mxu0
  %5594 = vmatprep.mubr.f32.mxu0 0.0
  %5595 = vmatmul.mubr.f32.gmra.mrb[0].mxu0 %v5270
  %v5596 = vpop.f32.mrb[0].mxu0
  %v5597 = vadd.f32 0.0, %v5596
  %v5598 = vpop.f32.mrb[0].mxu0
  %5599 = vmatprep.mubr.f32.mxu0 0.0
  %5600 = vmatmul.mubr.f32.gmra.mrb[0].mxu0 %v5273
  %v5601 = vpop.f32.mrb[0].mxu0
  %v5602 = vadd.f32 0.0, %v5601
  %v5603 = vpop.f32.mrb[0].mxu0
  %5604 = vmatprep.mubr.f32.mxu0 0.0
  %5605 = vmatmul.mubr.f32.gmra.mrb[0].mxu0 %v5276
  %v5606 = vpop.f32.mrb[0].mxu0
  %v5607 = vadd.f32 0.0, %v5606
  %v5608 = vpop.f32.mrb[0].mxu0
  %5609 = vmatprep.mubr.f32.mxu0 0.0
  %5610 = vmatmul.mubr.f32.gmra.mrb[0].mxu0 %v5279
  %v5611 = vpop.f32.mrb[0].mxu0
  %v5612 = vadd.f32 0.0, %v5611
  %v5613 = vpop.f32.mrb[0].mxu0
  %5614 = vmatprep.mubr.f32.mxu0 0.0
  %5615 = vmatmul.mubr.f32.gmra.mrb[0].mxu0 %v5282
  %v5616 = vpop.f32.mrb[0].mxu0
  %v5617 = vadd.f32 0.0, %v5616
  %v5618 = vpop.f32.mrb[0].mxu0
  %5619 = vmatprep.mubr.f32.mxu0 0.0
  %5620 = vmatmul.mubr.f32.gmra.mrb[0].mxu0 %v5285
  %v5621 = vpop.f32.mrb[0].mxu0
  %v5622 = vadd.f32 0.0, %v5621
  %v5623 = vpop.f32.mrb[0].mxu0
  %5624 = vmatprep.mubr.f32.mxu0 0.0
  %5625 = vmatmul.mubr.f32.gmra.mrb[0].mxu0 %v5288
  %v5626 = vpop.f32.mrb[0].mxu0
  %v5627 = vadd.f32 0.0, %v5626
  %v5628 = vpop.f32.mrb[0].mxu0
  %5629 = vmatprep.mubr.f32.mxu0 0.0
  %5630 = vmatmul.mubr.f32.gmra.mrb[0].mxu0 %v5291
  %v5631 = vpop.f32.mrb[0].mxu0
  %v5632 = vadd.f32 0.0, %v5631
  %v5633 = vpop.f32.mrb[0].mxu0
  %5634 = vmatprep.mubr.f32.mxu0 0.0
  %5635 = vmatmul.mubr.f32.gmra.mrb[0].mxu0 %v5294
  %v5636 = vpop.f32.mrb[0].mxu0
  %v5637 = vadd.f32 0.0, %v5636
  %v5638 = vpop.f32.mrb[0].mxu0
  %5639 = vmatprep.mubr.f32.mxu0 0.0
  %5640 = vmatmul.mubr.f32.gmra.mrb[0].mxu0 %v5297
  %v5641 = vpop.f32.mrb[0].mxu0
  %v5642 = vadd.f32 0.0, %v5641
  %v5643 = vpop.f32.mrb[0].mxu0
  %5644 = vmatprep.mubr.f32.mxu0 0.0
  %5645 = vmatmul.mubr.f32.gmra.mrb[0].mxu0 %v5300
  %v5646 = vpop.f32.mrb[0].mxu0
  %v5647 = vadd.f32 0.0, %v5646
  %v5648 = vpop.f32.mrb[0].mxu0
  %5649 = vmatprep.mubr.f32.mxu0 0.0
  %5650 = vmatmul.mubr.f32.gmra.mrb[0].mxu0 %v5303
  %v5651 = vpop.f32.mrb[0].mxu0
  %v5652 = vadd.f32 0.0, %v5651
  %v5653 = vpop.f32.mrb[0].mxu0
  %5654 = vmatprep.mubr.f32.mxu0 0.0
  %5655 = vmatmul.mubr.f32.gmra.mrb[0].mxu0 %v5306
  %v5656 = vpop.f32.mrb[0].mxu0
  %v5657 = vadd.f32 0.0, %v5656
  %v5658 = vpop.f32.mrb[0].mxu0
  %5659 = vmatprep.mubr.f32.mxu0 0.0
  %5660 = vmatmul.mubr.f32.gmra.mrb[0].mxu0 %v5309
  %v5661 = vpop.f32.mrb[0].mxu0
  %v5662 = vadd.f32 0.0, %v5661
  %v5663 = vpop.f32.mrb[0].mxu0
  %5664 = vmatprep.mubr.f32.mxu0 0.0
  %5665 = vmatmul.mubr.f32.gmra.mrb[0].mxu0 %v5312
  %v5666 = vpop.f32.mrb[0].mxu0
  %v5667 = vadd.f32 0.0, %v5666
  %v5668 = vpop.f32.mrb[0].mxu0
  %5669 = vmatprep.mubr.f32.mxu0 0.0
  %5670 = vmatmul.mubr.f32.gmra.mrb[0].mxu0 %v5315
  %v5671 = vpop.f32.mrb[0].mxu0
  %v5672 = vadd.f32 0.0, %v5671
  %v5673 = vpop.f32.mrb[0].mxu0
  %5674 = vmatprep.mubr.f32.mxu0 0.0
  %5675 = vmatmul.mubr.f32.gmra.mrb[0].mxu0 %v5318
  %v5676 = vpop.f32.mrb[0].mxu0
  %v5677 = vadd.f32 0.0, %v5676
  %v5678 = vpop.f32.mrb[0].mxu0
  %5679 = vmatprep.mubr.f32.mxu0 0.0
  %5680 = vmatmul.mubr.f32.gmra.mrb[0].mxu0 %v5321
  %v5681 = vpop.f32.mrb[0].mxu0
  %v5682 = vadd.f32 0.0, %v5681
  %v5683 = vpop.f32.mrb[0].mxu0
  %5684 = vmatprep.mubr.f32.mxu0 0.0
  %5685 = vmatmul.mubr.f32.gmra.mrb[0].mxu0 %v5324
  %v5686 = vpop.f32.mrb[0].mxu0
  %v5687 = vadd.f32 0.0, %v5686
  %v5688 = vpop.f32.mrb[0].mxu0
  %5689 = vmatprep.mubr.f32.mxu0 0.0
  %5690 = vmatmul.mubr.f32.gmra.mrb[0].mxu0 %v5327
  %v5691 = vpop.f32.mrb[0].mxu0
  %v5692 = vadd.f32 0.0, %v5691
  %v5693 = vpop.f32.mrb[0].mxu0
  %5694 = vmatprep.mubr.f32.mxu0 0.0
  %5695 = vmatmul.mubr.f32.gmra.mrb[0].mxu0 %v5330
  %v5696 = vpop.f32.mrb[0].mxu0
  %v5697 = vadd.f32 0.0, %v5696
  %v5698 = vpop.f32.mrb[0].mxu0
  %5699 = vmatprep.mubr.f32.mxu0 0.0
  %5700 = vmatmul.mubr.f32.gmra.mrb[0].mxu0 %v5333
  %v5701 = vpop.f32.mrb[0].mxu0
  %v5702 = vadd.f32 0.0, %v5701
  %v5703 = vpop.f32.mrb[0].mxu0
  %5704 = vmatprep.mubr.f32.mxu0 0.0
  %5705 = vmatmul.mubr.f32.gmra.mrb[0].mxu0 %v5336
  %v5706 = vpop.f32.mrb[0].mxu0
  %v5707 = vadd.f32 0.0, %v5706
  %v5708 = vpop.f32.mrb[0].mxu0
  %5709 = vmatprep.mubr.f32.mxu0 0.0
  %5710 = vmatmul.mubr.f32.gmra.mrb[0].mxu0 %v5339
  %v5711 = vpop.f32.mrb[0].mxu0
  %v5712 = vadd.f32 0.0, %v5711
  %v5713 = vpop.f32.mrb[0].mxu0
  %5714 = vmatprep.mubr.f32.mxu0 0.0
  %5715 = vmatmul.mubr.f32.gmra.mrb[0].mxu0 %v5342
  %v5716 = vpop.f32.mrb[0].mxu0
  %v5717 = vadd.f32 0.0, %v5716
  %v5718 = vpop.f32.mrb[0].mxu0
  %5719 = vmatprep.mubr.f32.mxu0 0.0
  %5720 = vmatmul.mubr.f32.gmra.mrb[0].mxu0 %v5345
  %v5721 = vpop.f32.mrb[0].mxu0
  %v5722 = vadd.f32 0.0, %v5721
  %v5723 = vpop.f32.mrb[0].mxu0
  %5724 = vmatprep.mubr.f32.mxu0 0.0
  %5725 = vmatmul.mubr.f32.gmra.mrb[0].mxu0 %v5348
  %v5726 = vpop.f32.mrb[0].mxu0
  %v5727 = vadd.f32 0.0, %v5726
  %v5728 = vpop.f32.mrb[0].mxu0
  %5729 = vmatprep.mubr.f32.mxu0 0.0
  %5730 = vmatmul.mubr.f32.gmra.mrb[0].mxu0 %v5351
  %v5731 = vpop.f32.mrb[0].mxu0
  %v5732 = vadd.f32 0.0, %v5731
  %v5733 = vpop.f32.mrb[0].mxu0
  %5734 = vmatprep.mubr.f32.mxu0 0.0
  %5735 = vmatmul.mubr.f32.gmra.mrb[0].mxu0 %v5354
  %v5736 = vpop.f32.mrb[0].mxu0
  %v5737 = vadd.f32 0.0, %v5736
  %v5738 = vpop.f32.mrb[0].mxu0
  %5739 = vmatprep.mubr.f32.mxu0 0.0
  %5740 = vmatmul.mubr.f32.gmra.mrb[0].mxu0 %v5357
  %v5741 = vpop.f32.mrb[0].mxu0
  %v5742 = vadd.f32 0.0, %v5741
  %v5743 = vpop.f32.mrb[0].mxu0
  %5744 = vmatprep.mubr.f32.mxu0 0.0
  %5745 = vmatmul.mubr.f32.gmra.mrb[0].mxu0 %v5360
  %v5746 = vpop.f32.mrb[0].mxu0
  %v5747 = vadd.f32 0.0, %v5746
  %v5748 = vpop.f32.mrb[0].mxu0
  %5749 = vdwg.mxu0
  %v5750 = vld [vmem:[%s10] sm:$0x1]
  %v5751 = vld [vmem:[%s11] sm:$0x1]
  %v5752 = vsel %vm107, %v5432, 0.0
  %v5753 = vsel %vm107, %v5437, 0.0
  %v5754 = vadd.f32 %v5752, %v5753
  %v5755 = vsel %vm107, %v5442, 0.0
  %v5756 = vadd.f32 %v5754, %v5755
  %v5757 = vsel %vm107, %v5447, 0.0
  %v5758 = vadd.f32 %v5756, %v5757
  %v5759 = vsel %vm107, %v5452, 0.0
  %v5760 = vadd.f32 %v5758, %v5759
  %v5761 = vsel %vm107, %v5457, 0.0
  %v5762 = vadd.f32 %v5760, %v5761
  %v5763 = vsel %vm107, %v5462, 0.0
  %v5764 = vadd.f32 %v5762, %v5763
  %v5765 = vsel %vm107, %v5467, 0.0
  %v5766 = vadd.f32 %v5764, %v5765
  %v5767 = vsel %vm107, %v5472, 0.0
  %v5768 = vadd.f32 %v5766, %v5767
  %v5769 = vsel %vm107, %v5477, 0.0
  %v5770 = vadd.f32 %v5768, %v5769
  %v5771 = vsel %vm107, %v5482, 0.0
  %v5772 = vadd.f32 %v5770, %v5771
  %v5773 = vsel %vm107, %v5487, 0.0
  %v5774 = vadd.f32 %v5772, %v5773
  %v5775 = vsel %vm107, %v5492, 0.0
  %v5776 = vadd.f32 %v5774, %v5775
  %v5777 = vsel %vm107, %v5497, 0.0
  %v5778 = vadd.f32 %v5776, %v5777
  %v5779 = vsel %vm107, %v5502, 0.0
  %v5780 = vadd.f32 %v5778, %v5779
  %v5781 = vsel %vm107, %v5507, 0.0
  %v5782 = vadd.f32 %v5780, %v5781
  %v5783 = vsel %vm107, %v5512, 0.0
  %v5784 = vadd.f32 %v5782, %v5783
  %v5785 = vsel %vm107, %v5517, 0.0
  %v5786 = vadd.f32 %v5784, %v5785
  %v5787 = vsel %vm107, %v5522, 0.0
  %v5788 = vadd.f32 %v5786, %v5787
  %v5789 = vsel %vm107, %v5527, 0.0
  %v5790 = vadd.f32 %v5788, %v5789
  %v5791 = vsel %vm107, %v5532, 0.0
  %v5792 = vadd.f32 %v5790, %v5791
  %v5793 = vsel %vm107, %v5537, 0.0
  %v5794 = vadd.f32 %v5792, %v5793
  %v5795 = vsel %vm107, %v5542, 0.0
  %v5796 = vadd.f32 %v5794, %v5795
  %v5797 = vsel %vm107, %v5547, 0.0
  %v5798 = vadd.f32 %v5796, %v5797
  %v5799 = vsel %vm107, %v5552, 0.0
  %v5800 = vadd.f32 %v5798, %v5799
  %v5801 = vsel %vm107, %v5557, 0.0
  %v5802 = vadd.f32 %v5800, %v5801
  %v5803 = vsel %vm107, %v5562, 0.0
  %v5804 = vadd.f32 %v5802, %v5803
  %v5805 = vsel %vm107, %v5567, 0.0
  %v5806 = vadd.f32 %v5804, %v5805
  %v5807 = vsel %vm107, %v5572, 0.0
  %v5808 = vadd.f32 %v5806, %v5807
  %v5809 = vsel %vm107, %v5577, 0.0
  %v5810 = vadd.f32 %v5808, %v5809
  %v5811 = vsel %vm107, %v5582, 0.0
  %v5812 = vadd.f32 %v5810, %v5811
  %v5813 = vsel %vm107, %v5587, 0.0
  %v5814 = vadd.f32 %v5812, %v5813
  %v5815 = vsel %vm107, %v5592, 0.0
  %v5816 = vadd.f32 %v5814, %v5815
  %v5817 = vsel %vm107, %v5597, 0.0
  %v5818 = vadd.f32 %v5816, %v5817
  %v5819 = vsel %vm107, %v5602, 0.0
  %v5820 = vadd.f32 %v5818, %v5819
  %v5821 = vsel %vm107, %v5607, 0.0
  %v5822 = vadd.f32 %v5820, %v5821
  %v5823 = vsel %vm107, %v5612, 0.0
  %v5824 = vadd.f32 %v5822, %v5823
  %v5825 = vsel %vm107, %v5617, 0.0
  %v5826 = vadd.f32 %v5824, %v5825
  %v5827 = vsel %vm107, %v5622, 0.0
  %v5828 = vadd.f32 %v5826, %v5827
  %v5829 = vsel %vm107, %v5627, 0.0
  %v5830 = vadd.f32 %v5828, %v5829
  %v5831 = vsel %vm107, %v5632, 0.0
  %v5832 = vadd.f32 %v5830, %v5831
  %v5833 = vsel %vm107, %v5637, 0.0
  %v5834 = vadd.f32 %v5832, %v5833
  %v5835 = vsel %vm107, %v5642, 0.0
  %v5836 = vadd.f32 %v5834, %v5835
  %v5837 = vsel %vm107, %v5647, 0.0
  %v5838 = vadd.f32 %v5836, %v5837
  %v5839 = vsel %vm107, %v5652, 0.0
  %v5840 = vadd.f32 %v5838, %v5839
  %v5841 = vsel %vm107, %v5657, 0.0
  %v5842 = vadd.f32 %v5840, %v5841
  %v5843 = vsel %vm107, %v5662, 0.0
  %v5844 = vadd.f32 %v5842, %v5843
  %v5845 = vsel %vm107, %v5667, 0.0
  %v5846 = vadd.f32 %v5844, %v5845
  %v5847 = vsel %vm107, %v5672, 0.0
  %v5848 = vadd.f32 %v5846, %v5847
  %v5849 = vsel %vm107, %v5677, 0.0
  %v5850 = vadd.f32 %v5848, %v5849
  %v5851 = vsel %vm107, %v5682, 0.0
  %v5852 = vadd.f32 %v5850, %v5851
  %v5853 = vsel %vm107, %v5687, 0.0
  %v5854 = vadd.f32 %v5852, %v5853
  %v5855 = vsel %vm107, %v5692, 0.0
  %v5856 = vadd.f32 %v5854, %v5855
  %v5857 = vsel %vm107, %v5697, 0.0
  %v5858 = vadd.f32 %v5856, %v5857
  %v5859 = vsel %vm107, %v5702, 0.0
  %v5860 = vadd.f32 %v5858, %v5859
  %v5861 = vsel %vm107, %v5707, 0.0
  %v5862 = vadd.f32 %v5860, %v5861
  %v5863 = vsel %vm107, %v5712, 0.0
  %v5864 = vadd.f32 %v5862, %v5863
  %v5865 = vsel %vm107, %v5717, 0.0
  %v5866 = vadd.f32 %v5864, %v5865
  %v5867 = vsel %vm107, %v5722, 0.0
  %v5868 = vadd.f32 %v5866, %v5867
  %v5869 = vsel %vm107, %v5727, 0.0
  %v5870 = vadd.f32 %v5868, %v5869
  %v5871 = vsel %vm107, %v5732, 0.0
  %v5872 = vadd.f32 %v5870, %v5871
  %v5873 = vsel %vm107, %v5737, 0.0
  %v5874 = vadd.f32 %v5872, %v5873
  %v5875 = vsel %vm107, %v5742, 0.0
  %v5876 = vadd.f32 %v5874, %v5875
  %v5877 = vsel %vm107, %v5747, 0.0
  %v5878 = vadd.f32 %v5876, %v5877
  %v5879 = vrot.slane %v5878, 4
  %v5880 = vadd.f32 %v5878, %v5879
  %v5881 = vrot.slane %v5880, 2
  %v5882 = vadd.f32 %v5880, %v5881
  %v5883 = vrot.slane %v5882, 1
  %v5884 = vadd.f32 %v5882, %v5883
  %v5885 = vmul.f32 %v5884, 0.001953125
  %v5886 = vmul.f32 %v5432, %v5432
  %v5887 = vmul.f32 %v5437, %v5437
  %v5888 = vmul.f32 %v5442, %v5442
  %v5889 = vmul.f32 %v5447, %v5447
  %v5890 = vmul.f32 %v5452, %v5452
  %v5891 = vmul.f32 %v5457, %v5457
  %v5892 = vmul.f32 %v5462, %v5462
  %v5893 = vmul.f32 %v5467, %v5467
  %v5894 = vmul.f32 %v5472, %v5472
  %v5895 = vmul.f32 %v5477, %v5477
  %v5896 = vmul.f32 %v5482, %v5482
  %v5897 = vmul.f32 %v5487, %v5487
  %v5898 = vmul.f32 %v5492, %v5492
  %v5899 = vmul.f32 %v5497, %v5497
  %v5900 = vmul.f32 %v5502, %v5502
  %v5901 = vmul.f32 %v5507, %v5507
  %v5902 = vmul.f32 %v5512, %v5512
  %v5903 = vmul.f32 %v5517, %v5517
  %v5904 = vmul.f32 %v5522, %v5522
  %v5905 = vmul.f32 %v5527, %v5527
  %v5906 = vmul.f32 %v5532, %v5532
  %v5907 = vmul.f32 %v5537, %v5537
  %v5908 = vmul.f32 %v5542, %v5542
  %v5909 = vmul.f32 %v5547, %v5547
  %v5910 = vmul.f32 %v5552, %v5552
  %v5911 = vmul.f32 %v5557, %v5557
  %v5912 = vmul.f32 %v5562, %v5562
  %v5913 = vmul.f32 %v5567, %v5567
  %v5914 = vmul.f32 %v5572, %v5572
  %v5915 = vmul.f32 %v5577, %v5577
  %v5916 = vmul.f32 %v5582, %v5582
  %v5917 = vmul.f32 %v5587, %v5587
  %v5918 = vmul.f32 %v5592, %v5592
  %v5919 = vmul.f32 %v5597, %v5597
  %v5920 = vmul.f32 %v5602, %v5602
  %v5921 = vmul.f32 %v5607, %v5607
  %v5922 = vmul.f32 %v5612, %v5612
  %v5923 = vmul.f32 %v5617, %v5617
  %v5924 = vmul.f32 %v5622, %v5622
  %v5925 = vmul.f32 %v5627, %v5627
  %v5926 = vmul.f32 %v5632, %v5632
  %v5927 = vmul.f32 %v5637, %v5637
  %v5928 = vmul.f32 %v5642, %v5642
  %v5929 = vmul.f32 %v5647, %v5647
  %v5930 = vmul.f32 %v5652, %v5652
  %v5931 = vmul.f32 %v5657, %v5657
  %v5932 = vmul.f32 %v5662, %v5662
  %v5933 = vmul.f32 %v5667, %v5667
  %v5934 = vmul.f32 %v5672, %v5672
  %v5935 = vmul.f32 %v5677, %v5677
  %v5936 = vmul.f32 %v5682, %v5682
  %v5937 = vmul.f32 %v5687, %v5687
  %v5938 = vmul.f32 %v5692, %v5692
  %v5939 = vmul.f32 %v5697, %v5697
  %v5940 = vmul.f32 %v5702, %v5702
  %v5941 = vmul.f32 %v5707, %v5707
  %v5942 = vmul.f32 %v5712, %v5712
  %v5943 = vmul.f32 %v5717, %v5717
  %v5944 = vmul.f32 %v5722, %v5722
  %v5945 = vmul.f32 %v5727, %v5727
  %v5946 = vmul.f32 %v5732, %v5732
  %v5947 = vmul.f32 %v5737, %v5737
  %v5948 = vmul.f32 %v5742, %v5742
  %v5949 = vmul.f32 %v5747, %v5747
  %v5950 = vsel %vm107, %v5886, 0.0
  %v5951 = vsel %vm107, %v5887, 0.0
  %v5952 = vadd.f32 %v5950, %v5951
  %v5953 = vsel %vm107, %v5888, 0.0
  %v5954 = vadd.f32 %v5952, %v5953
  %v5955 = vsel %vm107, %v5889, 0.0
  %v5956 = vadd.f32 %v5954, %v5955
  %v5957 = vsel %vm107, %v5890, 0.0
  %v5958 = vadd.f32 %v5956, %v5957
  %v5959 = vsel %vm107, %v5891, 0.0
  %v5960 = vadd.f32 %v5958, %v5959
  %v5961 = vsel %vm107, %v5892, 0.0
  %v5962 = vadd.f32 %v5960, %v5961
  %v5963 = vsel %vm107, %v5893, 0.0
  %v5964 = vadd.f32 %v5962, %v5963
  %v5965 = vsel %vm107, %v5894, 0.0
  %v5966 = vadd.f32 %v5964, %v5965
  %v5967 = vsel %vm107, %v5895, 0.0
  %v5968 = vadd.f32 %v5966, %v5967
  %v5969 = vsel %vm107, %v5896, 0.0
  %v5970 = vadd.f32 %v5968, %v5969
  %v5971 = vsel %vm107, %v5897, 0.0
  %v5972 = vadd.f32 %v5970, %v5971
  %v5973 = vsel %vm107, %v5898, 0.0
  %v5974 = vadd.f32 %v5972, %v5973
  %v5975 = vsel %vm107, %v5899, 0.0
  %v5976 = vadd.f32 %v5974, %v5975
  %v5977 = vsel %vm107, %v5900, 0.0
  %v5978 = vadd.f32 %v5976, %v5977
  %v5979 = vsel %vm107, %v5901, 0.0
  %v5980 = vadd.f32 %v5978, %v5979
  %v5981 = vsel %vm107, %v5902, 0.0
  %v5982 = vadd.f32 %v5980, %v5981
  %v5983 = vsel %vm107, %v5903, 0.0
  %v5984 = vadd.f32 %v5982, %v5983
  %v5985 = vsel %vm107, %v5904, 0.0
  %v5986 = vadd.f32 %v5984, %v5985
  %v5987 = vsel %vm107, %v5905, 0.0
  %v5988 = vadd.f32 %v5986, %v5987
  %v5989 = vsel %vm107, %v5906, 0.0
  %v5990 = vadd.f32 %v5988, %v5989
  %v5991 = vsel %vm107, %v5907, 0.0
  %v5992 = vadd.f32 %v5990, %v5991
  %v5993 = vsel %vm107, %v5908, 0.0
  %v5994 = vadd.f32 %v5992, %v5993
  %v5995 = vsel %vm107, %v5909, 0.0
  %v5996 = vadd.f32 %v5994, %v5995
  %v5997 = vsel %vm107, %v5910, 0.0
  %v5998 = vadd.f32 %v5996, %v5997
  %v5999 = vsel %vm107, %v5911, 0.0
  %v6000 = vadd.f32 %v5998, %v5999
  %v6001 = vsel %vm107, %v5912, 0.0
  %v6002 = vadd.f32 %v6000, %v6001
  %v6003 = vsel %vm107, %v5913, 0.0
  %v6004 = vadd.f32 %v6002, %v6003
  %v6005 = vsel %vm107, %v5914, 0.0
  %v6006 = vadd.f32 %v6004, %v6005
  %v6007 = vsel %vm107, %v5915, 0.0
  %v6008 = vadd.f32 %v6006, %v6007
  %v6009 = vsel %vm107, %v5916, 0.0
  %v6010 = vadd.f32 %v6008, %v6009
  %v6011 = vsel %vm107, %v5917, 0.0
  %v6012 = vadd.f32 %v6010, %v6011
  %v6013 = vsel %vm107, %v5918, 0.0
  %v6014 = vadd.f32 %v6012, %v6013
  %v6015 = vsel %vm107, %v5919, 0.0
  %v6016 = vadd.f32 %v6014, %v6015
  %v6017 = vsel %vm107, %v5920, 0.0
  %v6018 = vadd.f32 %v6016, %v6017
  %v6019 = vsel %vm107, %v5921, 0.0
  %v6020 = vadd.f32 %v6018, %v6019
  %v6021 = vsel %vm107, %v5922, 0.0
  %v6022 = vadd.f32 %v6020, %v6021
  %v6023 = vsel %vm107, %v5923, 0.0
  %v6024 = vadd.f32 %v6022, %v6023
  %v6025 = vsel %vm107, %v5924, 0.0
  %v6026 = vadd.f32 %v6024, %v6025
  %v6027 = vsel %vm107, %v5925, 0.0
  %v6028 = vadd.f32 %v6026, %v6027
  %v6029 = vsel %vm107, %v5926, 0.0
  %v6030 = vadd.f32 %v6028, %v6029
  %v6031 = vsel %vm107, %v5927, 0.0
  %v6032 = vadd.f32 %v6030, %v6031
  %v6033 = vsel %vm107, %v5928, 0.0
  %v6034 = vadd.f32 %v6032, %v6033
  %v6035 = vsel %vm107, %v5929, 0.0
  %v6036 = vadd.f32 %v6034, %v6035
  %v6037 = vsel %vm107, %v5930, 0.0
  %v6038 = vadd.f32 %v6036, %v6037
  %v6039 = vsel %vm107, %v5931, 0.0
  %v6040 = vadd.f32 %v6038, %v6039
  %v6041 = vsel %vm107, %v5932, 0.0
  %v6042 = vadd.f32 %v6040, %v6041
  %v6043 = vsel %vm107, %v5933, 0.0
  %v6044 = vadd.f32 %v6042, %v6043
  %v6045 = vsel %vm107, %v5934, 0.0
  %v6046 = vadd.f32 %v6044, %v6045
  %v6047 = vsel %vm107, %v5935, 0.0
  %v6048 = vadd.f32 %v6046, %v6047
  %v6049 = vsel %vm107, %v5936, 0.0
  %v6050 = vadd.f32 %v6048, %v6049
  %v6051 = vsel %vm107, %v5937, 0.0
  %v6052 = vadd.f32 %v6050, %v6051
  %v6053 = vsel %vm107, %v5938, 0.0
  %v6054 = vadd.f32 %v6052, %v6053
  %v6055 = vsel %vm107, %v5939, 0.0
  %v6056 = vadd.f32 %v6054, %v6055
  %v6057 = vsel %vm107, %v5940, 0.0
  %v6058 = vadd.f32 %v6056, %v6057
  %v6059 = vsel %vm107, %v5941, 0.0
  %v6060 = vadd.f32 %v6058, %v6059
  %v6061 = vsel %vm107, %v5942, 0.0
  %v6062 = vadd.f32 %v6060, %v6061
  %v6063 = vsel %vm107, %v5943, 0.0
  %v6064 = vadd.f32 %v6062, %v6063
  %v6065 = vsel %vm107, %v5944, 0.0
  %v6066 = vadd.f32 %v6064, %v6065
  %v6067 = vsel %vm107, %v5945, 0.0
  %v6068 = vadd.f32 %v6066, %v6067
  %v6069 = vsel %vm107, %v5946, 0.0
  %v6070 = vadd.f32 %v6068, %v6069
  %v6071 = vsel %vm107, %v5947, 0.0
  %v6072 = vadd.f32 %v6070, %v6071
  %v6073 = vsel %vm107, %v5948, 0.0
  %v6074 = vadd.f32 %v6072, %v6073
  %v6075 = vsel %vm107, %v5949, 0.0
  %v6076 = vadd.f32 %v6074, %v6075
  %v6077 = vrot.slane %v6076, 4
  %v6078 = vadd.f32 %v6076, %v6077
  %v6079 = vrot.slane %v6078, 2
  %v6080 = vadd.f32 %v6078, %v6079
  %v6081 = vrot.slane %v6080, 1
  %v6082 = vadd.f32 %v6080, %v6081
  %v6083 = vmul.f32 %v6082, 0.001953125
  %v6084 = vmul.f32 %v5885, %v5885
  %v6085 = vsub.f32 %v6083, %v6084
  %v6086 = vadd.f32 %v6085, 1e-05
  %v6087 = vrsqrt.pop %v6086
  %v6088 = vmul.f32 %v5750, %v6087
  %v6089 = vmul.f32 %v5885, %v6088
  %v6090 = vsub.f32 %v5751, %v6089
  %v6092 = vlaneseq
  %v6093 = vshrl.u32 %v6092, 7
  %v6094 = vsub.s32 0, %v6093
  %v6095 = vrot.slane %v6088, %v6094
  %v6097 = vmul.f32 %v5432, %v6095
  %v6098 = vmul.f32 %v5437, %v6095
  %v6099 = vmul.f32 %v5442, %v6095
  %v6100 = vmul.f32 %v5447, %v6095
  %v6101 = vmul.f32 %v5452, %v6095
  %v6102 = vmul.f32 %v5457, %v6095
  %v6103 = vmul.f32 %v5462, %v6095
  %v6104 = vmul.f32 %v5467, %v6095
  %v6105 = vmul.f32 %v5472, %v6095
  %v6106 = vmul.f32 %v5477, %v6095
  %v6107 = vmul.f32 %v5482, %v6095
  %v6108 = vmul.f32 %v5487, %v6095
  %v6109 = vmul.f32 %v5492, %v6095
  %v6110 = vmul.f32 %v5497, %v6095
  %v6111 = vmul.f32 %v5502, %v6095
  %v6112 = vmul.f32 %v5507, %v6095
  %v6113 = vmul.f32 %v5512, %v6095
  %v6114 = vmul.f32 %v5517, %v6095
  %v6115 = vmul.f32 %v5522, %v6095
  %v6116 = vmul.f32 %v5527, %v6095
  %v6117 = vmul.f32 %v5532, %v6095
  %v6118 = vmul.f32 %v5537, %v6095
  %v6119 = vmul.f32 %v5542, %v6095
  %v6120 = vmul.f32 %v5547, %v6095
  %v6121 = vmul.f32 %v5552, %v6095
  %v6122 = vmul.f32 %v5557, %v6095
  %v6123 = vmul.f32 %v5562, %v6095
  %v6124 = vmul.f32 %v5567, %v6095
  %v6125 = vmul.f32 %v5572, %v6095
  %v6126 = vmul.f32 %v5577, %v6095
  %v6127 = vmul.f32 %v5582, %v6095
  %v6128 = vmul.f32 %v5587, %v6095
  %v6129 = vmul.f32 %v5592, %v6095
  %v6130 = vmul.f32 %v5597, %v6095
  %v6131 = vmul.f32 %v5602, %v6095
  %v6132 = vmul.f32 %v5607, %v6095
  %v6133 = vmul.f32 %v5612, %v6095
  %v6134 = vmul.f32 %v5617, %v6095
  %v6135 = vmul.f32 %v5622, %v6095
  %v6136 = vmul.f32 %v5627, %v6095
  %v6137 = vmul.f32 %v5632, %v6095
  %v6138 = vmul.f32 %v5637, %v6095
  %v6139 = vmul.f32 %v5642, %v6095
  %v6140 = vmul.f32 %v5647, %v6095
  %v6141 = vmul.f32 %v5652, %v6095
  %v6142 = vmul.f32 %v5657, %v6095
  %v6143 = vmul.f32 %v5662, %v6095
  %v6144 = vmul.f32 %v5667, %v6095
  %v6145 = vmul.f32 %v5672, %v6095
  %v6146 = vmul.f32 %v5677, %v6095
  %v6147 = vmul.f32 %v5682, %v6095
  %v6148 = vmul.f32 %v5687, %v6095
  %v6149 = vmul.f32 %v5692, %v6095
  %v6150 = vmul.f32 %v5697, %v6095
  %v6151 = vmul.f32 %v5702, %v6095
  %v6152 = vmul.f32 %v5707, %v6095
  %v6153 = vmul.f32 %v5712, %v6095
  %v6154 = vmul.f32 %v5717, %v6095
  %v6155 = vmul.f32 %v5722, %v6095
  %v6156 = vmul.f32 %v5727, %v6095
  %v6157 = vmul.f32 %v5732, %v6095
  %v6158 = vmul.f32 %v5737, %v6095
  %v6159 = vmul.f32 %v5742, %v6095
  %v6160 = vmul.f32 %v5747, %v6095
  %v6162 = vlaneseq
  %v6163 = vshrl.u32 %v6162, 7
  %v6164 = vsub.s32 0, %v6163
  %v6165 = vrot.slane %v6090, %v6164
  %v6167 = vadd.f32 %v6097, %v6165
  %v6168 = vadd.f32 %v6098, %v6165
  %v6169 = vadd.f32 %v6099, %v6165
  %v6170 = vadd.f32 %v6100, %v6165
  %v6171 = vadd.f32 %v6101, %v6165
  %v6172 = vadd.f32 %v6102, %v6165
  %v6173 = vadd.f32 %v6103, %v6165
  %v6174 = vadd.f32 %v6104, %v6165
  %v6175 = vadd.f32 %v6105, %v6165
  %v6176 = vadd.f32 %v6106, %v6165
  %v6177 = vadd.f32 %v6107, %v6165
  %v6178 = vadd.f32 %v6108, %v6165
  %v6179 = vadd.f32 %v6109, %v6165
  %v6180 = vadd.f32 %v6110, %v6165
  %v6181 = vadd.f32 %v6111, %v6165
  %v6182 = vadd.f32 %v6112, %v6165
  %v6183 = vadd.f32 %v6113, %v6165
  %v6184 = vadd.f32 %v6114, %v6165
  %v6185 = vadd.f32 %v6115, %v6165
  %v6186 = vadd.f32 %v6116, %v6165
  %v6187 = vadd.f32 %v6117, %v6165
  %v6188 = vadd.f32 %v6118, %v6165
  %v6189 = vadd.f32 %v6119, %v6165
  %v6190 = vadd.f32 %v6120, %v6165
  %v6191 = vadd.f32 %v6121, %v6165
  %v6192 = vadd.f32 %v6122, %v6165
  %v6193 = vadd.f32 %v6123, %v6165
  %v6194 = vadd.f32 %v6124, %v6165
  %v6195 = vadd.f32 %v6125, %v6165
  %v6196 = vadd.f32 %v6126, %v6165
  %v6197 = vadd.f32 %v6127, %v6165
  %v6198 = vadd.f32 %v6128, %v6165
  %v6199 = vadd.f32 %v6129, %v6165
  %v6200 = vadd.f32 %v6130, %v6165
  %v6201 = vadd.f32 %v6131, %v6165
  %v6202 = vadd.f32 %v6132, %v6165
  %v6203 = vadd.f32 %v6133, %v6165
  %v6204 = vadd.f32 %v6134, %v6165
  %v6205 = vadd.f32 %v6135, %v6165
  %v6206 = vadd.f32 %v6136, %v6165
  %v6207 = vadd.f32 %v6137, %v6165
  %v6208 = vadd.f32 %v6138, %v6165
  %v6209 = vadd.f32 %v6139, %v6165
  %v6210 = vadd.f32 %v6140, %v6165
  %v6211 = vadd.f32 %v6141, %v6165
  %v6212 = vadd.f32 %v6142, %v6165
  %v6213 = vadd.f32 %v6143, %v6165
  %v6214 = vadd.f32 %v6144, %v6165
  %v6215 = vadd.f32 %v6145, %v6165
  %v6216 = vadd.f32 %v6146, %v6165
  %v6217 = vadd.f32 %v6147, %v6165
  %v6218 = vadd.f32 %v6148, %v6165
  %v6219 = vadd.f32 %v6149, %v6165
  %v6220 = vadd.f32 %v6150, %v6165
  %v6221 = vadd.f32 %v6151, %v6165
  %v6222 = vadd.f32 %v6152, %v6165
  %v6223 = vadd.f32 %v6153, %v6165
  %v6224 = vadd.f32 %v6154, %v6165
  %v6225 = vadd.f32 %v6155, %v6165
  %v6226 = vadd.f32 %v6156, %v6165
  %v6227 = vadd.f32 %v6157, %v6165
  %v6228 = vadd.f32 %v6158, %v6165
  %v6229 = vadd.f32 %v6159, %v6165
  %v6230 = vadd.f32 %v6160, %v6165
  %v6232 = vsel %vm687, %v5105, 0
  %v6235 = vsel %vm687, %v5106, 0
  %v6238 = vsel %vm687, %v5107, 0
  %v6241 = vsel %vm687, %v5108, 0
  %v6244 = vsel %vm687, %v5109, 0
  %v6247 = vsel %vm687, %v5110, 0
  %v6250 = vsel %vm687, %v5111, 0
  %v6253 = vsel %vm687, %v5112, 0
  %v6256 = vsel %vm687, %v5113, 0
  %v6259 = vsel %vm687, %v5114, 0
  %v6262 = vsel %vm687, %v5115, 0
  %v6265 = vsel %vm687, %v5116, 0
  %v6268 = vsel %vm687, %v5117, 0
  %v6271 = vsel %vm687, %v5118, 0
  %v6274 = vsel %vm687, %v5119, 0
  %v6277 = vsel %vm687, %v5120, 0
  %v6280 = vsel %vm687, %v5121, 0
  %v6283 = vsel %vm687, %v5122, 0
  %v6286 = vsel %vm687, %v5123, 0
  %v6289 = vsel %vm687, %v5124, 0
  %v6292 = vsel %vm687, %v5125, 0
  %v6295 = vsel %vm687, %v5126, 0
  %v6298 = vsel %vm687, %v5127, 0
  %v6301 = vsel %vm687, %v5128, 0
  %v6304 = vsel %vm687, %v5129, 0
  %v6307 = vsel %vm687, %v5130, 0
  %v6310 = vsel %vm687, %v5131, 0
  %v6313 = vsel %vm687, %v5132, 0
  %v6316 = vsel %vm687, %v5133, 0
  %v6319 = vsel %vm687, %v5134, 0
  %v6322 = vsel %vm687, %v5135, 0
  %v6325 = vsel %vm687, %v5136, 0
  %v6328 = vsel %vm687, %v5137, 0
  %v6331 = vsel %vm687, %v5138, 0
  %v6334 = vsel %vm687, %v5139, 0
  %v6337 = vsel %vm687, %v5140, 0
  %v6340 = vsel %vm687, %v5141, 0
  %v6343 = vsel %vm687, %v5142, 0
  %v6346 = vsel %vm687, %v5143, 0
  %v6349 = vsel %vm687, %v5144, 0
  %v6352 = vsel %vm687, %v5145, 0
  %v6355 = vsel %vm687, %v5146, 0
  %v6358 = vsel %vm687, %v5147, 0
  %v6361 = vsel %vm687, %v5148, 0
  %v6364 = vsel %vm687, %v5149, 0
  %v6367 = vsel %vm687, %v5150, 0
  %v6370 = vsel %vm687, %v5151, 0
  %v6373 = vsel %vm687, %v5152, 0
  %v6376 = vsel %vm687, %v5153, 0
  %v6379 = vsel %vm687, %v5154, 0
  %v6382 = vsel %vm687, %v5155, 0
  %v6385 = vsel %vm687, %v5156, 0
  %v6388 = vsel %vm687, %v5157, 0
  %v6391 = vsel %vm687, %v5158, 0
  %v6394 = vsel %vm687, %v5159, 0
  %v6397 = vsel %vm687, %v5160, 0
  %v6400 = vsel %vm687, %v5161, 0
  %v6403 = vsel %vm687, %v5162, 0
  %v6406 = vsel %vm687, %v5163, 0
  %v6409 = vsel %vm687, %v5164, 0
  %v6412 = vsel %vm687, %v5165, 0
  %v6415 = vsel %vm687, %v5166, 0
  %v6418 = vsel %vm687, %v5167, 0
  %v6421 = vsel %vm687, %v5168, 0
  %6423 = vmatprep.subr.mxu0 0.0
  %6424 = vmatpush1.msra.mxu0 %v5363
  %6425 = vmatprep.subr.mxu0 0.0
  %6426 = vmatpush1.msra.mxu0 0.0
  %6427 = vmatprep.subr.mxu0 0.0
  %6428 = vmatpush1.msra.mxu0 0.0
  %6429 = vmatprep.subr.mxu0 0.0
  %6430 = vmatpush1.msra.mxu0 0.0
  %6431 = vmatprep.subr.mxu0 0.0
  %6432 = vmatpush1.msra.mxu0 0.0
  %6433 = vmatprep.subr.mxu0 0.0
  %6434 = vmatpush1.msra.mxu0 0.0
  %6435 = vmatprep.subr.mxu0 0.0
  %6436 = vmatpush1.msra.mxu0 0.0
  %6437 = vmatprep.subr.mxu0 0.0
  %6438 = vmatpush1.msra.mxu0 0.0
  %6439 = vmatprep.subr.mxu0 0.0
  %6440 = vmatpush1.msra.mxu0 0.0
  %6441 = vmatprep.subr.mxu0 0.0
  %6442 = vmatpush1.msra.mxu0 0.0
  %6443 = vmatprep.subr.mxu0 0.0
  %6444 = vmatpush1.msra.mxu0 0.0
  %6445 = vmatprep.subr.mxu0 0.0
  %6446 = vmatpush1.msra.mxu0 0.0
  %6447 = vmatprep.subr.mxu0 0.0
  %6448 = vmatpush1.msra.mxu0 0.0
  %6449 = vmatprep.subr.mxu0 0.0
  %6450 = vmatpush1.msra.mxu0 0.0
  %6451 = vmatprep.subr.mxu0 0.0
  %6452 = vmatpush1.msra.mxu0 0.0
  %6453 = vmatprep.subr.mxu0 0.0
  %6454 = vmatpush1.msra.mxu0 0.0
  %6455 = vmatprep.subr.mxu0 0.0
  %6456 = vmatpush1.msra.mxu0 0.0
  %6457 = vmatprep.subr.mxu0 0.0
  %6458 = vmatpush1.msra.mxu0 0.0
  %6459 = vmatprep.subr.mxu0 0.0
  %6460 = vmatpush1.msra.mxu0 0.0
  %6461 = vmatprep.subr.mxu0 0.0
  %6462 = vmatpush1.msra.mxu0 0.0
  %6463 = vmatprep.subr.mxu0 0.0
  %6464 = vmatpush1.msra.mxu0 0.0
  %6465 = vmatprep.subr.mxu0 0.0
  %6466 = vmatpush1.msra.mxu0 0.0
  %6467 = vmatprep.subr.mxu0 0.0
  %6468 = vmatpush1.msra.mxu0 0.0
  %6469 = vmatprep.subr.mxu0 0.0
  %6470 = vmatpush1.msra.mxu0 0.0
  %6471 = vmatprep.subr.mxu0 0.0
  %6472 = vmatpush1.msra.mxu0 0.0
  %6473 = vmatprep.subr.mxu0 0.0
  %6474 = vmatpush1.msra.mxu0 0.0
  %6475 = vmatprep.subr.mxu0 0.0
  %6476 = vmatpush1.msra.mxu0 0.0
  %6477 = vmatprep.subr.mxu0 0.0
  %6478 = vmatpush1.msra.mxu0 0.0
  %6479 = vmatprep.subr.mxu0 0.0
  %6480 = vmatpush1.msra.mxu0 0.0
  %6481 = vmatprep.subr.mxu0 0.0
  %6482 = vmatpush1.msra.mxu0 0.0
  %6483 = vmatprep.subr.mxu0 0.0
  %6484 = vmatpush1.msra.mxu0 0.0
  %6485 = vmatprep.subr.mxu0 0.0
  %6486 = vmatpush1.msra.mxu0 0.0
  %6487 = vmatprep.mubr.f32.mxu0 0.0
  %6488 = vmatmul.mubr.f32.gmra.mrb[0].mxu0 %v6232
  %v6489 = vpop.f32.mrb[0].mxu0
  %v6490 = vadd.f32 0.0, %v6489
  %v6491 = vpop.f32.mrb[0].mxu0
  %6492 = vmatprep.mubr.f32.mxu0 0.0
  %6493 = vmatmul.mubr.f32.gmra.mrb[0].mxu0 %v6235
  %v6494 = vpop.f32.mrb[0].mxu0
  %v6495 = vadd.f32 0.0, %v6494
  %v6496 = vpop.f32.mrb[0].mxu0
  %6497 = vmatprep.mubr.f32.mxu0 0.0
  %6498 = vmatmul.mubr.f32.gmra.mrb[0].mxu0 %v6238
  %v6499 = vpop.f32.mrb[0].mxu0
  %v6500 = vadd.f32 0.0, %v6499
  %v6501 = vpop.f32.mrb[0].mxu0
  %6502 = vmatprep.mubr.f32.mxu0 0.0
  %6503 = vmatmul.mubr.f32.gmra.mrb[0].mxu0 %v6241
  %v6504 = vpop.f32.mrb[0].mxu0
  %v6505 = vadd.f32 0.0, %v6504
  %v6506 = vpop.f32.mrb[0].mxu0
  %6507 = vmatprep.mubr.f32.mxu0 0.0
  %6508 = vmatmul.mubr.f32.gmra.mrb[0].mxu0 %v6244
  %v6509 = vpop.f32.mrb[0].mxu0
  %v6510 = vadd.f32 0.0, %v6509
  %v6511 = vpop.f32.mrb[0].mxu0
  %6512 = vmatprep.mubr.f32.mxu0 0.0
  %6513 = vmatmul.mubr.f32.gmra.mrb[0].mxu0 %v6247
  %v6514 = vpop.f32.mrb[0].mxu0
  %v6515 = vadd.f32 0.0, %v6514
  %v6516 = vpop.f32.mrb[0].mxu0
  %6517 = vmatprep.mubr.f32.mxu0 0.0
  %6518 = vmatmul.mubr.f32.gmra.mrb[0].mxu0 %v6250
  %v6519 = vpop.f32.mrb[0].mxu0
  %v6520 = vadd.f32 0.0, %v6519
  %v6521 = vpop.f32.mrb[0].mxu0
  %6522 = vmatprep.mubr.f32.mxu0 0.0
  %6523 = vmatmul.mubr.f32.gmra.mrb[0].mxu0 %v6253
  %v6524 = vpop.f32.mrb[0].mxu0
  %v6525 = vadd.f32 0.0, %v6524
  %v6526 = vpop.f32.mrb[0].mxu0
  %6527 = vmatprep.mubr.f32.mxu0 0.0
  %6528 = vmatmul.mubr.f32.gmra.mrb[0].mxu0 %v6256
  %v6529 = vpop.f32.mrb[0].mxu0
  %v6530 = vadd.f32 0.0, %v6529
  %v6531 = vpop.f32.mrb[0].mxu0
  %6532 = vmatprep.mubr.f32.mxu0 0.0
  %6533 = vmatmul.mubr.f32.gmra.mrb[0].mxu0 %v6259
  %v6534 = vpop.f32.mrb[0].mxu0
  %v6535 = vadd.f32 0.0, %v6534
  %v6536 = vpop.f32.mrb[0].mxu0
  %6537 = vmatprep.mubr.f32.mxu0 0.0
  %6538 = vmatmul.mubr.f32.gmra.mrb[0].mxu0 %v6262
  %v6539 = vpop.f32.mrb[0].mxu0
  %v6540 = vadd.f32 0.0, %v6539
  %v6541 = vpop.f32.mrb[0].mxu0
  %6542 = vmatprep.mubr.f32.mxu0 0.0
  %6543 = vmatmul.mubr.f32.gmra.mrb[0].mxu0 %v6265
  %v6544 = vpop.f32.mrb[0].mxu0
  %v6545 = vadd.f32 0.0, %v6544
  %v6546 = vpop.f32.mrb[0].mxu0
  %6547 = vmatprep.mubr.f32.mxu0 0.0
  %6548 = vmatmul.mubr.f32.gmra.mrb[0].mxu0 %v6268
  %v6549 = vpop.f32.mrb[0].mxu0
  %v6550 = vadd.f32 0.0, %v6549
  %v6551 = vpop.f32.mrb[0].mxu0
  %6552 = vmatprep.mubr.f32.mxu0 0.0
  %6553 = vmatmul.mubr.f32.gmra.mrb[0].mxu0 %v6271
  %v6554 = vpop.f32.mrb[0].mxu0
  %v6555 = vadd.f32 0.0, %v6554
  %v6556 = vpop.f32.mrb[0].mxu0
  %6557 = vmatprep.mubr.f32.mxu0 0.0
  %6558 = vmatmul.mubr.f32.gmra.mrb[0].mxu0 %v6274
  %v6559 = vpop.f32.mrb[0].mxu0
  %v6560 = vadd.f32 0.0, %v6559
  %v6561 = vpop.f32.mrb[0].mxu0
  %6562 = vmatprep.mubr.f32.mxu0 0.0
  %6563 = vmatmul.mubr.f32.gmra.mrb[0].mxu0 %v6277
  %v6564 = vpop.f32.mrb[0].mxu0
  %v6565 = vadd.f32 0.0, %v6564
  %v6566 = vpop.f32.mrb[0].mxu0
  %6567 = vmatprep.mubr.f32.mxu0 0.0
  %6568 = vmatmul.mubr.f32.gmra.mrb[0].mxu0 %v6280
  %v6569 = vpop.f32.mrb[0].mxu0
  %v6570 = vadd.f32 0.0, %v6569
  %v6571 = vpop.f32.mrb[0].mxu0
  %6572 = vmatprep.mubr.f32.mxu0 0.0
  %6573 = vmatmul.mubr.f32.gmra.mrb[0].mxu0 %v6283
  %v6574 = vpop.f32.mrb[0].mxu0
  %v6575 = vadd.f32 0.0, %v6574
  %v6576 = vpop.f32.mrb[0].mxu0
  %6577 = vmatprep.mubr.f32.mxu0 0.0
  %6578 = vmatmul.mubr.f32.gmra.mrb[0].mxu0 %v6286
  %v6579 = vpop.f32.mrb[0].mxu0
  %v6580 = vadd.f32 0.0, %v6579
  %v6581 = vpop.f32.mrb[0].mxu0
  %6582 = vmatprep.mubr.f32.mxu0 0.0
  %6583 = vmatmul.mubr.f32.gmra.mrb[0].mxu0 %v6289
  %v6584 = vpop.f32.mrb[0].mxu0
  %v6585 = vadd.f32 0.0, %v6584
  %v6586 = vpop.f32.mrb[0].mxu0
  %6587 = vmatprep.mubr.f32.mxu0 0.0
  %6588 = vmatmul.mubr.f32.gmra.mrb[0].mxu0 %v6292
  %v6589 = vpop.f32.mrb[0].mxu0
  %v6590 = vadd.f32 0.0, %v6589
  %v6591 = vpop.f32.mrb[0].mxu0
  %6592 = vmatprep.mubr.f32.mxu0 0.0
  %6593 = vmatmul.mubr.f32.gmra.mrb[0].mxu0 %v6295
  %v6594 = vpop.f32.mrb[0].mxu0
  %v6595 = vadd.f32 0.0, %v6594
  %v6596 = vpop.f32.mrb[0].mxu0
  %6597 = vmatprep.mubr.f32.mxu0 0.0
  %6598 = vmatmul.mubr.f32.gmra.mrb[0].mxu0 %v6298
  %v6599 = vpop.f32.mrb[0].mxu0
  %v6600 = vadd.f32 0.0, %v6599
  %v6601 = vpop.f32.mrb[0].mxu0
  %6602 = vmatprep.mubr.f32.mxu0 0.0
  %6603 = vmatmul.mubr.f32.gmra.mrb[0].mxu0 %v6301
  %v6604 = vpop.f32.mrb[0].mxu0
  %v6605 = vadd.f32 0.0, %v6604
  %v6606 = vpop.f32.mrb[0].mxu0
  %6607 = vmatprep.mubr.f32.mxu0 0.0
  %6608 = vmatmul.mubr.f32.gmra.mrb[0].mxu0 %v6304
  %v6609 = vpop.f32.mrb[0].mxu0
  %v6610 = vadd.f32 0.0, %v6609
  %v6611 = vpop.f32.mrb[0].mxu0
  %6612 = vmatprep.mubr.f32.mxu0 0.0
  %6613 = vmatmul.mubr.f32.gmra.mrb[0].mxu0 %v6307
  %v6614 = vpop.f32.mrb[0].mxu0
  %v6615 = vadd.f32 0.0, %v6614
  %v6616 = vpop.f32.mrb[0].mxu0
  %6617 = vmatprep.mubr.f32.mxu0 0.0
  %6618 = vmatmul.mubr.f32.gmra.mrb[0].mxu0 %v6310
  %v6619 = vpop.f32.mrb[0].mxu0
  %v6620 = vadd.f32 0.0, %v6619
  %v6621 = vpop.f32.mrb[0].mxu0
  %6622 = vmatprep.mubr.f32.mxu0 0.0
  %6623 = vmatmul.mubr.f32.gmra.mrb[0].mxu0 %v6313
  %v6624 = vpop.f32.mrb[0].mxu0
  %v6625 = vadd.f32 0.0, %v6624
  %v6626 = vpop.f32.mrb[0].mxu0
  %6627 = vmatprep.mubr.f32.mxu0 0.0
  %6628 = vmatmul.mubr.f32.gmra.mrb[0].mxu0 %v6316
  %v6629 = vpop.f32.mrb[0].mxu0
  %v6630 = vadd.f32 0.0, %v6629
  %v6631 = vpop.f32.mrb[0].mxu0
  %6632 = vmatprep.mubr.f32.mxu0 0.0
  %6633 = vmatmul.mubr.f32.gmra.mrb[0].mxu0 %v6319
  %v6634 = vpop.f32.mrb[0].mxu0
  %v6635 = vadd.f32 0.0, %v6634
  %v6636 = vpop.f32.mrb[0].mxu0
  %6637 = vmatprep.mubr.f32.mxu0 0.0
  %6638 = vmatmul.mubr.f32.gmra.mrb[0].mxu0 %v6322
  %v6639 = vpop.f32.mrb[0].mxu0
  %v6640 = vadd.f32 0.0, %v6639
  %v6641 = vpop.f32.mrb[0].mxu0
  %6642 = vmatprep.mubr.f32.mxu0 0.0
  %6643 = vmatmul.mubr.f32.gmra.mrb[0].mxu0 %v6325
  %v6644 = vpop.f32.mrb[0].mxu0
  %v6645 = vadd.f32 0.0, %v6644
  %v6646 = vpop.f32.mrb[0].mxu0
  %6647 = vmatprep.mubr.f32.mxu0 0.0
  %6648 = vmatmul.mubr.f32.gmra.mrb[0].mxu0 %v6328
  %v6649 = vpop.f32.mrb[0].mxu0
  %v6650 = vadd.f32 0.0, %v6649
  %v6651 = vpop.f32.mrb[0].mxu0
  %6652 = vmatprep.mubr.f32.mxu0 0.0
  %6653 = vmatmul.mubr.f32.gmra.mrb[0].mxu0 %v6331
  %v6654 = vpop.f32.mrb[0].mxu0
  %v6655 = vadd.f32 0.0, %v6654
  %v6656 = vpop.f32.mrb[0].mxu0
  %6657 = vmatprep.mubr.f32.mxu0 0.0
  %6658 = vmatmul.mubr.f32.gmra.mrb[0].mxu0 %v6334
  %v6659 = vpop.f32.mrb[0].mxu0
  %v6660 = vadd.f32 0.0, %v6659
  %v6661 = vpop.f32.mrb[0].mxu0
  %6662 = vmatprep.mubr.f32.mxu0 0.0
  %6663 = vmatmul.mubr.f32.gmra.mrb[0].mxu0 %v6337
  %v6664 = vpop.f32.mrb[0].mxu0
  %v6665 = vadd.f32 0.0, %v6664
  %v6666 = vpop.f32.mrb[0].mxu0
  %6667 = vmatprep.mubr.f32.mxu0 0.0
  %6668 = vmatmul.mubr.f32.gmra.mrb[0].mxu0 %v6340
  %v6669 = vpop.f32.mrb[0].mxu0
  %v6670 = vadd.f32 0.0, %v6669
  %v6671 = vpop.f32.mrb[0].mxu0
  %6672 = vmatprep.mubr.f32.mxu0 0.0
  %6673 = vmatmul.mubr.f32.gmra.mrb[0].mxu0 %v6343
  %v6674 = vpop.f32.mrb[0].mxu0
  %v6675 = vadd.f32 0.0, %v6674
  %v6676 = vpop.f32.mrb[0].mxu0
  %6677 = vmatprep.mubr.f32.mxu0 0.0
  %6678 = vmatmul.mubr.f32.gmra.mrb[0].mxu0 %v6346
  %v6679 = vpop.f32.mrb[0].mxu0
  %v6680 = vadd.f32 0.0, %v6679
  %v6681 = vpop.f32.mrb[0].mxu0
  %6682 = vmatprep.mubr.f32.mxu0 0.0
  %6683 = vmatmul.mubr.f32.gmra.mrb[0].mxu0 %v6349
  %v6684 = vpop.f32.mrb[0].mxu0
  %v6685 = vadd.f32 0.0, %v6684
  %v6686 = vpop.f32.mrb[0].mxu0
  %6687 = vmatprep.mubr.f32.mxu0 0.0
  %6688 = vmatmul.mubr.f32.gmra.mrb[0].mxu0 %v6352
  %v6689 = vpop.f32.mrb[0].mxu0
  %v6690 = vadd.f32 0.0, %v6689
  %v6691 = vpop.f32.mrb[0].mxu0
  %6692 = vmatprep.mubr.f32.mxu0 0.0
  %6693 = vmatmul.mubr.f32.gmra.mrb[0].mxu0 %v6355
  %v6694 = vpop.f32.mrb[0].mxu0
  %v6695 = vadd.f32 0.0, %v6694
  %v6696 = vpop.f32.mrb[0].mxu0
  %6697 = vmatprep.mubr.f32.mxu0 0.0
  %6698 = vmatmul.mubr.f32.gmra.mrb[0].mxu0 %v6358
  %v6699 = vpop.f32.mrb[0].mxu0
  %v6700 = vadd.f32 0.0, %v6699
  %v6701 = vpop.f32.mrb[0].mxu0
  %6702 = vmatprep.mubr.f32.mxu0 0.0
  %6703 = vmatmul.mubr.f32.gmra.mrb[0].mxu0 %v6361
  %v6704 = vpop.f32.mrb[0].mxu0
  %v6705 = vadd.f32 0.0, %v6704
  %v6706 = vpop.f32.mrb[0].mxu0
  %6707 = vmatprep.mubr.f32.mxu0 0.0
  %6708 = vmatmul.mubr.f32.gmra.mrb[0].mxu0 %v6364
  %v6709 = vpop.f32.mrb[0].mxu0
  %v6710 = vadd.f32 0.0, %v6709
  %v6711 = vpop.f32.mrb[0].mxu0
  %6712 = vmatprep.mubr.f32.mxu0 0.0
  %6713 = vmatmul.mubr.f32.gmra.mrb[0].mxu0 %v6367
  %v6714 = vpop.f32.mrb[0].mxu0
  %v6715 = vadd.f32 0.0, %v6714
  %v6716 = vpop.f32.mrb[0].mxu0
  %6717 = vmatprep.mubr.f32.mxu0 0.0
  %6718 = vmatmul.mubr.f32.gmra.mrb[0].mxu0 %v6370
  %v6719 = vpop.f32.mrb[0].mxu0
  %v6720 = vadd.f32 0.0, %v6719
  %v6721 = vpop.f32.mrb[0].mxu0
  %6722 = vmatprep.mubr.f32.mxu0 0.0
  %6723 = vmatmul.mubr.f32.gmra.mrb[0].mxu0 %v6373
  %v6724 = vpop.f32.mrb[0].mxu0
  %v6725 = vadd.f32 0.0, %v6724
  %v6726 = vpop.f32.mrb[0].mxu0
  %6727 = vmatprep.mubr.f32.mxu0 0.0
  %6728 = vmatmul.mubr.f32.gmra.mrb[0].mxu0 %v6376
  %v6729 = vpop.f32.mrb[0].mxu0
  %v6730 = vadd.f32 0.0, %v6729
  %v6731 = vpop.f32.mrb[0].mxu0
  %6732 = vmatprep.mubr.f32.mxu0 0.0
  %6733 = vmatmul.mubr.f32.gmra.mrb[0].mxu0 %v6379
  %v6734 = vpop.f32.mrb[0].mxu0
  %v6735 = vadd.f32 0.0, %v6734
  %v6736 = vpop.f32.mrb[0].mxu0
  %6737 = vmatprep.mubr.f32.mxu0 0.0
  %6738 = vmatmul.mubr.f32.gmra.mrb[0].mxu0 %v6382
  %v6739 = vpop.f32.mrb[0].mxu0
  %v6740 = vadd.f32 0.0, %v6739
  %v6741 = vpop.f32.mrb[0].mxu0
  %6742 = vmatprep.mubr.f32.mxu0 0.0
  %6743 = vmatmul.mubr.f32.gmra.mrb[0].mxu0 %v6385
  %v6744 = vpop.f32.mrb[0].mxu0
  %v6745 = vadd.f32 0.0, %v6744
  %v6746 = vpop.f32.mrb[0].mxu0
  %6747 = vmatprep.mubr.f32.mxu0 0.0
  %6748 = vmatmul.mubr.f32.gmra.mrb[0].mxu0 %v6388
  %v6749 = vpop.f32.mrb[0].mxu0
  %v6750 = vadd.f32 0.0, %v6749
  %v6751 = vpop.f32.mrb[0].mxu0
  %6752 = vmatprep.mubr.f32.mxu0 0.0
  %6753 = vmatmul.mubr.f32.gmra.mrb[0].mxu0 %v6391
  %v6754 = vpop.f32.mrb[0].mxu0
  %v6755 = vadd.f32 0.0, %v6754
  %v6756 = vpop.f32.mrb[0].mxu0
  %6757 = vmatprep.mubr.f32.mxu0 0.0
  %6758 = vmatmul.mubr.f32.gmra.mrb[0].mxu0 %v6394
  %v6759 = vpop.f32.mrb[0].mxu0
  %v6760 = vadd.f32 0.0, %v6759
  %v6761 = vpop.f32.mrb[0].mxu0
  %6762 = vmatprep.mubr.f32.mxu0 0.0
  %6763 = vmatmul.mubr.f32.gmra.mrb[0].mxu0 %v6397
  %v6764 = vpop.f32.mrb[0].mxu0
  %v6765 = vadd.f32 0.0, %v6764
  %v6766 = vpop.f32.mrb[0].mxu0
  %6767 = vmatprep.mubr.f32.mxu0 0.0
  %6768 = vmatmul.mubr.f32.gmra.mrb[0].mxu0 %v6400
  %v6769 = vpop.f32.mrb[0].mxu0
  %v6770 = vadd.f32 0.0, %v6769
  %v6771 = vpop.f32.mrb[0].mxu0
  %6772 = vmatprep.mubr.f32.mxu0 0.0
  %6773 = vmatmul.mubr.f32.gmra.mrb[0].mxu0 %v6403
  %v6774 = vpop.f32.mrb[0].mxu0
  %v6775 = vadd.f32 0.0, %v6774
  %v6776 = vpop.f32.mrb[0].mxu0
  %6777 = vmatprep.mubr.f32.mxu0 0.0
  %6778 = vmatmul.mubr.f32.gmra.mrb[0].mxu0 %v6406
  %v6779 = vpop.f32.mrb[0].mxu0
  %v6780 = vadd.f32 0.0, %v6779
  %v6781 = vpop.f32.mrb[0].mxu0
  %6782 = vmatprep.mubr.f32.mxu0 0.0
  %6783 = vmatmul.mubr.f32.gmra.mrb[0].mxu0 %v6409
  %v6784 = vpop.f32.mrb[0].mxu0
  %v6785 = vadd.f32 0.0, %v6784
  %v6786 = vpop.f32.mrb[0].mxu0
  %6787 = vmatprep.mubr.f32.mxu0 0.0
  %6788 = vmatmul.mubr.f32.gmra.mrb[0].mxu0 %v6412
  %v6789 = vpop.f32.mrb[0].mxu0
  %v6790 = vadd.f32 0.0, %v6789
  %v6791 = vpop.f32.mrb[0].mxu0
  %6792 = vmatprep.mubr.f32.mxu0 0.0
  %6793 = vmatmul.mubr.f32.gmra.mrb[0].mxu0 %v6415
  %v6794 = vpop.f32.mrb[0].mxu0
  %v6795 = vadd.f32 0.0, %v6794
  %v6796 = vpop.f32.mrb[0].mxu0
  %6797 = vmatprep.mubr.f32.mxu0 0.0
  %6798 = vmatmul.mubr.f32.gmra.mrb[0].mxu0 %v6418
  %v6799 = vpop.f32.mrb[0].mxu0
  %v6800 = vadd.f32 0.0, %v6799
  %v6801 = vpop.f32.mrb[0].mxu0
  %6802 = vmatprep.mubr.f32.mxu0 0.0
  %6803 = vmatmul.mubr.f32.gmra.mrb[0].mxu0 %v6421
  %v6804 = vpop.f32.mrb[0].mxu0
  %v6805 = vadd.f32 0.0, %v6804
  %v6806 = vpop.f32.mrb[0].mxu0
  %6807 = vdwg.mxu0
  %v6808 = vsel %vm107, %v6490, 0.0
  %v6809 = vsel %vm107, %v6495, 0.0
  %v6810 = vadd.f32 %v6808, %v6809
  %v6811 = vsel %vm107, %v6500, 0.0
  %v6812 = vadd.f32 %v6810, %v6811
  %v6813 = vsel %vm107, %v6505, 0.0
  %v6814 = vadd.f32 %v6812, %v6813
  %v6815 = vsel %vm107, %v6510, 0.0
  %v6816 = vadd.f32 %v6814, %v6815
  %v6817 = vsel %vm107, %v6515, 0.0
  %v6818 = vadd.f32 %v6816, %v6817
  %v6819 = vsel %vm107, %v6520, 0.0
  %v6820 = vadd.f32 %v6818, %v6819
  %v6821 = vsel %vm107, %v6525, 0.0
  %v6822 = vadd.f32 %v6820, %v6821
  %v6823 = vsel %vm107, %v6530, 0.0
  %v6824 = vadd.f32 %v6822, %v6823
  %v6825 = vsel %vm107, %v6535, 0.0
  %v6826 = vadd.f32 %v6824, %v6825
  %v6827 = vsel %vm107, %v6540, 0.0
  %v6828 = vadd.f32 %v6826, %v6827
  %v6829 = vsel %vm107, %v6545, 0.0
  %v6830 = vadd.f32 %v6828, %v6829
  %v6831 = vsel %vm107, %v6550, 0.0
  %v6832 = vadd.f32 %v6830, %v6831
  %v6833 = vsel %vm107, %v6555, 0.0
  %v6834 = vadd.f32 %v6832, %v6833
  %v6835 = vsel %vm107, %v6560, 0.0
  %v6836 = vadd.f32 %v6834, %v6835
  %v6837 = vsel %vm107, %v6565, 0.0
  %v6838 = vadd.f32 %v6836, %v6837
  %v6839 = vsel %vm107, %v6570, 0.0
  %v6840 = vadd.f32 %v6838, %v6839
  %v6841 = vsel %vm107, %v6575, 0.0
  %v6842 = vadd.f32 %v6840, %v6841
  %v6843 = vsel %vm107, %v6580, 0.0
  %v6844 = vadd.f32 %v6842, %v6843
  %v6845 = vsel %vm107, %v6585, 0.0
  %v6846 = vadd.f32 %v6844, %v6845
  %v6847 = vsel %vm107, %v6590, 0.0
  %v6848 = vadd.f32 %v6846, %v6847
  %v6849 = vsel %vm107, %v6595, 0.0
  %v6850 = vadd.f32 %v6848, %v6849
  %v6851 = vsel %vm107, %v6600, 0.0
  %v6852 = vadd.f32 %v6850, %v6851
  %v6853 = vsel %vm107, %v6605, 0.0
  %v6854 = vadd.f32 %v6852, %v6853
  %v6855 = vsel %vm107, %v6610, 0.0
  %v6856 = vadd.f32 %v6854, %v6855
  %v6857 = vsel %vm107, %v6615, 0.0
  %v6858 = vadd.f32 %v6856, %v6857
  %v6859 = vsel %vm107, %v6620, 0.0
  %v6860 = vadd.f32 %v6858, %v6859
  %v6861 = vsel %vm107, %v6625, 0.0
  %v6862 = vadd.f32 %v6860, %v6861
  %v6863 = vsel %vm107, %v6630, 0.0
  %v6864 = vadd.f32 %v6862, %v6863
  %v6865 = vsel %vm107, %v6635, 0.0
  %v6866 = vadd.f32 %v6864, %v6865
  %v6867 = vsel %vm107, %v6640, 0.0
  %v6868 = vadd.f32 %v6866, %v6867
  %v6869 = vsel %vm107, %v6645, 0.0
  %v6870 = vadd.f32 %v6868, %v6869
  %v6871 = vsel %vm107, %v6650, 0.0
  %v6872 = vadd.f32 %v6870, %v6871
  %v6873 = vsel %vm107, %v6655, 0.0
  %v6874 = vadd.f32 %v6872, %v6873
  %v6875 = vsel %vm107, %v6660, 0.0
  %v6876 = vadd.f32 %v6874, %v6875
  %v6877 = vsel %vm107, %v6665, 0.0
  %v6878 = vadd.f32 %v6876, %v6877
  %v6879 = vsel %vm107, %v6670, 0.0
  %v6880 = vadd.f32 %v6878, %v6879
  %v6881 = vsel %vm107, %v6675, 0.0
  %v6882 = vadd.f32 %v6880, %v6881
  %v6883 = vsel %vm107, %v6680, 0.0
  %v6884 = vadd.f32 %v6882, %v6883
  %v6885 = vsel %vm107, %v6685, 0.0
  %v6886 = vadd.f32 %v6884, %v6885
  %v6887 = vsel %vm107, %v6690, 0.0
  %v6888 = vadd.f32 %v6886, %v6887
  %v6889 = vsel %vm107, %v6695, 0.0
  %v6890 = vadd.f32 %v6888, %v6889
  %v6891 = vsel %vm107, %v6700, 0.0
  %v6892 = vadd.f32 %v6890, %v6891
  %v6893 = vsel %vm107, %v6705, 0.0
  %v6894 = vadd.f32 %v6892, %v6893
  %v6895 = vsel %vm107, %v6710, 0.0
  %v6896 = vadd.f32 %v6894, %v6895
  %v6897 = vsel %vm107, %v6715, 0.0
  %v6898 = vadd.f32 %v6896, %v6897
  %v6899 = vsel %vm107, %v6720, 0.0
  %v6900 = vadd.f32 %v6898, %v6899
  %v6901 = vsel %vm107, %v6725, 0.0
  %v6902 = vadd.f32 %v6900, %v6901
  %v6903 = vsel %vm107, %v6730, 0.0
  %v6904 = vadd.f32 %v6902, %v6903
  %v6905 = vsel %vm107, %v6735, 0.0
  %v6906 = vadd.f32 %v6904, %v6905
  %v6907 = vsel %vm107, %v6740, 0.0
  %v6908 = vadd.f32 %v6906, %v6907
  %v6909 = vsel %vm107, %v6745, 0.0
  %v6910 = vadd.f32 %v6908, %v6909
  %v6911 = vsel %vm107, %v6750, 0.0
  %v6912 = vadd.f32 %v6910, %v6911
  %v6913 = vsel %vm107, %v6755, 0.0
  %v6914 = vadd.f32 %v6912, %v6913
  %v6915 = vsel %vm107, %v6760, 0.0
  %v6916 = vadd.f32 %v6914, %v6915
  %v6917 = vsel %vm107, %v6765, 0.0
  %v6918 = vadd.f32 %v6916, %v6917
  %v6919 = vsel %vm107, %v6770, 0.0
  %v6920 = vadd.f32 %v6918, %v6919
  %v6921 = vsel %vm107, %v6775, 0.0
  %v6922 = vadd.f32 %v6920, %v6921
  %v6923 = vsel %vm107, %v6780, 0.0
  %v6924 = vadd.f32 %v6922, %v6923
  %v6925 = vsel %vm107, %v6785, 0.0
  %v6926 = vadd.f32 %v6924, %v6925
  %v6927 = vsel %vm107, %v6790, 0.0
  %v6928 = vadd.f32 %v6926, %v6927
  %v6929 = vsel %vm107, %v6795, 0.0
  %v6930 = vadd.f32 %v6928, %v6929
  %v6931 = vsel %vm107, %v6800, 0.0
  %v6932 = vadd.f32 %v6930, %v6931
  %v6933 = vsel %vm107, %v6805, 0.0
  %v6934 = vadd.f32 %v6932, %v6933
  %v6935 = vrot.slane %v6934, 4
  %v6936 = vadd.f32 %v6934, %v6935
  %v6937 = vrot.slane %v6936, 2
  %v6938 = vadd.f32 %v6936, %v6937
  %v6939 = vrot.slane %v6938, 1
  %v6940 = vadd.f32 %v6938, %v6939
  %v6941 = vmul.f32 %v6940, 0.001953125
  %v6942 = vmul.f32 %v6490, %v6490
  %v6943 = vmul.f32 %v6495, %v6495
  %v6944 = vmul.f32 %v6500, %v6500
  %v6945 = vmul.f32 %v6505, %v6505
  %v6946 = vmul.f32 %v6510, %v6510
  %v6947 = vmul.f32 %v6515, %v6515
  %v6948 = vmul.f32 %v6520, %v6520
  %v6949 = vmul.f32 %v6525, %v6525
  %v6950 = vmul.f32 %v6530, %v6530
  %v6951 = vmul.f32 %v6535, %v6535
  %v6952 = vmul.f32 %v6540, %v6540
  %v6953 = vmul.f32 %v6545, %v6545
  %v6954 = vmul.f32 %v6550, %v6550
  %v6955 = vmul.f32 %v6555, %v6555
  %v6956 = vmul.f32 %v6560, %v6560
  %v6957 = vmul.f32 %v6565, %v6565
  %v6958 = vmul.f32 %v6570, %v6570
  %v6959 = vmul.f32 %v6575, %v6575
  %v6960 = vmul.f32 %v6580, %v6580
  %v6961 = vmul.f32 %v6585, %v6585
  %v6962 = vmul.f32 %v6590, %v6590
  %v6963 = vmul.f32 %v6595, %v6595
  %v6964 = vmul.f32 %v6600, %v6600
  %v6965 = vmul.f32 %v6605, %v6605
  %v6966 = vmul.f32 %v6610, %v6610
  %v6967 = vmul.f32 %v6615, %v6615
  %v6968 = vmul.f32 %v6620, %v6620
  %v6969 = vmul.f32 %v6625, %v6625
  %v6970 = vmul.f32 %v6630, %v6630
  %v6971 = vmul.f32 %v6635, %v6635
  %v6972 = vmul.f32 %v6640, %v6640
  %v6973 = vmul.f32 %v6645, %v6645
  %v6974 = vmul.f32 %v6650, %v6650
  %v6975 = vmul.f32 %v6655, %v6655
  %v6976 = vmul.f32 %v6660, %v6660
  %v6977 = vmul.f32 %v6665, %v6665
  %v6978 = vmul.f32 %v6670, %v6670
  %v6979 = vmul.f32 %v6675, %v6675
  %v6980 = vmul.f32 %v6680, %v6680
  %v6981 = vmul.f32 %v6685, %v6685
  %v6982 = vmul.f32 %v6690, %v6690
  %v6983 = vmul.f32 %v6695, %v6695
  %v6984 = vmul.f32 %v6700, %v6700
  %v6985 = vmul.f32 %v6705, %v6705
  %v6986 = vmul.f32 %v6710, %v6710
  %v6987 = vmul.f32 %v6715, %v6715
  %v6988 = vmul.f32 %v6720, %v6720
  %v6989 = vmul.f32 %v6725, %v6725
  %v6990 = vmul.f32 %v6730, %v6730
  %v6991 = vmul.f32 %v6735, %v6735
  %v6992 = vmul.f32 %v6740, %v6740
  %v6993 = vmul.f32 %v6745, %v6745
  %v6994 = vmul.f32 %v6750, %v6750
  %v6995 = vmul.f32 %v6755, %v6755
  %v6996 = vmul.f32 %v6760, %v6760
  %v6997 = vmul.f32 %v6765, %v6765
  %v6998 = vmul.f32 %v6770, %v6770
  %v6999 = vmul.f32 %v6775, %v6775
  %v7000 = vmul.f32 %v6780, %v6780
  %v7001 = vmul.f32 %v6785, %v6785
  %v7002 = vmul.f32 %v6790, %v6790
  %v7003 = vmul.f32 %v6795, %v6795
  %v7004 = vmul.f32 %v6800, %v6800
  %v7005 = vmul.f32 %v6805, %v6805
  %v7006 = vsel %vm107, %v6942, 0.0
  %v7007 = vsel %vm107, %v6943, 0.0
  %v7008 = vadd.f32 %v7006, %v7007
  %v7009 = vsel %vm107, %v6944, 0.0
  %v7010 = vadd.f32 %v7008, %v7009
  %v7011 = vsel %vm107, %v6945, 0.0
  %v7012 = vadd.f32 %v7010, %v7011
  %v7013 = vsel %vm107, %v6946, 0.0
  %v7014 = vadd.f32 %v7012, %v7013
  %v7015 = vsel %vm107, %v6947, 0.0
  %v7016 = vadd.f32 %v7014, %v7015
  %v7017 = vsel %vm107, %v6948, 0.0
  %v7018 = vadd.f32 %v7016, %v7017
  %v7019 = vsel %vm107, %v6949, 0.0
  %v7020 = vadd.f32 %v7018, %v7019
  %v7021 = vsel %vm107, %v6950, 0.0
  %v7022 = vadd.f32 %v7020, %v7021
  %v7023 = vsel %vm107, %v6951, 0.0
  %v7024 = vadd.f32 %v7022, %v7023
  %v7025 = vsel %vm107, %v6952, 0.0
  %v7026 = vadd.f32 %v7024, %v7025
  %v7027 = vsel %vm107, %v6953, 0.0
  %v7028 = vadd.f32 %v7026, %v7027
  %v7029 = vsel %vm107, %v6954, 0.0
  %v7030 = vadd.f32 %v7028, %v7029
  %v7031 = vsel %vm107, %v6955, 0.0
  %v7032 = vadd.f32 %v7030, %v7031
  %v7033 = vsel %vm107, %v6956, 0.0
  %v7034 = vadd.f32 %v7032, %v7033
  %v7035 = vsel %vm107, %v6957, 0.0
  %v7036 = vadd.f32 %v7034, %v7035
  %v7037 = vsel %vm107, %v6958, 0.0
  %v7038 = vadd.f32 %v7036, %v7037
  %v7039 = vsel %vm107, %v6959, 0.0
  %v7040 = vadd.f32 %v7038, %v7039
  %v7041 = vsel %vm107, %v6960, 0.0
  %v7042 = vadd.f32 %v7040, %v7041
  %v7043 = vsel %vm107, %v6961, 0.0
  %v7044 = vadd.f32 %v7042, %v7043
  %v7045 = vsel %vm107, %v6962, 0.0
  %v7046 = vadd.f32 %v7044, %v7045
  %v7047 = vsel %vm107, %v6963, 0.0
  %v7048 = vadd.f32 %v7046, %v7047
  %v7049 = vsel %vm107, %v6964, 0.0
  %v7050 = vadd.f32 %v7048, %v7049
  %v7051 = vsel %vm107, %v6965, 0.0
  %v7052 = vadd.f32 %v7050, %v7051
  %v7053 = vsel %vm107, %v6966, 0.0
  %v7054 = vadd.f32 %v7052, %v7053
  %v7055 = vsel %vm107, %v6967, 0.0
  %v7056 = vadd.f32 %v7054, %v7055
  %v7057 = vsel %vm107, %v6968, 0.0
  %v7058 = vadd.f32 %v7056, %v7057
  %v7059 = vsel %vm107, %v6969, 0.0
  %v7060 = vadd.f32 %v7058, %v7059
  %v7061 = vsel %vm107, %v6970, 0.0
  %v7062 = vadd.f32 %v7060, %v7061
  %v7063 = vsel %vm107, %v6971, 0.0
  %v7064 = vadd.f32 %v7062, %v7063
  %v7065 = vsel %vm107, %v6972, 0.0
  %v7066 = vadd.f32 %v7064, %v7065
  %v7067 = vsel %vm107, %v6973, 0.0
  %v7068 = vadd.f32 %v7066, %v7067
  %v7069 = vsel %vm107, %v6974, 0.0
  %v7070 = vadd.f32 %v7068, %v7069
  %v7071 = vsel %vm107, %v6975, 0.0
  %v7072 = vadd.f32 %v7070, %v7071
  %v7073 = vsel %vm107, %v6976, 0.0
  %v7074 = vadd.f32 %v7072, %v7073
  %v7075 = vsel %vm107, %v6977, 0.0
  %v7076 = vadd.f32 %v7074, %v7075
  %v7077 = vsel %vm107, %v6978, 0.0
  %v7078 = vadd.f32 %v7076, %v7077
  %v7079 = vsel %vm107, %v6979, 0.0
  %v7080 = vadd.f32 %v7078, %v7079
  %v7081 = vsel %vm107, %v6980, 0.0
  %v7082 = vadd.f32 %v7080, %v7081
  %v7083 = vsel %vm107, %v6981, 0.0
  %v7084 = vadd.f32 %v7082, %v7083
  %v7085 = vsel %vm107, %v6982, 0.0
  %v7086 = vadd.f32 %v7084, %v7085
  %v7087 = vsel %vm107, %v6983, 0.0
  %v7088 = vadd.f32 %v7086, %v7087
  %v7089 = vsel %vm107, %v6984, 0.0
  %v7090 = vadd.f32 %v7088, %v7089
  %v7091 = vsel %vm107, %v6985, 0.0
  %v7092 = vadd.f32 %v7090, %v7091
  %v7093 = vsel %vm107, %v6986, 0.0
  %v7094 = vadd.f32 %v7092, %v7093
  %v7095 = vsel %vm107, %v6987, 0.0
  %v7096 = vadd.f32 %v7094, %v7095
  %v7097 = vsel %vm107, %v6988, 0.0
  %v7098 = vadd.f32 %v7096, %v7097
  %v7099 = vsel %vm107, %v6989, 0.0
  %v7100 = vadd.f32 %v7098, %v7099
  %v7101 = vsel %vm107, %v6990, 0.0
  %v7102 = vadd.f32 %v7100, %v7101
  %v7103 = vsel %vm107, %v6991, 0.0
  %v7104 = vadd.f32 %v7102, %v7103
  %v7105 = vsel %vm107, %v6992, 0.0
  %v7106 = vadd.f32 %v7104, %v7105
  %v7107 = vsel %vm107, %v6993, 0.0
  %v7108 = vadd.f32 %v7106, %v7107
  %v7109 = vsel %vm107, %v6994, 0.0
  %v7110 = vadd.f32 %v7108, %v7109
  %v7111 = vsel %vm107, %v6995, 0.0
  %v7112 = vadd.f32 %v7110, %v7111
  %v7113 = vsel %vm107, %v6996, 0.0
  %v7114 = vadd.f32 %v7112, %v7113
  %v7115 = vsel %vm107, %v6997, 0.0
  %v7116 = vadd.f32 %v7114, %v7115
  %v7117 = vsel %vm107, %v6998, 0.0
  %v7118 = vadd.f32 %v7116, %v7117
  %v7119 = vsel %vm107, %v6999, 0.0
  %v7120 = vadd.f32 %v7118, %v7119
  %v7121 = vsel %vm107, %v7000, 0.0
  %v7122 = vadd.f32 %v7120, %v7121
  %v7123 = vsel %vm107, %v7001, 0.0
  %v7124 = vadd.f32 %v7122, %v7123
  %v7125 = vsel %vm107, %v7002, 0.0
  %v7126 = vadd.f32 %v7124, %v7125
  %v7127 = vsel %vm107, %v7003, 0.0
  %v7128 = vadd.f32 %v7126, %v7127
  %v7129 = vsel %vm107, %v7004, 0.0
  %v7130 = vadd.f32 %v7128, %v7129
  %v7131 = vsel %vm107, %v7005, 0.0
  %v7132 = vadd.f32 %v7130, %v7131
  %v7133 = vrot.slane %v7132, 4
  %v7134 = vadd.f32 %v7132, %v7133
  %v7135 = vrot.slane %v7134, 2
  %v7136 = vadd.f32 %v7134, %v7135
  %v7137 = vrot.slane %v7136, 1
  %v7138 = vadd.f32 %v7136, %v7137
  %v7139 = vmul.f32 %v7138, 0.001953125
  %v7140 = vmul.f32 %v6941, %v6941
  %v7141 = vsub.f32 %v7139, %v7140
  %v7142 = vadd.f32 %v7141, 1e-05
  %v7143 = vrsqrt.pop %v7142
  %v7144 = vmul.f32 %v5750, %v7143
  %v7145 = vmul.f32 %v6941, %v7144
  %v7146 = vsub.f32 %v5751, %v7145
  %v7148 = vlaneseq
  %v7149 = vshrl.u32 %v7148, 7
  %v7150 = vsub.s32 0, %v7149
  %v7151 = vrot.slane %v7144, %v7150
  %v7153 = vmul.f32 %v6490, %v7151
  %v7154 = vmul.f32 %v6495, %v7151
  %v7155 = vmul.f32 %v6500, %v7151
  %v7156 = vmul.f32 %v6505, %v7151
  %v7157 = vmul.f32 %v6510, %v7151
  %v7158 = vmul.f32 %v6515, %v7151
  %v7159 = vmul.f32 %v6520, %v7151
  %v7160 = vmul.f32 %v6525, %v7151
  %v7161 = vmul.f32 %v6530, %v7151
  %v7162 = vmul.f32 %v6535, %v7151
  %v7163 = vmul.f32 %v6540, %v7151
  %v7164 = vmul.f32 %v6545, %v7151
  %v7165 = vmul.f32 %v6550, %v7151
  %v7166 = vmul.f32 %v6555, %v7151
  %v7167 = vmul.f32 %v6560, %v7151
  %v7168 = vmul.f32 %v6565, %v7151
  %v7169 = vmul.f32 %v6570, %v7151
  %v7170 = vmul.f32 %v6575, %v7151
  %v7171 = vmul.f32 %v6580, %v7151
  %v7172 = vmul.f32 %v6585, %v7151
  %v7173 = vmul.f32 %v6590, %v7151
  %v7174 = vmul.f32 %v6595, %v7151
  %v7175 = vmul.f32 %v6600, %v7151
  %v7176 = vmul.f32 %v6605, %v7151
  %v7177 = vmul.f32 %v6610, %v7151
  %v7178 = vmul.f32 %v6615, %v7151
  %v7179 = vmul.f32 %v6620, %v7151
  %v7180 = vmul.f32 %v6625, %v7151
  %v7181 = vmul.f32 %v6630, %v7151
  %v7182 = vmul.f32 %v6635, %v7151
  %v7183 = vmul.f32 %v6640, %v7151
  %v7184 = vmul.f32 %v6645, %v7151
  %v7185 = vmul.f32 %v6650, %v7151
  %v7186 = vmul.f32 %v6655, %v7151
  %v7187 = vmul.f32 %v6660, %v7151
  %v7188 = vmul.f32 %v6665, %v7151
  %v7189 = vmul.f32 %v6670, %v7151
  %v7190 = vmul.f32 %v6675, %v7151
  %v7191 = vmul.f32 %v6680, %v7151
  %v7192 = vmul.f32 %v6685, %v7151
  %v7193 = vmul.f32 %v6690, %v7151
  %v7194 = vmul.f32 %v6695, %v7151
  %v7195 = vmul.f32 %v6700, %v7151
  %v7196 = vmul.f32 %v6705, %v7151
  %v7197 = vmul.f32 %v6710, %v7151
  %v7198 = vmul.f32 %v6715, %v7151
  %v7199 = vmul.f32 %v6720, %v7151
  %v7200 = vmul.f32 %v6725, %v7151
  %v7201 = vmul.f32 %v6730, %v7151
  %v7202 = vmul.f32 %v6735, %v7151
  %v7203 = vmul.f32 %v6740, %v7151
  %v7204 = vmul.f32 %v6745, %v7151
  %v7205 = vmul.f32 %v6750, %v7151
  %v7206 = vmul.f32 %v6755, %v7151
  %v7207 = vmul.f32 %v6760, %v7151
  %v7208 = vmul.f32 %v6765, %v7151
  %v7209 = vmul.f32 %v6770, %v7151
  %v7210 = vmul.f32 %v6775, %v7151
  %v7211 = vmul.f32 %v6780, %v7151
  %v7212 = vmul.f32 %v6785, %v7151
  %v7213 = vmul.f32 %v6790, %v7151
  %v7214 = vmul.f32 %v6795, %v7151
  %v7215 = vmul.f32 %v6800, %v7151
  %v7216 = vmul.f32 %v6805, %v7151
  %v7218 = vlaneseq
  %v7219 = vshrl.u32 %v7218, 7
  %v7220 = vsub.s32 0, %v7219
  %v7221 = vrot.slane %v7146, %v7220
  %v7223 = vadd.f32 %v7153, %v7221
  %v7224 = vadd.f32 %v7154, %v7221
  %v7225 = vadd.f32 %v7155, %v7221
  %v7226 = vadd.f32 %v7156, %v7221
  %v7227 = vadd.f32 %v7157, %v7221
  %v7228 = vadd.f32 %v7158, %v7221
  %v7229 = vadd.f32 %v7159, %v7221
  %v7230 = vadd.f32 %v7160, %v7221
  %v7231 = vadd.f32 %v7161, %v7221
  %v7232 = vadd.f32 %v7162, %v7221
  %v7233 = vadd.f32 %v7163, %v7221
  %v7234 = vadd.f32 %v7164, %v7221
  %v7235 = vadd.f32 %v7165, %v7221
  %v7236 = vadd.f32 %v7166, %v7221
  %v7237 = vadd.f32 %v7167, %v7221
  %v7238 = vadd.f32 %v7168, %v7221
  %v7239 = vadd.f32 %v7169, %v7221
  %v7240 = vadd.f32 %v7170, %v7221
  %v7241 = vadd.f32 %v7171, %v7221
  %v7242 = vadd.f32 %v7172, %v7221
  %v7243 = vadd.f32 %v7173, %v7221
  %v7244 = vadd.f32 %v7174, %v7221
  %v7245 = vadd.f32 %v7175, %v7221
  %v7246 = vadd.f32 %v7176, %v7221
  %v7247 = vadd.f32 %v7177, %v7221
  %v7248 = vadd.f32 %v7178, %v7221
  %v7249 = vadd.f32 %v7179, %v7221
  %v7250 = vadd.f32 %v7180, %v7221
  %v7251 = vadd.f32 %v7181, %v7221
  %v7252 = vadd.f32 %v7182, %v7221
  %v7253 = vadd.f32 %v7183, %v7221
  %v7254 = vadd.f32 %v7184, %v7221
  %v7255 = vadd.f32 %v7185, %v7221
  %v7256 = vadd.f32 %v7186, %v7221
  %v7257 = vadd.f32 %v7187, %v7221
  %v7258 = vadd.f32 %v7188, %v7221
  %v7259 = vadd.f32 %v7189, %v7221
  %v7260 = vadd.f32 %v7190, %v7221
  %v7261 = vadd.f32 %v7191, %v7221
  %v7262 = vadd.f32 %v7192, %v7221
  %v7263 = vadd.f32 %v7193, %v7221
  %v7264 = vadd.f32 %v7194, %v7221
  %v7265 = vadd.f32 %v7195, %v7221
  %v7266 = vadd.f32 %v7196, %v7221
  %v7267 = vadd.f32 %v7197, %v7221
  %v7268 = vadd.f32 %v7198, %v7221
  %v7269 = vadd.f32 %v7199, %v7221
  %v7270 = vadd.f32 %v7200, %v7221
  %v7271 = vadd.f32 %v7201, %v7221
  %v7272 = vadd.f32 %v7202, %v7221
  %v7273 = vadd.f32 %v7203, %v7221
  %v7274 = vadd.f32 %v7204, %v7221
  %v7275 = vadd.f32 %v7205, %v7221
  %v7276 = vadd.f32 %v7206, %v7221
  %v7277 = vadd.f32 %v7207, %v7221
  %v7278 = vadd.f32 %v7208, %v7221
  %v7279 = vadd.f32 %v7209, %v7221
  %v7280 = vadd.f32 %v7210, %v7221
  %v7281 = vadd.f32 %v7211, %v7221
  %v7282 = vadd.f32 %v7212, %v7221
  %v7283 = vadd.f32 %v7213, %v7221
  %v7284 = vadd.f32 %v7214, %v7221
  %v7285 = vadd.f32 %v7215, %v7221
  %v7286 = vadd.f32 %v7216, %v7221
  %v7287 = vld [vmem:[%s1] sm:$0xff]
  %v7288 = vld [vmem:[%s1 + $0x8] sm:$0xff]
  %v7289 = vld [vmem:[%s1 + $0x10] sm:$0xff]
  %v7290 = vld [vmem:[%s1 + $0x18] sm:$0xff]
  %v7291 = vld [vmem:[%s1 + $0x20] sm:$0xff]
  %v7292 = vld [vmem:[%s1 + $0x28] sm:$0xff]
  %v7293 = vld [vmem:[%s1 + $0x30] sm:$0xff]
  %v7294 = vld [vmem:[%s1 + $0x38] sm:$0xff]
  %v7295 = vld [vmem:[%s1 + $0x40] sm:$0xff]
  %v7296 = vld [vmem:[%s1 + $0x48] sm:$0xff]
  %v7297 = vld [vmem:[%s1 + $0x50] sm:$0xff]
  %v7298 = vld [vmem:[%s1 + $0x58] sm:$0xff]
  %v7299 = vld [vmem:[%s1 + $0x60] sm:$0xff]
  %v7300 = vld [vmem:[%s1 + $0x68] sm:$0xff]
  %v7301 = vld [vmem:[%s1 + $0x70] sm:$0xff]
  %v7302 = vld [vmem:[%s1 + $0x78] sm:$0xff]
  %v7303 = vld [vmem:[%s1 + $0x80] sm:$0xff]
  %v7304 = vld [vmem:[%s1 + $0x88] sm:$0xff]
  %v7305 = vld [vmem:[%s1 + $0x90] sm:$0xff]
  %v7306 = vld [vmem:[%s1 + $0x98] sm:$0xff]
  %v7307 = vld [vmem:[%s1 + $0xa0] sm:$0xff]
  %v7308 = vld [vmem:[%s1 + $0xa8] sm:$0xff]
  %v7309 = vld [vmem:[%s1 + $0xb0] sm:$0xff]
  %v7310 = vld [vmem:[%s1 + $0xb8] sm:$0xff]
  %v7311 = vld [vmem:[%s1 + $0xc0] sm:$0xff]
  %v7312 = vld [vmem:[%s1 + $0xc8] sm:$0xff]
  %v7313 = vld [vmem:[%s1 + $0xd0] sm:$0xff]
  %v7314 = vld [vmem:[%s1 + $0xd8] sm:$0xff]
  %v7315 = vld [vmem:[%s1 + $0xe0] sm:$0xff]
  %v7316 = vld [vmem:[%s1 + $0xe8] sm:$0xff]
  %v7317 = vld [vmem:[%s1 + $0xf0] sm:$0xff]
  %v7318 = vld [vmem:[%s1 + $0xf8] sm:$0xff]
  %v7319 = vld [vmem:[%s1 + $0x100] sm:$0xff]
  %v7320 = vld [vmem:[%s1 + $0x108] sm:$0xff]
  %v7321 = vld [vmem:[%s1 + $0x110] sm:$0xff]
  %v7322 = vld [vmem:[%s1 + $0x118] sm:$0xff]
  %v7323 = vld [vmem:[%s1 + $0x120] sm:$0xff]
  %v7324 = vld [vmem:[%s1 + $0x128] sm:$0xff]
  %v7325 = vld [vmem:[%s1 + $0x130] sm:$0xff]
  %v7326 = vld [vmem:[%s1 + $0x138] sm:$0xff]
  %v7327 = vld [vmem:[%s1 + $0x140] sm:$0xff]
  %v7328 = vld [vmem:[%s1 + $0x148] sm:$0xff]
  %v7329 = vld [vmem:[%s1 + $0x150] sm:$0xff]
  %v7330 = vld [vmem:[%s1 + $0x158] sm:$0xff]
  %v7331 = vld [vmem:[%s1 + $0x160] sm:$0xff]
  %v7332 = vld [vmem:[%s1 + $0x168] sm:$0xff]
  %v7333 = vld [vmem:[%s1 + $0x170] sm:$0xff]
  %v7334 = vld [vmem:[%s1 + $0x178] sm:$0xff]
  %v7335 = vld [vmem:[%s1 + $0x180] sm:$0xff]
  %v7336 = vld [vmem:[%s1 + $0x188] sm:$0xff]
  %v7337 = vld [vmem:[%s1 + $0x190] sm:$0xff]
  %v7338 = vld [vmem:[%s1 + $0x198] sm:$0xff]
  %v7339 = vld [vmem:[%s1 + $0x1a0] sm:$0xff]
  %v7340 = vld [vmem:[%s1 + $0x1a8] sm:$0xff]
  %v7341 = vld [vmem:[%s1 + $0x1b0] sm:$0xff]
  %v7342 = vld [vmem:[%s1 + $0x1b8] sm:$0xff]
  %v7343 = vld [vmem:[%s1 + $0x1c0] sm:$0xff]
  %v7344 = vld [vmem:[%s1 + $0x1c8] sm:$0xff]
  %v7345 = vld [vmem:[%s1 + $0x1d0] sm:$0xff]
  %v7346 = vld [vmem:[%s1 + $0x1d8] sm:$0xff]
  %v7347 = vld [vmem:[%s1 + $0x1e0] sm:$0xff]
  %v7348 = vld [vmem:[%s1 + $0x1e8] sm:$0xff]
  %v7349 = vld [vmem:[%s1 + $0x1f0] sm:$0xff]
  %v7350 = vld [vmem:[%s1 + $0x1f8] sm:$0xff]
  %7352 = vset.pattern.permute.xlu0 0
  %7353 = vperm.xlu0 %7352, %v7287
  %v7354 = vpop.permute.xlu0 %7353
  %7357 = vset.pattern.permute.xlu0 0
  %7358 = vperm.xlu0 %7357, %v7288
  %v7359 = vpop.permute.xlu0 %7358
  %7362 = vset.pattern.permute.xlu0 0
  %7363 = vperm.xlu0 %7362, %v7289
  %v7364 = vpop.permute.xlu0 %7363
  %7367 = vset.pattern.permute.xlu0 0
  %7368 = vperm.xlu0 %7367, %v7290
  %v7369 = vpop.permute.xlu0 %7368
  %7372 = vset.pattern.permute.xlu0 0
  %7373 = vperm.xlu0 %7372, %v7291
  %v7374 = vpop.permute.xlu0 %7373
  %7377 = vset.pattern.permute.xlu0 0
  %7378 = vperm.xlu0 %7377, %v7292
  %v7379 = vpop.permute.xlu0 %7378
  %7382 = vset.pattern.permute.xlu0 0
  %7383 = vperm.xlu0 %7382, %v7293
  %v7384 = vpop.permute.xlu0 %7383
  %7387 = vset.pattern.permute.xlu0 0
  %7388 = vperm.xlu0 %7387, %v7294
  %v7389 = vpop.permute.xlu0 %7388
  %7392 = vset.pattern.permute.xlu0 0
  %7393 = vperm.xlu0 %7392, %v7295
  %v7394 = vpop.permute.xlu0 %7393
  %7397 = vset.pattern.permute.xlu0 0
  %7398 = vperm.xlu0 %7397, %v7296
  %v7399 = vpop.permute.xlu0 %7398
  %7402 = vset.pattern.permute.xlu0 0
  %7403 = vperm.xlu0 %7402, %v7297
  %v7404 = vpop.permute.xlu0 %7403
  %7407 = vset.pattern.permute.xlu0 0
  %7408 = vperm.xlu0 %7407, %v7298
  %v7409 = vpop.permute.xlu0 %7408
  %7412 = vset.pattern.permute.xlu0 0
  %7413 = vperm.xlu0 %7412, %v7299
  %v7414 = vpop.permute.xlu0 %7413
  %7417 = vset.pattern.permute.xlu0 0
  %7418 = vperm.xlu0 %7417, %v7300
  %v7419 = vpop.permute.xlu0 %7418
  %7422 = vset.pattern.permute.xlu0 0
  %7423 = vperm.xlu0 %7422, %v7301
  %v7424 = vpop.permute.xlu0 %7423
  %7427 = vset.pattern.permute.xlu0 0
  %7428 = vperm.xlu0 %7427, %v7302
  %v7429 = vpop.permute.xlu0 %7428
  %7432 = vset.pattern.permute.xlu0 0
  %7433 = vperm.xlu0 %7432, %v7303
  %v7434 = vpop.permute.xlu0 %7433
  %7437 = vset.pattern.permute.xlu0 0
  %7438 = vperm.xlu0 %7437, %v7304
  %v7439 = vpop.permute.xlu0 %7438
  %7442 = vset.pattern.permute.xlu0 0
  %7443 = vperm.xlu0 %7442, %v7305
  %v7444 = vpop.permute.xlu0 %7443
  %7447 = vset.pattern.permute.xlu0 0
  %7448 = vperm.xlu0 %7447, %v7306
  %v7449 = vpop.permute.xlu0 %7448
  %7452 = vset.pattern.permute.xlu0 0
  %7453 = vperm.xlu0 %7452, %v7307
  %v7454 = vpop.permute.xlu0 %7453
  %7457 = vset.pattern.permute.xlu0 0
  %7458 = vperm.xlu0 %7457, %v7308
  %v7459 = vpop.permute.xlu0 %7458
  %7462 = vset.pattern.permute.xlu0 0
  %7463 = vperm.xlu0 %7462, %v7309
  %v7464 = vpop.permute.xlu0 %7463
  %7467 = vset.pattern.permute.xlu0 0
  %7468 = vperm.xlu0 %7467, %v7310
  %v7469 = vpop.permute.xlu0 %7468
  %7472 = vset.pattern.permute.xlu0 0
  %7473 = vperm.xlu0 %7472, %v7311
  %v7474 = vpop.permute.xlu0 %7473
  %7477 = vset.pattern.permute.xlu0 0
  %7478 = vperm.xlu0 %7477, %v7312
  %v7479 = vpop.permute.xlu0 %7478
  %7482 = vset.pattern.permute.xlu0 0
  %7483 = vperm.xlu0 %7482, %v7313
  %v7484 = vpop.permute.xlu0 %7483
  %7487 = vset.pattern.permute.xlu0 0
  %7488 = vperm.xlu0 %7487, %v7314
  %v7489 = vpop.permute.xlu0 %7488
  %7492 = vset.pattern.permute.xlu0 0
  %7493 = vperm.xlu0 %7492, %v7315
  %v7494 = vpop.permute.xlu0 %7493
  %7497 = vset.pattern.permute.xlu0 0
  %7498 = vperm.xlu0 %7497, %v7316
  %v7499 = vpop.permute.xlu0 %7498
  %7502 = vset.pattern.permute.xlu0 0
  %7503 = vperm.xlu0 %7502, %v7317
  %v7504 = vpop.permute.xlu0 %7503
  %7507 = vset.pattern.permute.xlu0 0
  %7508 = vperm.xlu0 %7507, %v7318
  %v7509 = vpop.permute.xlu0 %7508
  %7512 = vset.pattern.permute.xlu0 0
  %7513 = vperm.xlu0 %7512, %v7319
  %v7514 = vpop.permute.xlu0 %7513
  %7517 = vset.pattern.permute.xlu0 0
  %7518 = vperm.xlu0 %7517, %v7320
  %v7519 = vpop.permute.xlu0 %7518
  %7522 = vset.pattern.permute.xlu0 0
  %7523 = vperm.xlu0 %7522, %v7321
  %v7524 = vpop.permute.xlu0 %7523
  %7527 = vset.pattern.permute.xlu0 0
  %7528 = vperm.xlu0 %7527, %v7322
  %v7529 = vpop.permute.xlu0 %7528
  %7532 = vset.pattern.permute.xlu0 0
  %7533 = vperm.xlu0 %7532, %v7323
  %v7534 = vpop.permute.xlu0 %7533
  %7537 = vset.pattern.permute.xlu0 0
  %7538 = vperm.xlu0 %7537, %v7324
  %v7539 = vpop.permute.xlu0 %7538
  %7542 = vset.pattern.permute.xlu0 0
  %7543 = vperm.xlu0 %7542, %v7325
  %v7544 = vpop.permute.xlu0 %7543
  %7547 = vset.pattern.permute.xlu0 0
  %7548 = vperm.xlu0 %7547, %v7326
  %v7549 = vpop.permute.xlu0 %7548
  %7552 = vset.pattern.permute.xlu0 0
  %7553 = vperm.xlu0 %7552, %v7327
  %v7554 = vpop.permute.xlu0 %7553
  %7557 = vset.pattern.permute.xlu0 0
  %7558 = vperm.xlu0 %7557, %v7328
  %v7559 = vpop.permute.xlu0 %7558
  %7562 = vset.pattern.permute.xlu0 0
  %7563 = vperm.xlu0 %7562, %v7329
  %v7564 = vpop.permute.xlu0 %7563
  %7567 = vset.pattern.permute.xlu0 0
  %7568 = vperm.xlu0 %7567, %v7330
  %v7569 = vpop.permute.xlu0 %7568
  %7572 = vset.pattern.permute.xlu0 0
  %7573 = vperm.xlu0 %7572, %v7331
  %v7574 = vpop.permute.xlu0 %7573
  %7577 = vset.pattern.permute.xlu0 0
  %7578 = vperm.xlu0 %7577, %v7332
  %v7579 = vpop.permute.xlu0 %7578
  %7582 = vset.pattern.permute.xlu0 0
  %7583 = vperm.xlu0 %7582, %v7333
  %v7584 = vpop.permute.xlu0 %7583
  %7587 = vset.pattern.permute.xlu0 0
  %7588 = vperm.xlu0 %7587, %v7334
  %v7589 = vpop.permute.xlu0 %7588
  %7592 = vset.pattern.permute.xlu0 0
  %7593 = vperm.xlu0 %7592, %v7335
  %v7594 = vpop.permute.xlu0 %7593
  %7597 = vset.pattern.permute.xlu0 0
  %7598 = vperm.xlu0 %7597, %v7336
  %v7599 = vpop.permute.xlu0 %7598
  %7602 = vset.pattern.permute.xlu0 0
  %7603 = vperm.xlu0 %7602, %v7337
  %v7604 = vpop.permute.xlu0 %7603
  %7607 = vset.pattern.permute.xlu0 0
  %7608 = vperm.xlu0 %7607, %v7338
  %v7609 = vpop.permute.xlu0 %7608
  %7612 = vset.pattern.permute.xlu0 0
  %7613 = vperm.xlu0 %7612, %v7339
  %v7614 = vpop.permute.xlu0 %7613
  %7617 = vset.pattern.permute.xlu0 0
  %7618 = vperm.xlu0 %7617, %v7340
  %v7619 = vpop.permute.xlu0 %7618
  %7622 = vset.pattern.permute.xlu0 0
  %7623 = vperm.xlu0 %7622, %v7341
  %v7624 = vpop.permute.xlu0 %7623
  %7627 = vset.pattern.permute.xlu0 0
  %7628 = vperm.xlu0 %7627, %v7342
  %v7629 = vpop.permute.xlu0 %7628
  %7632 = vset.pattern.permute.xlu0 0
  %7633 = vperm.xlu0 %7632, %v7343
  %v7634 = vpop.permute.xlu0 %7633
  %7637 = vset.pattern.permute.xlu0 0
  %7638 = vperm.xlu0 %7637, %v7344
  %v7639 = vpop.permute.xlu0 %7638
  %7642 = vset.pattern.permute.xlu0 0
  %7643 = vperm.xlu0 %7642, %v7345
  %v7644 = vpop.permute.xlu0 %7643
  %7647 = vset.pattern.permute.xlu0 0
  %7648 = vperm.xlu0 %7647, %v7346
  %v7649 = vpop.permute.xlu0 %7648
  %7652 = vset.pattern.permute.xlu0 0
  %7653 = vperm.xlu0 %7652, %v7347
  %v7654 = vpop.permute.xlu0 %7653
  %7657 = vset.pattern.permute.xlu0 0
  %7658 = vperm.xlu0 %7657, %v7348
  %v7659 = vpop.permute.xlu0 %7658
  %7662 = vset.pattern.permute.xlu0 0
  %7663 = vperm.xlu0 %7662, %v7349
  %v7664 = vpop.permute.xlu0 %7663
  %7667 = vset.pattern.permute.xlu0 0
  %7668 = vperm.xlu0 %7667, %v7350
  %v7669 = vpop.permute.xlu0 %7668
  %v7671 = vmul.f32 %v7354, %v6167
  %v7672 = vmul.f32 %v7359, %v6168
  %v7673 = vmul.f32 %v7364, %v6169
  %v7674 = vmul.f32 %v7369, %v6170
  %v7675 = vmul.f32 %v7374, %v6171
  %v7676 = vmul.f32 %v7379, %v6172
  %v7677 = vmul.f32 %v7384, %v6173
  %v7678 = vmul.f32 %v7389, %v6174
  %v7679 = vmul.f32 %v7394, %v6175
  %v7680 = vmul.f32 %v7399, %v6176
  %v7681 = vmul.f32 %v7404, %v6177
  %v7682 = vmul.f32 %v7409, %v6178
  %v7683 = vmul.f32 %v7414, %v6179
  %v7684 = vmul.f32 %v7419, %v6180
  %v7685 = vmul.f32 %v7424, %v6181
  %v7686 = vmul.f32 %v7429, %v6182
  %v7687 = vmul.f32 %v7434, %v6183
  %v7688 = vmul.f32 %v7439, %v6184
  %v7689 = vmul.f32 %v7444, %v6185
  %v7690 = vmul.f32 %v7449, %v6186
  %v7691 = vmul.f32 %v7454, %v6187
  %v7692 = vmul.f32 %v7459, %v6188
  %v7693 = vmul.f32 %v7464, %v6189
  %v7694 = vmul.f32 %v7469, %v6190
  %v7695 = vmul.f32 %v7474, %v6191
  %v7696 = vmul.f32 %v7479, %v6192
  %v7697 = vmul.f32 %v7484, %v6193
  %v7698 = vmul.f32 %v7489, %v6194
  %v7699 = vmul.f32 %v7494, %v6195
  %v7700 = vmul.f32 %v7499, %v6196
  %v7701 = vmul.f32 %v7504, %v6197
  %v7702 = vmul.f32 %v7509, %v6198
  %v7703 = vmul.f32 %v7514, %v6199
  %v7704 = vmul.f32 %v7519, %v6200
  %v7705 = vmul.f32 %v7524, %v6201
  %v7706 = vmul.f32 %v7529, %v6202
  %v7707 = vmul.f32 %v7534, %v6203
  %v7708 = vmul.f32 %v7539, %v6204
  %v7709 = vmul.f32 %v7544, %v6205
  %v7710 = vmul.f32 %v7549, %v6206
  %v7711 = vmul.f32 %v7554, %v6207
  %v7712 = vmul.f32 %v7559, %v6208
  %v7713 = vmul.f32 %v7564, %v6209
  %v7714 = vmul.f32 %v7569, %v6210
  %v7715 = vmul.f32 %v7574, %v6211
  %v7716 = vmul.f32 %v7579, %v6212
  %v7717 = vmul.f32 %v7584, %v6213
  %v7718 = vmul.f32 %v7589, %v6214
  %v7719 = vmul.f32 %v7594, %v6215
  %v7720 = vmul.f32 %v7599, %v6216
  %v7721 = vmul.f32 %v7604, %v6217
  %v7722 = vmul.f32 %v7609, %v6218
  %v7723 = vmul.f32 %v7614, %v6219
  %v7724 = vmul.f32 %v7619, %v6220
  %v7725 = vmul.f32 %v7624, %v6221
  %v7726 = vmul.f32 %v7629, %v6222
  %v7727 = vmul.f32 %v7634, %v6223
  %v7728 = vmul.f32 %v7639, %v6224
  %v7729 = vmul.f32 %v7644, %v6225
  %v7730 = vmul.f32 %v7649, %v6226
  %v7731 = vmul.f32 %v7654, %v6227
  %v7732 = vmul.f32 %v7659, %v6228
  %v7733 = vmul.f32 %v7664, %v6229
  %v7734 = vmul.f32 %v7669, %v6230
  %v7735 = vadd.f32 %v41, %v7671
  %v7736 = vadd.f32 %v42, %v7672
  %v7737 = vadd.f32 %v43, %v7673
  %v7738 = vadd.f32 %v44, %v7674
  %v7739 = vadd.f32 %v45, %v7675
  %v7740 = vadd.f32 %v46, %v7676
  %v7741 = vadd.f32 %v47, %v7677
  %v7742 = vadd.f32 %v48, %v7678
  %v7743 = vadd.f32 %v49, %v7679
  %v7744 = vadd.f32 %v50, %v7680
  %v7745 = vadd.f32 %v51, %v7681
  %v7746 = vadd.f32 %v52, %v7682
  %v7747 = vadd.f32 %v53, %v7683
  %v7748 = vadd.f32 %v54, %v7684
  %v7749 = vadd.f32 %v55, %v7685
  %v7750 = vadd.f32 %v56, %v7686
  %v7751 = vadd.f32 %v57, %v7687
  %v7752 = vadd.f32 %v58, %v7688
  %v7753 = vadd.f32 %v59, %v7689
  %v7754 = vadd.f32 %v60, %v7690
  %v7755 = vadd.f32 %v61, %v7691
  %v7756 = vadd.f32 %v62, %v7692
  %v7757 = vadd.f32 %v63, %v7693
  %v7758 = vadd.f32 %v64, %v7694
  %v7759 = vadd.f32 %v65, %v7695
  %v7760 = vadd.f32 %v66, %v7696
  %v7761 = vadd.f32 %v67, %v7697
  %v7762 = vadd.f32 %v68, %v7698
  %v7763 = vadd.f32 %v69, %v7699
  %v7764 = vadd.f32 %v70, %v7700
  %v7765 = vadd.f32 %v71, %v7701
  %v7766 = vadd.f32 %v72, %v7702
  %v7767 = vadd.f32 %v73, %v7703
  %v7768 = vadd.f32 %v74, %v7704
  %v7769 = vadd.f32 %v75, %v7705
  %v7770 = vadd.f32 %v76, %v7706
  %v7771 = vadd.f32 %v77, %v7707
  %v7772 = vadd.f32 %v78, %v7708
  %v7773 = vadd.f32 %v79, %v7709
  %v7774 = vadd.f32 %v80, %v7710
  %v7775 = vadd.f32 %v81, %v7711
  %v7776 = vadd.f32 %v82, %v7712
  %v7777 = vadd.f32 %v83, %v7713
  %v7778 = vadd.f32 %v84, %v7714
  %v7779 = vadd.f32 %v85, %v7715
  %v7780 = vadd.f32 %v86, %v7716
  %v7781 = vadd.f32 %v87, %v7717
  %v7782 = vadd.f32 %v88, %v7718
  %v7783 = vadd.f32 %v89, %v7719
  %v7784 = vadd.f32 %v90, %v7720
  %v7785 = vadd.f32 %v91, %v7721
  %v7786 = vadd.f32 %v92, %v7722
  %v7787 = vadd.f32 %v93, %v7723
  %v7788 = vadd.f32 %v94, %v7724
  %v7789 = vadd.f32 %v95, %v7725
  %v7790 = vadd.f32 %v96, %v7726
  %v7791 = vadd.f32 %v97, %v7727
  %v7792 = vadd.f32 %v98, %v7728
  %v7793 = vadd.f32 %v99, %v7729
  %v7794 = vadd.f32 %v100, %v7730
  %v7795 = vadd.f32 %v101, %v7731
  %v7796 = vadd.f32 %v102, %v7732
  %v7797 = vadd.f32 %v103, %v7733
  %v7798 = vadd.f32 %v104, %v7734
  %v7799 = vld [vmem:[%s2] sm:$0xff]
  %v7800 = vld [vmem:[%s2 + $0x8] sm:$0xff]
  %v7801 = vld [vmem:[%s2 + $0x10] sm:$0xff]
  %v7802 = vld [vmem:[%s2 + $0x18] sm:$0xff]
  %v7803 = vld [vmem:[%s2 + $0x20] sm:$0xff]
  %v7804 = vld [vmem:[%s2 + $0x28] sm:$0xff]
  %v7805 = vld [vmem:[%s2 + $0x30] sm:$0xff]
  %v7806 = vld [vmem:[%s2 + $0x38] sm:$0xff]
  %v7807 = vld [vmem:[%s2 + $0x40] sm:$0xff]
  %v7808 = vld [vmem:[%s2 + $0x48] sm:$0xff]
  %v7809 = vld [vmem:[%s2 + $0x50] sm:$0xff]
  %v7810 = vld [vmem:[%s2 + $0x58] sm:$0xff]
  %v7811 = vld [vmem:[%s2 + $0x60] sm:$0xff]
  %v7812 = vld [vmem:[%s2 + $0x68] sm:$0xff]
  %v7813 = vld [vmem:[%s2 + $0x70] sm:$0xff]
  %v7814 = vld [vmem:[%s2 + $0x78] sm:$0xff]
  %v7815 = vld [vmem:[%s2 + $0x80] sm:$0xff]
  %v7816 = vld [vmem:[%s2 + $0x88] sm:$0xff]
  %v7817 = vld [vmem:[%s2 + $0x90] sm:$0xff]
  %v7818 = vld [vmem:[%s2 + $0x98] sm:$0xff]
  %v7819 = vld [vmem:[%s2 + $0xa0] sm:$0xff]
  %v7820 = vld [vmem:[%s2 + $0xa8] sm:$0xff]
  %v7821 = vld [vmem:[%s2 + $0xb0] sm:$0xff]
  %v7822 = vld [vmem:[%s2 + $0xb8] sm:$0xff]
  %v7823 = vld [vmem:[%s2 + $0xc0] sm:$0xff]
  %v7824 = vld [vmem:[%s2 + $0xc8] sm:$0xff]
  %v7825 = vld [vmem:[%s2 + $0xd0] sm:$0xff]
  %v7826 = vld [vmem:[%s2 + $0xd8] sm:$0xff]
  %v7827 = vld [vmem:[%s2 + $0xe0] sm:$0xff]
  %v7828 = vld [vmem:[%s2 + $0xe8] sm:$0xff]
  %v7829 = vld [vmem:[%s2 + $0xf0] sm:$0xff]
  %v7830 = vld [vmem:[%s2 + $0xf8] sm:$0xff]
  %v7831 = vld [vmem:[%s2 + $0x100] sm:$0xff]
  %v7832 = vld [vmem:[%s2 + $0x108] sm:$0xff]
  %v7833 = vld [vmem:[%s2 + $0x110] sm:$0xff]
  %v7834 = vld [vmem:[%s2 + $0x118] sm:$0xff]
  %v7835 = vld [vmem:[%s2 + $0x120] sm:$0xff]
  %v7836 = vld [vmem:[%s2 + $0x128] sm:$0xff]
  %v7837 = vld [vmem:[%s2 + $0x130] sm:$0xff]
  %v7838 = vld [vmem:[%s2 + $0x138] sm:$0xff]
  %v7839 = vld [vmem:[%s2 + $0x140] sm:$0xff]
  %v7840 = vld [vmem:[%s2 + $0x148] sm:$0xff]
  %v7841 = vld [vmem:[%s2 + $0x150] sm:$0xff]
  %v7842 = vld [vmem:[%s2 + $0x158] sm:$0xff]
  %v7843 = vld [vmem:[%s2 + $0x160] sm:$0xff]
  %v7844 = vld [vmem:[%s2 + $0x168] sm:$0xff]
  %v7845 = vld [vmem:[%s2 + $0x170] sm:$0xff]
  %v7846 = vld [vmem:[%s2 + $0x178] sm:$0xff]
  %v7847 = vld [vmem:[%s2 + $0x180] sm:$0xff]
  %v7848 = vld [vmem:[%s2 + $0x188] sm:$0xff]
  %v7849 = vld [vmem:[%s2 + $0x190] sm:$0xff]
  %v7850 = vld [vmem:[%s2 + $0x198] sm:$0xff]
  %v7851 = vld [vmem:[%s2 + $0x1a0] sm:$0xff]
  %v7852 = vld [vmem:[%s2 + $0x1a8] sm:$0xff]
  %v7853 = vld [vmem:[%s2 + $0x1b0] sm:$0xff]
  %v7854 = vld [vmem:[%s2 + $0x1b8] sm:$0xff]
  %v7855 = vld [vmem:[%s2 + $0x1c0] sm:$0xff]
  %v7856 = vld [vmem:[%s2 + $0x1c8] sm:$0xff]
  %v7857 = vld [vmem:[%s2 + $0x1d0] sm:$0xff]
  %v7858 = vld [vmem:[%s2 + $0x1d8] sm:$0xff]
  %v7859 = vld [vmem:[%s2 + $0x1e0] sm:$0xff]
  %v7860 = vld [vmem:[%s2 + $0x1e8] sm:$0xff]
  %v7861 = vld [vmem:[%s2 + $0x1f0] sm:$0xff]
  %v7862 = vld [vmem:[%s2 + $0x1f8] sm:$0xff]
  %7864 = vset.pattern.permute.xlu0 0
  %7865 = vperm.xlu0 %7864, %v7799
  %v7866 = vpop.permute.xlu0 %7865
  %7869 = vset.pattern.permute.xlu0 0
  %7870 = vperm.xlu0 %7869, %v7800
  %v7871 = vpop.permute.xlu0 %7870
  %7874 = vset.pattern.permute.xlu0 0
  %7875 = vperm.xlu0 %7874, %v7801
  %v7876 = vpop.permute.xlu0 %7875
  %7879 = vset.pattern.permute.xlu0 0
  %7880 = vperm.xlu0 %7879, %v7802
  %v7881 = vpop.permute.xlu0 %7880
  %7884 = vset.pattern.permute.xlu0 0
  %7885 = vperm.xlu0 %7884, %v7803
  %v7886 = vpop.permute.xlu0 %7885
  %7889 = vset.pattern.permute.xlu0 0
  %7890 = vperm.xlu0 %7889, %v7804
  %v7891 = vpop.permute.xlu0 %7890
  %7894 = vset.pattern.permute.xlu0 0
  %7895 = vperm.xlu0 %7894, %v7805
  %v7896 = vpop.permute.xlu0 %7895
  %7899 = vset.pattern.permute.xlu0 0
  %7900 = vperm.xlu0 %7899, %v7806
  %v7901 = vpop.permute.xlu0 %7900
  %7904 = vset.pattern.permute.xlu0 0
  %7905 = vperm.xlu0 %7904, %v7807
  %v7906 = vpop.permute.xlu0 %7905
  %7909 = vset.pattern.permute.xlu0 0
  %7910 = vperm.xlu0 %7909, %v7808
  %v7911 = vpop.permute.xlu0 %7910
  %7914 = vset.pattern.permute.xlu0 0
  %7915 = vperm.xlu0 %7914, %v7809
  %v7916 = vpop.permute.xlu0 %7915
  %7919 = vset.pattern.permute.xlu0 0
  %7920 = vperm.xlu0 %7919, %v7810
  %v7921 = vpop.permute.xlu0 %7920
  %7924 = vset.pattern.permute.xlu0 0
  %7925 = vperm.xlu0 %7924, %v7811
  %v7926 = vpop.permute.xlu0 %7925
  %7929 = vset.pattern.permute.xlu0 0
  %7930 = vperm.xlu0 %7929, %v7812
  %v7931 = vpop.permute.xlu0 %7930
  %7934 = vset.pattern.permute.xlu0 0
  %7935 = vperm.xlu0 %7934, %v7813
  %v7936 = vpop.permute.xlu0 %7935
  %7939 = vset.pattern.permute.xlu0 0
  %7940 = vperm.xlu0 %7939, %v7814
  %v7941 = vpop.permute.xlu0 %7940
  %7944 = vset.pattern.permute.xlu0 0
  %7945 = vperm.xlu0 %7944, %v7815
  %v7946 = vpop.permute.xlu0 %7945
  %7949 = vset.pattern.permute.xlu0 0
  %7950 = vperm.xlu0 %7949, %v7816
  %v7951 = vpop.permute.xlu0 %7950
  %7954 = vset.pattern.permute.xlu0 0
  %7955 = vperm.xlu0 %7954, %v7817
  %v7956 = vpop.permute.xlu0 %7955
  %7959 = vset.pattern.permute.xlu0 0
  %7960 = vperm.xlu0 %7959, %v7818
  %v7961 = vpop.permute.xlu0 %7960
  %7964 = vset.pattern.permute.xlu0 0
  %7965 = vperm.xlu0 %7964, %v7819
  %v7966 = vpop.permute.xlu0 %7965
  %7969 = vset.pattern.permute.xlu0 0
  %7970 = vperm.xlu0 %7969, %v7820
  %v7971 = vpop.permute.xlu0 %7970
  %7974 = vset.pattern.permute.xlu0 0
  %7975 = vperm.xlu0 %7974, %v7821
  %v7976 = vpop.permute.xlu0 %7975
  %7979 = vset.pattern.permute.xlu0 0
  %7980 = vperm.xlu0 %7979, %v7822
  %v7981 = vpop.permute.xlu0 %7980
  %7984 = vset.pattern.permute.xlu0 0
  %7985 = vperm.xlu0 %7984, %v7823
  %v7986 = vpop.permute.xlu0 %7985
  %7989 = vset.pattern.permute.xlu0 0
  %7990 = vperm.xlu0 %7989, %v7824
  %v7991 = vpop.permute.xlu0 %7990
  %7994 = vset.pattern.permute.xlu0 0
  %7995 = vperm.xlu0 %7994, %v7825
  %v7996 = vpop.permute.xlu0 %7995
  %7999 = vset.pattern.permute.xlu0 0
  %8000 = vperm.xlu0 %7999, %v7826
  %v8001 = vpop.permute.xlu0 %8000
  %8004 = vset.pattern.permute.xlu0 0
  %8005 = vperm.xlu0 %8004, %v7827
  %v8006 = vpop.permute.xlu0 %8005
  %8009 = vset.pattern.permute.xlu0 0
  %8010 = vperm.xlu0 %8009, %v7828
  %v8011 = vpop.permute.xlu0 %8010
  %8014 = vset.pattern.permute.xlu0 0
  %8015 = vperm.xlu0 %8014, %v7829
  %v8016 = vpop.permute.xlu0 %8015
  %8019 = vset.pattern.permute.xlu0 0
  %8020 = vperm.xlu0 %8019, %v7830
  %v8021 = vpop.permute.xlu0 %8020
  %8024 = vset.pattern.permute.xlu0 0
  %8025 = vperm.xlu0 %8024, %v7831
  %v8026 = vpop.permute.xlu0 %8025
  %8029 = vset.pattern.permute.xlu0 0
  %8030 = vperm.xlu0 %8029, %v7832
  %v8031 = vpop.permute.xlu0 %8030
  %8034 = vset.pattern.permute.xlu0 0
  %8035 = vperm.xlu0 %8034, %v7833
  %v8036 = vpop.permute.xlu0 %8035
  %8039 = vset.pattern.permute.xlu0 0
  %8040 = vperm.xlu0 %8039, %v7834
  %v8041 = vpop.permute.xlu0 %8040
  %8044 = vset.pattern.permute.xlu0 0
  %8045 = vperm.xlu0 %8044, %v7835
  %v8046 = vpop.permute.xlu0 %8045
  %8049 = vset.pattern.permute.xlu0 0
  %8050 = vperm.xlu0 %8049, %v7836
  %v8051 = vpop.permute.xlu0 %8050
  %8054 = vset.pattern.permute.xlu0 0
  %8055 = vperm.xlu0 %8054, %v7837
  %v8056 = vpop.permute.xlu0 %8055
  %8059 = vset.pattern.permute.xlu0 0
  %8060 = vperm.xlu0 %8059, %v7838
  %v8061 = vpop.permute.xlu0 %8060
  %8064 = vset.pattern.permute.xlu0 0
  %8065 = vperm.xlu0 %8064, %v7839
  %v8066 = vpop.permute.xlu0 %8065
  %8069 = vset.pattern.permute.xlu0 0
  %8070 = vperm.xlu0 %8069, %v7840
  %v8071 = vpop.permute.xlu0 %8070
  %8074 = vset.pattern.permute.xlu0 0
  %8075 = vperm.xlu0 %8074, %v7841
  %v8076 = vpop.permute.xlu0 %8075
  %8079 = vset.pattern.permute.xlu0 0
  %8080 = vperm.xlu0 %8079, %v7842
  %v8081 = vpop.permute.xlu0 %8080
  %8084 = vset.pattern.permute.xlu0 0
  %8085 = vperm.xlu0 %8084, %v7843
  %v8086 = vpop.permute.xlu0 %8085
  %8089 = vset.pattern.permute.xlu0 0
  %8090 = vperm.xlu0 %8089, %v7844
  %v8091 = vpop.permute.xlu0 %8090
  %8094 = vset.pattern.permute.xlu0 0
  %8095 = vperm.xlu0 %8094, %v7845
  %v8096 = vpop.permute.xlu0 %8095
  %8099 = vset.pattern.permute.xlu0 0
  %8100 = vperm.xlu0 %8099, %v7846
  %v8101 = vpop.permute.xlu0 %8100
  %8104 = vset.pattern.permute.xlu0 0
  %8105 = vperm.xlu0 %8104, %v7847
  %v8106 = vpop.permute.xlu0 %8105
  %8109 = vset.pattern.permute.xlu0 0
  %8110 = vperm.xlu0 %8109, %v7848
  %v8111 = vpop.permute.xlu0 %8110
  %8114 = vset.pattern.permute.xlu0 0
  %8115 = vperm.xlu0 %8114, %v7849
  %v8116 = vpop.permute.xlu0 %8115
  %8119 = vset.pattern.permute.xlu0 0
  %8120 = vperm.xlu0 %8119, %v7850
  %v8121 = vpop.permute.xlu0 %8120
  %8124 = vset.pattern.permute.xlu0 0
  %8125 = vperm.xlu0 %8124, %v7851
  %v8126 = vpop.permute.xlu0 %8125
  %8129 = vset.pattern.permute.xlu0 0
  %8130 = vperm.xlu0 %8129, %v7852
  %v8131 = vpop.permute.xlu0 %8130
  %8134 = vset.pattern.permute.xlu0 0
  %8135 = vperm.xlu0 %8134, %v7853
  %v8136 = vpop.permute.xlu0 %8135
  %8139 = vset.pattern.permute.xlu0 0
  %8140 = vperm.xlu0 %8139, %v7854
  %v8141 = vpop.permute.xlu0 %8140
  %8144 = vset.pattern.permute.xlu0 0
  %8145 = vperm.xlu0 %8144, %v7855
  %v8146 = vpop.permute.xlu0 %8145
  %8149 = vset.pattern.permute.xlu0 0
  %8150 = vperm.xlu0 %8149, %v7856
  %v8151 = vpop.permute.xlu0 %8150
  %8154 = vset.pattern.permute.xlu0 0
  %8155 = vperm.xlu0 %8154, %v7857
  %v8156 = vpop.permute.xlu0 %8155
  %8159 = vset.pattern.permute.xlu0 0
  %8160 = vperm.xlu0 %8159, %v7858
  %v8161 = vpop.permute.xlu0 %8160
  %8164 = vset.pattern.permute.xlu0 0
  %8165 = vperm.xlu0 %8164, %v7859
  %v8166 = vpop.permute.xlu0 %8165
  %8169 = vset.pattern.permute.xlu0 0
  %8170 = vperm.xlu0 %8169, %v7860
  %v8171 = vpop.permute.xlu0 %8170
  %8174 = vset.pattern.permute.xlu0 0
  %8175 = vperm.xlu0 %8174, %v7861
  %v8176 = vpop.permute.xlu0 %8175
  %8179 = vset.pattern.permute.xlu0 0
  %8180 = vperm.xlu0 %8179, %v7862
  %v8181 = vpop.permute.xlu0 %8180
  %v8183 = vmul.f32 %v7866, %v7223
  %v8184 = vmul.f32 %v7871, %v7224
  %v8185 = vmul.f32 %v7876, %v7225
  %v8186 = vmul.f32 %v7881, %v7226
  %v8187 = vmul.f32 %v7886, %v7227
  %v8188 = vmul.f32 %v7891, %v7228
  %v8189 = vmul.f32 %v7896, %v7229
  %v8190 = vmul.f32 %v7901, %v7230
  %v8191 = vmul.f32 %v7906, %v7231
  %v8192 = vmul.f32 %v7911, %v7232
  %v8193 = vmul.f32 %v7916, %v7233
  %v8194 = vmul.f32 %v7921, %v7234
  %v8195 = vmul.f32 %v7926, %v7235
  %v8196 = vmul.f32 %v7931, %v7236
  %v8197 = vmul.f32 %v7936, %v7237
  %v8198 = vmul.f32 %v7941, %v7238
  %v8199 = vmul.f32 %v7946, %v7239
  %v8200 = vmul.f32 %v7951, %v7240
  %v8201 = vmul.f32 %v7956, %v7241
  %v8202 = vmul.f32 %v7961, %v7242
  %v8203 = vmul.f32 %v7966, %v7243
  %v8204 = vmul.f32 %v7971, %v7244
  %v8205 = vmul.f32 %v7976, %v7245
  %v8206 = vmul.f32 %v7981, %v7246
  %v8207 = vmul.f32 %v7986, %v7247
  %v8208 = vmul.f32 %v7991, %v7248
  %v8209 = vmul.f32 %v7996, %v7249
  %v8210 = vmul.f32 %v8001, %v7250
  %v8211 = vmul.f32 %v8006, %v7251
  %v8212 = vmul.f32 %v8011, %v7252
  %v8213 = vmul.f32 %v8016, %v7253
  %v8214 = vmul.f32 %v8021, %v7254
  %v8215 = vmul.f32 %v8026, %v7255
  %v8216 = vmul.f32 %v8031, %v7256
  %v8217 = vmul.f32 %v8036, %v7257
  %v8218 = vmul.f32 %v8041, %v7258
  %v8219 = vmul.f32 %v8046, %v7259
  %v8220 = vmul.f32 %v8051, %v7260
  %v8221 = vmul.f32 %v8056, %v7261
  %v8222 = vmul.f32 %v8061, %v7262
  %v8223 = vmul.f32 %v8066, %v7263
  %v8224 = vmul.f32 %v8071, %v7264
  %v8225 = vmul.f32 %v8076, %v7265
  %v8226 = vmul.f32 %v8081, %v7266
  %v8227 = vmul.f32 %v8086, %v7267
  %v8228 = vmul.f32 %v8091, %v7268
  %v8229 = vmul.f32 %v8096, %v7269
  %v8230 = vmul.f32 %v8101, %v7270
  %v8231 = vmul.f32 %v8106, %v7271
  %v8232 = vmul.f32 %v8111, %v7272
  %v8233 = vmul.f32 %v8116, %v7273
  %v8234 = vmul.f32 %v8121, %v7274
  %v8235 = vmul.f32 %v8126, %v7275
  %v8236 = vmul.f32 %v8131, %v7276
  %v8237 = vmul.f32 %v8136, %v7277
  %v8238 = vmul.f32 %v8141, %v7278
  %v8239 = vmul.f32 %v8146, %v7279
  %v8240 = vmul.f32 %v8151, %v7280
  %v8241 = vmul.f32 %v8156, %v7281
  %v8242 = vmul.f32 %v8161, %v7282
  %v8243 = vmul.f32 %v8166, %v7283
  %v8244 = vmul.f32 %v8171, %v7284
  %v8245 = vmul.f32 %v8176, %v7285
  %v8246 = vmul.f32 %v8181, %v7286
  %v8247 = vadd.f32 %v7735, %v8183
  %v8248 = vadd.f32 %v7736, %v8184
  %v8249 = vadd.f32 %v7737, %v8185
  %v8250 = vadd.f32 %v7738, %v8186
  %v8251 = vadd.f32 %v7739, %v8187
  %v8252 = vadd.f32 %v7740, %v8188
  %v8253 = vadd.f32 %v7741, %v8189
  %v8254 = vadd.f32 %v7742, %v8190
  %v8255 = vadd.f32 %v7743, %v8191
  %v8256 = vadd.f32 %v7744, %v8192
  %v8257 = vadd.f32 %v7745, %v8193
  %v8258 = vadd.f32 %v7746, %v8194
  %v8259 = vadd.f32 %v7747, %v8195
  %v8260 = vadd.f32 %v7748, %v8196
  %v8261 = vadd.f32 %v7749, %v8197
  %v8262 = vadd.f32 %v7750, %v8198
  %v8263 = vadd.f32 %v7751, %v8199
  %v8264 = vadd.f32 %v7752, %v8200
  %v8265 = vadd.f32 %v7753, %v8201
  %v8266 = vadd.f32 %v7754, %v8202
  %v8267 = vadd.f32 %v7755, %v8203
  %v8268 = vadd.f32 %v7756, %v8204
  %v8269 = vadd.f32 %v7757, %v8205
  %v8270 = vadd.f32 %v7758, %v8206
  %v8271 = vadd.f32 %v7759, %v8207
  %v8272 = vadd.f32 %v7760, %v8208
  %v8273 = vadd.f32 %v7761, %v8209
  %v8274 = vadd.f32 %v7762, %v8210
  %v8275 = vadd.f32 %v7763, %v8211
  %v8276 = vadd.f32 %v7764, %v8212
  %v8277 = vadd.f32 %v7765, %v8213
  %v8278 = vadd.f32 %v7766, %v8214
  %v8279 = vadd.f32 %v7767, %v8215
  %v8280 = vadd.f32 %v7768, %v8216
  %v8281 = vadd.f32 %v7769, %v8217
  %v8282 = vadd.f32 %v7770, %v8218
  %v8283 = vadd.f32 %v7771, %v8219
  %v8284 = vadd.f32 %v7772, %v8220
  %v8285 = vadd.f32 %v7773, %v8221
  %v8286 = vadd.f32 %v7774, %v8222
  %v8287 = vadd.f32 %v7775, %v8223
  %v8288 = vadd.f32 %v7776, %v8224
  %v8289 = vadd.f32 %v7777, %v8225
  %v8290 = vadd.f32 %v7778, %v8226
  %v8291 = vadd.f32 %v7779, %v8227
  %v8292 = vadd.f32 %v7780, %v8228
  %v8293 = vadd.f32 %v7781, %v8229
  %v8294 = vadd.f32 %v7782, %v8230
  %v8295 = vadd.f32 %v7783, %v8231
  %v8296 = vadd.f32 %v7784, %v8232
  %v8297 = vadd.f32 %v7785, %v8233
  %v8298 = vadd.f32 %v7786, %v8234
  %v8299 = vadd.f32 %v7787, %v8235
  %v8300 = vadd.f32 %v7788, %v8236
  %v8301 = vadd.f32 %v7789, %v8237
  %v8302 = vadd.f32 %v7790, %v8238
  %v8303 = vadd.f32 %v7791, %v8239
  %v8304 = vadd.f32 %v7792, %v8240
  %v8305 = vadd.f32 %v7793, %v8241
  %v8306 = vadd.f32 %v7794, %v8242
  %v8307 = vadd.f32 %v7795, %v8243
  %v8308 = vadd.f32 %v7796, %v8244
  %v8309 = vadd.f32 %v7797, %v8245
  %v8310 = vadd.f32 %v7798, %v8246
  %v8311 = vmax.f32 %v8247, 0.0
  %v8312 = vmax.f32 %v8248, 0.0
  %v8313 = vmax.f32 %v8249, 0.0
  %v8314 = vmax.f32 %v8250, 0.0
  %v8315 = vmax.f32 %v8251, 0.0
  %v8316 = vmax.f32 %v8252, 0.0
  %v8317 = vmax.f32 %v8253, 0.0
  %v8318 = vmax.f32 %v8254, 0.0
  %v8319 = vmax.f32 %v8255, 0.0
  %v8320 = vmax.f32 %v8256, 0.0
  %v8321 = vmax.f32 %v8257, 0.0
  %v8322 = vmax.f32 %v8258, 0.0
  %v8323 = vmax.f32 %v8259, 0.0
  %v8324 = vmax.f32 %v8260, 0.0
  %v8325 = vmax.f32 %v8261, 0.0
  %v8326 = vmax.f32 %v8262, 0.0
  %v8327 = vmax.f32 %v8263, 0.0
  %v8328 = vmax.f32 %v8264, 0.0
  %v8329 = vmax.f32 %v8265, 0.0
  %v8330 = vmax.f32 %v8266, 0.0
  %v8331 = vmax.f32 %v8267, 0.0
  %v8332 = vmax.f32 %v8268, 0.0
  %v8333 = vmax.f32 %v8269, 0.0
  %v8334 = vmax.f32 %v8270, 0.0
  %v8335 = vmax.f32 %v8271, 0.0
  %v8336 = vmax.f32 %v8272, 0.0
  %v8337 = vmax.f32 %v8273, 0.0
  %v8338 = vmax.f32 %v8274, 0.0
  %v8339 = vmax.f32 %v8275, 0.0
  %v8340 = vmax.f32 %v8276, 0.0
  %v8341 = vmax.f32 %v8277, 0.0
  %v8342 = vmax.f32 %v8278, 0.0
  %v8343 = vmax.f32 %v8279, 0.0
  %v8344 = vmax.f32 %v8280, 0.0
  %v8345 = vmax.f32 %v8281, 0.0
  %v8346 = vmax.f32 %v8282, 0.0
  %v8347 = vmax.f32 %v8283, 0.0
  %v8348 = vmax.f32 %v8284, 0.0
  %v8349 = vmax.f32 %v8285, 0.0
  %v8350 = vmax.f32 %v8286, 0.0
  %v8351 = vmax.f32 %v8287, 0.0
  %v8352 = vmax.f32 %v8288, 0.0
  %v8353 = vmax.f32 %v8289, 0.0
  %v8354 = vmax.f32 %v8290, 0.0
  %v8355 = vmax.f32 %v8291, 0.0
  %v8356 = vmax.f32 %v8292, 0.0
  %v8357 = vmax.f32 %v8293, 0.0
  %v8358 = vmax.f32 %v8294, 0.0
  %v8359 = vmax.f32 %v8295, 0.0
  %v8360 = vmax.f32 %v8296, 0.0
  %v8361 = vmax.f32 %v8297, 0.0
  %v8362 = vmax.f32 %v8298, 0.0
  %v8363 = vmax.f32 %v8299, 0.0
  %v8364 = vmax.f32 %v8300, 0.0
  %v8365 = vmax.f32 %v8301, 0.0
  %v8366 = vmax.f32 %v8302, 0.0
  %v8367 = vmax.f32 %v8303, 0.0
  %v8368 = vmax.f32 %v8304, 0.0
  %v8369 = vmax.f32 %v8305, 0.0
  %v8370 = vmax.f32 %v8306, 0.0
  %v8371 = vmax.f32 %v8307, 0.0
  %v8372 = vmax.f32 %v8308, 0.0
  %v8373 = vmax.f32 %v8309, 0.0
  %v8374 = vmax.f32 %v8310, 0.0
  %8375 = vst.msk [vmem:[%s12] sm:$0xff] %vm107, %v8311
  %8376 = vst.msk [vmem:[%s12 + $0x8] sm:$0xff] %vm107, %v8312
  %8377 = vst.msk [vmem:[%s12 + $0x10] sm:$0xff] %vm107, %v8313
  %8378 = vst.msk [vmem:[%s12 + $0x18] sm:$0xff] %vm107, %v8314
  %8379 = vst.msk [vmem:[%s12 + $0x20] sm:$0xff] %vm107, %v8315
  %8380 = vst.msk [vmem:[%s12 + $0x28] sm:$0xff] %vm107, %v8316
  %8381 = vst.msk [vmem:[%s12 + $0x30] sm:$0xff] %vm107, %v8317
  %8382 = vst.msk [vmem:[%s12 + $0x38] sm:$0xff] %vm107, %v8318
  %8383 = vst.msk [vmem:[%s12 + $0x40] sm:$0xff] %vm107, %v8319
  %8384 = vst.msk [vmem:[%s12 + $0x48] sm:$0xff] %vm107, %v8320
  %8385 = vst.msk [vmem:[%s12 + $0x50] sm:$0xff] %vm107, %v8321
  %8386 = vst.msk [vmem:[%s12 + $0x58] sm:$0xff] %vm107, %v8322
  %8387 = vst.msk [vmem:[%s12 + $0x60] sm:$0xff] %vm107, %v8323
  %8388 = vst.msk [vmem:[%s12 + $0x68] sm:$0xff] %vm107, %v8324
  %8389 = vst.msk [vmem:[%s12 + $0x70] sm:$0xff] %vm107, %v8325
  %8390 = vst.msk [vmem:[%s12 + $0x78] sm:$0xff] %vm107, %v8326
  %8391 = vst.msk [vmem:[%s12 + $0x80] sm:$0xff] %vm107, %v8327
  %8392 = vst.msk [vmem:[%s12 + $0x88] sm:$0xff] %vm107, %v8328
  %8393 = vst.msk [vmem:[%s12 + $0x90] sm:$0xff] %vm107, %v8329
  %8394 = vst.msk [vmem:[%s12 + $0x98] sm:$0xff] %vm107, %v8330
  %8395 = vst.msk [vmem:[%s12 + $0xa0] sm:$0xff] %vm107, %v8331
  %8396 = vst.msk [vmem:[%s12 + $0xa8] sm:$0xff] %vm107, %v8332
  %8397 = vst.msk [vmem:[%s12 + $0xb0] sm:$0xff] %vm107, %v8333
  %8398 = vst.msk [vmem:[%s12 + $0xb8] sm:$0xff] %vm107, %v8334
  %8399 = vst.msk [vmem:[%s12 + $0xc0] sm:$0xff] %vm107, %v8335
  %8400 = vst.msk [vmem:[%s12 + $0xc8] sm:$0xff] %vm107, %v8336
  %8401 = vst.msk [vmem:[%s12 + $0xd0] sm:$0xff] %vm107, %v8337
  %8402 = vst.msk [vmem:[%s12 + $0xd8] sm:$0xff] %vm107, %v8338
  %8403 = vst.msk [vmem:[%s12 + $0xe0] sm:$0xff] %vm107, %v8339
  %8404 = vst.msk [vmem:[%s12 + $0xe8] sm:$0xff] %vm107, %v8340
  %8405 = vst.msk [vmem:[%s12 + $0xf0] sm:$0xff] %vm107, %v8341
  %8406 = vst.msk [vmem:[%s12 + $0xf8] sm:$0xff] %vm107, %v8342
  %8407 = vst.msk [vmem:[%s12 + $0x100] sm:$0xff] %vm107, %v8343
  %8408 = vst.msk [vmem:[%s12 + $0x108] sm:$0xff] %vm107, %v8344
  %8409 = vst.msk [vmem:[%s12 + $0x110] sm:$0xff] %vm107, %v8345
  %8410 = vst.msk [vmem:[%s12 + $0x118] sm:$0xff] %vm107, %v8346
  %8411 = vst.msk [vmem:[%s12 + $0x120] sm:$0xff] %vm107, %v8347
  %8412 = vst.msk [vmem:[%s12 + $0x128] sm:$0xff] %vm107, %v8348
  %8413 = vst.msk [vmem:[%s12 + $0x130] sm:$0xff] %vm107, %v8349
  %8414 = vst.msk [vmem:[%s12 + $0x138] sm:$0xff] %vm107, %v8350
  %8415 = vst.msk [vmem:[%s12 + $0x140] sm:$0xff] %vm107, %v8351
  %8416 = vst.msk [vmem:[%s12 + $0x148] sm:$0xff] %vm107, %v8352
  %8417 = vst.msk [vmem:[%s12 + $0x150] sm:$0xff] %vm107, %v8353
  %8418 = vst.msk [vmem:[%s12 + $0x158] sm:$0xff] %vm107, %v8354
  %8419 = vst.msk [vmem:[%s12 + $0x160] sm:$0xff] %vm107, %v8355
  %8420 = vst.msk [vmem:[%s12 + $0x168] sm:$0xff] %vm107, %v8356
  %8421 = vst.msk [vmem:[%s12 + $0x170] sm:$0xff] %vm107, %v8357
  %8422 = vst.msk [vmem:[%s12 + $0x178] sm:$0xff] %vm107, %v8358
  %8423 = vst.msk [vmem:[%s12 + $0x180] sm:$0xff] %vm107, %v8359
  %8424 = vst.msk [vmem:[%s12 + $0x188] sm:$0xff] %vm107, %v8360
  %8425 = vst.msk [vmem:[%s12 + $0x190] sm:$0xff] %vm107, %v8361
  %8426 = vst.msk [vmem:[%s12 + $0x198] sm:$0xff] %vm107, %v8362
  %8427 = vst.msk [vmem:[%s12 + $0x1a0] sm:$0xff] %vm107, %v8363
  %8428 = vst.msk [vmem:[%s12 + $0x1a8] sm:$0xff] %vm107, %v8364
  %8429 = vst.msk [vmem:[%s12 + $0x1b0] sm:$0xff] %vm107, %v8365
  %8430 = vst.msk [vmem:[%s12 + $0x1b8] sm:$0xff] %vm107, %v8366
  %8431 = vst.msk [vmem:[%s12 + $0x1c0] sm:$0xff] %vm107, %v8367
  %8432 = vst.msk [vmem:[%s12 + $0x1c8] sm:$0xff] %vm107, %v8368
  %8433 = vst.msk [vmem:[%s12 + $0x1d0] sm:$0xff] %vm107, %v8369
  %8434 = vst.msk [vmem:[%s12 + $0x1d8] sm:$0xff] %vm107, %v8370
  %8435 = vst.msk [vmem:[%s12 + $0x1e0] sm:$0xff] %vm107, %v8371
  %8436 = vst.msk [vmem:[%s12 + $0x1e8] sm:$0xff] %vm107, %v8372
  %8437 = vst.msk [vmem:[%s12 + $0x1f0] sm:$0xff] %vm107, %v8373
  %8438 = vst.msk [vmem:[%s12 + $0x1f8] sm:$0xff] %vm107, %v8374
  // Predicated region
  $region50: #{tpu_custom_call.1} parent=0 // pred_check
    _
  $region51: #{tpu_custom_call.1} parent=0 // pred_check_branch
    %8440 = sbr.rel (0) target = $region53
  $region52: #{tpu_custom_call.1} parent=0 // pred_region
    _
  $region53: #{tpu_custom_call.1} parent=0 // pred_fallthru
    _
  // Predicated region
  $region54: #{tpu_custom_call.1} parent=0 // pred_check
    _
  $region55: #{tpu_custom_call.1} parent=0 // pred_check_branch
    %8442 = sbr.rel (0) target = $region57
  $region56: #{tpu_custom_call.1} parent=0 // pred_region
    _
  $region57: #{tpu_custom_call.1} parent=0 // pred_fallthru
    _

</llo_original>
